<compile_context>
chip_gen: v7x
topology: tpu7x:2x2x1
jax: 0.10.0
libtpu: 0.0.40
codegen_flags: <defaults>
</compile_context>

<pallas_src>
import functools

import jax
import jax.numpy as jnp
from jax import lax
from jax.experimental import pallas as pl
from jax.experimental.pallas import tpu as pltpu


PAD = 3  # covers the largest dilation (3) of the 3x3 convs
_DILS = (1, 2, 3)
# the 8 non-center positions of a 3x3 kernel, as (dy, dx) offsets in {-1,0,1}
_RING = tuple((ky, kx) for ky in (-1, 0, 1) for kx in (-1, 0, 1)
              if not (ky == 0 and kx == 0))


# ----------------------------- Pallas kernel --------------------------------
def _cpfe_kernel(xp_ref, wc_ref, woff_ref, scale_ref, shift_ref, out_ref,
                 acc_ref, *, H, W, Cin, Cout):
    """One batch element per grid step.

    xp_ref   : (H+2*PAD, W+2*PAD, Cin)  zero-padded NHWC input tile
    wc_ref   : (Cin, 4*Cout)            fused center taps
                                        [conv_1_1 | dil1 ctr | dil2 ctr | dil3 ctr]
    woff_ref : (24, Cout, Cin)          off-center taps, t = dil_idx*8 + ring_idx
                                        (stored (out, in): Cin=128 is lane-dense)
    scale_ref: (1, 4*Cout)              folded BN scale
    shift_ref: (1, 4*Cout)              folded BN shift (conv bias folded in)
    out_ref  : (H, W, 4*Cout)
    acc_ref  : VMEM scratch (H*W, 4*Cout) f32 accumulator
    """
    HW = H * W

    def tap(dy, dx):
        # static slice of the zero-padded image, flattened to (H*W, Cin)
        xs = xp_ref[PAD + dy: PAD + dy + H, PAD + dx: PAD + dx + W, :]
        return xs.reshape(HW, Cin)

    # ---- fused center taps: one lane-dense (HW,Cin)@(Cin,4*Cout) matmul -----
    xc = tap(0, 0)
    acc_ref[...] = jnp.dot(xc, wc_ref[...],
                           preferred_element_type=jnp.float32)       # (HW, 4C)

    # ---- off-center taps of the three dilated 3x3 convs ---------------------
    for di, d in enumerate(_DILS):
        s = None
        for r, (ky, kx) in enumerate(_RING):
            xt = tap(d * ky, d * kx)                                  # (HW, Cin)
            w_t = woff_ref[di * 8 + r]                                # (Cout, Cin)
            part = lax.dot_general(xt, w_t, (((1,), (1,)), ((), ())),
                                   preferred_element_type=jnp.float32)
            s = part if s is None else s + part                       # (HW, Cout)
        c0 = (di + 1) * Cout
        acc_ref[:, c0:c0 + Cout] += s

    # ---- fused (bias + inference BatchNorm) + ReLU epilogue ------------------
    y = acc_ref[...] * scale_ref[...] + shift_ref[...]
    y = jnp.maximum(y, 0.0)
    out_ref[...] = y.reshape(H, W, 4 * Cout).astype(out_ref.dtype)


def cpfe_pallas(x_nhwc, wc, woff, scale, shift):
    """x_nhwc: (B, H, W, Cin) f32. Returns relu(BN(concat convs)): (B, H, W, 4*Cout)."""
    B, H, W, Cin = x_nhwc.shape
    Cout4 = wc.shape[1]
    Cout = Cout4 // 4

    xp = jnp.pad(x_nhwc, ((0, 0), (PAD, PAD), (PAD, PAD), (0, 0)))
    Hp, Wp = H + 2 * PAD, W + 2 * PAD

    kernel = functools.partial(_cpfe_kernel, H=H, W=W, Cin=Cin, Cout=Cout)
    return pl.pallas_call(
        kernel,
        out_shape=jax.ShapeDtypeStruct((B, H, W, Cout4), x_nhwc.dtype),
        grid_spec=pltpu.PrefetchScalarGridSpec(
            num_scalar_prefetch=0,
            grid=(B,),
            in_specs=[
                pl.BlockSpec((None, Hp, Wp, Cin), lambda b: (b, 0, 0, 0)),  # x (padded)
                pl.BlockSpec((Cin, Cout4), lambda b: (0, 0)),               # fused centers
                pl.BlockSpec((24, Cout, Cin), lambda b: (0, 0, 0)),         # off-center taps
                pl.BlockSpec((1, Cout4), lambda b: (0, 0)),                 # BN scale
                pl.BlockSpec((1, Cout4), lambda b: (0, 0)),                 # BN shift
            ],
            out_specs=pl.BlockSpec((None, H, W, Cout4), lambda b: (b, 0, 0, 0)),
            scratch_shapes=[pltpu.VMEM((H * W, Cout4), jnp.float32)],
        ),
        compiler_params=pltpu.CompilerParams(
            dimension_semantics=("parallel",)),
    )(xp, wc, woff, scale, shift)


# ------------------------------- forward ------------------------------------
def cpfe_forward(x_nchw, params, eps=1e-5):
    """CPFE forward, NCHW in / NCHW out (torch-compatible boundary layout).

    params:
      conv_1_1   : (w (Cout,Cin,1,1), b (Cout,))
      conv_dil_3 : (w (Cout,Cin,3,3), b (Cout,))   dilation 1
      conv_dil_5 : (w (Cout,Cin,3,3), b (Cout,))   dilation 2
      conv_dil_7 : (w (Cout,Cin,3,3), b (Cout,))   dilation 3
      bn         : (gamma, beta, running_mean, running_var), each (4*Cout,)
    """
    w11, b11 = params["conv_1_1"]
    w3, b3 = params["conv_dil_3"]
    w5, b5 = params["conv_dil_5"]
    w7, b7 = params["conv_dil_7"]
    g, beta, mu, var = params["bn"]

    # Fused center-tap weight: (Cin, 4*Cout)
    centers = [w11[:, :, 0, 0], w3[:, :, 1, 1], w5[:, :, 1, 1], w7[:, :, 1, 1]]
    wc = jnp.concatenate([c.T for c in centers], axis=1)

    # Off-center taps (24, Cout, Cin), dilation-major / ring-minor (matches kernel)
    woff = jnp.stack([wd[:, :, ky + 1, kx + 1]
                      for wd in (w3, w5, w7) for (ky, kx) in _RING], axis=0)

    # Fold conv bias + inference BatchNorm into per-channel scale / shift.
    bias = jnp.concatenate([b11, b3, b5, b7], axis=0)       # (4*Cout,)
    scale = g * lax.rsqrt(var + eps)
    shift = beta - mu * scale + bias * scale

    # NCHW -> NHWC once at the boundary (a JAX-native pipeline would stay NHWC).
    x_nhwc = jnp.transpose(x_nchw, (0, 2, 3, 1))
    y = cpfe_pallas(x_nhwc, wc, woff, scale[None, :], shift[None, :])
    return jnp.transpose(y, (0, 3, 1, 2))


# --------------------- pure-JAX reference (for checking) --------------------
def cpfe_reference(x_nchw, params, eps=1e-5):
    w11, b11 = params["conv_1_1"]
    y11 = jnp.einsum("bchw,oc->bohw", x_nchw, w11[:, :, 0, 0],
                     precision=lax.Precision.HIGHEST) + b11[None, :, None, None]

    def dil_conv(w, b, d):
        y = lax.conv_general_dilated(
            x_nchw, w, window_strides=(1, 1), padding=[(d, d), (d, d)],
            rhs_dilation=(d, d), dimension_numbers=("NCHW", "OIHW", "NCHW"),
            precision=lax.Precision.HIGHEST)
        return y + b[None, :, None, None]

    y3 = dil_conv(*params["conv_dil_3"], 1)
    y5 = dil_conv(*params["conv_dil_5"], 2)
    y7 = dil_conv(*params["conv_dil_7"], 3)
    cat = jnp.concatenate([y11, y3, y5, y7], axis=1)

    g, beta, mu, var = params["bn"]
    s = g * lax.rsqrt(var + eps)
    y = cat * s[None, :, None, None] + (beta - mu * s)[None, :, None, None]
    return jnp.maximum(y, 0.0)


if __name__ == "__main__":
    key = jax.random.PRNGKey(0)
    # feature_layer='conv2_2': in_channels=128, out_channels=32
    # (concat channels = 4*32 = 128 exactly fill the 128-lane vreg dimension).
    B, Cin, Cout, H, W = 2, 128, 32, 16, 16
    ks = jax.random.split(key, 13)

    def rnd(k, shape, s=0.05):
        return s * jax.random.normal(k, shape, dtype=jnp.float32)

    x = jax.random.normal(ks[0], (B, Cin, H, W), dtype=jnp.float32)
    params = {
        "conv_1_1":   (rnd(ks[1], (Cout, Cin, 1, 1)), rnd(ks[2], (Cout,))),
        "conv_dil_3": (rnd(ks[3], (Cout, Cin, 3, 3)), rnd(ks[4], (Cout,))),
        "conv_dil_5": (rnd(ks[5], (Cout, Cin, 3, 3)), rnd(ks[6], (Cout,))),
        "conv_dil_7": (rnd(ks[7], (Cout, Cin, 3, 3)), rnd(ks[8], (Cout,))),
        "bn": (1.0 + 0.1 * jax.random.normal(ks[9], (4 * Cout,), jnp.float32),
               0.1 * jax.random.normal(ks[10], (4 * Cout,), jnp.float32),
               0.1 * jax.random.normal(ks[11], (4 * Cout,), jnp.float32),
               1.0 + jnp.abs(0.1 * jax.random.normal(ks[12], (4 * Cout,), jnp.float32))),
    }

    out = jax.jit(cpfe_forward)(x, params)
    jax.block_until_ready(out)
    assert out.shape == (B, 4 * Cout, H, W), out.shape

    ref = cpfe_reference(x, params)
    max_err = float(jnp.max(jnp.abs(out - ref)))
    assert max_err < 2e-2, f"max abs err {max_err}"
    print("KERNEL_OK")
</pallas_src>

<mosaic_0001>
module attributes {stable_mosaic.version = 11 : i64} {
  func.func @_cpfe_kernel(%arg0: i32, %arg1: memref<1x22x22x128xf32, #tpu.memory_space<vmem>>, %arg2: memref<128x128xf32, #tpu.memory_space<vmem>>, %arg3: memref<24x32x128xf32, #tpu.memory_space<vmem>>, %arg4: memref<1x128xf32, #tpu.memory_space<vmem>>, %arg5: memref<1x128xf32, #tpu.memory_space<vmem>>, %arg6: memref<1x16x16x128xf32, #tpu.memory_space<vmem>>, %arg7: memref<256x128xf32, #tpu.memory_space<vmem>>) attributes {dimension_semantics = [#tpu.dimension_semantics<parallel>], iteration_bounds = array<i64: 2>, scalar_prefetch = 0 : i64, scratch_operands = 1 : i64, tpu.core_type = #tpu.core_type<tc>, window_params = [{transform_indices = @transform_0, window_bounds = array<i64: 1, 22, 22, 128>}, {pipeline_mode = #tpu.pipeline_mode<synchronous>, transform_indices = @transform_1, window_bounds = array<i64: 128, 128>}, {pipeline_mode = #tpu.pipeline_mode<synchronous>, transform_indices = @transform_2, window_bounds = array<i64: 24, 32, 128>}, {pipeline_mode = #tpu.pipeline_mode<synchronous>, transform_indices = @transform_3, window_bounds = array<i64: 1, 128>}, {pipeline_mode = #tpu.pipeline_mode<synchronous>, transform_indices = @transform_4, window_bounds = array<i64: 1, 128>}, {transform_indices = @transform_5, window_bounds = array<i64: 1, 16, 16, 128>}]} {
    %c0 = arith.constant 0 : index
    %c3 = arith.constant 3 : index
    %c3_0 = arith.constant 3 : index
    %c0_1 = arith.constant 0 : index
    %0 = vector.load %arg1[%c0, %c3, %c3_0, %c0_1] : memref<1x22x22x128xf32, #tpu.memory_space<vmem>>, vector<1x16x16x128xf32>
    %1 = vector.shape_cast %0 : vector<1x16x16x128xf32> to vector<16x16x128xf32>
    %2 = vector.shape_cast %1 : vector<16x16x128xf32> to vector<256x128xf32>
    %c0_2 = arith.constant 0 : index
    %c0_3 = arith.constant 0 : index
    %3 = vector.load %arg2[%c0_2, %c0_3] : memref<128x128xf32, #tpu.memory_space<vmem>>, vector<128x128xf32>
    %cst = arith.constant dense<0.000000e+00> : vector<256x128xf32>
    %4 = tpu.matmul %2, %3, %cst {dimension_numbers = #tpu.dot_dimension_numbers<[1], [0], [0], [1], [0, 0, 1, 1], [], []>} : vector<256x128xf32>, vector<128x128xf32>, vector<256x128xf32> -> vector<256x128xf32>
    %c0_4 = arith.constant 0 : index
    %c0_5 = arith.constant 0 : index
    %5 = vector.load %arg7[%c0_4, %c0_5] : memref<256x128xf32, #tpu.memory_space<vmem>>, vector<256x128xf32>
    tpu.vector_store %arg7[%c0_4, %c0_5], %4 {strides = array<i32>} : memref<256x128xf32, #tpu.memory_space<vmem>>, vector<256x128xf32>,
    %c0_6 = arith.constant 0 : index
    %c2 = arith.constant 2 : index
    %c2_7 = arith.constant 2 : index
    %c0_8 = arith.constant 0 : index
    %6 = vector.load %arg1[%c0_6, %c2, %c2_7, %c0_8] : memref<1x22x22x128xf32, #tpu.memory_space<vmem>>, vector<1x16x16x128xf32>
    %7 = vector.shape_cast %6 : vector<1x16x16x128xf32> to vector<16x16x128xf32>
    %8 = vector.shape_cast %7 : vector<16x16x128xf32> to vector<256x128xf32>
    %c0_9 = arith.constant 0 : index
    %c0_10 = arith.constant 0 : index
    %c0_11 = arith.constant 0 : index
    %9 = vector.load %arg3[%c0_9, %c0_10, %c0_11] : memref<24x32x128xf32, #tpu.memory_space<vmem>>, vector<1x32x128xf32>
    %10 = vector.shape_cast %9 : vector<1x32x128xf32> to vector<32x128xf32>
    %cst_12 = arith.constant dense<0.000000e+00> : vector<256x32xf32>
    %11 = tpu.matmul %8, %10, %cst_12 {dimension_numbers = #tpu.dot_dimension_numbers<[1], [1], [0], [0], [0, 0, 1, 0], [], []>} : vector<256x128xf32>, vector<32x128xf32>, vector<256x32xf32> -> vector<256x32xf32>
    %c0_13 = arith.constant 0 : index
    %c2_14 = arith.constant 2 : index
    %c3_15 = arith.constant 3 : index
    %c0_16 = arith.constant 0 : index
    %12 = vector.load %arg1[%c0_13, %c2_14, %c3_15, %c0_16] : memref<1x22x22x128xf32, #tpu.memory_space<vmem>>, vector<1x16x16x128xf32>
    %13 = vector.shape_cast %12 : vector<1x16x16x128xf32> to vector<16x16x128xf32>
    %14 = vector.shape_cast %13 : vector<16x16x128xf32> to vector<256x128xf32>
    %c1 = arith.constant 1 : index
    %c0_17 = arith.constant 0 : index
    %c0_18 = arith.constant 0 : index
    %15 = vector.load %arg3[%c1, %c0_17, %c0_18] : memref<24x32x128xf32, #tpu.memory_space<vmem>>, vector<1x32x128xf32>
    %16 = vector.shape_cast %15 : vector<1x32x128xf32> to vector<32x128xf32>
    %cst_19 = arith.constant dense<0.000000e+00> : vector<256x32xf32>
    %17 = tpu.matmul %14, %16, %cst_19 {dimension_numbers = #tpu.dot_dimension_numbers<[1], [1], [0], [0], [0, 0, 1, 0], [], []>} : vector<256x128xf32>, vector<32x128xf32>, vector<256x32xf32> -> vector<256x32xf32>
    %18 = arith.addf %11, %17 : vector<256x32xf32>
    %c0_20 = arith.constant 0 : index
    %c2_21 = arith.constant 2 : index
    %c4 = arith.constant 4 : index
    %c0_22 = arith.constant 0 : index
    %19 = vector.load %arg1[%c0_20, %c2_21, %c4, %c0_22] : memref<1x22x22x128xf32, #tpu.memory_space<vmem>>, vector<1x16x16x128xf32>
    %20 = vector.shape_cast %19 : vector<1x16x16x128xf32> to vector<16x16x128xf32>
    %21 = vector.shape_cast %20 : vector<16x16x128xf32> to vector<256x128xf32>
    %c2_23 = arith.constant 2 : index
    %c0_24 = arith.constant 0 : index
    %c0_25 = arith.constant 0 : index
    %22 = vector.load %arg3[%c2_23, %c0_24, %c0_25] : memref<24x32x128xf32, #tpu.memory_space<vmem>>, vector<1x32x128xf32>
    %23 = vector.shape_cast %22 : vector<1x32x128xf32> to vector<32x128xf32>
    %cst_26 = arith.constant dense<0.000000e+00> : vector<256x32xf32>
    %24 = tpu.matmul %21, %23, %cst_26 {dimension_numbers = #tpu.dot_dimension_numbers<[1], [1], [0], [0], [0, 0, 1, 0], [], []>} : vector<256x128xf32>, vector<32x128xf32>, vector<256x32xf32> -> vector<256x32xf32>
    %25 = arith.addf %18, %24 : vector<256x32xf32>
    %c0_27 = arith.constant 0 : index
    %c3_28 = arith.constant 3 : index
    %c2_29 = arith.constant 2 : index
    %c0_30 = arith.constant 0 : index
    %26 = vector.load %arg1[%c0_27, %c3_28, %c2_29, %c0_30] : memref<1x22x22x128xf32, #tpu.memory_space<vmem>>, vector<1x16x16x128xf32>
    %27 = vector.shape_cast %26 : vector<1x16x16x128xf32> to vector<16x16x128xf32>
    %28 = vector.shape_cast %27 : vector<16x16x128xf32> to vector<256x128xf32>
    %c3_31 = arith.constant 3 : index
    %c0_32 = arith.constant 0 : index
    %c0_33 = arith.constant 0 : index
    %29 = vector.load %arg3[%c3_31, %c0_32, %c0_33] : memref<24x32x128xf32, #tpu.memory_space<vmem>>, vector<1x32x128xf32>
    %30 = vector.shape_cast %29 : vector<1x32x128xf32> to vector<32x128xf32>
    %cst_34 = arith.constant dense<0.000000e+00> : vector<256x32xf32>
    %31 = tpu.matmul %28, %30, %cst_34 {dimension_numbers = #tpu.dot_dimension_numbers<[1], [1], [0], [0], [0, 0, 1, 0], [], []>} : vector<256x128xf32>, vector<32x128xf32>, vector<256x32xf32> -> vector<256x32xf32>
    %32 = arith.addf %25, %31 : vector<256x32xf32>
    %c0_35 = arith.constant 0 : index
    %c3_36 = arith.constant 3 : index
    %c4_37 = arith.constant 4 : index
    %c0_38 = arith.constant 0 : index
    %33 = vector.load %arg1[%c0_35, %c3_36, %c4_37, %c0_38] : memref<1x22x22x128xf32, #tpu.memory_space<vmem>>, vector<1x16x16x128xf32>
    %34 = vector.shape_cast %33 : vector<1x16x16x128xf32> to vector<16x16x128xf32>
    %35 = vector.shape_cast %34 : vector<16x16x128xf32> to vector<256x128xf32>
    %c4_39 = arith.constant 4 : index
    %c0_40 = arith.constant 0 : index
    %c0_41 = arith.constant 0 : index
    %36 = vector.load %arg3[%c4_39, %c0_40, %c0_41] : memref<24x32x128xf32, #tpu.memory_space<vmem>>, vector<1x32x128xf32>
    %37 = vector.shape_cast %36 : vector<1x32x128xf32> to vector<32x128xf32>
    %cst_42 = arith.constant dense<0.000000e+00> : vector<256x32xf32>
    %38 = tpu.matmul %35, %37, %cst_42 {dimension_numbers = #tpu.dot_dimension_numbers<[1], [1], [0], [0], [0, 0, 1, 0], [], []>} : vector<256x128xf32>, vector<32x128xf32>, vector<256x32xf32> -> vector<256x32xf32>
    %39 = arith.addf %32, %38 : vector<256x32xf32>
    %c0_43 = arith.constant 0 : index
    %c4_44 = arith.constant 4 : index
    %c2_45 = arith.constant 2 : index
    %c0_46 = arith.constant 0 : index
    %40 = vector.load %arg1[%c0_43, %c4_44, %c2_45, %c0_46] : memref<1x22x22x128xf32, #tpu.memory_space<vmem>>, vector<1x16x16x128xf32>
    %41 = vector.shape_cast %40 : vector<1x16x16x128xf32> to vector<16x16x128xf32>
    %42 = vector.shape_cast %41 : vector<16x16x128xf32> to vector<256x128xf32>
    %c5 = arith.constant 5 : index
    %c0_47 = arith.constant 0 : index
    %c0_48 = arith.constant 0 : index
    %43 = vector.load %arg3[%c5, %c0_47, %c0_48] : memref<24x32x128xf32, #tpu.memory_space<vmem>>, vector<1x32x128xf32>
    %44 = vector.shape_cast %43 : vector<1x32x128xf32> to vector<32x128xf32>
    %cst_49 = arith.constant dense<0.000000e+00> : vector<256x32xf32>
    %45 = tpu.matmul %42, %44, %cst_49 {dimension_numbers = #tpu.dot_dimension_numbers<[1], [1], [0], [0], [0, 0, 1, 0], [], []>} : vector<256x128xf32>, vector<32x128xf32>, vector<256x32xf32> -> vector<256x32xf32>
    %46 = arith.addf %39, %45 : vector<256x32xf32>
    %c0_50 = arith.constant 0 : index
    %c4_51 = arith.constant 4 : index
    %c3_52 = arith.constant 3 : index
    %c0_53 = arith.constant 0 : index
    %47 = vector.load %arg1[%c0_50, %c4_51, %c3_52, %c0_53] : memref<1x22x22x128xf32, #tpu.memory_space<vmem>>, vector<1x16x16x128xf32>
    %48 = vector.shape_cast %47 : vector<1x16x16x128xf32> to vector<16x16x128xf32>
    %49 = vector.shape_cast %48 : vector<16x16x128xf32> to vector<256x128xf32>
    %c6 = arith.constant 6 : index
    %c0_54 = arith.constant 0 : index
    %c0_55 = arith.constant 0 : index
    %50 = vector.load %arg3[%c6, %c0_54, %c0_55] : memref<24x32x128xf32, #tpu.memory_space<vmem>>, vector<1x32x128xf32>
    %51 = vector.shape_cast %50 : vector<1x32x128xf32> to vector<32x128xf32>
    %cst_56 = arith.constant dense<0.000000e+00> : vector<256x32xf32>
    %52 = tpu.matmul %49, %51, %cst_56 {dimension_numbers = #tpu.dot_dimension_numbers<[1], [1], [0], [0], [0, 0, 1, 0], [], []>} : vector<256x128xf32>, vector<32x128xf32>, vector<256x32xf32> -> vector<256x32xf32>
    %53 = arith.addf %46, %52 : vector<256x32xf32>
    %c0_57 = arith.constant 0 : index
    %c4_58 = arith.constant 4 : index
    %c4_59 = arith.constant 4 : index
    %c0_60 = arith.constant 0 : index
    %54 = vector.load %arg1[%c0_57, %c4_58, %c4_59, %c0_60] : memref<1x22x22x128xf32, #tpu.memory_space<vmem>>, vector<1x16x16x128xf32>
    %55 = vector.shape_cast %54 : vector<1x16x16x128xf32> to vector<16x16x128xf32>
    %56 = vector.shape_cast %55 : vector<16x16x128xf32> to vector<256x128xf32>
    %c7 = arith.constant 7 : index
    %c0_61 = arith.constant 0 : index
    %c0_62 = arith.constant 0 : index
    %57 = vector.load %arg3[%c7, %c0_61, %c0_62] : memref<24x32x128xf32, #tpu.memory_space<vmem>>, vector<1x32x128xf32>
    %58 = vector.shape_cast %57 : vector<1x32x128xf32> to vector<32x128xf32>
    %cst_63 = arith.constant dense<0.000000e+00> : vector<256x32xf32>
    %59 = tpu.matmul %56, %58, %cst_63 {dimension_numbers = #tpu.dot_dimension_numbers<[1], [1], [0], [0], [0, 0, 1, 0], [], []>} : vector<256x128xf32>, vector<32x128xf32>, vector<256x32xf32> -> vector<256x32xf32>
    %60 = arith.addf %53, %59 : vector<256x32xf32>
    %c0_64 = arith.constant 0 : index
    %c32 = arith.constant 32 : index
    %61 = vector.load %arg7[%c0_64, %c32] : memref<256x128xf32, #tpu.memory_space<vmem>>, vector<256x32xf32>
    %62 = arith.addf %61, %60 : vector<256x32xf32>
    %c0_65 = arith.constant 0 : index
    %c32_66 = arith.constant 32 : index
    %63 = vector.load %arg7[%c0_65, %c32_66] : memref<256x128xf32, #tpu.memory_space<vmem>>, vector<256x32xf32>
    tpu.vector_store %arg7[%c0_65, %c32_66], %62 {strides = array<i32>} : memref<256x128xf32, #tpu.memory_space<vmem>>, vector<256x32xf32>,
    %c0_67 = arith.constant 0 : index
    %c1_68 = arith.constant 1 : index
    %c1_69 = arith.constant 1 : index
    %c0_70 = arith.constant 0 : index
    %64 = vector.load %arg1[%c0_67, %c1_68, %c1_69, %c0_70] : memref<1x22x22x128xf32, #tpu.memory_space<vmem>>, vector<1x16x16x128xf32>
    %65 = vector.shape_cast %64 : vector<1x16x16x128xf32> to vector<16x16x128xf32>
    %66 = vector.shape_cast %65 : vector<16x16x128xf32> to vector<256x128xf32>
    %c8 = arith.constant 8 : index
    %c0_71 = arith.constant 0 : index
    %c0_72 = arith.constant 0 : index
    %67 = vector.load %arg3[%c8, %c0_71, %c0_72] : memref<24x32x128xf32, #tpu.memory_space<vmem>>, vector<1x32x128xf32>
    %68 = vector.shape_cast %67 : vector<1x32x128xf32> to vector<32x128xf32>
    %cst_73 = arith.constant dense<0.000000e+00> : vector<256x32xf32>
    %69 = tpu.matmul %66, %68, %cst_73 {dimension_numbers = #tpu.dot_dimension_numbers<[1], [1], [0], [0], [0, 0, 1, 0], [], []>} : vector<256x128xf32>, vector<32x128xf32>, vector<256x32xf32> -> vector<256x32xf32>
    %c0_74 = arith.constant 0 : index
    %c1_75 = arith.constant 1 : index
    %c3_76 = arith.constant 3 : index
    %c0_77 = arith.constant 0 : index
    %70 = vector.load %arg1[%c0_74, %c1_75, %c3_76, %c0_77] : memref<1x22x22x128xf32, #tpu.memory_space<vmem>>, vector<1x16x16x128xf32>
    %71 = vector.shape_cast %70 : vector<1x16x16x128xf32> to vector<16x16x128xf32>
    %72 = vector.shape_cast %71 : vector<16x16x128xf32> to vector<256x128xf32>
    %c9 = arith.constant 9 : index
    %c0_78 = arith.constant 0 : index
    %c0_79 = arith.constant 0 : index
    %73 = vector.load %arg3[%c9, %c0_78, %c0_79] : memref<24x32x128xf32, #tpu.memory_space<vmem>>, vector<1x32x128xf32>
    %74 = vector.shape_cast %73 : vector<1x32x128xf32> to vector<32x128xf32>
    %cst_80 = arith.constant dense<0.000000e+00> : vector<256x32xf32>
    %75 = tpu.matmul %72, %74, %cst_80 {dimension_numbers = #tpu.dot_dimension_numbers<[1], [1], [0], [0], [0, 0, 1, 0], [], []>} : vector<256x128xf32>, vector<32x128xf32>, vector<256x32xf32> -> vector<256x32xf32>
    %76 = arith.addf %69, %75 : vector<256x32xf32>
    %c0_81 = arith.constant 0 : index
    %c1_82 = arith.constant 1 : index
    %c5_83 = arith.constant 5 : index
    %c0_84 = arith.constant 0 : index
    %77 = vector.load %arg1[%c0_81, %c1_82, %c5_83, %c0_84] : memref<1x22x22x128xf32, #tpu.memory_space<vmem>>, vector<1x16x16x128xf32>
    %78 = vector.shape_cast %77 : vector<1x16x16x128xf32> to vector<16x16x128xf32>
    %79 = vector.shape_cast %78 : vector<16x16x128xf32> to vector<256x128xf32>
    %c10 = arith.constant 10 : index
    %c0_85 = arith.constant 0 : index
    %c0_86 = arith.constant 0 : index
    %80 = vector.load %arg3[%c10, %c0_85, %c0_86] : memref<24x32x128xf32, #tpu.memory_space<vmem>>, vector<1x32x128xf32>
    %81 = vector.shape_cast %80 : vector<1x32x128xf32> to vector<32x128xf32>
    %cst_87 = arith.constant dense<0.000000e+00> : vector<256x32xf32>
    %82 = tpu.matmul %79, %81, %cst_87 {dimension_numbers = #tpu.dot_dimension_numbers<[1], [1], [0], [0], [0, 0, 1, 0], [], []>} : vector<256x128xf32>, vector<32x128xf32>, vector<256x32xf32> -> vector<256x32xf32>
    %83 = arith.addf %76, %82 : vector<256x32xf32>
    %c0_88 = arith.constant 0 : index
    %c3_89 = arith.constant 3 : index
    %c1_90 = arith.constant 1 : index
    %c0_91 = arith.constant 0 : index
    %84 = vector.load %arg1[%c0_88, %c3_89, %c1_90, %c0_91] : memref<1x22x22x128xf32, #tpu.memory_space<vmem>>, vector<1x16x16x128xf32>
    %85 = vector.shape_cast %84 : vector<1x16x16x128xf32> to vector<16x16x128xf32>
    %86 = vector.shape_cast %85 : vector<16x16x128xf32> to vector<256x128xf32>
    %c11 = arith.constant 11 : index
    %c0_92 = arith.constant 0 : index
    %c0_93 = arith.constant 0 : index
    %87 = vector.load %arg3[%c11, %c0_92, %c0_93] : memref<24x32x128xf32, #tpu.memory_space<vmem>>, vector<1x32x128xf32>
    %88 = vector.shape_cast %87 : vector<1x32x128xf32> to vector<32x128xf32>
    %cst_94 = arith.constant dense<0.000000e+00> : vector<256x32xf32>
    %89 = tpu.matmul %86, %88, %cst_94 {dimension_numbers = #tpu.dot_dimension_numbers<[1], [1], [0], [0], [0, 0, 1, 0], [], []>} : vector<256x128xf32>, vector<32x128xf32>, vector<256x32xf32> -> vector<256x32xf32>
    %90 = arith.addf %83, %89 : vector<256x32xf32>
    %c0_95 = arith.constant 0 : index
    %c3_96 = arith.constant 3 : index
    %c5_97 = arith.constant 5 : index
    %c0_98 = arith.constant 0 : index
    %91 = vector.load %arg1[%c0_95, %c3_96, %c5_97, %c0_98] : memref<1x22x22x128xf32, #tpu.memory_space<vmem>>, vector<1x16x16x128xf32>
    %92 = vector.shape_cast %91 : vector<1x16x16x128xf32> to vector<16x16x128xf32>
    %93 = vector.shape_cast %92 : vector<16x16x128xf32> to vector<256x128xf32>
    %c12 = arith.constant 12 : index
    %c0_99 = arith.constant 0 : index
    %c0_100 = arith.constant 0 : index
    %94 = vector.load %arg3[%c12, %c0_99, %c0_100] : memref<24x32x128xf32, #tpu.memory_space<vmem>>, vector<1x32x128xf32>
    %95 = vector.shape_cast %94 : vector<1x32x128xf32> to vector<32x128xf32>
    %cst_101 = arith.constant dense<0.000000e+00> : vector<256x32xf32>
    %96 = tpu.matmul %93, %95, %cst_101 {dimension_numbers = #tpu.dot_dimension_numbers<[1], [1], [0], [0], [0, 0, 1, 0], [], []>} : vector<256x128xf32>, vector<32x128xf32>, vector<256x32xf32> -> vector<256x32xf32>
    %97 = arith.addf %90, %96 : vector<256x32xf32>
    %c0_102 = arith.constant 0 : index
    %c5_103 = arith.constant 5 : index
    %c1_104 = arith.constant 1 : index
    %c0_105 = arith.constant 0 : index
    %98 = vector.load %arg1[%c0_102, %c5_103, %c1_104, %c0_105] : memref<1x22x22x128xf32, #tpu.memory_space<vmem>>, vector<1x16x16x128xf32>
    %99 = vector.shape_cast %98 : vector<1x16x16x128xf32> to vector<16x16x128xf32>
    %100 = vector.shape_cast %99 : vector<16x16x128xf32> to vector<256x128xf32>
    %c13 = arith.constant 13 : index
    %c0_106 = arith.constant 0 : index
    %c0_107 = arith.constant 0 : index
    %101 = vector.load %arg3[%c13, %c0_106, %c0_107] : memref<24x32x128xf32, #tpu.memory_space<vmem>>, vector<1x32x128xf32>
    %102 = vector.shape_cast %101 : vector<1x32x128xf32> to vector<32x128xf32>
    %cst_108 = arith.constant dense<0.000000e+00> : vector<256x32xf32>
    %103 = tpu.matmul %100, %102, %cst_108 {dimension_numbers = #tpu.dot_dimension_numbers<[1], [1], [0], [0], [0, 0, 1, 0], [], []>} : vector<256x128xf32>, vector<32x128xf32>, vector<256x32xf32> -> vector<256x32xf32>
    %104 = arith.addf %97, %103 : vector<256x32xf32>
    %c0_109 = arith.constant 0 : index
    %c5_110 = arith.constant 5 : index
    %c3_111 = arith.constant 3 : index
    %c0_112 = arith.constant 0 : index
    %105 = vector.load %arg1[%c0_109, %c5_110, %c3_111, %c0_112] : memref<1x22x22x128xf32, #tpu.memory_space<vmem>>, vector<1x16x16x128xf32>
    %106 = vector.shape_cast %105 : vector<1x16x16x128xf32> to vector<16x16x128xf32>
    %107 = vector.shape_cast %106 : vector<16x16x128xf32> to vector<256x128xf32>
    %c14 = arith.constant 14 : index
    %c0_113 = arith.constant 0 : index
    %c0_114 = arith.constant 0 : index
    %108 = vector.load %arg3[%c14, %c0_113, %c0_114] : memref<24x32x128xf32, #tpu.memory_space<vmem>>, vector<1x32x128xf32>
    %109 = vector.shape_cast %108 : vector<1x32x128xf32> to vector<32x128xf32>
    %cst_115 = arith.constant dense<0.000000e+00> : vector<256x32xf32>
    %110 = tpu.matmul %107, %109, %cst_115 {dimension_numbers = #tpu.dot_dimension_numbers<[1], [1], [0], [0], [0, 0, 1, 0], [], []>} : vector<256x128xf32>, vector<32x128xf32>, vector<256x32xf32> -> vector<256x32xf32>
    %111 = arith.addf %104, %110 : vector<256x32xf32>
    %c0_116 = arith.constant 0 : index
    %c5_117 = arith.constant 5 : index
    %c5_118 = arith.constant 5 : index
    %c0_119 = arith.constant 0 : index
    %112 = vector.load %arg1[%c0_116, %c5_117, %c5_118, %c0_119] : memref<1x22x22x128xf32, #tpu.memory_space<vmem>>, vector<1x16x16x128xf32>
    %113 = vector.shape_cast %112 : vector<1x16x16x128xf32> to vector<16x16x128xf32>
    %114 = vector.shape_cast %113 : vector<16x16x128xf32> to vector<256x128xf32>
    %c15 = arith.constant 15 : index
    %c0_120 = arith.constant 0 : index
    %c0_121 = arith.constant 0 : index
    %115 = vector.load %arg3[%c15, %c0_120, %c0_121] : memref<24x32x128xf32, #tpu.memory_space<vmem>>, vector<1x32x128xf32>
    %116 = vector.shape_cast %115 : vector<1x32x128xf32> to vector<32x128xf32>
    %cst_122 = arith.constant dense<0.000000e+00> : vector<256x32xf32>
    %117 = tpu.matmul %114, %116, %cst_122 {dimension_numbers = #tpu.dot_dimension_numbers<[1], [1], [0], [0], [0, 0, 1, 0], [], []>} : vector<256x128xf32>, vector<32x128xf32>, vector<256x32xf32> -> vector<256x32xf32>
    %118 = arith.addf %111, %117 : vector<256x32xf32>
    %c0_123 = arith.constant 0 : index
    %c64 = arith.constant 64 : index
    %119 = vector.load %arg7[%c0_123, %c64] : memref<256x128xf32, #tpu.memory_space<vmem>>, vector<256x32xf32>
    %120 = arith.addf %119, %118 : vector<256x32xf32>
    %c0_124 = arith.constant 0 : index
    %c64_125 = arith.constant 64 : index
    %121 = vector.load %arg7[%c0_124, %c64_125] : memref<256x128xf32, #tpu.memory_space<vmem>>, vector<256x32xf32>
    tpu.vector_store %arg7[%c0_124, %c64_125], %120 {strides = array<i32>} : memref<256x128xf32, #tpu.memory_space<vmem>>, vector<256x32xf32>,
    %c0_126 = arith.constant 0 : index
    %c0_127 = arith.constant 0 : index
    %c0_128 = arith.constant 0 : index
    %c0_129 = arith.constant 0 : index
    %122 = vector.load %arg1[%c0_126, %c0_127, %c0_128, %c0_129] : memref<1x22x22x128xf32, #tpu.memory_space<vmem>>, vector<1x16x16x128xf32>
    %123 = vector.shape_cast %122 : vector<1x16x16x128xf32> to vector<16x16x128xf32>
    %124 = vector.shape_cast %123 : vector<16x16x128xf32> to vector<256x128xf32>
    %c16 = arith.constant 16 : index
    %c0_130 = arith.constant 0 : index
    %c0_131 = arith.constant 0 : index
    %125 = vector.load %arg3[%c16, %c0_130, %c0_131] : memref<24x32x128xf32, #tpu.memory_space<vmem>>, vector<1x32x128xf32>
    %126 = vector.shape_cast %125 : vector<1x32x128xf32> to vector<32x128xf32>
    %cst_132 = arith.constant dense<0.000000e+00> : vector<256x32xf32>
    %127 = tpu.matmul %124, %126, %cst_132 {dimension_numbers = #tpu.dot_dimension_numbers<[1], [1], [0], [0], [0, 0, 1, 0], [], []>} : vector<256x128xf32>, vector<32x128xf32>, vector<256x32xf32> -> vector<256x32xf32>
    %c0_133 = arith.constant 0 : index
    %c0_134 = arith.constant 0 : index
    %c3_135 = arith.constant 3 : index
    %c0_136 = arith.constant 0 : index
    %128 = vector.load %arg1[%c0_133, %c0_134, %c3_135, %c0_136] : memref<1x22x22x128xf32, #tpu.memory_space<vmem>>, vector<1x16x16x128xf32>
    %129 = vector.shape_cast %128 : vector<1x16x16x128xf32> to vector<16x16x128xf32>
    %130 = vector.shape_cast %129 : vector<16x16x128xf32> to vector<256x128xf32>
    %c17 = arith.constant 17 : index
    %c0_137 = arith.constant 0 : index
    %c0_138 = arith.constant 0 : index
    %131 = vector.load %arg3[%c17, %c0_137, %c0_138] : memref<24x32x128xf32, #tpu.memory_space<vmem>>, vector<1x32x128xf32>
    %132 = vector.shape_cast %131 : vector<1x32x128xf32> to vector<32x128xf32>
    %cst_139 = arith.constant dense<0.000000e+00> : vector<256x32xf32>
    %133 = tpu.matmul %130, %132, %cst_139 {dimension_numbers = #tpu.dot_dimension_numbers<[1], [1], [0], [0], [0, 0, 1, 0], [], []>} : vector<256x128xf32>, vector<32x128xf32>, vector<256x32xf32> -> vector<256x32xf32>
    %134 = arith.addf %127, %133 : vector<256x32xf32>
    %c0_140 = arith.constant 0 : index
    %c0_141 = arith.constant 0 : index
    %c6_142 = arith.constant 6 : index
    %c0_143 = arith.constant 0 : index
    %135 = vector.load %arg1[%c0_140, %c0_141, %c6_142, %c0_143] : memref<1x22x22x128xf32, #tpu.memory_space<vmem>>, vector<1x16x16x128xf32>
    %136 = vector.shape_cast %135 : vector<1x16x16x128xf32> to vector<16x16x128xf32>
    %137 = vector.shape_cast %136 : vector<16x16x128xf32> to vector<256x128xf32>
    %c18 = arith.constant 18 : index
    %c0_144 = arith.constant 0 : index
    %c0_145 = arith.constant 0 : index
    %138 = vector.load %arg3[%c18, %c0_144, %c0_145] : memref<24x32x128xf32, #tpu.memory_space<vmem>>, vector<1x32x128xf32>
    %139 = vector.shape_cast %138 : vector<1x32x128xf32> to vector<32x128xf32>
    %cst_146 = arith.constant dense<0.000000e+00> : vector<256x32xf32>
    %140 = tpu.matmul %137, %139, %cst_146 {dimension_numbers = #tpu.dot_dimension_numbers<[1], [1], [0], [0], [0, 0, 1, 0], [], []>} : vector<256x128xf32>, vector<32x128xf32>, vector<256x32xf32> -> vector<256x32xf32>
    %141 = arith.addf %134, %140 : vector<256x32xf32>
    %c0_147 = arith.constant 0 : index
    %c3_148 = arith.constant 3 : index
    %c0_149 = arith.constant 0 : index
    %c0_150 = arith.constant 0 : index
    %142 = vector.load %arg1[%c0_147, %c3_148, %c0_149, %c0_150] : memref<1x22x22x128xf32, #tpu.memory_space<vmem>>, vector<1x16x16x128xf32>
    %143 = vector.shape_cast %142 : vector<1x16x16x128xf32> to vector<16x16x128xf32>
    %144 = vector.shape_cast %143 : vector<16x16x128xf32> to vector<256x128xf32>
    %c19 = arith.constant 19 : index
    %c0_151 = arith.constant 0 : index
    %c0_152 = arith.constant 0 : index
    %145 = vector.load %arg3[%c19, %c0_151, %c0_152] : memref<24x32x128xf32, #tpu.memory_space<vmem>>, vector<1x32x128xf32>
    %146 = vector.shape_cast %145 : vector<1x32x128xf32> to vector<32x128xf32>
    %cst_153 = arith.constant dense<0.000000e+00> : vector<256x32xf32>
    %147 = tpu.matmul %144, %146, %cst_153 {dimension_numbers = #tpu.dot_dimension_numbers<[1], [1], [0], [0], [0, 0, 1, 0], [], []>} : vector<256x128xf32>, vector<32x128xf32>, vector<256x32xf32> -> vector<256x32xf32>
    %148 = arith.addf %141, %147 : vector<256x32xf32>
    %c0_154 = arith.constant 0 : index
    %c3_155 = arith.constant 3 : index
    %c6_156 = arith.constant 6 : index
    %c0_157 = arith.constant 0 : index
    %149 = vector.load %arg1[%c0_154, %c3_155, %c6_156, %c0_157] : memref<1x22x22x128xf32, #tpu.memory_space<vmem>>, vector<1x16x16x128xf32>
    %150 = vector.shape_cast %149 : vector<1x16x16x128xf32> to vector<16x16x128xf32>
    %151 = vector.shape_cast %150 : vector<16x16x128xf32> to vector<256x128xf32>
    %c20 = arith.constant 20 : index
    %c0_158 = arith.constant 0 : index
    %c0_159 = arith.constant 0 : index
    %152 = vector.load %arg3[%c20, %c0_158, %c0_159] : memref<24x32x128xf32, #tpu.memory_space<vmem>>, vector<1x32x128xf32>
    %153 = vector.shape_cast %152 : vector<1x32x128xf32> to vector<32x128xf32>
    %cst_160 = arith.constant dense<0.000000e+00> : vector<256x32xf32>
    %154 = tpu.matmul %151, %153, %cst_160 {dimension_numbers = #tpu.dot_dimension_numbers<[1], [1], [0], [0], [0, 0, 1, 0], [], []>} : vector<256x128xf32>, vector<32x128xf32>, vector<256x32xf32> -> vector<256x32xf32>
    %155 = arith.addf %148, %154 : vector<256x32xf32>
    %c0_161 = arith.constant 0 : index
    %c6_162 = arith.constant 6 : index
    %c0_163 = arith.constant 0 : index
    %c0_164 = arith.constant 0 : index
    %156 = vector.load %arg1[%c0_161, %c6_162, %c0_163, %c0_164] : memref<1x22x22x128xf32, #tpu.memory_space<vmem>>, vector<1x16x16x128xf32>
    %157 = vector.shape_cast %156 : vector<1x16x16x128xf32> to vector<16x16x128xf32>
    %158 = vector.shape_cast %157 : vector<16x16x128xf32> to vector<256x128xf32>
    %c21 = arith.constant 21 : index
    %c0_165 = arith.constant 0 : index
    %c0_166 = arith.constant 0 : index
    %159 = vector.load %arg3[%c21, %c0_165, %c0_166] : memref<24x32x128xf32, #tpu.memory_space<vmem>>, vector<1x32x128xf32>
    %160 = vector.shape_cast %159 : vector<1x32x128xf32> to vector<32x128xf32>
    %cst_167 = arith.constant dense<0.000000e+00> : vector<256x32xf32>
    %161 = tpu.matmul %158, %160, %cst_167 {dimension_numbers = #tpu.dot_dimension_numbers<[1], [1], [0], [0], [0, 0, 1, 0], [], []>} : vector<256x128xf32>, vector<32x128xf32>, vector<256x32xf32> -> vector<256x32xf32>
    %162 = arith.addf %155, %161 : vector<256x32xf32>
    %c0_168 = arith.constant 0 : index
    %c6_169 = arith.constant 6 : index
    %c3_170 = arith.constant 3 : index
    %c0_171 = arith.constant 0 : index
    %163 = vector.load %arg1[%c0_168, %c6_169, %c3_170, %c0_171] : memref<1x22x22x128xf32, #tpu.memory_space<vmem>>, vector<1x16x16x128xf32>
    %164 = vector.shape_cast %163 : vector<1x16x16x128xf32> to vector<16x16x128xf32>
    %165 = vector.shape_cast %164 : vector<16x16x128xf32> to vector<256x128xf32>
    %c22 = arith.constant 22 : index
    %c0_172 = arith.constant 0 : index
    %c0_173 = arith.constant 0 : index
    %166 = vector.load %arg3[%c22, %c0_172, %c0_173] : memref<24x32x128xf32, #tpu.memory_space<vmem>>, vector<1x32x128xf32>
    %167 = vector.shape_cast %166 : vector<1x32x128xf32> to vector<32x128xf32>
    %cst_174 = arith.constant dense<0.000000e+00> : vector<256x32xf32>
    %168 = tpu.matmul %165, %167, %cst_174 {dimension_numbers = #tpu.dot_dimension_numbers<[1], [1], [0], [0], [0, 0, 1, 0], [], []>} : vector<256x128xf32>, vector<32x128xf32>, vector<256x32xf32> -> vector<256x32xf32>
    %169 = arith.addf %162, %168 : vector<256x32xf32>
    %c0_175 = arith.constant 0 : index
    %c6_176 = arith.constant 6 : index
    %c6_177 = arith.constant 6 : index
    %c0_178 = arith.constant 0 : index
    %170 = vector.load %arg1[%c0_175, %c6_176, %c6_177, %c0_178] : memref<1x22x22x128xf32, #tpu.memory_space<vmem>>, vector<1x16x16x128xf32>
    %171 = vector.shape_cast %170 : vector<1x16x16x128xf32> to vector<16x16x128xf32>
    %172 = vector.shape_cast %171 : vector<16x16x128xf32> to vector<256x128xf32>
    %c23 = arith.constant 23 : index
    %c0_179 = arith.constant 0 : index
    %c0_180 = arith.constant 0 : index
    %173 = vector.load %arg3[%c23, %c0_179, %c0_180] : memref<24x32x128xf32, #tpu.memory_space<vmem>>, vector<1x32x128xf32>
    %174 = vector.shape_cast %173 : vector<1x32x128xf32> to vector<32x128xf32>
    %cst_181 = arith.constant dense<0.000000e+00> : vector<256x32xf32>
    %175 = tpu.matmul %172, %174, %cst_181 {dimension_numbers = #tpu.dot_dimension_numbers<[1], [1], [0], [0], [0, 0, 1, 0], [], []>} : vector<256x128xf32>, vector<32x128xf32>, vector<256x32xf32> -> vector<256x32xf32>
    %176 = arith.addf %169, %175 : vector<256x32xf32>
    %c0_182 = arith.constant 0 : index
    %c96 = arith.constant 96 : index
    %177 = vector.load %arg7[%c0_182, %c96] : memref<256x128xf32, #tpu.memory_space<vmem>>, vector<256x32xf32>
    %178 = arith.addf %177, %176 : vector<256x32xf32>
    %c0_183 = arith.constant 0 : index
    %c96_184 = arith.constant 96 : index
    %179 = vector.load %arg7[%c0_183, %c96_184] : memref<256x128xf32, #tpu.memory_space<vmem>>, vector<256x32xf32>
    tpu.vector_store %arg7[%c0_183, %c96_184], %178 {strides = array<i32>} : memref<256x128xf32, #tpu.memory_space<vmem>>, vector<256x32xf32>,
    %c0_185 = arith.constant 0 : index
    %c0_186 = arith.constant 0 : index
    %180 = vector.load %arg7[%c0_185, %c0_186] : memref<256x128xf32, #tpu.memory_space<vmem>>, vector<256x128xf32>
    %c0_187 = arith.constant 0 : index
    %c0_188 = arith.constant 0 : index
    %181 = vector.load %arg4[%c0_187, %c0_188] : memref<1x128xf32, #tpu.memory_space<vmem>>, vector<1x128xf32>
    %182 = vector.broadcast %181 : vector<1x128xf32> to vector<256x128xf32>
    %183 = arith.mulf %180, %182 : vector<256x128xf32>
    %c0_189 = arith.constant 0 : index
    %c0_190 = arith.constant 0 : index
    %184 = vector.load %arg5[%c0_189, %c0_190] : memref<1x128xf32, #tpu.memory_space<vmem>>, vector<1x128xf32>
    %185 = vector.broadcast %184 : vector<1x128xf32> to vector<256x128xf32>
    %186 = arith.addf %183, %185 : vector<256x128xf32>
    %cst_191 = arith.constant 0.000000e+00 : f32
    %187 = vector.broadcast %cst_191 : f32 to vector<256x128xf32>
    %188 = arith.maximumf %186, %187 : vector<256x128xf32>
    %189 = vector.shape_cast %188 : vector<256x128xf32> to vector<16x16x128xf32>
    %c0_192 = arith.constant 0 : index
    %c0_193 = arith.constant 0 : index
    %c0_194 = arith.constant 0 : index
    %c0_195 = arith.constant 0 : index
    %190 = vector.load %arg6[%c0_192, %c0_193, %c0_194, %c0_195] : memref<1x16x16x128xf32, #tpu.memory_space<vmem>>, vector<1x16x16x128xf32>
    %191 = vector.shape_cast %190 : vector<1x16x16x128xf32> to vector<16x16x128xf32>
    %192 = vector.shape_cast %189 : vector<16x16x128xf32> to vector<1x16x16x128xf32>
    tpu.vector_store %arg6[%c0_192, %c0_193, %c0_194, %c0_195], %192 {strides = array<i32>} : memref<1x16x16x128xf32, #tpu.memory_space<vmem>>, vector<1x16x16x128xf32>,
    return
  }
  func.func @transform_0(%arg0: i32) -> (i32, i32, i32, i32) {
    %c0_i32 = arith.constant 0 : i32
    %c0_i32_0 = arith.constant 0 : i32
    %c0_i32_1 = arith.constant 0 : i32
    %c0_i32_2 = arith.constant 0 : i32
    return %arg0, %c0_i32, %c0_i32_0, %c0_i32_1 : i32, i32, i32, i32
  }
  func.func @transform_1(%arg0: i32) -> (i32, i32) {
    %c0_i32 = arith.constant 0 : i32
    %c0_i32_0 = arith.constant 0 : i32
    %c0_i32_1 = arith.constant 0 : i32
    return %c0_i32, %c0_i32_0 : i32, i32
  }
  func.func @transform_2(%arg0: i32) -> (i32, i32, i32) {
    %c0_i32 = arith.constant 0 : i32
    %c0_i32_0 = arith.constant 0 : i32
    %c0_i32_1 = arith.constant 0 : i32
    %c0_i32_2 = arith.constant 0 : i32
    return %c0_i32, %c0_i32_0, %c0_i32_1 : i32, i32, i32
  }
  func.func @transform_3(%arg0: i32) -> (i32, i32) {
    %c0_i32 = arith.constant 0 : i32
    %c0_i32_0 = arith.constant 0 : i32
    %c0_i32_1 = arith.constant 0 : i32
    return %c0_i32, %c0_i32_0 : i32, i32
  }
  func.func @transform_4(%arg0: i32) -> (i32, i32) {
    %c0_i32 = arith.constant 0 : i32
    %c0_i32_0 = arith.constant 0 : i32
    %c0_i32_1 = arith.constant 0 : i32
    return %c0_i32, %c0_i32_0 : i32, i32
  }
  func.func @transform_5(%arg0: i32) -> (i32, i32, i32, i32) {
    %c0_i32 = arith.constant 0 : i32
    %c0_i32_0 = arith.constant 0 : i32
    %c0_i32_1 = arith.constant 0 : i32
    %c0_i32_2 = arith.constant 0 : i32
    return %arg0, %c0_i32, %c0_i32_0, %c0_i32_1 : i32, i32, i32, i32
  }
}

</mosaic_0001>

<llo_original>
// kernel: cpfe_forward.1
$region0: #{cpfe_forward.1}
  #allocation0 [shape = 'u32[]', space=smem, size = 0x4, offset = 0x4, fixed_abs, tag = 'smem constant byte address 0x4 - core index']
  #allocation1 [shape = 'u32[144,128]{1,0:T(1,128)}', space=vmem, size = 0x12000, scoped, tag = 'internal scratch']
  #allocation2 [shape = 'f32[256,128]{1,0:T(8,128)}', space=vmem, size = 0x20000, scoped, tag = 'scratch operand']
  %s0 = inlined_call_operand.vmem [shape: f32[2,22,22,128], index: 0, kind: input, shape index: {}]
  %s1 = inlined_call_operand.vmem [shape: f32[128,128], index: 1, kind: input, shape index: {}]
  %s2 = inlined_call_operand.vmem [shape: f32[24,32,128], index: 2, kind: input, shape index: {}]
  %s3 = inlined_call_operand.vmem [shape: f32[1,128], index: 3, kind: input, shape index: {}]
  %s4 = inlined_call_operand.vmem [shape: f32[1,128], index: 4, kind: input, shape index: {}]
  %s5 = inlined_call_operand.hbm [shape: f32[2,16,16,128], index: 5, kind: output, shape index: {}]
  %s6 = sld [smem:[#allocation0]]
  $region53: #{cpfe_forward.1} parent=0
    _
  %s8 = ssub.s32 1, %s6
  %s9 = scalar_select 0, %s8, %s6
  $region1: #{cpfe_forward.1} parent=0
    #allocation3 [shape = 'u8[262144]{0}', space=vmem, size = 0x40000, scoped, tag = 'output window, operand 0']
    #allocation4 [shape = 's32[2]{0}', space=sflag, size = 0x8, scoped, tag = 'scoped memory for cpfe_forward.1']
    %10 = vsyncpa [#allocation4], 0
    %s11 = scalar_lea.sflag [#allocation4], 1
    %12 = vsyncpa %s11, 0
    loop: start=0, step=1, limit=4
    $region2: #{cpfe_forward.1} parent=1 // loop_pre_header
      _
    $region3: #{cpfe_forward.1} parent=1 // loop_header
      %s14 = sphi 0, %s18
      %p15 = scmp.ge.s32.totalorder %s14, 4
      %s24 = sphi 0, %s26
      %s27 = sphi 0, %s24
      %s28 = sphi 0, %s27
      %s44 = sphi 0, %s28
      %s48 = sphi 0, %s48
      %s50 = sphi 0, %s48
      %s51 = sphi 0, %s50
      %s65 = sphi 0, %s51
      %s69 = sphi 0, %s69
      %s71 = sphi 0, %s69
      %s72 = sphi 0, %s71
      %s86 = sphi 0, %s72
      %s90 = sphi 0, %s90
      %s92 = sphi 0, %s90
      %s93 = sphi 0, %s92
      %s107 = sphi 0, %s93
      %s111 = sphi 0, %s111
      %s113 = sphi 0, %s111
      %s114 = sphi 0, %s113
      %s128 = sphi 0, %s114
      %s134 = sphi 0, %s136
      %s137 = sphi 0, %s134
      %s138 = sphi 0, %s137
      %s154 = sphi 0, %s138
    $region4: #{cpfe_forward.1} parent=1 // loop_header_branch
      %17 = sbr.rel (%p15) target = $region8
    $region5: #{cpfe_forward.1} parent=1 // loop_body
      %s19 = ssub.s32 %s14, 1
      %s20 = ssub.s32 %s14, 2
      %s21 = sadd.s32 %s14, 1
      %s22 = ssub.s32 %s14, %s21
      %p23 = scmp.eq.s32.totalorder %s22, 0
      %s25 = sadd.s32 %s24, 1
      %s26 = scalar_select %p23, %s24, %s25
      %p29 = pneg %p23
      %p30 = scmp.eq.s32.totalorder %s14, 1
      %p31 = por %p29, %p30
      %p32 = scmp.ne.s32.totalorder %s24, %s27
      %p33 = scmp.eq.s32.totalorder %s14, 0
      %p34 = por %p32, %p33
      %p35 = scmp.ne.s32.totalorder %s24, %s27
      %p36 = scmp.eq.s32.totalorder %s19, 1
      %p37 = por %p35, %p36
      %p38 = scmp.ne.s32.totalorder %s27, %s28
      %p39 = scmp.eq.s32.totalorder %s19, 0
      %p40 = por %p38, %p39
      %p41 = scmp.ne.s32.totalorder %s27, %s28
      %p42 = scmp.eq.s32.totalorder %s20, 1
      %p43 = por %p41, %p42
      %p45 = scmp.ne.s32.totalorder %s28, %s44
      %p46 = scmp.eq.s32.totalorder %s20, 0
      %p47 = por %p45, %p46
      %s49 = sadd.s32 %s48, 1
      %p52 = scmp.eq.s32.totalorder %s14, 1
      %p53 = scmp.ne.s32.totalorder %s48, %s50
      %p54 = scmp.eq.s32.totalorder %s14, 0
      %p55 = por %p53, %p54
      %p56 = scmp.ne.s32.totalorder %s48, %s50
      %p57 = scmp.eq.s32.totalorder %s19, 1
      %p58 = por %p56, %p57
      %p59 = scmp.ne.s32.totalorder %s50, %s51
      %p60 = scmp.eq.s32.totalorder %s19, 0
      %p61 = por %p59, %p60
      %p62 = scmp.ne.s32.totalorder %s50, %s51
      %p63 = scmp.eq.s32.totalorder %s20, 1
      %p64 = por %p62, %p63
      %p66 = scmp.ne.s32.totalorder %s51, %s65
      %p67 = scmp.eq.s32.totalorder %s20, 0
      %p68 = por %p66, %p67
      %s70 = sadd.s32 %s69, 1
      %p73 = scmp.eq.s32.totalorder %s14, 1
      %p74 = scmp.ne.s32.totalorder %s69, %s71
      %p75 = scmp.eq.s32.totalorder %s14, 0
      %p76 = por %p74, %p75
      %p77 = scmp.ne.s32.totalorder %s69, %s71
      %p78 = scmp.eq.s32.totalorder %s19, 1
      %p79 = por %p77, %p78
      %p80 = scmp.ne.s32.totalorder %s71, %s72
      %p81 = scmp.eq.s32.totalorder %s19, 0
      %p82 = por %p80, %p81
      %p83 = scmp.ne.s32.totalorder %s71, %s72
      %p84 = scmp.eq.s32.totalorder %s20, 1
      %p85 = por %p83, %p84
      %p87 = scmp.ne.s32.totalorder %s72, %s86
      %p88 = scmp.eq.s32.totalorder %s20, 0
      %p89 = por %p87, %p88
      %s91 = sadd.s32 %s90, 1
      %p94 = scmp.eq.s32.totalorder %s14, 1
      %p95 = scmp.ne.s32.totalorder %s90, %s92
      %p96 = scmp.eq.s32.totalorder %s14, 0
      %p97 = por %p95, %p96
      %p98 = scmp.ne.s32.totalorder %s90, %s92
      %p99 = scmp.eq.s32.totalorder %s19, 1
      %p100 = por %p98, %p99
      %p101 = scmp.ne.s32.totalorder %s92, %s93
      %p102 = scmp.eq.s32.totalorder %s19, 0
      %p103 = por %p101, %p102
      %p104 = scmp.ne.s32.totalorder %s92, %s93
      %p105 = scmp.eq.s32.totalorder %s20, 1
      %p106 = por %p104, %p105
      %p108 = scmp.ne.s32.totalorder %s93, %s107
      %p109 = scmp.eq.s32.totalorder %s20, 0
      %p110 = por %p108, %p109
      %s112 = sadd.s32 %s111, 1
      %p115 = scmp.eq.s32.totalorder %s14, 1
      %p116 = scmp.ne.s32.totalorder %s111, %s113
      %p117 = scmp.eq.s32.totalorder %s14, 0
      %p118 = por %p116, %p117
      %p119 = scmp.ne.s32.totalorder %s111, %s113
      %p120 = scmp.eq.s32.totalorder %s19, 1
      %p121 = por %p119, %p120
      %p122 = scmp.ne.s32.totalorder %s113, %s114
      %p123 = scmp.eq.s32.totalorder %s19, 0
      %p124 = por %p122, %p123
      %p125 = scmp.ne.s32.totalorder %s113, %s114
      %p126 = scmp.eq.s32.totalorder %s20, 1
      %p127 = por %p125, %p126
      %p129 = scmp.ne.s32.totalorder %s114, %s128
      %p130 = scmp.eq.s32.totalorder %s20, 0
      %p131 = por %p129, %p130
      %s132 = ssub.s32 %s14, %s21
      %p133 = scmp.eq.s32.totalorder %s132, 0
      %s135 = sadd.s32 %s134, 1
      %s136 = scalar_select %p133, %s134, %s135
      %p139 = pneg %p133
      %p140 = scmp.eq.s32.totalorder %s14, 1
      %p141 = por %p139, %p140
      %p142 = scmp.ne.s32.totalorder %s134, %s137
      %p143 = scmp.eq.s32.totalorder %s14, 0
      %p144 = por %p142, %p143
      %p145 = scmp.ne.s32.totalorder %s134, %s137
      %p146 = scmp.eq.s32.totalorder %s19, 1
      %p147 = por %p145, %p146
      %p148 = scmp.ne.s32.totalorder %s137, %s138
      %p149 = scmp.eq.s32.totalorder %s19, 0
      %p150 = por %p148, %p149
      %p151 = scmp.ne.s32.totalorder %s137, %s138
      %p152 = scmp.eq.s32.totalorder %s20, 1
      %p153 = por %p151, %p152
      %p155 = scmp.ne.s32.totalorder %s138, %s154
      %p156 = scmp.eq.s32.totalorder %s20, 0
      %p157 = por %p155, %p156
      %p158 = scmp.le.s32.totalorder 1, %s14
      %p159 = scmp.lt.s32.totalorder %s14, 3
      %p160 = pnand %p158, %p159
      %p161 = pneg %p160
      // Predicated region
      $region9: #{cpfe_forward.1} parent=5 // pred_check
        _
      $region10: #{cpfe_forward.1} parent=5 // pred_check_branch
        %163 = sbr.rel (%p160) target = $region12
      $region11: #{cpfe_forward.1} parent=5 // pred_region
        %s164 = ssub.s32 %s14, 1
        // Predicated region
        $region13: #{cpfe_forward.1} parent=11 // pred_check
          %p165 = pneg %p61
        $region14: #{cpfe_forward.1} parent=11 // pred_check_branch
          %167 = sbr.rel (%p165) target = $region16
        $region15: #{cpfe_forward.1} parent=11 // pred_region
          _
        $region16: #{cpfe_forward.1} parent=11 // pred_fallthru
          _
        // Predicated region
        $region17: #{cpfe_forward.1} parent=11 // pred_check
          %p168 = pneg %p82
        $region18: #{cpfe_forward.1} parent=11 // pred_check_branch
          %170 = sbr.rel (%p168) target = $region20
        $region19: #{cpfe_forward.1} parent=11 // pred_region
          _
        $region20: #{cpfe_forward.1} parent=11 // pred_fallthru
          _
        // Predicated region
        $region21: #{cpfe_forward.1} parent=11 // pred_check
          %p171 = pneg %p103
        $region22: #{cpfe_forward.1} parent=11 // pred_check_branch
          %173 = sbr.rel (%p171) target = $region24
        $region23: #{cpfe_forward.1} parent=11 // pred_region
          _
        $region24: #{cpfe_forward.1} parent=11 // pred_fallthru
          _
        // Predicated region
        $region25: #{cpfe_forward.1} parent=11 // pred_check
          %p174 = pneg %p124
        $region26: #{cpfe_forward.1} parent=11 // pred_check_branch
          %176 = sbr.rel (%p174) target = $region28
        $region27: #{cpfe_forward.1} parent=11 // pred_region
          _
        $region28: #{cpfe_forward.1} parent=11 // pred_fallthru
          _
      $region12: #{cpfe_forward.1} parent=5 // pred_fallthru
        _
      %p177 = scmp.lt.s32.totalorder %s14, 2
      // Predicated region
      $region29: #{cpfe_forward.1} parent=5 // pred_check
        %p178 = pneg %p177
      $region30: #{cpfe_forward.1} parent=5 // pred_check_branch
        %180 = sbr.rel (%p178) target = $region32
      $region31: #{cpfe_forward.1} parent=5 // pred_region
        // Predicated region
        $region33: #{cpfe_forward.1} parent=31 // pred_check
          %p181 = pneg %p34
        $region34: #{cpfe_forward.1} parent=31 // pred_check_branch
          %183 = sbr.rel (%p181) target = $region36
        $region35: #{cpfe_forward.1} parent=31 // pred_region
          %p184 = scmp.lt.s32.totalorder %s14, 1
          %s185 = scalar_select %p184, %s14, 1
          %s186 = smul.addr %s185, 66
          %s187 = smul.addr %s186, 8
          %s188 = scalar_lea.vmem %s0, %s187
        $region36: #{cpfe_forward.1} parent=31 // pred_fallthru
          _
      $region32: #{cpfe_forward.1} parent=5 // pred_fallthru
        _
      %p189 = scmp.le.s32.totalorder 1, %s14
      %p190 = scmp.lt.s32.totalorder %s14, 3
      %p191 = pnand %p189, %p190
      %p192 = pneg %p191
      // Predicated region
      $region37: #{cpfe_forward.1} parent=5 // pred_check
        _
      $region38: #{cpfe_forward.1} parent=5 // pred_check_branch
        %194 = sbr.rel (%p191) target = $region40
      $region39: #{cpfe_forward.1} parent=5 // pred_region
        %s195 = ssub.s32 %s14, 1
        %p196 = scmp.lt.s32.totalorder %s19, 1
        %s197 = scalar_select %p196, %s19, 1
        %s198 = smul.addr %s197, 66
        %s199 = smul.addr %s198, 8
        %s200 = scalar_lea.vmem %s0, %s199
        %p201 = pneg %p40
        %p202 = pneg %p37
        %p203 = pneg %p61
        %p204 = pneg %p58
        %p205 = pneg %p82
        %p206 = pneg %p79
        %p207 = pneg %p103
        %p208 = pneg %p100
        %p209 = pneg %p124
        %p210 = pneg %p121
        %p211 = pneg %p150
        %p212 = pneg %p147
        %s213 = sand.u32 %s137, 1
        %s214 = scalar_lea.sflag [#allocation4], %s213
        %s215 = sand.u32 %s137, 1
        %s216 = smul.addr %s215, 256
        %s217 = scalar_lea.vmem [#allocation3], %s216
        %p218 = scmp.lt.s32.totalorder %s19, 1
        %s219 = scalar_select %p218, %s19, 1
        %s220 = smul.addr %s219, 66
        %s221 = smul.addr %s220, 8
        %s222 = scalar_lea.vmem %s0, %s221
        %s223 = scalar_lea.vmem %s222, 72
        %v224 = vld [vmem:[%s223 + $0x3] sm:$0xff]
        %v225 = vld [vmem:[%s223 + $0xb] sm:$0xff]
        %v226 = vld [vmem:[%s223 + $0x1b] sm:$0xff]
        %v227 = vld [vmem:[%s223 + $0x23] sm:$0xff]
        %v228 = vld [vmem:[%s223 + $0x33] sm:$0xff]
        %v229 = vld [vmem:[%s223 + $0x3b] sm:$0xff]
        %v230 = vld [vmem:[%s223 + $0x4b] sm:$0xff]
        %v231 = vld [vmem:[%s223 + $0x53] sm:$0xff]
        %v232 = vld [vmem:[%s223 + $0x63] sm:$0xff]
        %v233 = vld [vmem:[%s223 + $0x6b] sm:$0xff]
        %v234 = vld [vmem:[%s223 + $0x7b] sm:$0xff]
        %v235 = vld [vmem:[%s223 + $0x83] sm:$0xff]
        %v236 = vld [vmem:[%s223 + $0x93] sm:$0xff]
        %v237 = vld [vmem:[%s223 + $0x9b] sm:$0xff]
        %v238 = vld [vmem:[%s223 + $0xab] sm:$0xff]
        %v239 = vld [vmem:[%s223 + $0xb3] sm:$0xff]
        %v240 = vld [vmem:[%s223 + $0xc3] sm:$0xff]
        %v241 = vld [vmem:[%s223 + $0xcb] sm:$0xff]
        %v242 = vld [vmem:[%s223 + $0xdb] sm:$0xff]
        %v243 = vld [vmem:[%s223 + $0xe3] sm:$0xff]
        %v244 = vld [vmem:[%s223 + $0xf3] sm:$0xff]
        %v245 = vld [vmem:[%s223 + $0xfb] sm:$0xff]
        %v246 = vld [vmem:[%s223 + $0x10b] sm:$0xff]
        %v247 = vld [vmem:[%s223 + $0x113] sm:$0xff]
        %v248 = vld [vmem:[%s223 + $0x123] sm:$0xff]
        %v249 = vld [vmem:[%s223 + $0x12b] sm:$0xff]
        %v250 = vld [vmem:[%s223 + $0x13b] sm:$0xff]
        %v251 = vld [vmem:[%s223 + $0x143] sm:$0xff]
        %v252 = vld [vmem:[%s223 + $0x153] sm:$0xff]
        %v253 = vld [vmem:[%s223 + $0x15b] sm:$0xff]
        %v254 = vld [vmem:[%s223 + $0x16b] sm:$0xff]
        %v255 = vld [vmem:[%s223 + $0x173] sm:$0xff]
        %v256 = vld [vmem:[%s1] sm:$0xff]
        %v257 = vld [vmem:[%s1 + $0x8] sm:$0xff]
        %v258 = vld [vmem:[%s1 + $0x10] sm:$0xff]
        %v259 = vld [vmem:[%s1 + $0x18] sm:$0xff]
        %v260 = vld [vmem:[%s1 + $0x20] sm:$0xff]
        %v261 = vld [vmem:[%s1 + $0x28] sm:$0xff]
        %v262 = vld [vmem:[%s1 + $0x30] sm:$0xff]
        %v263 = vld [vmem:[%s1 + $0x38] sm:$0xff]
        %v264 = vld [vmem:[%s1 + $0x40] sm:$0xff]
        %v265 = vld [vmem:[%s1 + $0x48] sm:$0xff]
        %v266 = vld [vmem:[%s1 + $0x50] sm:$0xff]
        %v267 = vld [vmem:[%s1 + $0x58] sm:$0xff]
        %v268 = vld [vmem:[%s1 + $0x60] sm:$0xff]
        %v269 = vld [vmem:[%s1 + $0x68] sm:$0xff]
        %v270 = vld [vmem:[%s1 + $0x70] sm:$0xff]
        %v271 = vld [vmem:[%s1 + $0x78] sm:$0xff]
        %272 = vmatprep.subr.mxu0 0.0
        %273 = vmatpush1.msra.mxu0 %v256
        %274 = vmatprep.subr.mxu0 0.0
        %275 = vmatpush1.msra.mxu0 %v257
        %276 = vmatprep.subr.mxu0 0.0
        %277 = vmatpush1.msra.mxu0 %v258
        %278 = vmatprep.subr.mxu0 0.0
        %279 = vmatpush1.msra.mxu0 %v259
        %280 = vmatprep.subr.mxu0 0.0
        %281 = vmatpush1.msra.mxu0 %v260
        %282 = vmatprep.subr.mxu0 0.0
        %283 = vmatpush1.msra.mxu0 %v261
        %284 = vmatprep.subr.mxu0 0.0
        %285 = vmatpush1.msra.mxu0 %v262
        %286 = vmatprep.subr.mxu0 0.0
        %287 = vmatpush1.msra.mxu0 %v263
        %288 = vmatprep.subr.mxu0 0.0
        %289 = vmatpush1.msra.mxu0 %v264
        %290 = vmatprep.subr.mxu0 0.0
        %291 = vmatpush1.msra.mxu0 %v265
        %292 = vmatprep.subr.mxu0 0.0
        %293 = vmatpush1.msra.mxu0 %v266
        %294 = vmatprep.subr.mxu0 0.0
        %295 = vmatpush1.msra.mxu0 %v267
        %296 = vmatprep.subr.mxu0 0.0
        %297 = vmatpush1.msra.mxu0 %v268
        %298 = vmatprep.subr.mxu0 0.0
        %299 = vmatpush1.msra.mxu0 %v269
        %300 = vmatprep.subr.mxu0 0.0
        %301 = vmatpush1.msra.mxu0 %v270
        %302 = vmatprep.subr.mxu0 0.0
        %303 = vmatpush1.msra.mxu0 %v271
        %304 = vmatprep.subr.mxu0 0.0
        %305 = vmatpush1.msra.mxu0 0.0
        %306 = vmatprep.subr.mxu0 0.0
        %307 = vmatpush1.msra.mxu0 0.0
        %308 = vmatprep.subr.mxu0 0.0
        %309 = vmatpush1.msra.mxu0 0.0
        %310 = vmatprep.subr.mxu0 0.0
        %311 = vmatpush1.msra.mxu0 0.0
        %312 = vmatprep.subr.mxu0 0.0
        %313 = vmatpush1.msra.mxu0 0.0
        %314 = vmatprep.subr.mxu0 0.0
        %315 = vmatpush1.msra.mxu0 0.0
        %316 = vmatprep.subr.mxu0 0.0
        %317 = vmatpush1.msra.mxu0 0.0
        %318 = vmatprep.subr.mxu0 0.0
        %319 = vmatpush1.msra.mxu0 0.0
        %320 = vmatprep.subr.mxu0 0.0
        %321 = vmatpush1.msra.mxu0 0.0
        %322 = vmatprep.subr.mxu0 0.0
        %323 = vmatpush1.msra.mxu0 0.0
        %324 = vmatprep.subr.mxu0 0.0
        %325 = vmatpush1.msra.mxu0 0.0
        %326 = vmatprep.subr.mxu0 0.0
        %327 = vmatpush1.msra.mxu0 0.0
        %328 = vmatprep.subr.mxu0 0.0
        %329 = vmatpush1.msra.mxu0 0.0
        %330 = vmatprep.subr.mxu0 0.0
        %331 = vmatpush1.msra.mxu0 0.0
        %332 = vmatprep.subr.mxu0 0.0
        %333 = vmatpush1.msra.mxu0 0.0
        %334 = vmatprep.subr.mxu0 0.0
        %335 = vmatpush1.msra.mxu0 0.0
        %336 = vmatprep.mubr.f32.mxu0 0.0
        %337 = vmatmul.mubr.f32.gmra.mrb[0].mxu0 %v224
        %v338 = vpop.f32.mrb[0].mxu0
        %v339 = vadd.f32 0.0, %v338
        %v340 = vpop.f32.mrb[0].mxu0
        %341 = vmatprep.mubr.f32.mxu0 0.0
        %342 = vmatmul.mubr.f32.gmra.mrb[0].mxu0 %v225
        %v343 = vpop.f32.mrb[0].mxu0
        %v344 = vadd.f32 0.0, %v343
        %v345 = vpop.f32.mrb[0].mxu0
        %346 = vmatprep.mubr.f32.mxu0 0.0
        %347 = vmatmul.mubr.f32.gmra.mrb[0].mxu0 %v226
        %v348 = vpop.f32.mrb[0].mxu0
        %v349 = vadd.f32 0.0, %v348
        %v350 = vpop.f32.mrb[0].mxu0
        %351 = vmatprep.mubr.f32.mxu0 0.0
        %352 = vmatmul.mubr.f32.gmra.mrb[0].mxu0 %v227
        %v353 = vpop.f32.mrb[0].mxu0
        %v354 = vadd.f32 0.0, %v353
        %v355 = vpop.f32.mrb[0].mxu0
        %356 = vmatprep.mubr.f32.mxu0 0.0
        %357 = vmatmul.mubr.f32.gmra.mrb[0].mxu0 %v228
        %v358 = vpop.f32.mrb[0].mxu0
        %v359 = vadd.f32 0.0, %v358
        %v360 = vpop.f32.mrb[0].mxu0
        %361 = vmatprep.mubr.f32.mxu0 0.0
        %362 = vmatmul.mubr.f32.gmra.mrb[0].mxu0 %v229
        %v363 = vpop.f32.mrb[0].mxu0
        %v364 = vadd.f32 0.0, %v363
        %v365 = vpop.f32.mrb[0].mxu0
        %366 = vmatprep.mubr.f32.mxu0 0.0
        %367 = vmatmul.mubr.f32.gmra.mrb[0].mxu0 %v230
        %v368 = vpop.f32.mrb[0].mxu0
        %v369 = vadd.f32 0.0, %v368
        %v370 = vpop.f32.mrb[0].mxu0
        %371 = vmatprep.mubr.f32.mxu0 0.0
        %372 = vmatmul.mubr.f32.gmra.mrb[0].mxu0 %v231
        %v373 = vpop.f32.mrb[0].mxu0
        %v374 = vadd.f32 0.0, %v373
        %v375 = vpop.f32.mrb[0].mxu0
        %376 = vmatprep.mubr.f32.mxu0 0.0
        %377 = vmatmul.mubr.f32.gmra.mrb[0].mxu0 %v232
        %v378 = vpop.f32.mrb[0].mxu0
        %v379 = vadd.f32 0.0, %v378
        %v380 = vpop.f32.mrb[0].mxu0
        %381 = vmatprep.mubr.f32.mxu0 0.0
        %382 = vmatmul.mubr.f32.gmra.mrb[0].mxu0 %v233
        %v383 = vpop.f32.mrb[0].mxu0
        %v384 = vadd.f32 0.0, %v383
        %v385 = vpop.f32.mrb[0].mxu0
        %386 = vmatprep.mubr.f32.mxu0 0.0
        %387 = vmatmul.mubr.f32.gmra.mrb[0].mxu0 %v234
        %v388 = vpop.f32.mrb[0].mxu0
        %v389 = vadd.f32 0.0, %v388
        %v390 = vpop.f32.mrb[0].mxu0
        %391 = vmatprep.mubr.f32.mxu0 0.0
        %392 = vmatmul.mubr.f32.gmra.mrb[0].mxu0 %v235
        %v393 = vpop.f32.mrb[0].mxu0
        %v394 = vadd.f32 0.0, %v393
        %v395 = vpop.f32.mrb[0].mxu0
        %396 = vmatprep.mubr.f32.mxu0 0.0
        %397 = vmatmul.mubr.f32.gmra.mrb[0].mxu0 %v236
        %v398 = vpop.f32.mrb[0].mxu0
        %v399 = vadd.f32 0.0, %v398
        %v400 = vpop.f32.mrb[0].mxu0
        %401 = vmatprep.mubr.f32.mxu0 0.0
        %402 = vmatmul.mubr.f32.gmra.mrb[0].mxu0 %v237
        %v403 = vpop.f32.mrb[0].mxu0
        %v404 = vadd.f32 0.0, %v403
        %v405 = vpop.f32.mrb[0].mxu0
        %406 = vmatprep.mubr.f32.mxu0 0.0
        %407 = vmatmul.mubr.f32.gmra.mrb[0].mxu0 %v238
        %v408 = vpop.f32.mrb[0].mxu0
        %v409 = vadd.f32 0.0, %v408
        %v410 = vpop.f32.mrb[0].mxu0
        %411 = vmatprep.mubr.f32.mxu0 0.0
        %412 = vmatmul.mubr.f32.gmra.mrb[0].mxu0 %v239
        %v413 = vpop.f32.mrb[0].mxu0
        %v414 = vadd.f32 0.0, %v413
        %v415 = vpop.f32.mrb[0].mxu0
        %416 = vmatprep.mubr.f32.mxu0 0.0
        %417 = vmatmul.mubr.f32.gmra.mrb[0].mxu0 %v240
        %v418 = vpop.f32.mrb[0].mxu0
        %v419 = vadd.f32 0.0, %v418
        %v420 = vpop.f32.mrb[0].mxu0
        %421 = vmatprep.mubr.f32.mxu0 0.0
        %422 = vmatmul.mubr.f32.gmra.mrb[0].mxu0 %v241
        %v423 = vpop.f32.mrb[0].mxu0
        %v424 = vadd.f32 0.0, %v423
        %v425 = vpop.f32.mrb[0].mxu0
        %426 = vmatprep.mubr.f32.mxu0 0.0
        %427 = vmatmul.mubr.f32.gmra.mrb[0].mxu0 %v242
        %v428 = vpop.f32.mrb[0].mxu0
        %v429 = vadd.f32 0.0, %v428
        %v430 = vpop.f32.mrb[0].mxu0
        %431 = vmatprep.mubr.f32.mxu0 0.0
        %432 = vmatmul.mubr.f32.gmra.mrb[0].mxu0 %v243
        %v433 = vpop.f32.mrb[0].mxu0
        %v434 = vadd.f32 0.0, %v433
        %v435 = vpop.f32.mrb[0].mxu0
        %436 = vmatprep.mubr.f32.mxu0 0.0
        %437 = vmatmul.mubr.f32.gmra.mrb[0].mxu0 %v244
        %v438 = vpop.f32.mrb[0].mxu0
        %v439 = vadd.f32 0.0, %v438
        %v440 = vpop.f32.mrb[0].mxu0
        %441 = vmatprep.mubr.f32.mxu0 0.0
        %442 = vmatmul.mubr.f32.gmra.mrb[0].mxu0 %v245
        %v443 = vpop.f32.mrb[0].mxu0
        %v444 = vadd.f32 0.0, %v443
        %v445 = vpop.f32.mrb[0].mxu0
        %446 = vmatprep.mubr.f32.mxu0 0.0
        %447 = vmatmul.mubr.f32.gmra.mrb[0].mxu0 %v246
        %v448 = vpop.f32.mrb[0].mxu0
        %v449 = vadd.f32 0.0, %v448
        %v450 = vpop.f32.mrb[0].mxu0
        %451 = vmatprep.mubr.f32.mxu0 0.0
        %452 = vmatmul.mubr.f32.gmra.mrb[0].mxu0 %v247
        %v453 = vpop.f32.mrb[0].mxu0
        %v454 = vadd.f32 0.0, %v453
        %v455 = vpop.f32.mrb[0].mxu0
        %456 = vmatprep.mubr.f32.mxu0 0.0
        %457 = vmatmul.mubr.f32.gmra.mrb[0].mxu0 %v248
        %v458 = vpop.f32.mrb[0].mxu0
        %v459 = vadd.f32 0.0, %v458
        %v460 = vpop.f32.mrb[0].mxu0
        %461 = vmatprep.mubr.f32.mxu0 0.0
        %462 = vmatmul.mubr.f32.gmra.mrb[0].mxu0 %v249
        %v463 = vpop.f32.mrb[0].mxu0
        %v464 = vadd.f32 0.0, %v463
        %v465 = vpop.f32.mrb[0].mxu0
        %466 = vmatprep.mubr.f32.mxu0 0.0
        %467 = vmatmul.mubr.f32.gmra.mrb[0].mxu0 %v250
        %v468 = vpop.f32.mrb[0].mxu0
        %v469 = vadd.f32 0.0, %v468
        %v470 = vpop.f32.mrb[0].mxu0
        %471 = vmatprep.mubr.f32.mxu0 0.0
        %472 = vmatmul.mubr.f32.gmra.mrb[0].mxu0 %v251
        %v473 = vpop.f32.mrb[0].mxu0
        %v474 = vadd.f32 0.0, %v473
        %v475 = vpop.f32.mrb[0].mxu0
        %476 = vmatprep.mubr.f32.mxu0 0.0
        %477 = vmatmul.mubr.f32.gmra.mrb[0].mxu0 %v252
        %v478 = vpop.f32.mrb[0].mxu0
        %v479 = vadd.f32 0.0, %v478
        %v480 = vpop.f32.mrb[0].mxu0
        %481 = vmatprep.mubr.f32.mxu0 0.0
        %482 = vmatmul.mubr.f32.gmra.mrb[0].mxu0 %v253
        %v483 = vpop.f32.mrb[0].mxu0
        %v484 = vadd.f32 0.0, %v483
        %v485 = vpop.f32.mrb[0].mxu0
        %486 = vmatprep.mubr.f32.mxu0 0.0
        %487 = vmatmul.mubr.f32.gmra.mrb[0].mxu0 %v254
        %v488 = vpop.f32.mrb[0].mxu0
        %v489 = vadd.f32 0.0, %v488
        %v490 = vpop.f32.mrb[0].mxu0
        %491 = vmatprep.mubr.f32.mxu0 0.0
        %492 = vmatmul.mubr.f32.gmra.mrb[0].mxu0 %v255
        %v493 = vpop.f32.mrb[0].mxu0
        %v494 = vadd.f32 0.0, %v493
        %v495 = vpop.f32.mrb[0].mxu0
        %496 = vdwg.mxu0
        %497 = vst [vmem:[#allocation2] sm:$0xff] %v339
        %498 = vst [vmem:[#allocation2 + $0x8] sm:$0xff] %v344
        %499 = vst [vmem:[#allocation2 + $0x10] sm:$0xff] %v349
        %500 = vst [vmem:[#allocation2 + $0x18] sm:$0xff] %v354
        %501 = vst [vmem:[#allocation2 + $0x20] sm:$0xff] %v359
        %502 = vst [vmem:[#allocation2 + $0x28] sm:$0xff] %v364
        %503 = vst [vmem:[#allocation2 + $0x30] sm:$0xff] %v369
        %504 = vst [vmem:[#allocation2 + $0x38] sm:$0xff] %v374
        %505 = vst [vmem:[#allocation2 + $0x40] sm:$0xff] %v379
        %506 = vst [vmem:[#allocation2 + $0x48] sm:$0xff] %v384
        %507 = vst [vmem:[#allocation2 + $0x50] sm:$0xff] %v389
        %508 = vst [vmem:[#allocation2 + $0x58] sm:$0xff] %v394
        %509 = vst [vmem:[#allocation2 + $0x60] sm:$0xff] %v399
        %510 = vst [vmem:[#allocation2 + $0x68] sm:$0xff] %v404
        %511 = vst [vmem:[#allocation2 + $0x70] sm:$0xff] %v409
        %512 = vst [vmem:[#allocation2 + $0x78] sm:$0xff] %v414
        %513 = vst [vmem:[#allocation2 + $0x80] sm:$0xff] %v419
        %514 = vst [vmem:[#allocation2 + $0x88] sm:$0xff] %v424
        %515 = vst [vmem:[#allocation2 + $0x90] sm:$0xff] %v429
        %516 = vst [vmem:[#allocation2 + $0x98] sm:$0xff] %v434
        %517 = vst [vmem:[#allocation2 + $0xa0] sm:$0xff] %v439
        %518 = vst [vmem:[#allocation2 + $0xa8] sm:$0xff] %v444
        %519 = vst [vmem:[#allocation2 + $0xb0] sm:$0xff] %v449
        %520 = vst [vmem:[#allocation2 + $0xb8] sm:$0xff] %v454
        %521 = vst [vmem:[#allocation2 + $0xc0] sm:$0xff] %v459
        %522 = vst [vmem:[#allocation2 + $0xc8] sm:$0xff] %v464
        %523 = vst [vmem:[#allocation2 + $0xd0] sm:$0xff] %v469
        %524 = vst [vmem:[#allocation2 + $0xd8] sm:$0xff] %v474
        %525 = vst [vmem:[#allocation2 + $0xe0] sm:$0xff] %v479
        %526 = vst [vmem:[#allocation2 + $0xe8] sm:$0xff] %v484
        %527 = vst [vmem:[#allocation2 + $0xf0] sm:$0xff] %v489
        %528 = vst [vmem:[#allocation2 + $0xf8] sm:$0xff] %v494
        %s529 = scalar_lea.vmem %s222, 48
        %v530 = vld [vmem:[%s529 + $0x2] sm:$0xff]
        %v531 = vld [vmem:[%s529 + $0xa] sm:$0xff]
        %v532 = vld [vmem:[%s529 + $0x1a] sm:$0xff]
        %v533 = vld [vmem:[%s529 + $0x22] sm:$0xff]
        %v534 = vld [vmem:[%s529 + $0x32] sm:$0xff]
        %v535 = vld [vmem:[%s529 + $0x3a] sm:$0xff]
        %v536 = vld [vmem:[%s529 + $0x4a] sm:$0xff]
        %v537 = vld [vmem:[%s529 + $0x52] sm:$0xff]
        %v538 = vld [vmem:[%s529 + $0x62] sm:$0xff]
        %v539 = vld [vmem:[%s529 + $0x6a] sm:$0xff]
        %v540 = vld [vmem:[%s529 + $0x7a] sm:$0xff]
        %v541 = vld [vmem:[%s529 + $0x82] sm:$0xff]
        %v542 = vld [vmem:[%s529 + $0x92] sm:$0xff]
        %v543 = vld [vmem:[%s529 + $0x9a] sm:$0xff]
        %v544 = vld [vmem:[%s529 + $0xaa] sm:$0xff]
        %v545 = vld [vmem:[%s529 + $0xb2] sm:$0xff]
        %v546 = vld [vmem:[%s529 + $0xc2] sm:$0xff]
        %v547 = vld [vmem:[%s529 + $0xca] sm:$0xff]
        %v548 = vld [vmem:[%s529 + $0xda] sm:$0xff]
        %v549 = vld [vmem:[%s529 + $0xe2] sm:$0xff]
        %v550 = vld [vmem:[%s529 + $0xf2] sm:$0xff]
        %v551 = vld [vmem:[%s529 + $0xfa] sm:$0xff]
        %v552 = vld [vmem:[%s529 + $0x10a] sm:$0xff]
        %v553 = vld [vmem:[%s529 + $0x112] sm:$0xff]
        %v554 = vld [vmem:[%s529 + $0x122] sm:$0xff]
        %v555 = vld [vmem:[%s529 + $0x12a] sm:$0xff]
        %v556 = vld [vmem:[%s529 + $0x13a] sm:$0xff]
        %v557 = vld [vmem:[%s529 + $0x142] sm:$0xff]
        %v558 = vld [vmem:[%s529 + $0x152] sm:$0xff]
        %v559 = vld [vmem:[%s529 + $0x15a] sm:$0xff]
        %v560 = vld [vmem:[%s529 + $0x16a] sm:$0xff]
        %v561 = vld [vmem:[%s529 + $0x172] sm:$0xff]
        %v562 = vld [vmem:[%s2] sm:$0xff]
        %v563 = vld [vmem:[%s2 + $0x8] sm:$0xff]
        %v564 = vld [vmem:[%s2 + $0x10] sm:$0xff]
        %v565 = vld [vmem:[%s2 + $0x18] sm:$0xff]
        %v566 = vld [vmem:[%s529 + $0x3] sm:$0xff]
        %v567 = vld [vmem:[%s529 + $0xb] sm:$0xff]
        %v568 = vld [vmem:[%s529 + $0x1b] sm:$0xff]
        %v569 = vld [vmem:[%s529 + $0x23] sm:$0xff]
        %v570 = vld [vmem:[%s529 + $0x33] sm:$0xff]
        %v571 = vld [vmem:[%s529 + $0x3b] sm:$0xff]
        %v572 = vld [vmem:[%s529 + $0x4b] sm:$0xff]
        %v573 = vld [vmem:[%s529 + $0x53] sm:$0xff]
        %v574 = vld [vmem:[%s529 + $0x63] sm:$0xff]
        %v575 = vld [vmem:[%s529 + $0x6b] sm:$0xff]
        %v576 = vld [vmem:[%s529 + $0x7b] sm:$0xff]
        %v577 = vld [vmem:[%s529 + $0x83] sm:$0xff]
        %v578 = vld [vmem:[%s529 + $0x93] sm:$0xff]
        %v579 = vld [vmem:[%s529 + $0x9b] sm:$0xff]
        %v580 = vld [vmem:[%s529 + $0xab] sm:$0xff]
        %v581 = vld [vmem:[%s529 + $0xb3] sm:$0xff]
        %v582 = vld [vmem:[%s529 + $0xc3] sm:$0xff]
        %v583 = vld [vmem:[%s529 + $0xcb] sm:$0xff]
        %v584 = vld [vmem:[%s529 + $0xdb] sm:$0xff]
        %v585 = vld [vmem:[%s529 + $0xe3] sm:$0xff]
        %v586 = vld [vmem:[%s529 + $0xf3] sm:$0xff]
        %v587 = vld [vmem:[%s529 + $0xfb] sm:$0xff]
        %v588 = vld [vmem:[%s529 + $0x10b] sm:$0xff]
        %v589 = vld [vmem:[%s529 + $0x113] sm:$0xff]
        %v590 = vld [vmem:[%s529 + $0x123] sm:$0xff]
        %v591 = vld [vmem:[%s529 + $0x12b] sm:$0xff]
        %v592 = vld [vmem:[%s529 + $0x13b] sm:$0xff]
        %v593 = vld [vmem:[%s529 + $0x143] sm:$0xff]
        %v594 = vld [vmem:[%s529 + $0x153] sm:$0xff]
        %v595 = vld [vmem:[%s529 + $0x15b] sm:$0xff]
        %v596 = vld [vmem:[%s529 + $0x16b] sm:$0xff]
        %v597 = vld [vmem:[%s529 + $0x173] sm:$0xff]
        %s598 = scalar_lea.vmem %s2, 32
        %v599 = vld [vmem:[%s598] sm:$0xff]
        %v600 = vld [vmem:[%s598 + $0x8] sm:$0xff]
        %v601 = vld [vmem:[%s598 + $0x10] sm:$0xff]
        %v602 = vld [vmem:[%s598 + $0x18] sm:$0xff]
        %603 = vmatprep.subr.mxu0 0.0
        %604 = vmatpush1.xpose.msra.mxu0 %v599
        %605 = vmatprep.subr.mxu0 0.0
        %606 = vmatpush1.xpose.msra.mxu0 %v600
        %607 = vmatprep.subr.mxu0 0.0
        %608 = vmatpush1.xpose.msra.mxu0 %v601
        %609 = vmatprep.subr.mxu0 0.0
        %610 = vmatpush1.xpose.msra.mxu0 %v602
        %611 = vmatprep.subr.mxu0 0.0
        %612 = vmatpush1.xpose.msra.mxu0 0.0
        %613 = vmatprep.subr.mxu0 0.0
        %614 = vmatpush1.xpose.msra.mxu0 0.0
        %615 = vmatprep.subr.mxu0 0.0
        %616 = vmatpush1.xpose.msra.mxu0 0.0
        %617 = vmatprep.subr.mxu0 0.0
        %618 = vmatpush1.xpose.msra.mxu0 0.0
        %619 = vmatprep.subr.mxu0 0.0
        %620 = vmatpush1.xpose.msra.mxu0 0.0
        %621 = vmatprep.subr.mxu0 0.0
        %622 = vmatpush1.xpose.msra.mxu0 0.0
        %623 = vmatprep.subr.mxu0 0.0
        %624 = vmatpush1.xpose.msra.mxu0 0.0
        %625 = vmatprep.subr.mxu0 0.0
        %626 = vmatpush1.xpose.msra.mxu0 0.0
        %627 = vmatprep.subr.mxu0 0.0
        %628 = vmatpush1.xpose.msra.mxu0 0.0
        %629 = vmatprep.subr.mxu0 0.0
        %630 = vmatpush1.xpose.msra.mxu0 0.0
        %631 = vmatprep.subr.mxu0 0.0
        %632 = vmatpush1.xpose.msra.mxu0 0.0
        %633 = vmatprep.subr.mxu0 0.0
        %634 = vmatpush1.xpose.msra.mxu0 0.0
        %635 = vmatprep.subr.mxu0 0.0
        %636 = vmatpush1.xpose.msra.mxu0 0.0
        %637 = vmatprep.subr.mxu0 0.0
        %638 = vmatpush1.xpose.msra.mxu0 0.0
        %639 = vmatprep.subr.mxu0 0.0
        %640 = vmatpush1.xpose.msra.mxu0 0.0
        %641 = vmatprep.subr.mxu0 0.0
        %642 = vmatpush1.xpose.msra.mxu0 0.0
        %643 = vmatprep.subr.mxu0 0.0
        %644 = vmatpush1.xpose.msra.mxu0 0.0
        %645 = vmatprep.subr.mxu0 0.0
        %646 = vmatpush1.xpose.msra.mxu0 0.0
        %647 = vmatprep.subr.mxu0 0.0
        %648 = vmatpush1.xpose.msra.mxu0 0.0
        %649 = vmatprep.subr.mxu0 0.0
        %650 = vmatpush1.xpose.msra.mxu0 0.0
        %651 = vmatprep.subr.mxu0 0.0
        %652 = vmatpush1.xpose.msra.mxu0 0.0
        %653 = vmatprep.subr.mxu0 0.0
        %654 = vmatpush1.xpose.msra.mxu0 0.0
        %655 = vmatprep.subr.mxu0 0.0
        %656 = vmatpush1.xpose.msra.mxu0 0.0
        %657 = vmatprep.subr.mxu0 0.0
        %658 = vmatpush1.xpose.msra.mxu0 0.0
        %659 = vmatprep.subr.mxu0 0.0
        %660 = vmatpush1.xpose.msra.mxu0 0.0
        %661 = vmatprep.subr.mxu0 0.0
        %662 = vmatpush1.xpose.msra.mxu0 0.0
        %663 = vmatprep.subr.mxu0 0.0
        %664 = vmatpush1.xpose.msra.mxu0 0.0
        %665 = vmatprep.subr.mxu0 0.0
        %666 = vmatpush1.xpose.msra.mxu0 0.0
        %667 = vmatprep.mubr.f32.mxu0 0.0
        %668 = vmatmul.mubr.f32.gmra.mrb[0].mxu0 %v566
        %v669 = vpop.f32.mrb[0].mxu0
        %v670 = vadd.f32 0.0, %v669
        %v671 = vpop.f32.mrb[0].mxu0
        %672 = vmatprep.mubr.f32.mxu0 0.0
        %673 = vmatmul.mubr.f32.gmra.mrb[0].mxu0 %v567
        %v674 = vpop.f32.mrb[0].mxu0
        %v675 = vadd.f32 0.0, %v674
        %v676 = vpop.f32.mrb[0].mxu0
        %677 = vmatprep.mubr.f32.mxu0 0.0
        %678 = vmatmul.mubr.f32.gmra.mrb[0].mxu0 %v568
        %v679 = vpop.f32.mrb[0].mxu0
        %v680 = vadd.f32 0.0, %v679
        %v681 = vpop.f32.mrb[0].mxu0
        %682 = vmatprep.mubr.f32.mxu0 0.0
        %683 = vmatmul.mubr.f32.gmra.mrb[0].mxu0 %v569
        %v684 = vpop.f32.mrb[0].mxu0
        %v685 = vadd.f32 0.0, %v684
        %v686 = vpop.f32.mrb[0].mxu0
        %687 = vmatprep.mubr.f32.mxu0 0.0
        %688 = vmatmul.mubr.f32.gmra.mrb[0].mxu0 %v570
        %v689 = vpop.f32.mrb[0].mxu0
        %v690 = vadd.f32 0.0, %v689
        %v691 = vpop.f32.mrb[0].mxu0
        %692 = vmatprep.mubr.f32.mxu0 0.0
        %693 = vmatmul.mubr.f32.gmra.mrb[0].mxu0 %v571
        %v694 = vpop.f32.mrb[0].mxu0
        %v695 = vadd.f32 0.0, %v694
        %v696 = vpop.f32.mrb[0].mxu0
        %697 = vmatprep.mubr.f32.mxu0 0.0
        %698 = vmatmul.mubr.f32.gmra.mrb[0].mxu0 %v572
        %v699 = vpop.f32.mrb[0].mxu0
        %v700 = vadd.f32 0.0, %v699
        %v701 = vpop.f32.mrb[0].mxu0
        %702 = vmatprep.mubr.f32.mxu0 0.0
        %703 = vmatmul.mubr.f32.gmra.mrb[0].mxu0 %v573
        %v704 = vpop.f32.mrb[0].mxu0
        %v705 = vadd.f32 0.0, %v704
        %v706 = vpop.f32.mrb[0].mxu0
        %707 = vmatprep.mubr.f32.mxu0 0.0
        %708 = vmatmul.mubr.f32.gmra.mrb[0].mxu0 %v574
        %v709 = vpop.f32.mrb[0].mxu0
        %v710 = vadd.f32 0.0, %v709
        %v711 = vpop.f32.mrb[0].mxu0
        %712 = vmatprep.mubr.f32.mxu0 0.0
        %713 = vmatmul.mubr.f32.gmra.mrb[0].mxu0 %v575
        %v714 = vpop.f32.mrb[0].mxu0
        %v715 = vadd.f32 0.0, %v714
        %v716 = vpop.f32.mrb[0].mxu0
        %717 = vmatprep.mubr.f32.mxu0 0.0
        %718 = vmatmul.mubr.f32.gmra.mrb[0].mxu0 %v576
        %v719 = vpop.f32.mrb[0].mxu0
        %v720 = vadd.f32 0.0, %v719
        %v721 = vpop.f32.mrb[0].mxu0
        %722 = vmatprep.mubr.f32.mxu0 0.0
        %723 = vmatmul.mubr.f32.gmra.mrb[0].mxu0 %v577
        %v724 = vpop.f32.mrb[0].mxu0
        %v725 = vadd.f32 0.0, %v724
        %v726 = vpop.f32.mrb[0].mxu0
        %727 = vmatprep.mubr.f32.mxu0 0.0
        %728 = vmatmul.mubr.f32.gmra.mrb[0].mxu0 %v578
        %v729 = vpop.f32.mrb[0].mxu0
        %v730 = vadd.f32 0.0, %v729
        %v731 = vpop.f32.mrb[0].mxu0
        %732 = vmatprep.mubr.f32.mxu0 0.0
        %733 = vmatmul.mubr.f32.gmra.mrb[0].mxu0 %v579
        %v734 = vpop.f32.mrb[0].mxu0
        %v735 = vadd.f32 0.0, %v734
        %v736 = vpop.f32.mrb[0].mxu0
        %737 = vmatprep.mubr.f32.mxu0 0.0
        %738 = vmatmul.mubr.f32.gmra.mrb[0].mxu0 %v580
        %v739 = vpop.f32.mrb[0].mxu0
        %v740 = vadd.f32 0.0, %v739
        %v741 = vpop.f32.mrb[0].mxu0
        %742 = vmatprep.mubr.f32.mxu0 0.0
        %743 = vmatmul.mubr.f32.gmra.mrb[0].mxu0 %v581
        %v744 = vpop.f32.mrb[0].mxu0
        %v745 = vadd.f32 0.0, %v744
        %v746 = vpop.f32.mrb[0].mxu0
        %747 = vmatprep.mubr.f32.mxu0 0.0
        %748 = vmatmul.mubr.f32.gmra.mrb[0].mxu0 %v582
        %v749 = vpop.f32.mrb[0].mxu0
        %v750 = vadd.f32 0.0, %v749
        %v751 = vpop.f32.mrb[0].mxu0
        %752 = vmatprep.mubr.f32.mxu0 0.0
        %753 = vmatmul.mubr.f32.gmra.mrb[0].mxu0 %v583
        %v754 = vpop.f32.mrb[0].mxu0
        %v755 = vadd.f32 0.0, %v754
        %v756 = vpop.f32.mrb[0].mxu0
        %757 = vmatprep.mubr.f32.mxu0 0.0
        %758 = vmatmul.mubr.f32.gmra.mrb[0].mxu0 %v584
        %v759 = vpop.f32.mrb[0].mxu0
        %v760 = vadd.f32 0.0, %v759
        %v761 = vpop.f32.mrb[0].mxu0
        %762 = vmatprep.mubr.f32.mxu0 0.0
        %763 = vmatmul.mubr.f32.gmra.mrb[0].mxu0 %v585
        %v764 = vpop.f32.mrb[0].mxu0
        %v765 = vadd.f32 0.0, %v764
        %v766 = vpop.f32.mrb[0].mxu0
        %767 = vmatprep.mubr.f32.mxu0 0.0
        %768 = vmatmul.mubr.f32.gmra.mrb[0].mxu0 %v586
        %v769 = vpop.f32.mrb[0].mxu0
        %v770 = vadd.f32 0.0, %v769
        %v771 = vpop.f32.mrb[0].mxu0
        %772 = vmatprep.mubr.f32.mxu0 0.0
        %773 = vmatmul.mubr.f32.gmra.mrb[0].mxu0 %v587
        %v774 = vpop.f32.mrb[0].mxu0
        %v775 = vadd.f32 0.0, %v774
        %v776 = vpop.f32.mrb[0].mxu0
        %777 = vmatprep.mubr.f32.mxu0 0.0
        %778 = vmatmul.mubr.f32.gmra.mrb[0].mxu0 %v588
        %v779 = vpop.f32.mrb[0].mxu0
        %v780 = vadd.f32 0.0, %v779
        %v781 = vpop.f32.mrb[0].mxu0
        %782 = vmatprep.mubr.f32.mxu0 0.0
        %783 = vmatmul.mubr.f32.gmra.mrb[0].mxu0 %v589
        %v784 = vpop.f32.mrb[0].mxu0
        %v785 = vadd.f32 0.0, %v784
        %v786 = vpop.f32.mrb[0].mxu0
        %787 = vmatprep.mubr.f32.mxu0 0.0
        %788 = vmatmul.mubr.f32.gmra.mrb[0].mxu0 %v590
        %v789 = vpop.f32.mrb[0].mxu0
        %v790 = vadd.f32 0.0, %v789
        %v791 = vpop.f32.mrb[0].mxu0
        %792 = vmatprep.mubr.f32.mxu0 0.0
        %793 = vmatmul.mubr.f32.gmra.mrb[0].mxu0 %v591
        %v794 = vpop.f32.mrb[0].mxu0
        %v795 = vadd.f32 0.0, %v794
        %v796 = vpop.f32.mrb[0].mxu0
        %797 = vmatprep.mubr.f32.mxu0 0.0
        %798 = vmatmul.mubr.f32.gmra.mrb[0].mxu0 %v592
        %v799 = vpop.f32.mrb[0].mxu0
        %v800 = vadd.f32 0.0, %v799
        %v801 = vpop.f32.mrb[0].mxu0
        %802 = vmatprep.mubr.f32.mxu0 0.0
        %803 = vmatmul.mubr.f32.gmra.mrb[0].mxu0 %v593
        %v804 = vpop.f32.mrb[0].mxu0
        %v805 = vadd.f32 0.0, %v804
        %v806 = vpop.f32.mrb[0].mxu0
        %807 = vmatprep.mubr.f32.mxu0 0.0
        %808 = vmatmul.mubr.f32.gmra.mrb[0].mxu0 %v594
        %v809 = vpop.f32.mrb[0].mxu0
        %v810 = vadd.f32 0.0, %v809
        %v811 = vpop.f32.mrb[0].mxu0
        %812 = vmatprep.mubr.f32.mxu0 0.0
        %813 = vmatmul.mubr.f32.gmra.mrb[0].mxu0 %v595
        %v814 = vpop.f32.mrb[0].mxu0
        %v815 = vadd.f32 0.0, %v814
        %v816 = vpop.f32.mrb[0].mxu0
        %817 = vmatprep.mubr.f32.mxu0 0.0
        %818 = vmatmul.mubr.f32.gmra.mrb[0].mxu0 %v596
        %v819 = vpop.f32.mrb[0].mxu0
        %v820 = vadd.f32 0.0, %v819
        %v821 = vpop.f32.mrb[0].mxu0
        %822 = vmatprep.mubr.f32.mxu0 0.0
        %823 = vmatmul.mubr.f32.gmra.mrb[0].mxu0 %v597
        %v824 = vpop.f32.mrb[0].mxu0
        %v825 = vadd.f32 0.0, %v824
        %v826 = vpop.f32.mrb[0].mxu0
        %827 = vdwg.mxu0
        %828 = vmatprep.subr.mxu0 0.0
        %829 = vmatpush1.xpose.msra.mxu0 %v562
        %830 = vmatprep.subr.mxu0 0.0
        %831 = vmatpush1.xpose.msra.mxu0 %v563
        %832 = vmatprep.subr.mxu0 0.0
        %833 = vmatpush1.xpose.msra.mxu0 %v564
        %834 = vmatprep.subr.mxu0 0.0
        %835 = vmatpush1.xpose.msra.mxu0 %v565
        %836 = vmatprep.subr.mxu0 0.0
        %837 = vmatpush1.xpose.msra.mxu0 0.0
        %838 = vmatprep.subr.mxu0 0.0
        %839 = vmatpush1.xpose.msra.mxu0 0.0
        %840 = vmatprep.subr.mxu0 0.0
        %841 = vmatpush1.xpose.msra.mxu0 0.0
        %842 = vmatprep.subr.mxu0 0.0
        %843 = vmatpush1.xpose.msra.mxu0 0.0
        %844 = vmatprep.subr.mxu0 0.0
        %845 = vmatpush1.xpose.msra.mxu0 0.0
        %846 = vmatprep.subr.mxu0 0.0
        %847 = vmatpush1.xpose.msra.mxu0 0.0
        %848 = vmatprep.subr.mxu0 0.0
        %849 = vmatpush1.xpose.msra.mxu0 0.0
        %850 = vmatprep.subr.mxu0 0.0
        %851 = vmatpush1.xpose.msra.mxu0 0.0
        %852 = vmatprep.subr.mxu0 0.0
        %853 = vmatpush1.xpose.msra.mxu0 0.0
        %854 = vmatprep.subr.mxu0 0.0
        %855 = vmatpush1.xpose.msra.mxu0 0.0
        %856 = vmatprep.subr.mxu0 0.0
        %857 = vmatpush1.xpose.msra.mxu0 0.0
        %858 = vmatprep.subr.mxu0 0.0
        %859 = vmatpush1.xpose.msra.mxu0 0.0
        %860 = vmatprep.subr.mxu0 0.0
        %861 = vmatpush1.xpose.msra.mxu0 0.0
        %862 = vmatprep.subr.mxu0 0.0
        %863 = vmatpush1.xpose.msra.mxu0 0.0
        %864 = vmatprep.subr.mxu0 0.0
        %865 = vmatpush1.xpose.msra.mxu0 0.0
        %866 = vmatprep.subr.mxu0 0.0
        %867 = vmatpush1.xpose.msra.mxu0 0.0
        %868 = vmatprep.subr.mxu0 0.0
        %869 = vmatpush1.xpose.msra.mxu0 0.0
        %870 = vmatprep.subr.mxu0 0.0
        %871 = vmatpush1.xpose.msra.mxu0 0.0
        %872 = vmatprep.subr.mxu0 0.0
        %873 = vmatpush1.xpose.msra.mxu0 0.0
        %874 = vmatprep.subr.mxu0 0.0
        %875 = vmatpush1.xpose.msra.mxu0 0.0
        %876 = vmatprep.subr.mxu0 0.0
        %877 = vmatpush1.xpose.msra.mxu0 0.0
        %878 = vmatprep.subr.mxu0 0.0
        %879 = vmatpush1.xpose.msra.mxu0 0.0
        %880 = vmatprep.subr.mxu0 0.0
        %881 = vmatpush1.xpose.msra.mxu0 0.0
        %882 = vmatprep.subr.mxu0 0.0
        %883 = vmatpush1.xpose.msra.mxu0 0.0
        %884 = vmatprep.subr.mxu0 0.0
        %885 = vmatpush1.xpose.msra.mxu0 0.0
        %886 = vmatprep.subr.mxu0 0.0
        %887 = vmatpush1.xpose.msra.mxu0 0.0
        %888 = vmatprep.subr.mxu0 0.0
        %889 = vmatpush1.xpose.msra.mxu0 0.0
        %890 = vmatprep.subr.mxu0 0.0
        %891 = vmatpush1.xpose.msra.mxu0 0.0
        %892 = vmatprep.mubr.f32.mxu0 0.0
        %893 = vmatmul.mubr.f32.gmra.mrb[0].mxu0 %v530
        %v894 = vpop.f32.mrb[0].mxu0
        %v895 = vadd.f32 %v670, %v894
        %v896 = vpop.f32.mrb[0].mxu0
        %897 = vmatprep.mubr.f32.mxu0 0.0
        %898 = vmatmul.mubr.f32.gmra.mrb[0].mxu0 %v531
        %v899 = vpop.f32.mrb[0].mxu0
        %v900 = vadd.f32 %v675, %v899
        %v901 = vpop.f32.mrb[0].mxu0
        %902 = vmatprep.mubr.f32.mxu0 0.0
        %903 = vmatmul.mubr.f32.gmra.mrb[0].mxu0 %v532
        %v904 = vpop.f32.mrb[0].mxu0
        %v905 = vadd.f32 %v680, %v904
        %v906 = vpop.f32.mrb[0].mxu0
        %907 = vmatprep.mubr.f32.mxu0 0.0
        %908 = vmatmul.mubr.f32.gmra.mrb[0].mxu0 %v533
        %v909 = vpop.f32.mrb[0].mxu0
        %v910 = vadd.f32 %v685, %v909
        %v911 = vpop.f32.mrb[0].mxu0
        %912 = vmatprep.mubr.f32.mxu0 0.0
        %913 = vmatmul.mubr.f32.gmra.mrb[0].mxu0 %v534
        %v914 = vpop.f32.mrb[0].mxu0
        %v915 = vadd.f32 %v690, %v914
        %v916 = vpop.f32.mrb[0].mxu0
        %917 = vmatprep.mubr.f32.mxu0 0.0
        %918 = vmatmul.mubr.f32.gmra.mrb[0].mxu0 %v535
        %v919 = vpop.f32.mrb[0].mxu0
        %v920 = vadd.f32 %v695, %v919
        %v921 = vpop.f32.mrb[0].mxu0
        %922 = vmatprep.mubr.f32.mxu0 0.0
        %923 = vmatmul.mubr.f32.gmra.mrb[0].mxu0 %v536
        %v924 = vpop.f32.mrb[0].mxu0
        %v925 = vadd.f32 %v700, %v924
        %v926 = vpop.f32.mrb[0].mxu0
        %927 = vmatprep.mubr.f32.mxu0 0.0
        %928 = vmatmul.mubr.f32.gmra.mrb[0].mxu0 %v537
        %v929 = vpop.f32.mrb[0].mxu0
        %v930 = vadd.f32 %v705, %v929
        %v931 = vpop.f32.mrb[0].mxu0
        %932 = vmatprep.mubr.f32.mxu0 0.0
        %933 = vmatmul.mubr.f32.gmra.mrb[0].mxu0 %v538
        %v934 = vpop.f32.mrb[0].mxu0
        %v935 = vadd.f32 %v710, %v934
        %v936 = vpop.f32.mrb[0].mxu0
        %937 = vmatprep.mubr.f32.mxu0 0.0
        %938 = vmatmul.mubr.f32.gmra.mrb[0].mxu0 %v539
        %v939 = vpop.f32.mrb[0].mxu0
        %v940 = vadd.f32 %v715, %v939
        %v941 = vpop.f32.mrb[0].mxu0
        %942 = vmatprep.mubr.f32.mxu0 0.0
        %943 = vmatmul.mubr.f32.gmra.mrb[0].mxu0 %v540
        %v944 = vpop.f32.mrb[0].mxu0
        %v945 = vadd.f32 %v720, %v944
        %v946 = vpop.f32.mrb[0].mxu0
        %947 = vmatprep.mubr.f32.mxu0 0.0
        %948 = vmatmul.mubr.f32.gmra.mrb[0].mxu0 %v541
        %v949 = vpop.f32.mrb[0].mxu0
        %v950 = vadd.f32 %v725, %v949
        %v951 = vpop.f32.mrb[0].mxu0
        %952 = vmatprep.mubr.f32.mxu0 0.0
        %953 = vmatmul.mubr.f32.gmra.mrb[0].mxu0 %v542
        %v954 = vpop.f32.mrb[0].mxu0
        %v955 = vadd.f32 %v730, %v954
        %v956 = vpop.f32.mrb[0].mxu0
        %957 = vmatprep.mubr.f32.mxu0 0.0
        %958 = vmatmul.mubr.f32.gmra.mrb[0].mxu0 %v543
        %v959 = vpop.f32.mrb[0].mxu0
        %v960 = vadd.f32 %v735, %v959
        %v961 = vpop.f32.mrb[0].mxu0
        %962 = vmatprep.mubr.f32.mxu0 0.0
        %963 = vmatmul.mubr.f32.gmra.mrb[0].mxu0 %v544
        %v964 = vpop.f32.mrb[0].mxu0
        %v965 = vadd.f32 %v740, %v964
        %v966 = vpop.f32.mrb[0].mxu0
        %967 = vmatprep.mubr.f32.mxu0 0.0
        %968 = vmatmul.mubr.f32.gmra.mrb[0].mxu0 %v545
        %v969 = vpop.f32.mrb[0].mxu0
        %v970 = vadd.f32 %v745, %v969
        %v971 = vpop.f32.mrb[0].mxu0
        %972 = vmatprep.mubr.f32.mxu0 0.0
        %973 = vmatmul.mubr.f32.gmra.mrb[0].mxu0 %v546
        %v974 = vpop.f32.mrb[0].mxu0
        %v975 = vadd.f32 %v750, %v974
        %v976 = vpop.f32.mrb[0].mxu0
        %977 = vmatprep.mubr.f32.mxu0 0.0
        %978 = vmatmul.mubr.f32.gmra.mrb[0].mxu0 %v547
        %v979 = vpop.f32.mrb[0].mxu0
        %v980 = vadd.f32 %v755, %v979
        %v981 = vpop.f32.mrb[0].mxu0
        %982 = vmatprep.mubr.f32.mxu0 0.0
        %983 = vmatmul.mubr.f32.gmra.mrb[0].mxu0 %v548
        %v984 = vpop.f32.mrb[0].mxu0
        %v985 = vadd.f32 %v760, %v984
        %v986 = vpop.f32.mrb[0].mxu0
        %987 = vmatprep.mubr.f32.mxu0 0.0
        %988 = vmatmul.mubr.f32.gmra.mrb[0].mxu0 %v549
        %v989 = vpop.f32.mrb[0].mxu0
        %v990 = vadd.f32 %v765, %v989
        %v991 = vpop.f32.mrb[0].mxu0
        %992 = vmatprep.mubr.f32.mxu0 0.0
        %993 = vmatmul.mubr.f32.gmra.mrb[0].mxu0 %v550
        %v994 = vpop.f32.mrb[0].mxu0
        %v995 = vadd.f32 %v770, %v994
        %v996 = vpop.f32.mrb[0].mxu0
        %997 = vmatprep.mubr.f32.mxu0 0.0
        %998 = vmatmul.mubr.f32.gmra.mrb[0].mxu0 %v551
        %v999 = vpop.f32.mrb[0].mxu0
        %v1000 = vadd.f32 %v775, %v999
        %v1001 = vpop.f32.mrb[0].mxu0
        %1002 = vmatprep.mubr.f32.mxu0 0.0
        %1003 = vmatmul.mubr.f32.gmra.mrb[0].mxu0 %v552
        %v1004 = vpop.f32.mrb[0].mxu0
        %v1005 = vadd.f32 %v780, %v1004
        %v1006 = vpop.f32.mrb[0].mxu0
        %1007 = vmatprep.mubr.f32.mxu0 0.0
        %1008 = vmatmul.mubr.f32.gmra.mrb[0].mxu0 %v553
        %v1009 = vpop.f32.mrb[0].mxu0
        %v1010 = vadd.f32 %v785, %v1009
        %v1011 = vpop.f32.mrb[0].mxu0
        %1012 = vmatprep.mubr.f32.mxu0 0.0
        %1013 = vmatmul.mubr.f32.gmra.mrb[0].mxu0 %v554
        %v1014 = vpop.f32.mrb[0].mxu0
        %v1015 = vadd.f32 %v790, %v1014
        %v1016 = vpop.f32.mrb[0].mxu0
        %1017 = vmatprep.mubr.f32.mxu0 0.0
        %1018 = vmatmul.mubr.f32.gmra.mrb[0].mxu0 %v555
        %v1019 = vpop.f32.mrb[0].mxu0
        %v1020 = vadd.f32 %v795, %v1019
        %v1021 = vpop.f32.mrb[0].mxu0
        %1022 = vmatprep.mubr.f32.mxu0 0.0
        %1023 = vmatmul.mubr.f32.gmra.mrb[0].mxu0 %v556
        %v1024 = vpop.f32.mrb[0].mxu0
        %v1025 = vadd.f32 %v800, %v1024
        %v1026 = vpop.f32.mrb[0].mxu0
        %1027 = vmatprep.mubr.f32.mxu0 0.0
        %1028 = vmatmul.mubr.f32.gmra.mrb[0].mxu0 %v557
        %v1029 = vpop.f32.mrb[0].mxu0
        %v1030 = vadd.f32 %v805, %v1029
        %v1031 = vpop.f32.mrb[0].mxu0
        %1032 = vmatprep.mubr.f32.mxu0 0.0
        %1033 = vmatmul.mubr.f32.gmra.mrb[0].mxu0 %v558
        %v1034 = vpop.f32.mrb[0].mxu0
        %v1035 = vadd.f32 %v810, %v1034
        %v1036 = vpop.f32.mrb[0].mxu0
        %1037 = vmatprep.mubr.f32.mxu0 0.0
        %1038 = vmatmul.mubr.f32.gmra.mrb[0].mxu0 %v559
        %v1039 = vpop.f32.mrb[0].mxu0
        %v1040 = vadd.f32 %v815, %v1039
        %v1041 = vpop.f32.mrb[0].mxu0
        %1042 = vmatprep.mubr.f32.mxu0 0.0
        %1043 = vmatmul.mubr.f32.gmra.mrb[0].mxu0 %v560
        %v1044 = vpop.f32.mrb[0].mxu0
        %v1045 = vadd.f32 %v820, %v1044
        %v1046 = vpop.f32.mrb[0].mxu0
        %1047 = vmatprep.mubr.f32.mxu0 0.0
        %1048 = vmatmul.mubr.f32.gmra.mrb[0].mxu0 %v561
        %v1049 = vpop.f32.mrb[0].mxu0
        %v1050 = vadd.f32 %v825, %v1049
        %v1051 = vpop.f32.mrb[0].mxu0
        %1052 = vdwg.mxu0
        %v1053 = vld [vmem:[%s529 + $0x4] sm:$0xff]
        %v1054 = vld [vmem:[%s529 + $0xc] sm:$0xff]
        %v1055 = vld [vmem:[%s529 + $0x1c] sm:$0xff]
        %v1056 = vld [vmem:[%s529 + $0x24] sm:$0xff]
        %v1057 = vld [vmem:[%s529 + $0x34] sm:$0xff]
        %v1058 = vld [vmem:[%s529 + $0x3c] sm:$0xff]
        %v1059 = vld [vmem:[%s529 + $0x4c] sm:$0xff]
        %v1060 = vld [vmem:[%s529 + $0x54] sm:$0xff]
        %v1061 = vld [vmem:[%s529 + $0x64] sm:$0xff]
        %v1062 = vld [vmem:[%s529 + $0x6c] sm:$0xff]
        %v1063 = vld [vmem:[%s529 + $0x7c] sm:$0xff]
        %v1064 = vld [vmem:[%s529 + $0x84] sm:$0xff]
        %v1065 = vld [vmem:[%s529 + $0x94] sm:$0xff]
        %v1066 = vld [vmem:[%s529 + $0x9c] sm:$0xff]
        %v1067 = vld [vmem:[%s529 + $0xac] sm:$0xff]
        %v1068 = vld [vmem:[%s529 + $0xb4] sm:$0xff]
        %v1069 = vld [vmem:[%s529 + $0xc4] sm:$0xff]
        %v1070 = vld [vmem:[%s529 + $0xcc] sm:$0xff]
        %v1071 = vld [vmem:[%s529 + $0xdc] sm:$0xff]
        %v1072 = vld [vmem:[%s529 + $0xe4] sm:$0xff]
        %v1073 = vld [vmem:[%s529 + $0xf4] sm:$0xff]
        %v1074 = vld [vmem:[%s529 + $0xfc] sm:$0xff]
        %v1075 = vld [vmem:[%s529 + $0x10c] sm:$0xff]
        %v1076 = vld [vmem:[%s529 + $0x114] sm:$0xff]
        %v1077 = vld [vmem:[%s529 + $0x124] sm:$0xff]
        %v1078 = vld [vmem:[%s529 + $0x12c] sm:$0xff]
        %v1079 = vld [vmem:[%s529 + $0x13c] sm:$0xff]
        %v1080 = vld [vmem:[%s529 + $0x144] sm:$0xff]
        %v1081 = vld [vmem:[%s529 + $0x154] sm:$0xff]
        %v1082 = vld [vmem:[%s529 + $0x15c] sm:$0xff]
        %v1083 = vld [vmem:[%s529 + $0x16c] sm:$0xff]
        %v1084 = vld [vmem:[%s529 + $0x174] sm:$0xff]
        %s1085 = scalar_lea.vmem %s2, 64
        %v1086 = vld [vmem:[%s1085] sm:$0xff]
        %v1087 = vld [vmem:[%s1085 + $0x8] sm:$0xff]
        %v1088 = vld [vmem:[%s1085 + $0x10] sm:$0xff]
        %v1089 = vld [vmem:[%s1085 + $0x18] sm:$0xff]
        %1090 = vmatprep.subr.mxu0 0.0
        %1091 = vmatpush1.xpose.msra.mxu0 %v1086
        %1092 = vmatprep.subr.mxu0 0.0
        %1093 = vmatpush1.xpose.msra.mxu0 %v1087
        %1094 = vmatprep.subr.mxu0 0.0
        %1095 = vmatpush1.xpose.msra.mxu0 %v1088
        %1096 = vmatprep.subr.mxu0 0.0
        %1097 = vmatpush1.xpose.msra.mxu0 %v1089
        %1098 = vmatprep.subr.mxu0 0.0
        %1099 = vmatpush1.xpose.msra.mxu0 0.0
        %1100 = vmatprep.subr.mxu0 0.0
        %1101 = vmatpush1.xpose.msra.mxu0 0.0
        %1102 = vmatprep.subr.mxu0 0.0
        %1103 = vmatpush1.xpose.msra.mxu0 0.0
        %1104 = vmatprep.subr.mxu0 0.0
        %1105 = vmatpush1.xpose.msra.mxu0 0.0
        %1106 = vmatprep.subr.mxu0 0.0
        %1107 = vmatpush1.xpose.msra.mxu0 0.0
        %1108 = vmatprep.subr.mxu0 0.0
        %1109 = vmatpush1.xpose.msra.mxu0 0.0
        %1110 = vmatprep.subr.mxu0 0.0
        %1111 = vmatpush1.xpose.msra.mxu0 0.0
        %1112 = vmatprep.subr.mxu0 0.0
        %1113 = vmatpush1.xpose.msra.mxu0 0.0
        %1114 = vmatprep.subr.mxu0 0.0
        %1115 = vmatpush1.xpose.msra.mxu0 0.0
        %1116 = vmatprep.subr.mxu0 0.0
        %1117 = vmatpush1.xpose.msra.mxu0 0.0
        %1118 = vmatprep.subr.mxu0 0.0
        %1119 = vmatpush1.xpose.msra.mxu0 0.0
        %1120 = vmatprep.subr.mxu0 0.0
        %1121 = vmatpush1.xpose.msra.mxu0 0.0
        %1122 = vmatprep.subr.mxu0 0.0
        %1123 = vmatpush1.xpose.msra.mxu0 0.0
        %1124 = vmatprep.subr.mxu0 0.0
        %1125 = vmatpush1.xpose.msra.mxu0 0.0
        %1126 = vmatprep.subr.mxu0 0.0
        %1127 = vmatpush1.xpose.msra.mxu0 0.0
        %1128 = vmatprep.subr.mxu0 0.0
        %1129 = vmatpush1.xpose.msra.mxu0 0.0
        %1130 = vmatprep.subr.mxu0 0.0
        %1131 = vmatpush1.xpose.msra.mxu0 0.0
        %1132 = vmatprep.subr.mxu0 0.0
        %1133 = vmatpush1.xpose.msra.mxu0 0.0
        %1134 = vmatprep.subr.mxu0 0.0
        %1135 = vmatpush1.xpose.msra.mxu0 0.0
        %1136 = vmatprep.subr.mxu0 0.0
        %1137 = vmatpush1.xpose.msra.mxu0 0.0
        %1138 = vmatprep.subr.mxu0 0.0
        %1139 = vmatpush1.xpose.msra.mxu0 0.0
        %1140 = vmatprep.subr.mxu0 0.0
        %1141 = vmatpush1.xpose.msra.mxu0 0.0
        %1142 = vmatprep.subr.mxu0 0.0
        %1143 = vmatpush1.xpose.msra.mxu0 0.0
        %1144 = vmatprep.subr.mxu0 0.0
        %1145 = vmatpush1.xpose.msra.mxu0 0.0
        %1146 = vmatprep.subr.mxu0 0.0
        %1147 = vmatpush1.xpose.msra.mxu0 0.0
        %1148 = vmatprep.subr.mxu0 0.0
        %1149 = vmatpush1.xpose.msra.mxu0 0.0
        %1150 = vmatprep.subr.mxu0 0.0
        %1151 = vmatpush1.xpose.msra.mxu0 0.0
        %1152 = vmatprep.subr.mxu0 0.0
        %1153 = vmatpush1.xpose.msra.mxu0 0.0
        %1154 = vmatprep.mubr.f32.mxu0 0.0
        %1155 = vmatmul.mubr.f32.gmra.mrb[0].mxu0 %v1053
        %v1156 = vpop.f32.mrb[0].mxu0
        %v1157 = vadd.f32 0.0, %v1156
        %v1158 = vpop.f32.mrb[0].mxu0
        %1159 = vmatprep.mubr.f32.mxu0 0.0
        %1160 = vmatmul.mubr.f32.gmra.mrb[0].mxu0 %v1054
        %v1161 = vpop.f32.mrb[0].mxu0
        %v1162 = vadd.f32 0.0, %v1161
        %v1163 = vpop.f32.mrb[0].mxu0
        %1164 = vmatprep.mubr.f32.mxu0 0.0
        %1165 = vmatmul.mubr.f32.gmra.mrb[0].mxu0 %v1055
        %v1166 = vpop.f32.mrb[0].mxu0
        %v1167 = vadd.f32 0.0, %v1166
        %v1168 = vpop.f32.mrb[0].mxu0
        %1169 = vmatprep.mubr.f32.mxu0 0.0
        %1170 = vmatmul.mubr.f32.gmra.mrb[0].mxu0 %v1056
        %v1171 = vpop.f32.mrb[0].mxu0
        %v1172 = vadd.f32 0.0, %v1171
        %v1173 = vpop.f32.mrb[0].mxu0
        %1174 = vmatprep.mubr.f32.mxu0 0.0
        %1175 = vmatmul.mubr.f32.gmra.mrb[0].mxu0 %v1057
        %v1176 = vpop.f32.mrb[0].mxu0
        %v1177 = vadd.f32 0.0, %v1176
        %v1178 = vpop.f32.mrb[0].mxu0
        %1179 = vmatprep.mubr.f32.mxu0 0.0
        %1180 = vmatmul.mubr.f32.gmra.mrb[0].mxu0 %v1058
        %v1181 = vpop.f32.mrb[0].mxu0
        %v1182 = vadd.f32 0.0, %v1181
        %v1183 = vpop.f32.mrb[0].mxu0
        %1184 = vmatprep.mubr.f32.mxu0 0.0
        %1185 = vmatmul.mubr.f32.gmra.mrb[0].mxu0 %v1059
        %v1186 = vpop.f32.mrb[0].mxu0
        %v1187 = vadd.f32 0.0, %v1186
        %v1188 = vpop.f32.mrb[0].mxu0
        %1189 = vmatprep.mubr.f32.mxu0 0.0
        %1190 = vmatmul.mubr.f32.gmra.mrb[0].mxu0 %v1060
        %v1191 = vpop.f32.mrb[0].mxu0
        %v1192 = vadd.f32 0.0, %v1191
        %v1193 = vpop.f32.mrb[0].mxu0
        %1194 = vmatprep.mubr.f32.mxu0 0.0
        %1195 = vmatmul.mubr.f32.gmra.mrb[0].mxu0 %v1061
        %v1196 = vpop.f32.mrb[0].mxu0
        %v1197 = vadd.f32 0.0, %v1196
        %v1198 = vpop.f32.mrb[0].mxu0
        %1199 = vmatprep.mubr.f32.mxu0 0.0
        %1200 = vmatmul.mubr.f32.gmra.mrb[0].mxu0 %v1062
        %v1201 = vpop.f32.mrb[0].mxu0
        %v1202 = vadd.f32 0.0, %v1201
        %v1203 = vpop.f32.mrb[0].mxu0
        %1204 = vmatprep.mubr.f32.mxu0 0.0
        %1205 = vmatmul.mubr.f32.gmra.mrb[0].mxu0 %v1063
        %v1206 = vpop.f32.mrb[0].mxu0
        %v1207 = vadd.f32 0.0, %v1206
        %v1208 = vpop.f32.mrb[0].mxu0
        %1209 = vmatprep.mubr.f32.mxu0 0.0
        %1210 = vmatmul.mubr.f32.gmra.mrb[0].mxu0 %v1064
        %v1211 = vpop.f32.mrb[0].mxu0
        %v1212 = vadd.f32 0.0, %v1211
        %v1213 = vpop.f32.mrb[0].mxu0
        %1214 = vmatprep.mubr.f32.mxu0 0.0
        %1215 = vmatmul.mubr.f32.gmra.mrb[0].mxu0 %v1065
        %v1216 = vpop.f32.mrb[0].mxu0
        %v1217 = vadd.f32 0.0, %v1216
        %v1218 = vpop.f32.mrb[0].mxu0
        %1219 = vmatprep.mubr.f32.mxu0 0.0
        %1220 = vmatmul.mubr.f32.gmra.mrb[0].mxu0 %v1066
        %v1221 = vpop.f32.mrb[0].mxu0
        %v1222 = vadd.f32 0.0, %v1221
        %v1223 = vpop.f32.mrb[0].mxu0
        %1224 = vmatprep.mubr.f32.mxu0 0.0
        %1225 = vmatmul.mubr.f32.gmra.mrb[0].mxu0 %v1067
        %v1226 = vpop.f32.mrb[0].mxu0
        %v1227 = vadd.f32 0.0, %v1226
        %v1228 = vpop.f32.mrb[0].mxu0
        %1229 = vmatprep.mubr.f32.mxu0 0.0
        %1230 = vmatmul.mubr.f32.gmra.mrb[0].mxu0 %v1068
        %v1231 = vpop.f32.mrb[0].mxu0
        %v1232 = vadd.f32 0.0, %v1231
        %v1233 = vpop.f32.mrb[0].mxu0
        %1234 = vmatprep.mubr.f32.mxu0 0.0
        %1235 = vmatmul.mubr.f32.gmra.mrb[0].mxu0 %v1069
        %v1236 = vpop.f32.mrb[0].mxu0
        %v1237 = vadd.f32 0.0, %v1236
        %v1238 = vpop.f32.mrb[0].mxu0
        %1239 = vmatprep.mubr.f32.mxu0 0.0
        %1240 = vmatmul.mubr.f32.gmra.mrb[0].mxu0 %v1070
        %v1241 = vpop.f32.mrb[0].mxu0
        %v1242 = vadd.f32 0.0, %v1241
        %v1243 = vpop.f32.mrb[0].mxu0
        %1244 = vmatprep.mubr.f32.mxu0 0.0
        %1245 = vmatmul.mubr.f32.gmra.mrb[0].mxu0 %v1071
        %v1246 = vpop.f32.mrb[0].mxu0
        %v1247 = vadd.f32 0.0, %v1246
        %v1248 = vpop.f32.mrb[0].mxu0
        %1249 = vmatprep.mubr.f32.mxu0 0.0
        %1250 = vmatmul.mubr.f32.gmra.mrb[0].mxu0 %v1072
        %v1251 = vpop.f32.mrb[0].mxu0
        %v1252 = vadd.f32 0.0, %v1251
        %v1253 = vpop.f32.mrb[0].mxu0
        %1254 = vmatprep.mubr.f32.mxu0 0.0
        %1255 = vmatmul.mubr.f32.gmra.mrb[0].mxu0 %v1073
        %v1256 = vpop.f32.mrb[0].mxu0
        %v1257 = vadd.f32 0.0, %v1256
        %v1258 = vpop.f32.mrb[0].mxu0
        %1259 = vmatprep.mubr.f32.mxu0 0.0
        %1260 = vmatmul.mubr.f32.gmra.mrb[0].mxu0 %v1074
        %v1261 = vpop.f32.mrb[0].mxu0
        %v1262 = vadd.f32 0.0, %v1261
        %v1263 = vpop.f32.mrb[0].mxu0
        %1264 = vmatprep.mubr.f32.mxu0 0.0
        %1265 = vmatmul.mubr.f32.gmra.mrb[0].mxu0 %v1075
        %v1266 = vpop.f32.mrb[0].mxu0
        %v1267 = vadd.f32 0.0, %v1266
        %v1268 = vpop.f32.mrb[0].mxu0
        %1269 = vmatprep.mubr.f32.mxu0 0.0
        %1270 = vmatmul.mubr.f32.gmra.mrb[0].mxu0 %v1076
        %v1271 = vpop.f32.mrb[0].mxu0
        %v1272 = vadd.f32 0.0, %v1271
        %v1273 = vpop.f32.mrb[0].mxu0
        %1274 = vmatprep.mubr.f32.mxu0 0.0
        %1275 = vmatmul.mubr.f32.gmra.mrb[0].mxu0 %v1077
        %v1276 = vpop.f32.mrb[0].mxu0
        %v1277 = vadd.f32 0.0, %v1276
        %v1278 = vpop.f32.mrb[0].mxu0
        %1279 = vmatprep.mubr.f32.mxu0 0.0
        %1280 = vmatmul.mubr.f32.gmra.mrb[0].mxu0 %v1078
        %v1281 = vpop.f32.mrb[0].mxu0
        %v1282 = vadd.f32 0.0, %v1281
        %v1283 = vpop.f32.mrb[0].mxu0
        %1284 = vmatprep.mubr.f32.mxu0 0.0
        %1285 = vmatmul.mubr.f32.gmra.mrb[0].mxu0 %v1079
        %v1286 = vpop.f32.mrb[0].mxu0
        %v1287 = vadd.f32 0.0, %v1286
        %v1288 = vpop.f32.mrb[0].mxu0
        %1289 = vmatprep.mubr.f32.mxu0 0.0
        %1290 = vmatmul.mubr.f32.gmra.mrb[0].mxu0 %v1080
        %v1291 = vpop.f32.mrb[0].mxu0
        %v1292 = vadd.f32 0.0, %v1291
        %v1293 = vpop.f32.mrb[0].mxu0
        %1294 = vmatprep.mubr.f32.mxu0 0.0
        %1295 = vmatmul.mubr.f32.gmra.mrb[0].mxu0 %v1081
        %v1296 = vpop.f32.mrb[0].mxu0
        %v1297 = vadd.f32 0.0, %v1296
        %v1298 = vpop.f32.mrb[0].mxu0
        %1299 = vmatprep.mubr.f32.mxu0 0.0
        %1300 = vmatmul.mubr.f32.gmra.mrb[0].mxu0 %v1082
        %v1301 = vpop.f32.mrb[0].mxu0
        %v1302 = vadd.f32 0.0, %v1301
        %v1303 = vpop.f32.mrb[0].mxu0
        %1304 = vmatprep.mubr.f32.mxu0 0.0
        %1305 = vmatmul.mubr.f32.gmra.mrb[0].mxu0 %v1083
        %v1306 = vpop.f32.mrb[0].mxu0
        %v1307 = vadd.f32 0.0, %v1306
        %v1308 = vpop.f32.mrb[0].mxu0
        %1309 = vmatprep.mubr.f32.mxu0 0.0
        %1310 = vmatmul.mubr.f32.gmra.mrb[0].mxu0 %v1084
        %v1311 = vpop.f32.mrb[0].mxu0
        %v1312 = vadd.f32 0.0, %v1311
        %v1313 = vpop.f32.mrb[0].mxu0
        %1314 = vdwg.mxu0
        %v1315 = vadd.f32 %v895, %v1157
        %v1316 = vadd.f32 %v900, %v1162
        %v1317 = vadd.f32 %v905, %v1167
        %v1318 = vadd.f32 %v910, %v1172
        %v1319 = vadd.f32 %v915, %v1177
        %v1320 = vadd.f32 %v920, %v1182
        %v1321 = vadd.f32 %v925, %v1187
        %v1322 = vadd.f32 %v930, %v1192
        %v1323 = vadd.f32 %v935, %v1197
        %v1324 = vadd.f32 %v940, %v1202
        %v1325 = vadd.f32 %v945, %v1207
        %v1326 = vadd.f32 %v950, %v1212
        %v1327 = vadd.f32 %v955, %v1217
        %v1328 = vadd.f32 %v960, %v1222
        %v1329 = vadd.f32 %v965, %v1227
        %v1330 = vadd.f32 %v970, %v1232
        %v1331 = vadd.f32 %v975, %v1237
        %v1332 = vadd.f32 %v980, %v1242
        %v1333 = vadd.f32 %v985, %v1247
        %v1334 = vadd.f32 %v990, %v1252
        %v1335 = vadd.f32 %v995, %v1257
        %v1336 = vadd.f32 %v1000, %v1262
        %v1337 = vadd.f32 %v1005, %v1267
        %v1338 = vadd.f32 %v1010, %v1272
        %v1339 = vadd.f32 %v1015, %v1277
        %v1340 = vadd.f32 %v1020, %v1282
        %v1341 = vadd.f32 %v1025, %v1287
        %v1342 = vadd.f32 %v1030, %v1292
        %v1343 = vadd.f32 %v1035, %v1297
        %v1344 = vadd.f32 %v1040, %v1302
        %v1345 = vadd.f32 %v1045, %v1307
        %v1346 = vadd.f32 %v1050, %v1312
        %v1347 = vld [vmem:[%s223 + $0x2] sm:$0xff]
        %v1348 = vld [vmem:[%s223 + $0xa] sm:$0xff]
        %v1349 = vld [vmem:[%s223 + $0x1a] sm:$0xff]
        %v1350 = vld [vmem:[%s223 + $0x22] sm:$0xff]
        %v1351 = vld [vmem:[%s223 + $0x32] sm:$0xff]
        %v1352 = vld [vmem:[%s223 + $0x3a] sm:$0xff]
        %v1353 = vld [vmem:[%s223 + $0x4a] sm:$0xff]
        %v1354 = vld [vmem:[%s223 + $0x52] sm:$0xff]
        %v1355 = vld [vmem:[%s223 + $0x62] sm:$0xff]
        %v1356 = vld [vmem:[%s223 + $0x6a] sm:$0xff]
        %v1357 = vld [vmem:[%s223 + $0x7a] sm:$0xff]
        %v1358 = vld [vmem:[%s223 + $0x82] sm:$0xff]
        %v1359 = vld [vmem:[%s223 + $0x92] sm:$0xff]
        %v1360 = vld [vmem:[%s223 + $0x9a] sm:$0xff]
        %v1361 = vld [vmem:[%s223 + $0xaa] sm:$0xff]
        %v1362 = vld [vmem:[%s223 + $0xb2] sm:$0xff]
        %v1363 = vld [vmem:[%s223 + $0xc2] sm:$0xff]
        %v1364 = vld [vmem:[%s223 + $0xca] sm:$0xff]
        %v1365 = vld [vmem:[%s223 + $0xda] sm:$0xff]
        %v1366 = vld [vmem:[%s223 + $0xe2] sm:$0xff]
        %v1367 = vld [vmem:[%s223 + $0xf2] sm:$0xff]
        %v1368 = vld [vmem:[%s223 + $0xfa] sm:$0xff]
        %v1369 = vld [vmem:[%s223 + $0x10a] sm:$0xff]
        %v1370 = vld [vmem:[%s223 + $0x112] sm:$0xff]
        %v1371 = vld [vmem:[%s223 + $0x122] sm:$0xff]
        %v1372 = vld [vmem:[%s223 + $0x12a] sm:$0xff]
        %v1373 = vld [vmem:[%s223 + $0x13a] sm:$0xff]
        %v1374 = vld [vmem:[%s223 + $0x142] sm:$0xff]
        %v1375 = vld [vmem:[%s223 + $0x152] sm:$0xff]
        %v1376 = vld [vmem:[%s223 + $0x15a] sm:$0xff]
        %v1377 = vld [vmem:[%s223 + $0x16a] sm:$0xff]
        %v1378 = vld [vmem:[%s223 + $0x172] sm:$0xff]
        %s1379 = scalar_lea.vmem %s2, 96
        %v1380 = vld [vmem:[%s1379] sm:$0xff]
        %v1381 = vld [vmem:[%s1379 + $0x8] sm:$0xff]
        %v1382 = vld [vmem:[%s1379 + $0x10] sm:$0xff]
        %v1383 = vld [vmem:[%s1379 + $0x18] sm:$0xff]
        %1384 = vmatprep.subr.mxu0 0.0
        %1385 = vmatpush1.xpose.msra.mxu0 %v1380
        %1386 = vmatprep.subr.mxu0 0.0
        %1387 = vmatpush1.xpose.msra.mxu0 %v1381
        %1388 = vmatprep.subr.mxu0 0.0
        %1389 = vmatpush1.xpose.msra.mxu0 %v1382
        %1390 = vmatprep.subr.mxu0 0.0
        %1391 = vmatpush1.xpose.msra.mxu0 %v1383
        %1392 = vmatprep.subr.mxu0 0.0
        %1393 = vmatpush1.xpose.msra.mxu0 0.0
        %1394 = vmatprep.subr.mxu0 0.0
        %1395 = vmatpush1.xpose.msra.mxu0 0.0
        %1396 = vmatprep.subr.mxu0 0.0
        %1397 = vmatpush1.xpose.msra.mxu0 0.0
        %1398 = vmatprep.subr.mxu0 0.0
        %1399 = vmatpush1.xpose.msra.mxu0 0.0
        %1400 = vmatprep.subr.mxu0 0.0
        %1401 = vmatpush1.xpose.msra.mxu0 0.0
        %1402 = vmatprep.subr.mxu0 0.0
        %1403 = vmatpush1.xpose.msra.mxu0 0.0
        %1404 = vmatprep.subr.mxu0 0.0
        %1405 = vmatpush1.xpose.msra.mxu0 0.0
        %1406 = vmatprep.subr.mxu0 0.0
        %1407 = vmatpush1.xpose.msra.mxu0 0.0
        %1408 = vmatprep.subr.mxu0 0.0
        %1409 = vmatpush1.xpose.msra.mxu0 0.0
        %1410 = vmatprep.subr.mxu0 0.0
        %1411 = vmatpush1.xpose.msra.mxu0 0.0
        %1412 = vmatprep.subr.mxu0 0.0
        %1413 = vmatpush1.xpose.msra.mxu0 0.0
        %1414 = vmatprep.subr.mxu0 0.0
        %1415 = vmatpush1.xpose.msra.mxu0 0.0
        %1416 = vmatprep.subr.mxu0 0.0
        %1417 = vmatpush1.xpose.msra.mxu0 0.0
        %1418 = vmatprep.subr.mxu0 0.0
        %1419 = vmatpush1.xpose.msra.mxu0 0.0
        %1420 = vmatprep.subr.mxu0 0.0
        %1421 = vmatpush1.xpose.msra.mxu0 0.0
        %1422 = vmatprep.subr.mxu0 0.0
        %1423 = vmatpush1.xpose.msra.mxu0 0.0
        %1424 = vmatprep.subr.mxu0 0.0
        %1425 = vmatpush1.xpose.msra.mxu0 0.0
        %1426 = vmatprep.subr.mxu0 0.0
        %1427 = vmatpush1.xpose.msra.mxu0 0.0
        %1428 = vmatprep.subr.mxu0 0.0
        %1429 = vmatpush1.xpose.msra.mxu0 0.0
        %1430 = vmatprep.subr.mxu0 0.0
        %1431 = vmatpush1.xpose.msra.mxu0 0.0
        %1432 = vmatprep.subr.mxu0 0.0
        %1433 = vmatpush1.xpose.msra.mxu0 0.0
        %1434 = vmatprep.subr.mxu0 0.0
        %1435 = vmatpush1.xpose.msra.mxu0 0.0
        %1436 = vmatprep.subr.mxu0 0.0
        %1437 = vmatpush1.xpose.msra.mxu0 0.0
        %1438 = vmatprep.subr.mxu0 0.0
        %1439 = vmatpush1.xpose.msra.mxu0 0.0
        %1440 = vmatprep.subr.mxu0 0.0
        %1441 = vmatpush1.xpose.msra.mxu0 0.0
        %1442 = vmatprep.subr.mxu0 0.0
        %1443 = vmatpush1.xpose.msra.mxu0 0.0
        %1444 = vmatprep.subr.mxu0 0.0
        %1445 = vmatpush1.xpose.msra.mxu0 0.0
        %1446 = vmatprep.subr.mxu0 0.0
        %1447 = vmatpush1.xpose.msra.mxu0 0.0
        %1448 = vmatprep.mubr.f32.mxu0 0.0
        %1449 = vmatmul.mubr.f32.gmra.mrb[0].mxu0 %v1347
        %v1450 = vpop.f32.mrb[0].mxu0
        %v1451 = vadd.f32 0.0, %v1450
        %v1452 = vpop.f32.mrb[0].mxu0
        %1453 = vmatprep.mubr.f32.mxu0 0.0
        %1454 = vmatmul.mubr.f32.gmra.mrb[0].mxu0 %v1348
        %v1455 = vpop.f32.mrb[0].mxu0
        %v1456 = vadd.f32 0.0, %v1455
        %v1457 = vpop.f32.mrb[0].mxu0
        %1458 = vmatprep.mubr.f32.mxu0 0.0
        %1459 = vmatmul.mubr.f32.gmra.mrb[0].mxu0 %v1349
        %v1460 = vpop.f32.mrb[0].mxu0
        %v1461 = vadd.f32 0.0, %v1460
        %v1462 = vpop.f32.mrb[0].mxu0
        %1463 = vmatprep.mubr.f32.mxu0 0.0
        %1464 = vmatmul.mubr.f32.gmra.mrb[0].mxu0 %v1350
        %v1465 = vpop.f32.mrb[0].mxu0
        %v1466 = vadd.f32 0.0, %v1465
        %v1467 = vpop.f32.mrb[0].mxu0
        %1468 = vmatprep.mubr.f32.mxu0 0.0
        %1469 = vmatmul.mubr.f32.gmra.mrb[0].mxu0 %v1351
        %v1470 = vpop.f32.mrb[0].mxu0
        %v1471 = vadd.f32 0.0, %v1470
        %v1472 = vpop.f32.mrb[0].mxu0
        %1473 = vmatprep.mubr.f32.mxu0 0.0
        %1474 = vmatmul.mubr.f32.gmra.mrb[0].mxu0 %v1352
        %v1475 = vpop.f32.mrb[0].mxu0
        %v1476 = vadd.f32 0.0, %v1475
        %v1477 = vpop.f32.mrb[0].mxu0
        %1478 = vmatprep.mubr.f32.mxu0 0.0
        %1479 = vmatmul.mubr.f32.gmra.mrb[0].mxu0 %v1353
        %v1480 = vpop.f32.mrb[0].mxu0
        %v1481 = vadd.f32 0.0, %v1480
        %v1482 = vpop.f32.mrb[0].mxu0
        %1483 = vmatprep.mubr.f32.mxu0 0.0
        %1484 = vmatmul.mubr.f32.gmra.mrb[0].mxu0 %v1354
        %v1485 = vpop.f32.mrb[0].mxu0
        %v1486 = vadd.f32 0.0, %v1485
        %v1487 = vpop.f32.mrb[0].mxu0
        %1488 = vmatprep.mubr.f32.mxu0 0.0
        %1489 = vmatmul.mubr.f32.gmra.mrb[0].mxu0 %v1355
        %v1490 = vpop.f32.mrb[0].mxu0
        %v1491 = vadd.f32 0.0, %v1490
        %v1492 = vpop.f32.mrb[0].mxu0
        %1493 = vmatprep.mubr.f32.mxu0 0.0
        %1494 = vmatmul.mubr.f32.gmra.mrb[0].mxu0 %v1356
        %v1495 = vpop.f32.mrb[0].mxu0
        %v1496 = vadd.f32 0.0, %v1495
        %v1497 = vpop.f32.mrb[0].mxu0
        %1498 = vmatprep.mubr.f32.mxu0 0.0
        %1499 = vmatmul.mubr.f32.gmra.mrb[0].mxu0 %v1357
        %v1500 = vpop.f32.mrb[0].mxu0
        %v1501 = vadd.f32 0.0, %v1500
        %v1502 = vpop.f32.mrb[0].mxu0
        %1503 = vmatprep.mubr.f32.mxu0 0.0
        %1504 = vmatmul.mubr.f32.gmra.mrb[0].mxu0 %v1358
        %v1505 = vpop.f32.mrb[0].mxu0
        %v1506 = vadd.f32 0.0, %v1505
        %v1507 = vpop.f32.mrb[0].mxu0
        %1508 = vmatprep.mubr.f32.mxu0 0.0
        %1509 = vmatmul.mubr.f32.gmra.mrb[0].mxu0 %v1359
        %v1510 = vpop.f32.mrb[0].mxu0
        %v1511 = vadd.f32 0.0, %v1510
        %v1512 = vpop.f32.mrb[0].mxu0
        %1513 = vmatprep.mubr.f32.mxu0 0.0
        %1514 = vmatmul.mubr.f32.gmra.mrb[0].mxu0 %v1360
        %v1515 = vpop.f32.mrb[0].mxu0
        %v1516 = vadd.f32 0.0, %v1515
        %v1517 = vpop.f32.mrb[0].mxu0
        %1518 = vmatprep.mubr.f32.mxu0 0.0
        %1519 = vmatmul.mubr.f32.gmra.mrb[0].mxu0 %v1361
        %v1520 = vpop.f32.mrb[0].mxu0
        %v1521 = vadd.f32 0.0, %v1520
        %v1522 = vpop.f32.mrb[0].mxu0
        %1523 = vmatprep.mubr.f32.mxu0 0.0
        %1524 = vmatmul.mubr.f32.gmra.mrb[0].mxu0 %v1362
        %v1525 = vpop.f32.mrb[0].mxu0
        %v1526 = vadd.f32 0.0, %v1525
        %v1527 = vpop.f32.mrb[0].mxu0
        %1528 = vmatprep.mubr.f32.mxu0 0.0
        %1529 = vmatmul.mubr.f32.gmra.mrb[0].mxu0 %v1363
        %v1530 = vpop.f32.mrb[0].mxu0
        %v1531 = vadd.f32 0.0, %v1530
        %v1532 = vpop.f32.mrb[0].mxu0
        %1533 = vmatprep.mubr.f32.mxu0 0.0
        %1534 = vmatmul.mubr.f32.gmra.mrb[0].mxu0 %v1364
        %v1535 = vpop.f32.mrb[0].mxu0
        %v1536 = vadd.f32 0.0, %v1535
        %v1537 = vpop.f32.mrb[0].mxu0
        %1538 = vmatprep.mubr.f32.mxu0 0.0
        %1539 = vmatmul.mubr.f32.gmra.mrb[0].mxu0 %v1365
        %v1540 = vpop.f32.mrb[0].mxu0
        %v1541 = vadd.f32 0.0, %v1540
        %v1542 = vpop.f32.mrb[0].mxu0
        %1543 = vmatprep.mubr.f32.mxu0 0.0
        %1544 = vmatmul.mubr.f32.gmra.mrb[0].mxu0 %v1366
        %v1545 = vpop.f32.mrb[0].mxu0
        %v1546 = vadd.f32 0.0, %v1545
        %v1547 = vpop.f32.mrb[0].mxu0
        %1548 = vmatprep.mubr.f32.mxu0 0.0
        %1549 = vmatmul.mubr.f32.gmra.mrb[0].mxu0 %v1367
        %v1550 = vpop.f32.mrb[0].mxu0
        %v1551 = vadd.f32 0.0, %v1550
        %v1552 = vpop.f32.mrb[0].mxu0
        %1553 = vmatprep.mubr.f32.mxu0 0.0
        %1554 = vmatmul.mubr.f32.gmra.mrb[0].mxu0 %v1368
        %v1555 = vpop.f32.mrb[0].mxu0
        %v1556 = vadd.f32 0.0, %v1555
        %v1557 = vpop.f32.mrb[0].mxu0
        %1558 = vmatprep.mubr.f32.mxu0 0.0
        %1559 = vmatmul.mubr.f32.gmra.mrb[0].mxu0 %v1369
        %v1560 = vpop.f32.mrb[0].mxu0
        %v1561 = vadd.f32 0.0, %v1560
        %v1562 = vpop.f32.mrb[0].mxu0
        %1563 = vmatprep.mubr.f32.mxu0 0.0
        %1564 = vmatmul.mubr.f32.gmra.mrb[0].mxu0 %v1370
        %v1565 = vpop.f32.mrb[0].mxu0
        %v1566 = vadd.f32 0.0, %v1565
        %v1567 = vpop.f32.mrb[0].mxu0
        %1568 = vmatprep.mubr.f32.mxu0 0.0
        %1569 = vmatmul.mubr.f32.gmra.mrb[0].mxu0 %v1371
        %v1570 = vpop.f32.mrb[0].mxu0
        %v1571 = vadd.f32 0.0, %v1570
        %v1572 = vpop.f32.mrb[0].mxu0
        %1573 = vmatprep.mubr.f32.mxu0 0.0
        %1574 = vmatmul.mubr.f32.gmra.mrb[0].mxu0 %v1372
        %v1575 = vpop.f32.mrb[0].mxu0
        %v1576 = vadd.f32 0.0, %v1575
        %v1577 = vpop.f32.mrb[0].mxu0
        %1578 = vmatprep.mubr.f32.mxu0 0.0
        %1579 = vmatmul.mubr.f32.gmra.mrb[0].mxu0 %v1373
        %v1580 = vpop.f32.mrb[0].mxu0
        %v1581 = vadd.f32 0.0, %v1580
        %v1582 = vpop.f32.mrb[0].mxu0
        %1583 = vmatprep.mubr.f32.mxu0 0.0
        %1584 = vmatmul.mubr.f32.gmra.mrb[0].mxu0 %v1374
        %v1585 = vpop.f32.mrb[0].mxu0
        %v1586 = vadd.f32 0.0, %v1585
        %v1587 = vpop.f32.mrb[0].mxu0
        %1588 = vmatprep.mubr.f32.mxu0 0.0
        %1589 = vmatmul.mubr.f32.gmra.mrb[0].mxu0 %v1375
        %v1590 = vpop.f32.mrb[0].mxu0
        %v1591 = vadd.f32 0.0, %v1590
        %v1592 = vpop.f32.mrb[0].mxu0
        %1593 = vmatprep.mubr.f32.mxu0 0.0
        %1594 = vmatmul.mubr.f32.gmra.mrb[0].mxu0 %v1376
        %v1595 = vpop.f32.mrb[0].mxu0
        %v1596 = vadd.f32 0.0, %v1595
        %v1597 = vpop.f32.mrb[0].mxu0
        %1598 = vmatprep.mubr.f32.mxu0 0.0
        %1599 = vmatmul.mubr.f32.gmra.mrb[0].mxu0 %v1377
        %v1600 = vpop.f32.mrb[0].mxu0
        %v1601 = vadd.f32 0.0, %v1600
        %v1602 = vpop.f32.mrb[0].mxu0
        %1603 = vmatprep.mubr.f32.mxu0 0.0
        %1604 = vmatmul.mubr.f32.gmra.mrb[0].mxu0 %v1378
        %v1605 = vpop.f32.mrb[0].mxu0
        %v1606 = vadd.f32 0.0, %v1605
        %v1607 = vpop.f32.mrb[0].mxu0
        %1608 = vdwg.mxu0
        %v1609 = vadd.f32 %v1315, %v1451
        %v1610 = vadd.f32 %v1316, %v1456
        %v1611 = vadd.f32 %v1317, %v1461
        %v1612 = vadd.f32 %v1318, %v1466
        %v1613 = vadd.f32 %v1319, %v1471
        %v1614 = vadd.f32 %v1320, %v1476
        %v1615 = vadd.f32 %v1321, %v1481
        %v1616 = vadd.f32 %v1322, %v1486
        %v1617 = vadd.f32 %v1323, %v1491
        %v1618 = vadd.f32 %v1324, %v1496
        %v1619 = vadd.f32 %v1325, %v1501
        %v1620 = vadd.f32 %v1326, %v1506
        %v1621 = vadd.f32 %v1327, %v1511
        %v1622 = vadd.f32 %v1328, %v1516
        %v1623 = vadd.f32 %v1329, %v1521
        %v1624 = vadd.f32 %v1330, %v1526
        %v1625 = vadd.f32 %v1331, %v1531
        %v1626 = vadd.f32 %v1332, %v1536
        %v1627 = vadd.f32 %v1333, %v1541
        %v1628 = vadd.f32 %v1334, %v1546
        %v1629 = vadd.f32 %v1335, %v1551
        %v1630 = vadd.f32 %v1336, %v1556
        %v1631 = vadd.f32 %v1337, %v1561
        %v1632 = vadd.f32 %v1338, %v1566
        %v1633 = vadd.f32 %v1339, %v1571
        %v1634 = vadd.f32 %v1340, %v1576
        %v1635 = vadd.f32 %v1341, %v1581
        %v1636 = vadd.f32 %v1342, %v1586
        %v1637 = vadd.f32 %v1343, %v1591
        %v1638 = vadd.f32 %v1344, %v1596
        %v1639 = vadd.f32 %v1345, %v1601
        %v1640 = vadd.f32 %v1346, %v1606
        %v1641 = vld [vmem:[%s223 + $0x4] sm:$0xff]
        %v1642 = vld [vmem:[%s223 + $0xc] sm:$0xff]
        %v1643 = vld [vmem:[%s223 + $0x1c] sm:$0xff]
        %v1644 = vld [vmem:[%s223 + $0x24] sm:$0xff]
        %v1645 = vld [vmem:[%s223 + $0x34] sm:$0xff]
        %v1646 = vld [vmem:[%s223 + $0x3c] sm:$0xff]
        %v1647 = vld [vmem:[%s223 + $0x4c] sm:$0xff]
        %v1648 = vld [vmem:[%s223 + $0x54] sm:$0xff]
        %v1649 = vld [vmem:[%s223 + $0x64] sm:$0xff]
        %v1650 = vld [vmem:[%s223 + $0x6c] sm:$0xff]
        %v1651 = vld [vmem:[%s223 + $0x7c] sm:$0xff]
        %v1652 = vld [vmem:[%s223 + $0x84] sm:$0xff]
        %v1653 = vld [vmem:[%s223 + $0x94] sm:$0xff]
        %v1654 = vld [vmem:[%s223 + $0x9c] sm:$0xff]
        %v1655 = vld [vmem:[%s223 + $0xac] sm:$0xff]
        %v1656 = vld [vmem:[%s223 + $0xb4] sm:$0xff]
        %v1657 = vld [vmem:[%s223 + $0xc4] sm:$0xff]
        %v1658 = vld [vmem:[%s223 + $0xcc] sm:$0xff]
        %v1659 = vld [vmem:[%s223 + $0xdc] sm:$0xff]
        %v1660 = vld [vmem:[%s223 + $0xe4] sm:$0xff]
        %v1661 = vld [vmem:[%s223 + $0xf4] sm:$0xff]
        %v1662 = vld [vmem:[%s223 + $0xfc] sm:$0xff]
        %v1663 = vld [vmem:[%s223 + $0x10c] sm:$0xff]
        %v1664 = vld [vmem:[%s223 + $0x114] sm:$0xff]
        %v1665 = vld [vmem:[%s223 + $0x124] sm:$0xff]
        %v1666 = vld [vmem:[%s223 + $0x12c] sm:$0xff]
        %v1667 = vld [vmem:[%s223 + $0x13c] sm:$0xff]
        %v1668 = vld [vmem:[%s223 + $0x144] sm:$0xff]
        %v1669 = vld [vmem:[%s223 + $0x154] sm:$0xff]
        %v1670 = vld [vmem:[%s223 + $0x15c] sm:$0xff]
        %v1671 = vld [vmem:[%s223 + $0x16c] sm:$0xff]
        %v1672 = vld [vmem:[%s223 + $0x174] sm:$0xff]
        %s1673 = scalar_lea.vmem %s2, 128
        %v1674 = vld [vmem:[%s1673] sm:$0xff]
        %v1675 = vld [vmem:[%s1673 + $0x8] sm:$0xff]
        %v1676 = vld [vmem:[%s1673 + $0x10] sm:$0xff]
        %v1677 = vld [vmem:[%s1673 + $0x18] sm:$0xff]
        %1678 = vmatprep.subr.mxu0 0.0
        %1679 = vmatpush1.xpose.msra.mxu0 %v1674
        %1680 = vmatprep.subr.mxu0 0.0
        %1681 = vmatpush1.xpose.msra.mxu0 %v1675
        %1682 = vmatprep.subr.mxu0 0.0
        %1683 = vmatpush1.xpose.msra.mxu0 %v1676
        %1684 = vmatprep.subr.mxu0 0.0
        %1685 = vmatpush1.xpose.msra.mxu0 %v1677
        %1686 = vmatprep.subr.mxu0 0.0
        %1687 = vmatpush1.xpose.msra.mxu0 0.0
        %1688 = vmatprep.subr.mxu0 0.0
        %1689 = vmatpush1.xpose.msra.mxu0 0.0
        %1690 = vmatprep.subr.mxu0 0.0
        %1691 = vmatpush1.xpose.msra.mxu0 0.0
        %1692 = vmatprep.subr.mxu0 0.0
        %1693 = vmatpush1.xpose.msra.mxu0 0.0
        %1694 = vmatprep.subr.mxu0 0.0
        %1695 = vmatpush1.xpose.msra.mxu0 0.0
        %1696 = vmatprep.subr.mxu0 0.0
        %1697 = vmatpush1.xpose.msra.mxu0 0.0
        %1698 = vmatprep.subr.mxu0 0.0
        %1699 = vmatpush1.xpose.msra.mxu0 0.0
        %1700 = vmatprep.subr.mxu0 0.0
        %1701 = vmatpush1.xpose.msra.mxu0 0.0
        %1702 = vmatprep.subr.mxu0 0.0
        %1703 = vmatpush1.xpose.msra.mxu0 0.0
        %1704 = vmatprep.subr.mxu0 0.0
        %1705 = vmatpush1.xpose.msra.mxu0 0.0
        %1706 = vmatprep.subr.mxu0 0.0
        %1707 = vmatpush1.xpose.msra.mxu0 0.0
        %1708 = vmatprep.subr.mxu0 0.0
        %1709 = vmatpush1.xpose.msra.mxu0 0.0
        %1710 = vmatprep.subr.mxu0 0.0
        %1711 = vmatpush1.xpose.msra.mxu0 0.0
        %1712 = vmatprep.subr.mxu0 0.0
        %1713 = vmatpush1.xpose.msra.mxu0 0.0
        %1714 = vmatprep.subr.mxu0 0.0
        %1715 = vmatpush1.xpose.msra.mxu0 0.0
        %1716 = vmatprep.subr.mxu0 0.0
        %1717 = vmatpush1.xpose.msra.mxu0 0.0
        %1718 = vmatprep.subr.mxu0 0.0
        %1719 = vmatpush1.xpose.msra.mxu0 0.0
        %1720 = vmatprep.subr.mxu0 0.0
        %1721 = vmatpush1.xpose.msra.mxu0 0.0
        %1722 = vmatprep.subr.mxu0 0.0
        %1723 = vmatpush1.xpose.msra.mxu0 0.0
        %1724 = vmatprep.subr.mxu0 0.0
        %1725 = vmatpush1.xpose.msra.mxu0 0.0
        %1726 = vmatprep.subr.mxu0 0.0
        %1727 = vmatpush1.xpose.msra.mxu0 0.0
        %1728 = vmatprep.subr.mxu0 0.0
        %1729 = vmatpush1.xpose.msra.mxu0 0.0
        %1730 = vmatprep.subr.mxu0 0.0
        %1731 = vmatpush1.xpose.msra.mxu0 0.0
        %1732 = vmatprep.subr.mxu0 0.0
        %1733 = vmatpush1.xpose.msra.mxu0 0.0
        %1734 = vmatprep.subr.mxu0 0.0
        %1735 = vmatpush1.xpose.msra.mxu0 0.0
        %1736 = vmatprep.subr.mxu0 0.0
        %1737 = vmatpush1.xpose.msra.mxu0 0.0
        %1738 = vmatprep.subr.mxu0 0.0
        %1739 = vmatpush1.xpose.msra.mxu0 0.0
        %1740 = vmatprep.subr.mxu0 0.0
        %1741 = vmatpush1.xpose.msra.mxu0 0.0
        %1742 = vmatprep.mubr.f32.mxu0 0.0
        %1743 = vmatmul.mubr.f32.gmra.mrb[0].mxu0 %v1641
        %v1744 = vpop.f32.mrb[0].mxu0
        %v1745 = vadd.f32 0.0, %v1744
        %v1746 = vpop.f32.mrb[0].mxu0
        %1747 = vmatprep.mubr.f32.mxu0 0.0
        %1748 = vmatmul.mubr.f32.gmra.mrb[0].mxu0 %v1642
        %v1749 = vpop.f32.mrb[0].mxu0
        %v1750 = vadd.f32 0.0, %v1749
        %v1751 = vpop.f32.mrb[0].mxu0
        %1752 = vmatprep.mubr.f32.mxu0 0.0
        %1753 = vmatmul.mubr.f32.gmra.mrb[0].mxu0 %v1643
        %v1754 = vpop.f32.mrb[0].mxu0
        %v1755 = vadd.f32 0.0, %v1754
        %v1756 = vpop.f32.mrb[0].mxu0
        %1757 = vmatprep.mubr.f32.mxu0 0.0
        %1758 = vmatmul.mubr.f32.gmra.mrb[0].mxu0 %v1644
        %v1759 = vpop.f32.mrb[0].mxu0
        %v1760 = vadd.f32 0.0, %v1759
        %v1761 = vpop.f32.mrb[0].mxu0
        %1762 = vmatprep.mubr.f32.mxu0 0.0
        %1763 = vmatmul.mubr.f32.gmra.mrb[0].mxu0 %v1645
        %v1764 = vpop.f32.mrb[0].mxu0
        %v1765 = vadd.f32 0.0, %v1764
        %v1766 = vpop.f32.mrb[0].mxu0
        %1767 = vmatprep.mubr.f32.mxu0 0.0
        %1768 = vmatmul.mubr.f32.gmra.mrb[0].mxu0 %v1646
        %v1769 = vpop.f32.mrb[0].mxu0
        %v1770 = vadd.f32 0.0, %v1769
        %v1771 = vpop.f32.mrb[0].mxu0
        %1772 = vmatprep.mubr.f32.mxu0 0.0
        %1773 = vmatmul.mubr.f32.gmra.mrb[0].mxu0 %v1647
        %v1774 = vpop.f32.mrb[0].mxu0
        %v1775 = vadd.f32 0.0, %v1774
        %v1776 = vpop.f32.mrb[0].mxu0
        %1777 = vmatprep.mubr.f32.mxu0 0.0
        %1778 = vmatmul.mubr.f32.gmra.mrb[0].mxu0 %v1648
        %v1779 = vpop.f32.mrb[0].mxu0
        %v1780 = vadd.f32 0.0, %v1779
        %v1781 = vpop.f32.mrb[0].mxu0
        %1782 = vmatprep.mubr.f32.mxu0 0.0
        %1783 = vmatmul.mubr.f32.gmra.mrb[0].mxu0 %v1649
        %v1784 = vpop.f32.mrb[0].mxu0
        %v1785 = vadd.f32 0.0, %v1784
        %v1786 = vpop.f32.mrb[0].mxu0
        %1787 = vmatprep.mubr.f32.mxu0 0.0
        %1788 = vmatmul.mubr.f32.gmra.mrb[0].mxu0 %v1650
        %v1789 = vpop.f32.mrb[0].mxu0
        %v1790 = vadd.f32 0.0, %v1789
        %v1791 = vpop.f32.mrb[0].mxu0
        %1792 = vmatprep.mubr.f32.mxu0 0.0
        %1793 = vmatmul.mubr.f32.gmra.mrb[0].mxu0 %v1651
        %v1794 = vpop.f32.mrb[0].mxu0
        %v1795 = vadd.f32 0.0, %v1794
        %v1796 = vpop.f32.mrb[0].mxu0
        %1797 = vmatprep.mubr.f32.mxu0 0.0
        %1798 = vmatmul.mubr.f32.gmra.mrb[0].mxu0 %v1652
        %v1799 = vpop.f32.mrb[0].mxu0
        %v1800 = vadd.f32 0.0, %v1799
        %v1801 = vpop.f32.mrb[0].mxu0
        %1802 = vmatprep.mubr.f32.mxu0 0.0
        %1803 = vmatmul.mubr.f32.gmra.mrb[0].mxu0 %v1653
        %v1804 = vpop.f32.mrb[0].mxu0
        %v1805 = vadd.f32 0.0, %v1804
        %v1806 = vpop.f32.mrb[0].mxu0
        %1807 = vmatprep.mubr.f32.mxu0 0.0
        %1808 = vmatmul.mubr.f32.gmra.mrb[0].mxu0 %v1654
        %v1809 = vpop.f32.mrb[0].mxu0
        %v1810 = vadd.f32 0.0, %v1809
        %v1811 = vpop.f32.mrb[0].mxu0
        %1812 = vmatprep.mubr.f32.mxu0 0.0
        %1813 = vmatmul.mubr.f32.gmra.mrb[0].mxu0 %v1655
        %v1814 = vpop.f32.mrb[0].mxu0
        %v1815 = vadd.f32 0.0, %v1814
        %v1816 = vpop.f32.mrb[0].mxu0
        %1817 = vmatprep.mubr.f32.mxu0 0.0
        %1818 = vmatmul.mubr.f32.gmra.mrb[0].mxu0 %v1656
        %v1819 = vpop.f32.mrb[0].mxu0
        %v1820 = vadd.f32 0.0, %v1819
        %v1821 = vpop.f32.mrb[0].mxu0
        %1822 = vmatprep.mubr.f32.mxu0 0.0
        %1823 = vmatmul.mubr.f32.gmra.mrb[0].mxu0 %v1657
        %v1824 = vpop.f32.mrb[0].mxu0
        %v1825 = vadd.f32 0.0, %v1824
        %v1826 = vpop.f32.mrb[0].mxu0
        %1827 = vmatprep.mubr.f32.mxu0 0.0
        %1828 = vmatmul.mubr.f32.gmra.mrb[0].mxu0 %v1658
        %v1829 = vpop.f32.mrb[0].mxu0
        %v1830 = vadd.f32 0.0, %v1829
        %v1831 = vpop.f32.mrb[0].mxu0
        %1832 = vmatprep.mubr.f32.mxu0 0.0
        %1833 = vmatmul.mubr.f32.gmra.mrb[0].mxu0 %v1659
        %v1834 = vpop.f32.mrb[0].mxu0
        %v1835 = vadd.f32 0.0, %v1834
        %v1836 = vpop.f32.mrb[0].mxu0
        %1837 = vmatprep.mubr.f32.mxu0 0.0
        %1838 = vmatmul.mubr.f32.gmra.mrb[0].mxu0 %v1660
        %v1839 = vpop.f32.mrb[0].mxu0
        %v1840 = vadd.f32 0.0, %v1839
        %v1841 = vpop.f32.mrb[0].mxu0
        %1842 = vmatprep.mubr.f32.mxu0 0.0
        %1843 = vmatmul.mubr.f32.gmra.mrb[0].mxu0 %v1661
        %v1844 = vpop.f32.mrb[0].mxu0
        %v1845 = vadd.f32 0.0, %v1844
        %v1846 = vpop.f32.mrb[0].mxu0
        %1847 = vmatprep.mubr.f32.mxu0 0.0
        %1848 = vmatmul.mubr.f32.gmra.mrb[0].mxu0 %v1662
        %v1849 = vpop.f32.mrb[0].mxu0
        %v1850 = vadd.f32 0.0, %v1849
        %v1851 = vpop.f32.mrb[0].mxu0
        %1852 = vmatprep.mubr.f32.mxu0 0.0
        %1853 = vmatmul.mubr.f32.gmra.mrb[0].mxu0 %v1663
        %v1854 = vpop.f32.mrb[0].mxu0
        %v1855 = vadd.f32 0.0, %v1854
        %v1856 = vpop.f32.mrb[0].mxu0
        %1857 = vmatprep.mubr.f32.mxu0 0.0
        %1858 = vmatmul.mubr.f32.gmra.mrb[0].mxu0 %v1664
        %v1859 = vpop.f32.mrb[0].mxu0
        %v1860 = vadd.f32 0.0, %v1859
        %v1861 = vpop.f32.mrb[0].mxu0
        %1862 = vmatprep.mubr.f32.mxu0 0.0
        %1863 = vmatmul.mubr.f32.gmra.mrb[0].mxu0 %v1665
        %v1864 = vpop.f32.mrb[0].mxu0
        %v1865 = vadd.f32 0.0, %v1864
        %v1866 = vpop.f32.mrb[0].mxu0
        %1867 = vmatprep.mubr.f32.mxu0 0.0
        %1868 = vmatmul.mubr.f32.gmra.mrb[0].mxu0 %v1666
        %v1869 = vpop.f32.mrb[0].mxu0
        %v1870 = vadd.f32 0.0, %v1869
        %v1871 = vpop.f32.mrb[0].mxu0
        %1872 = vmatprep.mubr.f32.mxu0 0.0
        %1873 = vmatmul.mubr.f32.gmra.mrb[0].mxu0 %v1667
        %v1874 = vpop.f32.mrb[0].mxu0
        %v1875 = vadd.f32 0.0, %v1874
        %v1876 = vpop.f32.mrb[0].mxu0
        %1877 = vmatprep.mubr.f32.mxu0 0.0
        %1878 = vmatmul.mubr.f32.gmra.mrb[0].mxu0 %v1668
        %v1879 = vpop.f32.mrb[0].mxu0
        %v1880 = vadd.f32 0.0, %v1879
        %v1881 = vpop.f32.mrb[0].mxu0
        %1882 = vmatprep.mubr.f32.mxu0 0.0
        %1883 = vmatmul.mubr.f32.gmra.mrb[0].mxu0 %v1669
        %v1884 = vpop.f32.mrb[0].mxu0
        %v1885 = vadd.f32 0.0, %v1884
        %v1886 = vpop.f32.mrb[0].mxu0
        %1887 = vmatprep.mubr.f32.mxu0 0.0
        %1888 = vmatmul.mubr.f32.gmra.mrb[0].mxu0 %v1670
        %v1889 = vpop.f32.mrb[0].mxu0
        %v1890 = vadd.f32 0.0, %v1889
        %v1891 = vpop.f32.mrb[0].mxu0
        %1892 = vmatprep.mubr.f32.mxu0 0.0
        %1893 = vmatmul.mubr.f32.gmra.mrb[0].mxu0 %v1671
        %v1894 = vpop.f32.mrb[0].mxu0
        %v1895 = vadd.f32 0.0, %v1894
        %v1896 = vpop.f32.mrb[0].mxu0
        %1897 = vmatprep.mubr.f32.mxu0 0.0
        %1898 = vmatmul.mubr.f32.gmra.mrb[0].mxu0 %v1672
        %v1899 = vpop.f32.mrb[0].mxu0
        %v1900 = vadd.f32 0.0, %v1899
        %v1901 = vpop.f32.mrb[0].mxu0
        %1902 = vdwg.mxu0
        %v1903 = vadd.f32 %v1609, %v1745
        %v1904 = vadd.f32 %v1610, %v1750
        %v1905 = vadd.f32 %v1611, %v1755
        %v1906 = vadd.f32 %v1612, %v1760
        %v1907 = vadd.f32 %v1613, %v1765
        %v1908 = vadd.f32 %v1614, %v1770
        %v1909 = vadd.f32 %v1615, %v1775
        %v1910 = vadd.f32 %v1616, %v1780
        %v1911 = vadd.f32 %v1617, %v1785
        %v1912 = vadd.f32 %v1618, %v1790
        %v1913 = vadd.f32 %v1619, %v1795
        %v1914 = vadd.f32 %v1620, %v1800
        %v1915 = vadd.f32 %v1621, %v1805
        %v1916 = vadd.f32 %v1622, %v1810
        %v1917 = vadd.f32 %v1623, %v1815
        %v1918 = vadd.f32 %v1624, %v1820
        %v1919 = vadd.f32 %v1625, %v1825
        %v1920 = vadd.f32 %v1626, %v1830
        %v1921 = vadd.f32 %v1627, %v1835
        %v1922 = vadd.f32 %v1628, %v1840
        %v1923 = vadd.f32 %v1629, %v1845
        %v1924 = vadd.f32 %v1630, %v1850
        %v1925 = vadd.f32 %v1631, %v1855
        %v1926 = vadd.f32 %v1632, %v1860
        %v1927 = vadd.f32 %v1633, %v1865
        %v1928 = vadd.f32 %v1634, %v1870
        %v1929 = vadd.f32 %v1635, %v1875
        %v1930 = vadd.f32 %v1636, %v1880
        %v1931 = vadd.f32 %v1637, %v1885
        %v1932 = vadd.f32 %v1638, %v1890
        %v1933 = vadd.f32 %v1639, %v1895
        %v1934 = vadd.f32 %v1640, %v1900
        %s1935 = scalar_lea.vmem %s222, 96
        %v1936 = vld [vmem:[%s1935 + $0x2] sm:$0xff]
        %v1937 = vld [vmem:[%s1935 + $0xa] sm:$0xff]
        %v1938 = vld [vmem:[%s1935 + $0x1a] sm:$0xff]
        %v1939 = vld [vmem:[%s1935 + $0x22] sm:$0xff]
        %v1940 = vld [vmem:[%s1935 + $0x32] sm:$0xff]
        %v1941 = vld [vmem:[%s1935 + $0x3a] sm:$0xff]
        %v1942 = vld [vmem:[%s1935 + $0x4a] sm:$0xff]
        %v1943 = vld [vmem:[%s1935 + $0x52] sm:$0xff]
        %v1944 = vld [vmem:[%s1935 + $0x62] sm:$0xff]
        %v1945 = vld [vmem:[%s1935 + $0x6a] sm:$0xff]
        %v1946 = vld [vmem:[%s1935 + $0x7a] sm:$0xff]
        %v1947 = vld [vmem:[%s1935 + $0x82] sm:$0xff]
        %v1948 = vld [vmem:[%s1935 + $0x92] sm:$0xff]
        %v1949 = vld [vmem:[%s1935 + $0x9a] sm:$0xff]
        %v1950 = vld [vmem:[%s1935 + $0xaa] sm:$0xff]
        %v1951 = vld [vmem:[%s1935 + $0xb2] sm:$0xff]
        %v1952 = vld [vmem:[%s1935 + $0xc2] sm:$0xff]
        %v1953 = vld [vmem:[%s1935 + $0xca] sm:$0xff]
        %v1954 = vld [vmem:[%s1935 + $0xda] sm:$0xff]
        %v1955 = vld [vmem:[%s1935 + $0xe2] sm:$0xff]
        %v1956 = vld [vmem:[%s1935 + $0xf2] sm:$0xff]
        %v1957 = vld [vmem:[%s1935 + $0xfa] sm:$0xff]
        %v1958 = vld [vmem:[%s1935 + $0x10a] sm:$0xff]
        %v1959 = vld [vmem:[%s1935 + $0x112] sm:$0xff]
        %v1960 = vld [vmem:[%s1935 + $0x122] sm:$0xff]
        %v1961 = vld [vmem:[%s1935 + $0x12a] sm:$0xff]
        %v1962 = vld [vmem:[%s1935 + $0x13a] sm:$0xff]
        %v1963 = vld [vmem:[%s1935 + $0x142] sm:$0xff]
        %v1964 = vld [vmem:[%s1935 + $0x152] sm:$0xff]
        %v1965 = vld [vmem:[%s1935 + $0x15a] sm:$0xff]
        %v1966 = vld [vmem:[%s1935 + $0x16a] sm:$0xff]
        %v1967 = vld [vmem:[%s1935 + $0x172] sm:$0xff]
        %s1968 = scalar_lea.vmem %s2, 160
        %v1969 = vld [vmem:[%s1968] sm:$0xff]
        %v1970 = vld [vmem:[%s1968 + $0x8] sm:$0xff]
        %v1971 = vld [vmem:[%s1968 + $0x10] sm:$0xff]
        %v1972 = vld [vmem:[%s1968 + $0x18] sm:$0xff]
        %1973 = vmatprep.subr.mxu0 0.0
        %1974 = vmatpush1.xpose.msra.mxu0 %v1969
        %1975 = vmatprep.subr.mxu0 0.0
        %1976 = vmatpush1.xpose.msra.mxu0 %v1970
        %1977 = vmatprep.subr.mxu0 0.0
        %1978 = vmatpush1.xpose.msra.mxu0 %v1971
        %1979 = vmatprep.subr.mxu0 0.0
        %1980 = vmatpush1.xpose.msra.mxu0 %v1972
        %1981 = vmatprep.subr.mxu0 0.0
        %1982 = vmatpush1.xpose.msra.mxu0 0.0
        %1983 = vmatprep.subr.mxu0 0.0
        %1984 = vmatpush1.xpose.msra.mxu0 0.0
        %1985 = vmatprep.subr.mxu0 0.0
        %1986 = vmatpush1.xpose.msra.mxu0 0.0
        %1987 = vmatprep.subr.mxu0 0.0
        %1988 = vmatpush1.xpose.msra.mxu0 0.0
        %1989 = vmatprep.subr.mxu0 0.0
        %1990 = vmatpush1.xpose.msra.mxu0 0.0
        %1991 = vmatprep.subr.mxu0 0.0
        %1992 = vmatpush1.xpose.msra.mxu0 0.0
        %1993 = vmatprep.subr.mxu0 0.0
        %1994 = vmatpush1.xpose.msra.mxu0 0.0
        %1995 = vmatprep.subr.mxu0 0.0
        %1996 = vmatpush1.xpose.msra.mxu0 0.0
        %1997 = vmatprep.subr.mxu0 0.0
        %1998 = vmatpush1.xpose.msra.mxu0 0.0
        %1999 = vmatprep.subr.mxu0 0.0
        %2000 = vmatpush1.xpose.msra.mxu0 0.0
        %2001 = vmatprep.subr.mxu0 0.0
        %2002 = vmatpush1.xpose.msra.mxu0 0.0
        %2003 = vmatprep.subr.mxu0 0.0
        %2004 = vmatpush1.xpose.msra.mxu0 0.0
        %2005 = vmatprep.subr.mxu0 0.0
        %2006 = vmatpush1.xpose.msra.mxu0 0.0
        %2007 = vmatprep.subr.mxu0 0.0
        %2008 = vmatpush1.xpose.msra.mxu0 0.0
        %2009 = vmatprep.subr.mxu0 0.0
        %2010 = vmatpush1.xpose.msra.mxu0 0.0
        %2011 = vmatprep.subr.mxu0 0.0
        %2012 = vmatpush1.xpose.msra.mxu0 0.0
        %2013 = vmatprep.subr.mxu0 0.0
        %2014 = vmatpush1.xpose.msra.mxu0 0.0
        %2015 = vmatprep.subr.mxu0 0.0
        %2016 = vmatpush1.xpose.msra.mxu0 0.0
        %2017 = vmatprep.subr.mxu0 0.0
        %2018 = vmatpush1.xpose.msra.mxu0 0.0
        %2019 = vmatprep.subr.mxu0 0.0
        %2020 = vmatpush1.xpose.msra.mxu0 0.0
        %2021 = vmatprep.subr.mxu0 0.0
        %2022 = vmatpush1.xpose.msra.mxu0 0.0
        %2023 = vmatprep.subr.mxu0 0.0
        %2024 = vmatpush1.xpose.msra.mxu0 0.0
        %2025 = vmatprep.subr.mxu0 0.0
        %2026 = vmatpush1.xpose.msra.mxu0 0.0
        %2027 = vmatprep.subr.mxu0 0.0
        %2028 = vmatpush1.xpose.msra.mxu0 0.0
        %2029 = vmatprep.subr.mxu0 0.0
        %2030 = vmatpush1.xpose.msra.mxu0 0.0
        %2031 = vmatprep.subr.mxu0 0.0
        %2032 = vmatpush1.xpose.msra.mxu0 0.0
        %2033 = vmatprep.subr.mxu0 0.0
        %2034 = vmatpush1.xpose.msra.mxu0 0.0
        %2035 = vmatprep.subr.mxu0 0.0
        %2036 = vmatpush1.xpose.msra.mxu0 0.0
        %2037 = vmatprep.mubr.f32.mxu0 0.0
        %2038 = vmatmul.mubr.f32.gmra.mrb[0].mxu0 %v1936
        %v2039 = vpop.f32.mrb[0].mxu0
        %v2040 = vadd.f32 0.0, %v2039
        %v2041 = vpop.f32.mrb[0].mxu0
        %2042 = vmatprep.mubr.f32.mxu0 0.0
        %2043 = vmatmul.mubr.f32.gmra.mrb[0].mxu0 %v1937
        %v2044 = vpop.f32.mrb[0].mxu0
        %v2045 = vadd.f32 0.0, %v2044
        %v2046 = vpop.f32.mrb[0].mxu0
        %2047 = vmatprep.mubr.f32.mxu0 0.0
        %2048 = vmatmul.mubr.f32.gmra.mrb[0].mxu0 %v1938
        %v2049 = vpop.f32.mrb[0].mxu0
        %v2050 = vadd.f32 0.0, %v2049
        %v2051 = vpop.f32.mrb[0].mxu0
        %2052 = vmatprep.mubr.f32.mxu0 0.0
        %2053 = vmatmul.mubr.f32.gmra.mrb[0].mxu0 %v1939
        %v2054 = vpop.f32.mrb[0].mxu0
        %v2055 = vadd.f32 0.0, %v2054
        %v2056 = vpop.f32.mrb[0].mxu0
        %2057 = vmatprep.mubr.f32.mxu0 0.0
        %2058 = vmatmul.mubr.f32.gmra.mrb[0].mxu0 %v1940
        %v2059 = vpop.f32.mrb[0].mxu0
        %v2060 = vadd.f32 0.0, %v2059
        %v2061 = vpop.f32.mrb[0].mxu0
        %2062 = vmatprep.mubr.f32.mxu0 0.0
        %2063 = vmatmul.mubr.f32.gmra.mrb[0].mxu0 %v1941
        %v2064 = vpop.f32.mrb[0].mxu0
        %v2065 = vadd.f32 0.0, %v2064
        %v2066 = vpop.f32.mrb[0].mxu0
        %2067 = vmatprep.mubr.f32.mxu0 0.0
        %2068 = vmatmul.mubr.f32.gmra.mrb[0].mxu0 %v1942
        %v2069 = vpop.f32.mrb[0].mxu0
        %v2070 = vadd.f32 0.0, %v2069
        %v2071 = vpop.f32.mrb[0].mxu0
        %2072 = vmatprep.mubr.f32.mxu0 0.0
        %2073 = vmatmul.mubr.f32.gmra.mrb[0].mxu0 %v1943
        %v2074 = vpop.f32.mrb[0].mxu0
        %v2075 = vadd.f32 0.0, %v2074
        %v2076 = vpop.f32.mrb[0].mxu0
        %2077 = vmatprep.mubr.f32.mxu0 0.0
        %2078 = vmatmul.mubr.f32.gmra.mrb[0].mxu0 %v1944
        %v2079 = vpop.f32.mrb[0].mxu0
        %v2080 = vadd.f32 0.0, %v2079
        %v2081 = vpop.f32.mrb[0].mxu0
        %2082 = vmatprep.mubr.f32.mxu0 0.0
        %2083 = vmatmul.mubr.f32.gmra.mrb[0].mxu0 %v1945
        %v2084 = vpop.f32.mrb[0].mxu0
        %v2085 = vadd.f32 0.0, %v2084
        %v2086 = vpop.f32.mrb[0].mxu0
        %2087 = vmatprep.mubr.f32.mxu0 0.0
        %2088 = vmatmul.mubr.f32.gmra.mrb[0].mxu0 %v1946
        %v2089 = vpop.f32.mrb[0].mxu0
        %v2090 = vadd.f32 0.0, %v2089
        %v2091 = vpop.f32.mrb[0].mxu0
        %2092 = vmatprep.mubr.f32.mxu0 0.0
        %2093 = vmatmul.mubr.f32.gmra.mrb[0].mxu0 %v1947
        %v2094 = vpop.f32.mrb[0].mxu0
        %v2095 = vadd.f32 0.0, %v2094
        %v2096 = vpop.f32.mrb[0].mxu0
        %2097 = vmatprep.mubr.f32.mxu0 0.0
        %2098 = vmatmul.mubr.f32.gmra.mrb[0].mxu0 %v1948
        %v2099 = vpop.f32.mrb[0].mxu0
        %v2100 = vadd.f32 0.0, %v2099
        %v2101 = vpop.f32.mrb[0].mxu0
        %2102 = vmatprep.mubr.f32.mxu0 0.0
        %2103 = vmatmul.mubr.f32.gmra.mrb[0].mxu0 %v1949
        %v2104 = vpop.f32.mrb[0].mxu0
        %v2105 = vadd.f32 0.0, %v2104
        %v2106 = vpop.f32.mrb[0].mxu0
        %2107 = vmatprep.mubr.f32.mxu0 0.0
        %2108 = vmatmul.mubr.f32.gmra.mrb[0].mxu0 %v1950
        %v2109 = vpop.f32.mrb[0].mxu0
        %v2110 = vadd.f32 0.0, %v2109
        %v2111 = vpop.f32.mrb[0].mxu0
        %2112 = vmatprep.mubr.f32.mxu0 0.0
        %2113 = vmatmul.mubr.f32.gmra.mrb[0].mxu0 %v1951
        %v2114 = vpop.f32.mrb[0].mxu0
        %v2115 = vadd.f32 0.0, %v2114
        %v2116 = vpop.f32.mrb[0].mxu0
        %2117 = vmatprep.mubr.f32.mxu0 0.0
        %2118 = vmatmul.mubr.f32.gmra.mrb[0].mxu0 %v1952
        %v2119 = vpop.f32.mrb[0].mxu0
        %v2120 = vadd.f32 0.0, %v2119
        %v2121 = vpop.f32.mrb[0].mxu0
        %2122 = vmatprep.mubr.f32.mxu0 0.0
        %2123 = vmatmul.mubr.f32.gmra.mrb[0].mxu0 %v1953
        %v2124 = vpop.f32.mrb[0].mxu0
        %v2125 = vadd.f32 0.0, %v2124
        %v2126 = vpop.f32.mrb[0].mxu0
        %2127 = vmatprep.mubr.f32.mxu0 0.0
        %2128 = vmatmul.mubr.f32.gmra.mrb[0].mxu0 %v1954
        %v2129 = vpop.f32.mrb[0].mxu0
        %v2130 = vadd.f32 0.0, %v2129
        %v2131 = vpop.f32.mrb[0].mxu0
        %2132 = vmatprep.mubr.f32.mxu0 0.0
        %2133 = vmatmul.mubr.f32.gmra.mrb[0].mxu0 %v1955
        %v2134 = vpop.f32.mrb[0].mxu0
        %v2135 = vadd.f32 0.0, %v2134
        %v2136 = vpop.f32.mrb[0].mxu0
        %2137 = vmatprep.mubr.f32.mxu0 0.0
        %2138 = vmatmul.mubr.f32.gmra.mrb[0].mxu0 %v1956
        %v2139 = vpop.f32.mrb[0].mxu0
        %v2140 = vadd.f32 0.0, %v2139
        %v2141 = vpop.f32.mrb[0].mxu0
        %2142 = vmatprep.mubr.f32.mxu0 0.0
        %2143 = vmatmul.mubr.f32.gmra.mrb[0].mxu0 %v1957
        %v2144 = vpop.f32.mrb[0].mxu0
        %v2145 = vadd.f32 0.0, %v2144
        %v2146 = vpop.f32.mrb[0].mxu0
        %2147 = vmatprep.mubr.f32.mxu0 0.0
        %2148 = vmatmul.mubr.f32.gmra.mrb[0].mxu0 %v1958
        %v2149 = vpop.f32.mrb[0].mxu0
        %v2150 = vadd.f32 0.0, %v2149
        %v2151 = vpop.f32.mrb[0].mxu0
        %2152 = vmatprep.mubr.f32.mxu0 0.0
        %2153 = vmatmul.mubr.f32.gmra.mrb[0].mxu0 %v1959
        %v2154 = vpop.f32.mrb[0].mxu0
        %v2155 = vadd.f32 0.0, %v2154
        %v2156 = vpop.f32.mrb[0].mxu0
        %2157 = vmatprep.mubr.f32.mxu0 0.0
        %2158 = vmatmul.mubr.f32.gmra.mrb[0].mxu0 %v1960
        %v2159 = vpop.f32.mrb[0].mxu0
        %v2160 = vadd.f32 0.0, %v2159
        %v2161 = vpop.f32.mrb[0].mxu0
        %2162 = vmatprep.mubr.f32.mxu0 0.0
        %2163 = vmatmul.mubr.f32.gmra.mrb[0].mxu0 %v1961
        %v2164 = vpop.f32.mrb[0].mxu0
        %v2165 = vadd.f32 0.0, %v2164
        %v2166 = vpop.f32.mrb[0].mxu0
        %2167 = vmatprep.mubr.f32.mxu0 0.0
        %2168 = vmatmul.mubr.f32.gmra.mrb[0].mxu0 %v1962
        %v2169 = vpop.f32.mrb[0].mxu0
        %v2170 = vadd.f32 0.0, %v2169
        %v2171 = vpop.f32.mrb[0].mxu0
        %2172 = vmatprep.mubr.f32.mxu0 0.0
        %2173 = vmatmul.mubr.f32.gmra.mrb[0].mxu0 %v1963
        %v2174 = vpop.f32.mrb[0].mxu0
        %v2175 = vadd.f32 0.0, %v2174
        %v2176 = vpop.f32.mrb[0].mxu0
        %2177 = vmatprep.mubr.f32.mxu0 0.0
        %2178 = vmatmul.mubr.f32.gmra.mrb[0].mxu0 %v1964
        %v2179 = vpop.f32.mrb[0].mxu0
        %v2180 = vadd.f32 0.0, %v2179
        %v2181 = vpop.f32.mrb[0].mxu0
        %2182 = vmatprep.mubr.f32.mxu0 0.0
        %2183 = vmatmul.mubr.f32.gmra.mrb[0].mxu0 %v1965
        %v2184 = vpop.f32.mrb[0].mxu0
        %v2185 = vadd.f32 0.0, %v2184
        %v2186 = vpop.f32.mrb[0].mxu0
        %2187 = vmatprep.mubr.f32.mxu0 0.0
        %2188 = vmatmul.mubr.f32.gmra.mrb[0].mxu0 %v1966
        %v2189 = vpop.f32.mrb[0].mxu0
        %v2190 = vadd.f32 0.0, %v2189
        %v2191 = vpop.f32.mrb[0].mxu0
        %2192 = vmatprep.mubr.f32.mxu0 0.0
        %2193 = vmatmul.mubr.f32.gmra.mrb[0].mxu0 %v1967
        %v2194 = vpop.f32.mrb[0].mxu0
        %v2195 = vadd.f32 0.0, %v2194
        %v2196 = vpop.f32.mrb[0].mxu0
        %2197 = vdwg.mxu0
        %v2198 = vadd.f32 %v1903, %v2040
        %v2199 = vadd.f32 %v1904, %v2045
        %v2200 = vadd.f32 %v1905, %v2050
        %v2201 = vadd.f32 %v1906, %v2055
        %v2202 = vadd.f32 %v1907, %v2060
        %v2203 = vadd.f32 %v1908, %v2065
        %v2204 = vadd.f32 %v1909, %v2070
        %v2205 = vadd.f32 %v1910, %v2075
        %v2206 = vadd.f32 %v1911, %v2080
        %v2207 = vadd.f32 %v1912, %v2085
        %v2208 = vadd.f32 %v1913, %v2090
        %v2209 = vadd.f32 %v1914, %v2095
        %v2210 = vadd.f32 %v1915, %v2100
        %v2211 = vadd.f32 %v1916, %v2105
        %v2212 = vadd.f32 %v1917, %v2110
        %v2213 = vadd.f32 %v1918, %v2115
        %v2214 = vadd.f32 %v1919, %v2120
        %v2215 = vadd.f32 %v1920, %v2125
        %v2216 = vadd.f32 %v1921, %v2130
        %v2217 = vadd.f32 %v1922, %v2135
        %v2218 = vadd.f32 %v1923, %v2140
        %v2219 = vadd.f32 %v1924, %v2145
        %v2220 = vadd.f32 %v1925, %v2150
        %v2221 = vadd.f32 %v1926, %v2155
        %v2222 = vadd.f32 %v1927, %v2160
        %v2223 = vadd.f32 %v1928, %v2165
        %v2224 = vadd.f32 %v1929, %v2170
        %v2225 = vadd.f32 %v1930, %v2175
        %v2226 = vadd.f32 %v1931, %v2180
        %v2227 = vadd.f32 %v1932, %v2185
        %v2228 = vadd.f32 %v1933, %v2190
        %v2229 = vadd.f32 %v1934, %v2195
        %v2230 = vld [vmem:[%s1935 + $0x3] sm:$0xff]
        %v2231 = vld [vmem:[%s1935 + $0xb] sm:$0xff]
        %v2232 = vld [vmem:[%s1935 + $0x1b] sm:$0xff]
        %v2233 = vld [vmem:[%s1935 + $0x23] sm:$0xff]
        %v2234 = vld [vmem:[%s1935 + $0x33] sm:$0xff]
        %v2235 = vld [vmem:[%s1935 + $0x3b] sm:$0xff]
        %v2236 = vld [vmem:[%s1935 + $0x4b] sm:$0xff]
        %v2237 = vld [vmem:[%s1935 + $0x53] sm:$0xff]
        %v2238 = vld [vmem:[%s1935 + $0x63] sm:$0xff]
        %v2239 = vld [vmem:[%s1935 + $0x6b] sm:$0xff]
        %v2240 = vld [vmem:[%s1935 + $0x7b] sm:$0xff]
        %v2241 = vld [vmem:[%s1935 + $0x83] sm:$0xff]
        %v2242 = vld [vmem:[%s1935 + $0x93] sm:$0xff]
        %v2243 = vld [vmem:[%s1935 + $0x9b] sm:$0xff]
        %v2244 = vld [vmem:[%s1935 + $0xab] sm:$0xff]
        %v2245 = vld [vmem:[%s1935 + $0xb3] sm:$0xff]
        %v2246 = vld [vmem:[%s1935 + $0xc3] sm:$0xff]
        %v2247 = vld [vmem:[%s1935 + $0xcb] sm:$0xff]
        %v2248 = vld [vmem:[%s1935 + $0xdb] sm:$0xff]
        %v2249 = vld [vmem:[%s1935 + $0xe3] sm:$0xff]
        %v2250 = vld [vmem:[%s1935 + $0xf3] sm:$0xff]
        %v2251 = vld [vmem:[%s1935 + $0xfb] sm:$0xff]
        %v2252 = vld [vmem:[%s1935 + $0x10b] sm:$0xff]
        %v2253 = vld [vmem:[%s1935 + $0x113] sm:$0xff]
        %v2254 = vld [vmem:[%s1935 + $0x123] sm:$0xff]
        %v2255 = vld [vmem:[%s1935 + $0x12b] sm:$0xff]
        %v2256 = vld [vmem:[%s1935 + $0x13b] sm:$0xff]
        %v2257 = vld [vmem:[%s1935 + $0x143] sm:$0xff]
        %v2258 = vld [vmem:[%s1935 + $0x153] sm:$0xff]
        %v2259 = vld [vmem:[%s1935 + $0x15b] sm:$0xff]
        %v2260 = vld [vmem:[%s1935 + $0x16b] sm:$0xff]
        %v2261 = vld [vmem:[%s1935 + $0x173] sm:$0xff]
        %s2262 = scalar_lea.vmem %s2, 192
        %v2263 = vld [vmem:[%s2262] sm:$0xff]
        %v2264 = vld [vmem:[%s2262 + $0x8] sm:$0xff]
        %v2265 = vld [vmem:[%s2262 + $0x10] sm:$0xff]
        %v2266 = vld [vmem:[%s2262 + $0x18] sm:$0xff]
        %2267 = vmatprep.subr.mxu0 0.0
        %2268 = vmatpush1.xpose.msra.mxu0 %v2263
        %2269 = vmatprep.subr.mxu0 0.0
        %2270 = vmatpush1.xpose.msra.mxu0 %v2264
        %2271 = vmatprep.subr.mxu0 0.0
        %2272 = vmatpush1.xpose.msra.mxu0 %v2265
        %2273 = vmatprep.subr.mxu0 0.0
        %2274 = vmatpush1.xpose.msra.mxu0 %v2266
        %2275 = vmatprep.subr.mxu0 0.0
        %2276 = vmatpush1.xpose.msra.mxu0 0.0
        %2277 = vmatprep.subr.mxu0 0.0
        %2278 = vmatpush1.xpose.msra.mxu0 0.0
        %2279 = vmatprep.subr.mxu0 0.0
        %2280 = vmatpush1.xpose.msra.mxu0 0.0
        %2281 = vmatprep.subr.mxu0 0.0
        %2282 = vmatpush1.xpose.msra.mxu0 0.0
        %2283 = vmatprep.subr.mxu0 0.0
        %2284 = vmatpush1.xpose.msra.mxu0 0.0
        %2285 = vmatprep.subr.mxu0 0.0
        %2286 = vmatpush1.xpose.msra.mxu0 0.0
        %2287 = vmatprep.subr.mxu0 0.0
        %2288 = vmatpush1.xpose.msra.mxu0 0.0
        %2289 = vmatprep.subr.mxu0 0.0
        %2290 = vmatpush1.xpose.msra.mxu0 0.0
        %2291 = vmatprep.subr.mxu0 0.0
        %2292 = vmatpush1.xpose.msra.mxu0 0.0
        %2293 = vmatprep.subr.mxu0 0.0
        %2294 = vmatpush1.xpose.msra.mxu0 0.0
        %2295 = vmatprep.subr.mxu0 0.0
        %2296 = vmatpush1.xpose.msra.mxu0 0.0
        %2297 = vmatprep.subr.mxu0 0.0
        %2298 = vmatpush1.xpose.msra.mxu0 0.0
        %2299 = vmatprep.subr.mxu0 0.0
        %2300 = vmatpush1.xpose.msra.mxu0 0.0
        %2301 = vmatprep.subr.mxu0 0.0
        %2302 = vmatpush1.xpose.msra.mxu0 0.0
        %2303 = vmatprep.subr.mxu0 0.0
        %2304 = vmatpush1.xpose.msra.mxu0 0.0
        %2305 = vmatprep.subr.mxu0 0.0
        %2306 = vmatpush1.xpose.msra.mxu0 0.0
        %2307 = vmatprep.subr.mxu0 0.0
        %2308 = vmatpush1.xpose.msra.mxu0 0.0
        %2309 = vmatprep.subr.mxu0 0.0
        %2310 = vmatpush1.xpose.msra.mxu0 0.0
        %2311 = vmatprep.subr.mxu0 0.0
        %2312 = vmatpush1.xpose.msra.mxu0 0.0
        %2313 = vmatprep.subr.mxu0 0.0
        %2314 = vmatpush1.xpose.msra.mxu0 0.0
        %2315 = vmatprep.subr.mxu0 0.0
        %2316 = vmatpush1.xpose.msra.mxu0 0.0
        %2317 = vmatprep.subr.mxu0 0.0
        %2318 = vmatpush1.xpose.msra.mxu0 0.0
        %2319 = vmatprep.subr.mxu0 0.0
        %2320 = vmatpush1.xpose.msra.mxu0 0.0
        %2321 = vmatprep.subr.mxu0 0.0
        %2322 = vmatpush1.xpose.msra.mxu0 0.0
        %2323 = vmatprep.subr.mxu0 0.0
        %2324 = vmatpush1.xpose.msra.mxu0 0.0
        %2325 = vmatprep.subr.mxu0 0.0
        %2326 = vmatpush1.xpose.msra.mxu0 0.0
        %2327 = vmatprep.subr.mxu0 0.0
        %2328 = vmatpush1.xpose.msra.mxu0 0.0
        %2329 = vmatprep.subr.mxu0 0.0
        %2330 = vmatpush1.xpose.msra.mxu0 0.0
        %2331 = vmatprep.mubr.f32.mxu0 0.0
        %2332 = vmatmul.mubr.f32.gmra.mrb[0].mxu0 %v2230
        %v2333 = vpop.f32.mrb[0].mxu0
        %v2334 = vadd.f32 0.0, %v2333
        %v2335 = vpop.f32.mrb[0].mxu0
        %2336 = vmatprep.mubr.f32.mxu0 0.0
        %2337 = vmatmul.mubr.f32.gmra.mrb[0].mxu0 %v2231
        %v2338 = vpop.f32.mrb[0].mxu0
        %v2339 = vadd.f32 0.0, %v2338
        %v2340 = vpop.f32.mrb[0].mxu0
        %2341 = vmatprep.mubr.f32.mxu0 0.0
        %2342 = vmatmul.mubr.f32.gmra.mrb[0].mxu0 %v2232
        %v2343 = vpop.f32.mrb[0].mxu0
        %v2344 = vadd.f32 0.0, %v2343
        %v2345 = vpop.f32.mrb[0].mxu0
        %2346 = vmatprep.mubr.f32.mxu0 0.0
        %2347 = vmatmul.mubr.f32.gmra.mrb[0].mxu0 %v2233
        %v2348 = vpop.f32.mrb[0].mxu0
        %v2349 = vadd.f32 0.0, %v2348
        %v2350 = vpop.f32.mrb[0].mxu0
        %2351 = vmatprep.mubr.f32.mxu0 0.0
        %2352 = vmatmul.mubr.f32.gmra.mrb[0].mxu0 %v2234
        %v2353 = vpop.f32.mrb[0].mxu0
        %v2354 = vadd.f32 0.0, %v2353
        %v2355 = vpop.f32.mrb[0].mxu0
        %2356 = vmatprep.mubr.f32.mxu0 0.0
        %2357 = vmatmul.mubr.f32.gmra.mrb[0].mxu0 %v2235
        %v2358 = vpop.f32.mrb[0].mxu0
        %v2359 = vadd.f32 0.0, %v2358
        %v2360 = vpop.f32.mrb[0].mxu0
        %2361 = vmatprep.mubr.f32.mxu0 0.0
        %2362 = vmatmul.mubr.f32.gmra.mrb[0].mxu0 %v2236
        %v2363 = vpop.f32.mrb[0].mxu0
        %v2364 = vadd.f32 0.0, %v2363
        %v2365 = vpop.f32.mrb[0].mxu0
        %2366 = vmatprep.mubr.f32.mxu0 0.0
        %2367 = vmatmul.mubr.f32.gmra.mrb[0].mxu0 %v2237
        %v2368 = vpop.f32.mrb[0].mxu0
        %v2369 = vadd.f32 0.0, %v2368
        %v2370 = vpop.f32.mrb[0].mxu0
        %2371 = vmatprep.mubr.f32.mxu0 0.0
        %2372 = vmatmul.mubr.f32.gmra.mrb[0].mxu0 %v2238
        %v2373 = vpop.f32.mrb[0].mxu0
        %v2374 = vadd.f32 0.0, %v2373
        %v2375 = vpop.f32.mrb[0].mxu0
        %2376 = vmatprep.mubr.f32.mxu0 0.0
        %2377 = vmatmul.mubr.f32.gmra.mrb[0].mxu0 %v2239
        %v2378 = vpop.f32.mrb[0].mxu0
        %v2379 = vadd.f32 0.0, %v2378
        %v2380 = vpop.f32.mrb[0].mxu0
        %2381 = vmatprep.mubr.f32.mxu0 0.0
        %2382 = vmatmul.mubr.f32.gmra.mrb[0].mxu0 %v2240
        %v2383 = vpop.f32.mrb[0].mxu0
        %v2384 = vadd.f32 0.0, %v2383
        %v2385 = vpop.f32.mrb[0].mxu0
        %2386 = vmatprep.mubr.f32.mxu0 0.0
        %2387 = vmatmul.mubr.f32.gmra.mrb[0].mxu0 %v2241
        %v2388 = vpop.f32.mrb[0].mxu0
        %v2389 = vadd.f32 0.0, %v2388
        %v2390 = vpop.f32.mrb[0].mxu0
        %2391 = vmatprep.mubr.f32.mxu0 0.0
        %2392 = vmatmul.mubr.f32.gmra.mrb[0].mxu0 %v2242
        %v2393 = vpop.f32.mrb[0].mxu0
        %v2394 = vadd.f32 0.0, %v2393
        %v2395 = vpop.f32.mrb[0].mxu0
        %2396 = vmatprep.mubr.f32.mxu0 0.0
        %2397 = vmatmul.mubr.f32.gmra.mrb[0].mxu0 %v2243
        %v2398 = vpop.f32.mrb[0].mxu0
        %v2399 = vadd.f32 0.0, %v2398
        %v2400 = vpop.f32.mrb[0].mxu0
        %2401 = vmatprep.mubr.f32.mxu0 0.0
        %2402 = vmatmul.mubr.f32.gmra.mrb[0].mxu0 %v2244
        %v2403 = vpop.f32.mrb[0].mxu0
        %v2404 = vadd.f32 0.0, %v2403
        %v2405 = vpop.f32.mrb[0].mxu0
        %2406 = vmatprep.mubr.f32.mxu0 0.0
        %2407 = vmatmul.mubr.f32.gmra.mrb[0].mxu0 %v2245
        %v2408 = vpop.f32.mrb[0].mxu0
        %v2409 = vadd.f32 0.0, %v2408
        %v2410 = vpop.f32.mrb[0].mxu0
        %2411 = vmatprep.mubr.f32.mxu0 0.0
        %2412 = vmatmul.mubr.f32.gmra.mrb[0].mxu0 %v2246
        %v2413 = vpop.f32.mrb[0].mxu0
        %v2414 = vadd.f32 0.0, %v2413
        %v2415 = vpop.f32.mrb[0].mxu0
        %2416 = vmatprep.mubr.f32.mxu0 0.0
        %2417 = vmatmul.mubr.f32.gmra.mrb[0].mxu0 %v2247
        %v2418 = vpop.f32.mrb[0].mxu0
        %v2419 = vadd.f32 0.0, %v2418
        %v2420 = vpop.f32.mrb[0].mxu0
        %2421 = vmatprep.mubr.f32.mxu0 0.0
        %2422 = vmatmul.mubr.f32.gmra.mrb[0].mxu0 %v2248
        %v2423 = vpop.f32.mrb[0].mxu0
        %v2424 = vadd.f32 0.0, %v2423
        %v2425 = vpop.f32.mrb[0].mxu0
        %2426 = vmatprep.mubr.f32.mxu0 0.0
        %2427 = vmatmul.mubr.f32.gmra.mrb[0].mxu0 %v2249
        %v2428 = vpop.f32.mrb[0].mxu0
        %v2429 = vadd.f32 0.0, %v2428
        %v2430 = vpop.f32.mrb[0].mxu0
        %2431 = vmatprep.mubr.f32.mxu0 0.0
        %2432 = vmatmul.mubr.f32.gmra.mrb[0].mxu0 %v2250
        %v2433 = vpop.f32.mrb[0].mxu0
        %v2434 = vadd.f32 0.0, %v2433
        %v2435 = vpop.f32.mrb[0].mxu0
        %2436 = vmatprep.mubr.f32.mxu0 0.0
        %2437 = vmatmul.mubr.f32.gmra.mrb[0].mxu0 %v2251
        %v2438 = vpop.f32.mrb[0].mxu0
        %v2439 = vadd.f32 0.0, %v2438
        %v2440 = vpop.f32.mrb[0].mxu0
        %2441 = vmatprep.mubr.f32.mxu0 0.0
        %2442 = vmatmul.mubr.f32.gmra.mrb[0].mxu0 %v2252
        %v2443 = vpop.f32.mrb[0].mxu0
        %v2444 = vadd.f32 0.0, %v2443
        %v2445 = vpop.f32.mrb[0].mxu0
        %2446 = vmatprep.mubr.f32.mxu0 0.0
        %2447 = vmatmul.mubr.f32.gmra.mrb[0].mxu0 %v2253
        %v2448 = vpop.f32.mrb[0].mxu0
        %v2449 = vadd.f32 0.0, %v2448
        %v2450 = vpop.f32.mrb[0].mxu0
        %2451 = vmatprep.mubr.f32.mxu0 0.0
        %2452 = vmatmul.mubr.f32.gmra.mrb[0].mxu0 %v2254
        %v2453 = vpop.f32.mrb[0].mxu0
        %v2454 = vadd.f32 0.0, %v2453
        %v2455 = vpop.f32.mrb[0].mxu0
        %2456 = vmatprep.mubr.f32.mxu0 0.0
        %2457 = vmatmul.mubr.f32.gmra.mrb[0].mxu0 %v2255
        %v2458 = vpop.f32.mrb[0].mxu0
        %v2459 = vadd.f32 0.0, %v2458
        %v2460 = vpop.f32.mrb[0].mxu0
        %2461 = vmatprep.mubr.f32.mxu0 0.0
        %2462 = vmatmul.mubr.f32.gmra.mrb[0].mxu0 %v2256
        %v2463 = vpop.f32.mrb[0].mxu0
        %v2464 = vadd.f32 0.0, %v2463
        %v2465 = vpop.f32.mrb[0].mxu0
        %2466 = vmatprep.mubr.f32.mxu0 0.0
        %2467 = vmatmul.mubr.f32.gmra.mrb[0].mxu0 %v2257
        %v2468 = vpop.f32.mrb[0].mxu0
        %v2469 = vadd.f32 0.0, %v2468
        %v2470 = vpop.f32.mrb[0].mxu0
        %2471 = vmatprep.mubr.f32.mxu0 0.0
        %2472 = vmatmul.mubr.f32.gmra.mrb[0].mxu0 %v2258
        %v2473 = vpop.f32.mrb[0].mxu0
        %v2474 = vadd.f32 0.0, %v2473
        %v2475 = vpop.f32.mrb[0].mxu0
        %2476 = vmatprep.mubr.f32.mxu0 0.0
        %2477 = vmatmul.mubr.f32.gmra.mrb[0].mxu0 %v2259
        %v2478 = vpop.f32.mrb[0].mxu0
        %v2479 = vadd.f32 0.0, %v2478
        %v2480 = vpop.f32.mrb[0].mxu0
        %2481 = vmatprep.mubr.f32.mxu0 0.0
        %2482 = vmatmul.mubr.f32.gmra.mrb[0].mxu0 %v2260
        %v2483 = vpop.f32.mrb[0].mxu0
        %v2484 = vadd.f32 0.0, %v2483
        %v2485 = vpop.f32.mrb[0].mxu0
        %2486 = vmatprep.mubr.f32.mxu0 0.0
        %2487 = vmatmul.mubr.f32.gmra.mrb[0].mxu0 %v2261
        %v2488 = vpop.f32.mrb[0].mxu0
        %v2489 = vadd.f32 0.0, %v2488
        %v2490 = vpop.f32.mrb[0].mxu0
        %2491 = vdwg.mxu0
        %v2492 = vadd.f32 %v2198, %v2334
        %v2493 = vadd.f32 %v2199, %v2339
        %v2494 = vadd.f32 %v2200, %v2344
        %v2495 = vadd.f32 %v2201, %v2349
        %v2496 = vadd.f32 %v2202, %v2354
        %v2497 = vadd.f32 %v2203, %v2359
        %v2498 = vadd.f32 %v2204, %v2364
        %v2499 = vadd.f32 %v2205, %v2369
        %v2500 = vadd.f32 %v2206, %v2374
        %v2501 = vadd.f32 %v2207, %v2379
        %v2502 = vadd.f32 %v2208, %v2384
        %v2503 = vadd.f32 %v2209, %v2389
        %v2504 = vadd.f32 %v2210, %v2394
        %v2505 = vadd.f32 %v2211, %v2399
        %v2506 = vadd.f32 %v2212, %v2404
        %v2507 = vadd.f32 %v2213, %v2409
        %v2508 = vadd.f32 %v2214, %v2414
        %v2509 = vadd.f32 %v2215, %v2419
        %v2510 = vadd.f32 %v2216, %v2424
        %v2511 = vadd.f32 %v2217, %v2429
        %v2512 = vadd.f32 %v2218, %v2434
        %v2513 = vadd.f32 %v2219, %v2439
        %v2514 = vadd.f32 %v2220, %v2444
        %v2515 = vadd.f32 %v2221, %v2449
        %v2516 = vadd.f32 %v2222, %v2454
        %v2517 = vadd.f32 %v2223, %v2459
        %v2518 = vadd.f32 %v2224, %v2464
        %v2519 = vadd.f32 %v2225, %v2469
        %v2520 = vadd.f32 %v2226, %v2474
        %v2521 = vadd.f32 %v2227, %v2479
        %v2522 = vadd.f32 %v2228, %v2484
        %v2523 = vadd.f32 %v2229, %v2489
        %v2524 = vld [vmem:[%s1935 + $0x4] sm:$0xff]
        %v2525 = vld [vmem:[%s1935 + $0xc] sm:$0xff]
        %v2526 = vld [vmem:[%s1935 + $0x1c] sm:$0xff]
        %v2527 = vld [vmem:[%s1935 + $0x24] sm:$0xff]
        %v2528 = vld [vmem:[%s1935 + $0x34] sm:$0xff]
        %v2529 = vld [vmem:[%s1935 + $0x3c] sm:$0xff]
        %v2530 = vld [vmem:[%s1935 + $0x4c] sm:$0xff]
        %v2531 = vld [vmem:[%s1935 + $0x54] sm:$0xff]
        %v2532 = vld [vmem:[%s1935 + $0x64] sm:$0xff]
        %v2533 = vld [vmem:[%s1935 + $0x6c] sm:$0xff]
        %v2534 = vld [vmem:[%s1935 + $0x7c] sm:$0xff]
        %v2535 = vld [vmem:[%s1935 + $0x84] sm:$0xff]
        %v2536 = vld [vmem:[%s1935 + $0x94] sm:$0xff]
        %v2537 = vld [vmem:[%s1935 + $0x9c] sm:$0xff]
        %v2538 = vld [vmem:[%s1935 + $0xac] sm:$0xff]
        %v2539 = vld [vmem:[%s1935 + $0xb4] sm:$0xff]
        %v2540 = vld [vmem:[%s1935 + $0xc4] sm:$0xff]
        %v2541 = vld [vmem:[%s1935 + $0xcc] sm:$0xff]
        %v2542 = vld [vmem:[%s1935 + $0xdc] sm:$0xff]
        %v2543 = vld [vmem:[%s1935 + $0xe4] sm:$0xff]
        %v2544 = vld [vmem:[%s1935 + $0xf4] sm:$0xff]
        %v2545 = vld [vmem:[%s1935 + $0xfc] sm:$0xff]
        %v2546 = vld [vmem:[%s1935 + $0x10c] sm:$0xff]
        %v2547 = vld [vmem:[%s1935 + $0x114] sm:$0xff]
        %v2548 = vld [vmem:[%s1935 + $0x124] sm:$0xff]
        %v2549 = vld [vmem:[%s1935 + $0x12c] sm:$0xff]
        %v2550 = vld [vmem:[%s1935 + $0x13c] sm:$0xff]
        %v2551 = vld [vmem:[%s1935 + $0x144] sm:$0xff]
        %v2552 = vld [vmem:[%s1935 + $0x154] sm:$0xff]
        %v2553 = vld [vmem:[%s1935 + $0x15c] sm:$0xff]
        %v2554 = vld [vmem:[%s1935 + $0x16c] sm:$0xff]
        %v2555 = vld [vmem:[%s1935 + $0x174] sm:$0xff]
        %s2556 = scalar_lea.vmem %s2, 224
        %v2557 = vld [vmem:[%s2556] sm:$0xff]
        %v2558 = vld [vmem:[%s2556 + $0x8] sm:$0xff]
        %v2559 = vld [vmem:[%s2556 + $0x10] sm:$0xff]
        %v2560 = vld [vmem:[%s2556 + $0x18] sm:$0xff]
        %2561 = vmatprep.subr.mxu0 0.0
        %2562 = vmatpush1.xpose.msra.mxu0 %v2557
        %2563 = vmatprep.subr.mxu0 0.0
        %2564 = vmatpush1.xpose.msra.mxu0 %v2558
        %2565 = vmatprep.subr.mxu0 0.0
        %2566 = vmatpush1.xpose.msra.mxu0 %v2559
        %2567 = vmatprep.subr.mxu0 0.0
        %2568 = vmatpush1.xpose.msra.mxu0 %v2560
        %2569 = vmatprep.subr.mxu0 0.0
        %2570 = vmatpush1.xpose.msra.mxu0 0.0
        %2571 = vmatprep.subr.mxu0 0.0
        %2572 = vmatpush1.xpose.msra.mxu0 0.0
        %2573 = vmatprep.subr.mxu0 0.0
        %2574 = vmatpush1.xpose.msra.mxu0 0.0
        %2575 = vmatprep.subr.mxu0 0.0
        %2576 = vmatpush1.xpose.msra.mxu0 0.0
        %2577 = vmatprep.subr.mxu0 0.0
        %2578 = vmatpush1.xpose.msra.mxu0 0.0
        %2579 = vmatprep.subr.mxu0 0.0
        %2580 = vmatpush1.xpose.msra.mxu0 0.0
        %2581 = vmatprep.subr.mxu0 0.0
        %2582 = vmatpush1.xpose.msra.mxu0 0.0
        %2583 = vmatprep.subr.mxu0 0.0
        %2584 = vmatpush1.xpose.msra.mxu0 0.0
        %2585 = vmatprep.subr.mxu0 0.0
        %2586 = vmatpush1.xpose.msra.mxu0 0.0
        %2587 = vmatprep.subr.mxu0 0.0
        %2588 = vmatpush1.xpose.msra.mxu0 0.0
        %2589 = vmatprep.subr.mxu0 0.0
        %2590 = vmatpush1.xpose.msra.mxu0 0.0
        %2591 = vmatprep.subr.mxu0 0.0
        %2592 = vmatpush1.xpose.msra.mxu0 0.0
        %2593 = vmatprep.subr.mxu0 0.0
        %2594 = vmatpush1.xpose.msra.mxu0 0.0
        %2595 = vmatprep.subr.mxu0 0.0
        %2596 = vmatpush1.xpose.msra.mxu0 0.0
        %2597 = vmatprep.subr.mxu0 0.0
        %2598 = vmatpush1.xpose.msra.mxu0 0.0
        %2599 = vmatprep.subr.mxu0 0.0
        %2600 = vmatpush1.xpose.msra.mxu0 0.0
        %2601 = vmatprep.subr.mxu0 0.0
        %2602 = vmatpush1.xpose.msra.mxu0 0.0
        %2603 = vmatprep.subr.mxu0 0.0
        %2604 = vmatpush1.xpose.msra.mxu0 0.0
        %2605 = vmatprep.subr.mxu0 0.0
        %2606 = vmatpush1.xpose.msra.mxu0 0.0
        %2607 = vmatprep.subr.mxu0 0.0
        %2608 = vmatpush1.xpose.msra.mxu0 0.0
        %2609 = vmatprep.subr.mxu0 0.0
        %2610 = vmatpush1.xpose.msra.mxu0 0.0
        %2611 = vmatprep.subr.mxu0 0.0
        %2612 = vmatpush1.xpose.msra.mxu0 0.0
        %2613 = vmatprep.subr.mxu0 0.0
        %2614 = vmatpush1.xpose.msra.mxu0 0.0
        %2615 = vmatprep.subr.mxu0 0.0
        %2616 = vmatpush1.xpose.msra.mxu0 0.0
        %2617 = vmatprep.subr.mxu0 0.0
        %2618 = vmatpush1.xpose.msra.mxu0 0.0
        %2619 = vmatprep.subr.mxu0 0.0
        %2620 = vmatpush1.xpose.msra.mxu0 0.0
        %2621 = vmatprep.subr.mxu0 0.0
        %2622 = vmatpush1.xpose.msra.mxu0 0.0
        %2623 = vmatprep.subr.mxu0 0.0
        %2624 = vmatpush1.xpose.msra.mxu0 0.0
        %2625 = vmatprep.mubr.f32.mxu0 0.0
        %2626 = vmatmul.mubr.f32.gmra.mrb[0].mxu0 %v2524
        %v2627 = vpop.f32.mrb[0].mxu0
        %v2628 = vadd.f32 0.0, %v2627
        %v2629 = vpop.f32.mrb[0].mxu0
        %2630 = vmatprep.mubr.f32.mxu0 0.0
        %2631 = vmatmul.mubr.f32.gmra.mrb[0].mxu0 %v2525
        %v2632 = vpop.f32.mrb[0].mxu0
        %v2633 = vadd.f32 0.0, %v2632
        %v2634 = vpop.f32.mrb[0].mxu0
        %2635 = vmatprep.mubr.f32.mxu0 0.0
        %2636 = vmatmul.mubr.f32.gmra.mrb[0].mxu0 %v2526
        %v2637 = vpop.f32.mrb[0].mxu0
        %v2638 = vadd.f32 0.0, %v2637
        %v2639 = vpop.f32.mrb[0].mxu0
        %2640 = vmatprep.mubr.f32.mxu0 0.0
        %2641 = vmatmul.mubr.f32.gmra.mrb[0].mxu0 %v2527
        %v2642 = vpop.f32.mrb[0].mxu0
        %v2643 = vadd.f32 0.0, %v2642
        %v2644 = vpop.f32.mrb[0].mxu0
        %2645 = vmatprep.mubr.f32.mxu0 0.0
        %2646 = vmatmul.mubr.f32.gmra.mrb[0].mxu0 %v2528
        %v2647 = vpop.f32.mrb[0].mxu0
        %v2648 = vadd.f32 0.0, %v2647
        %v2649 = vpop.f32.mrb[0].mxu0
        %2650 = vmatprep.mubr.f32.mxu0 0.0
        %2651 = vmatmul.mubr.f32.gmra.mrb[0].mxu0 %v2529
        %v2652 = vpop.f32.mrb[0].mxu0
        %v2653 = vadd.f32 0.0, %v2652
        %v2654 = vpop.f32.mrb[0].mxu0
        %2655 = vmatprep.mubr.f32.mxu0 0.0
        %2656 = vmatmul.mubr.f32.gmra.mrb[0].mxu0 %v2530
        %v2657 = vpop.f32.mrb[0].mxu0
        %v2658 = vadd.f32 0.0, %v2657
        %v2659 = vpop.f32.mrb[0].mxu0
        %2660 = vmatprep.mubr.f32.mxu0 0.0
        %2661 = vmatmul.mubr.f32.gmra.mrb[0].mxu0 %v2531
        %v2662 = vpop.f32.mrb[0].mxu0
        %v2663 = vadd.f32 0.0, %v2662
        %v2664 = vpop.f32.mrb[0].mxu0
        %2665 = vmatprep.mubr.f32.mxu0 0.0
        %2666 = vmatmul.mubr.f32.gmra.mrb[0].mxu0 %v2532
        %v2667 = vpop.f32.mrb[0].mxu0
        %v2668 = vadd.f32 0.0, %v2667
        %v2669 = vpop.f32.mrb[0].mxu0
        %2670 = vmatprep.mubr.f32.mxu0 0.0
        %2671 = vmatmul.mubr.f32.gmra.mrb[0].mxu0 %v2533
        %v2672 = vpop.f32.mrb[0].mxu0
        %v2673 = vadd.f32 0.0, %v2672
        %v2674 = vpop.f32.mrb[0].mxu0
        %2675 = vmatprep.mubr.f32.mxu0 0.0
        %2676 = vmatmul.mubr.f32.gmra.mrb[0].mxu0 %v2534
        %v2677 = vpop.f32.mrb[0].mxu0
        %v2678 = vadd.f32 0.0, %v2677
        %v2679 = vpop.f32.mrb[0].mxu0
        %2680 = vmatprep.mubr.f32.mxu0 0.0
        %2681 = vmatmul.mubr.f32.gmra.mrb[0].mxu0 %v2535
        %v2682 = vpop.f32.mrb[0].mxu0
        %v2683 = vadd.f32 0.0, %v2682
        %v2684 = vpop.f32.mrb[0].mxu0
        %2685 = vmatprep.mubr.f32.mxu0 0.0
        %2686 = vmatmul.mubr.f32.gmra.mrb[0].mxu0 %v2536
        %v2687 = vpop.f32.mrb[0].mxu0
        %v2688 = vadd.f32 0.0, %v2687
        %v2689 = vpop.f32.mrb[0].mxu0
        %2690 = vmatprep.mubr.f32.mxu0 0.0
        %2691 = vmatmul.mubr.f32.gmra.mrb[0].mxu0 %v2537
        %v2692 = vpop.f32.mrb[0].mxu0
        %v2693 = vadd.f32 0.0, %v2692
        %v2694 = vpop.f32.mrb[0].mxu0
        %2695 = vmatprep.mubr.f32.mxu0 0.0
        %2696 = vmatmul.mubr.f32.gmra.mrb[0].mxu0 %v2538
        %v2697 = vpop.f32.mrb[0].mxu0
        %v2698 = vadd.f32 0.0, %v2697
        %v2699 = vpop.f32.mrb[0].mxu0
        %2700 = vmatprep.mubr.f32.mxu0 0.0
        %2701 = vmatmul.mubr.f32.gmra.mrb[0].mxu0 %v2539
        %v2702 = vpop.f32.mrb[0].mxu0
        %v2703 = vadd.f32 0.0, %v2702
        %v2704 = vpop.f32.mrb[0].mxu0
        %2705 = vmatprep.mubr.f32.mxu0 0.0
        %2706 = vmatmul.mubr.f32.gmra.mrb[0].mxu0 %v2540
        %v2707 = vpop.f32.mrb[0].mxu0
        %v2708 = vadd.f32 0.0, %v2707
        %v2709 = vpop.f32.mrb[0].mxu0
        %2710 = vmatprep.mubr.f32.mxu0 0.0
        %2711 = vmatmul.mubr.f32.gmra.mrb[0].mxu0 %v2541
        %v2712 = vpop.f32.mrb[0].mxu0
        %v2713 = vadd.f32 0.0, %v2712
        %v2714 = vpop.f32.mrb[0].mxu0
        %2715 = vmatprep.mubr.f32.mxu0 0.0
        %2716 = vmatmul.mubr.f32.gmra.mrb[0].mxu0 %v2542
        %v2717 = vpop.f32.mrb[0].mxu0
        %v2718 = vadd.f32 0.0, %v2717
        %v2719 = vpop.f32.mrb[0].mxu0
        %2720 = vmatprep.mubr.f32.mxu0 0.0
        %2721 = vmatmul.mubr.f32.gmra.mrb[0].mxu0 %v2543
        %v2722 = vpop.f32.mrb[0].mxu0
        %v2723 = vadd.f32 0.0, %v2722
        %v2724 = vpop.f32.mrb[0].mxu0
        %2725 = vmatprep.mubr.f32.mxu0 0.0
        %2726 = vmatmul.mubr.f32.gmra.mrb[0].mxu0 %v2544
        %v2727 = vpop.f32.mrb[0].mxu0
        %v2728 = vadd.f32 0.0, %v2727
        %v2729 = vpop.f32.mrb[0].mxu0
        %2730 = vmatprep.mubr.f32.mxu0 0.0
        %2731 = vmatmul.mubr.f32.gmra.mrb[0].mxu0 %v2545
        %v2732 = vpop.f32.mrb[0].mxu0
        %v2733 = vadd.f32 0.0, %v2732
        %v2734 = vpop.f32.mrb[0].mxu0
        %2735 = vmatprep.mubr.f32.mxu0 0.0
        %2736 = vmatmul.mubr.f32.gmra.mrb[0].mxu0 %v2546
        %v2737 = vpop.f32.mrb[0].mxu0
        %v2738 = vadd.f32 0.0, %v2737
        %v2739 = vpop.f32.mrb[0].mxu0
        %2740 = vmatprep.mubr.f32.mxu0 0.0
        %2741 = vmatmul.mubr.f32.gmra.mrb[0].mxu0 %v2547
        %v2742 = vpop.f32.mrb[0].mxu0
        %v2743 = vadd.f32 0.0, %v2742
        %v2744 = vpop.f32.mrb[0].mxu0
        %2745 = vmatprep.mubr.f32.mxu0 0.0
        %2746 = vmatmul.mubr.f32.gmra.mrb[0].mxu0 %v2548
        %v2747 = vpop.f32.mrb[0].mxu0
        %v2748 = vadd.f32 0.0, %v2747
        %v2749 = vpop.f32.mrb[0].mxu0
        %2750 = vmatprep.mubr.f32.mxu0 0.0
        %2751 = vmatmul.mubr.f32.gmra.mrb[0].mxu0 %v2549
        %v2752 = vpop.f32.mrb[0].mxu0
        %v2753 = vadd.f32 0.0, %v2752
        %v2754 = vpop.f32.mrb[0].mxu0
        %2755 = vmatprep.mubr.f32.mxu0 0.0
        %2756 = vmatmul.mubr.f32.gmra.mrb[0].mxu0 %v2550
        %v2757 = vpop.f32.mrb[0].mxu0
        %v2758 = vadd.f32 0.0, %v2757
        %v2759 = vpop.f32.mrb[0].mxu0
        %2760 = vmatprep.mubr.f32.mxu0 0.0
        %2761 = vmatmul.mubr.f32.gmra.mrb[0].mxu0 %v2551
        %v2762 = vpop.f32.mrb[0].mxu0
        %v2763 = vadd.f32 0.0, %v2762
        %v2764 = vpop.f32.mrb[0].mxu0
        %2765 = vmatprep.mubr.f32.mxu0 0.0
        %2766 = vmatmul.mubr.f32.gmra.mrb[0].mxu0 %v2552
        %v2767 = vpop.f32.mrb[0].mxu0
        %v2768 = vadd.f32 0.0, %v2767
        %v2769 = vpop.f32.mrb[0].mxu0
        %2770 = vmatprep.mubr.f32.mxu0 0.0
        %2771 = vmatmul.mubr.f32.gmra.mrb[0].mxu0 %v2553
        %v2772 = vpop.f32.mrb[0].mxu0
        %v2773 = vadd.f32 0.0, %v2772
        %v2774 = vpop.f32.mrb[0].mxu0
        %2775 = vmatprep.mubr.f32.mxu0 0.0
        %2776 = vmatmul.mubr.f32.gmra.mrb[0].mxu0 %v2554
        %v2777 = vpop.f32.mrb[0].mxu0
        %v2778 = vadd.f32 0.0, %v2777
        %v2779 = vpop.f32.mrb[0].mxu0
        %2780 = vmatprep.mubr.f32.mxu0 0.0
        %2781 = vmatmul.mubr.f32.gmra.mrb[0].mxu0 %v2555
        %v2782 = vpop.f32.mrb[0].mxu0
        %v2783 = vadd.f32 0.0, %v2782
        %v2784 = vpop.f32.mrb[0].mxu0
        %2785 = vdwg.mxu0
        %v2786 = vadd.f32 %v2492, %v2628
        %v2787 = vadd.f32 %v2493, %v2633
        %v2788 = vadd.f32 %v2494, %v2638
        %v2789 = vadd.f32 %v2495, %v2643
        %v2790 = vadd.f32 %v2496, %v2648
        %v2791 = vadd.f32 %v2497, %v2653
        %v2792 = vadd.f32 %v2498, %v2658
        %v2793 = vadd.f32 %v2499, %v2663
        %v2794 = vadd.f32 %v2500, %v2668
        %v2795 = vadd.f32 %v2501, %v2673
        %v2796 = vadd.f32 %v2502, %v2678
        %v2797 = vadd.f32 %v2503, %v2683
        %v2798 = vadd.f32 %v2504, %v2688
        %v2799 = vadd.f32 %v2505, %v2693
        %v2800 = vadd.f32 %v2506, %v2698
        %v2801 = vadd.f32 %v2507, %v2703
        %v2802 = vadd.f32 %v2508, %v2708
        %v2803 = vadd.f32 %v2509, %v2713
        %v2804 = vadd.f32 %v2510, %v2718
        %v2805 = vadd.f32 %v2511, %v2723
        %v2806 = vadd.f32 %v2512, %v2728
        %v2807 = vadd.f32 %v2513, %v2733
        %v2808 = vadd.f32 %v2514, %v2738
        %v2809 = vadd.f32 %v2515, %v2743
        %v2810 = vadd.f32 %v2516, %v2748
        %v2811 = vadd.f32 %v2517, %v2753
        %v2812 = vadd.f32 %v2518, %v2758
        %v2813 = vadd.f32 %v2519, %v2763
        %v2814 = vadd.f32 %v2520, %v2768
        %v2815 = vadd.f32 %v2521, %v2773
        %v2816 = vadd.f32 %v2522, %v2778
        %v2817 = vadd.f32 %v2523, %v2783
        %v2818 = vld [vmem:[#allocation2] sm:$0xff]
        %v2819 = vld [vmem:[#allocation2 + $0x8] sm:$0xff]
        %v2820 = vld [vmem:[#allocation2 + $0x10] sm:$0xff]
        %v2821 = vld [vmem:[#allocation2 + $0x18] sm:$0xff]
        %v2822 = vld [vmem:[#allocation2 + $0x20] sm:$0xff]
        %v2823 = vld [vmem:[#allocation2 + $0x28] sm:$0xff]
        %v2824 = vld [vmem:[#allocation2 + $0x30] sm:$0xff]
        %v2825 = vld [vmem:[#allocation2 + $0x38] sm:$0xff]
        %v2826 = vld [vmem:[#allocation2 + $0x40] sm:$0xff]
        %v2827 = vld [vmem:[#allocation2 + $0x48] sm:$0xff]
        %v2828 = vld [vmem:[#allocation2 + $0x50] sm:$0xff]
        %v2829 = vld [vmem:[#allocation2 + $0x58] sm:$0xff]
        %v2830 = vld [vmem:[#allocation2 + $0x60] sm:$0xff]
        %v2831 = vld [vmem:[#allocation2 + $0x68] sm:$0xff]
        %v2832 = vld [vmem:[#allocation2 + $0x70] sm:$0xff]
        %v2833 = vld [vmem:[#allocation2 + $0x78] sm:$0xff]
        %v2834 = vld [vmem:[#allocation2 + $0x80] sm:$0xff]
        %v2835 = vld [vmem:[#allocation2 + $0x88] sm:$0xff]
        %v2836 = vld [vmem:[#allocation2 + $0x90] sm:$0xff]
        %v2837 = vld [vmem:[#allocation2 + $0x98] sm:$0xff]
        %v2838 = vld [vmem:[#allocation2 + $0xa0] sm:$0xff]
        %v2839 = vld [vmem:[#allocation2 + $0xa8] sm:$0xff]
        %v2840 = vld [vmem:[#allocation2 + $0xb0] sm:$0xff]
        %v2841 = vld [vmem:[#allocation2 + $0xb8] sm:$0xff]
        %v2842 = vld [vmem:[#allocation2 + $0xc0] sm:$0xff]
        %v2843 = vld [vmem:[#allocation2 + $0xc8] sm:$0xff]
        %v2844 = vld [vmem:[#allocation2 + $0xd0] sm:$0xff]
        %v2845 = vld [vmem:[#allocation2 + $0xd8] sm:$0xff]
        %v2846 = vld [vmem:[#allocation2 + $0xe0] sm:$0xff]
        %v2847 = vld [vmem:[#allocation2 + $0xe8] sm:$0xff]
        %v2848 = vld [vmem:[#allocation2 + $0xf0] sm:$0xff]
        %v2849 = vld [vmem:[#allocation2 + $0xf8] sm:$0xff]
        %2882 = vrot.lane.b32.xlu0 %v2786, 32
        %v2883 = vpop.permute.xlu0 %2882
        %2884 = vrot.lane.b32.xlu0 %v2787, 32
        %v2885 = vpop.permute.xlu0 %2884
        %2886 = vrot.lane.b32.xlu0 %v2788, 32
        %v2887 = vpop.permute.xlu0 %2886
        %2888 = vrot.lane.b32.xlu0 %v2789, 32
        %v2889 = vpop.permute.xlu0 %2888
        %2890 = vrot.lane.b32.xlu0 %v2790, 32
        %v2891 = vpop.permute.xlu0 %2890
        %2892 = vrot.lane.b32.xlu0 %v2791, 32
        %v2893 = vpop.permute.xlu0 %2892
        %2894 = vrot.lane.b32.xlu0 %v2792, 32
        %v2895 = vpop.permute.xlu0 %2894
        %2896 = vrot.lane.b32.xlu0 %v2793, 32
        %v2897 = vpop.permute.xlu0 %2896
        %2898 = vrot.lane.b32.xlu0 %v2794, 32
        %v2899 = vpop.permute.xlu0 %2898
        %2900 = vrot.lane.b32.xlu0 %v2795, 32
        %v2901 = vpop.permute.xlu0 %2900
        %2902 = vrot.lane.b32.xlu0 %v2796, 32
        %v2903 = vpop.permute.xlu0 %2902
        %2904 = vrot.lane.b32.xlu0 %v2797, 32
        %v2905 = vpop.permute.xlu0 %2904
        %2906 = vrot.lane.b32.xlu0 %v2798, 32
        %v2907 = vpop.permute.xlu0 %2906
        %2908 = vrot.lane.b32.xlu0 %v2799, 32
        %v2909 = vpop.permute.xlu0 %2908
        %2910 = vrot.lane.b32.xlu0 %v2800, 32
        %v2911 = vpop.permute.xlu0 %2910
        %2912 = vrot.lane.b32.xlu0 %v2801, 32
        %v2913 = vpop.permute.xlu0 %2912
        %2914 = vrot.lane.b32.xlu0 %v2802, 32
        %v2915 = vpop.permute.xlu0 %2914
        %2916 = vrot.lane.b32.xlu0 %v2803, 32
        %v2917 = vpop.permute.xlu0 %2916
        %2918 = vrot.lane.b32.xlu0 %v2804, 32
        %v2919 = vpop.permute.xlu0 %2918
        %2920 = vrot.lane.b32.xlu0 %v2805, 32
        %v2921 = vpop.permute.xlu0 %2920
        %2922 = vrot.lane.b32.xlu0 %v2806, 32
        %v2923 = vpop.permute.xlu0 %2922
        %2924 = vrot.lane.b32.xlu0 %v2807, 32
        %v2925 = vpop.permute.xlu0 %2924
        %2926 = vrot.lane.b32.xlu0 %v2808, 32
        %v2927 = vpop.permute.xlu0 %2926
        %2928 = vrot.lane.b32.xlu0 %v2809, 32
        %v2929 = vpop.permute.xlu0 %2928
        %2930 = vrot.lane.b32.xlu0 %v2810, 32
        %v2931 = vpop.permute.xlu0 %2930
        %2932 = vrot.lane.b32.xlu0 %v2811, 32
        %v2933 = vpop.permute.xlu0 %2932
        %2934 = vrot.lane.b32.xlu0 %v2812, 32
        %v2935 = vpop.permute.xlu0 %2934
        %2936 = vrot.lane.b32.xlu0 %v2813, 32
        %v2937 = vpop.permute.xlu0 %2936
        %2938 = vrot.lane.b32.xlu0 %v2814, 32
        %v2939 = vpop.permute.xlu0 %2938
        %2940 = vrot.lane.b32.xlu0 %v2815, 32
        %v2941 = vpop.permute.xlu0 %2940
        %2942 = vrot.lane.b32.xlu0 %v2816, 32
        %v2943 = vpop.permute.xlu0 %2942
        %2944 = vrot.lane.b32.xlu0 %v2817, 32
        %v2945 = vpop.permute.xlu0 %2944
        %v2978 = vadd.f32 %v2818, %v2883
        %v2979 = vadd.f32 %v2819, %v2885
        %v2980 = vadd.f32 %v2820, %v2887
        %v2981 = vadd.f32 %v2821, %v2889
        %v2982 = vadd.f32 %v2822, %v2891
        %v2983 = vadd.f32 %v2823, %v2893
        %v2984 = vadd.f32 %v2824, %v2895
        %v2985 = vadd.f32 %v2825, %v2897
        %v2986 = vadd.f32 %v2826, %v2899
        %v2987 = vadd.f32 %v2827, %v2901
        %v2988 = vadd.f32 %v2828, %v2903
        %v2989 = vadd.f32 %v2829, %v2905
        %v2990 = vadd.f32 %v2830, %v2907
        %v2991 = vadd.f32 %v2831, %v2909
        %v2992 = vadd.f32 %v2832, %v2911
        %v2993 = vadd.f32 %v2833, %v2913
        %v2994 = vadd.f32 %v2834, %v2915
        %v2995 = vadd.f32 %v2835, %v2917
        %v2996 = vadd.f32 %v2836, %v2919
        %v2997 = vadd.f32 %v2837, %v2921
        %v2998 = vadd.f32 %v2838, %v2923
        %v2999 = vadd.f32 %v2839, %v2925
        %v3000 = vadd.f32 %v2840, %v2927
        %v3001 = vadd.f32 %v2841, %v2929
        %v3002 = vadd.f32 %v2842, %v2931
        %v3003 = vadd.f32 %v2843, %v2933
        %v3004 = vadd.f32 %v2844, %v2935
        %v3005 = vadd.f32 %v2845, %v2937
        %v3006 = vadd.f32 %v2846, %v2939
        %v3007 = vadd.f32 %v2847, %v2941
        %v3008 = vadd.f32 %v2848, %v2943
        %v3009 = vadd.f32 %v2849, %v2945
        %vm3010 = vcmask 523520
        %3011 = vst.msk [vmem:[#allocation2] sm:$0xff] %vm3010, %v2978
        %3012 = vst.msk [vmem:[#allocation2 + $0x8] sm:$0xff] %vm3010, %v2979
        %3013 = vst.msk [vmem:[#allocation2 + $0x10] sm:$0xff] %vm3010, %v2980
        %3014 = vst.msk [vmem:[#allocation2 + $0x18] sm:$0xff] %vm3010, %v2981
        %3015 = vst.msk [vmem:[#allocation2 + $0x20] sm:$0xff] %vm3010, %v2982
        %3016 = vst.msk [vmem:[#allocation2 + $0x28] sm:$0xff] %vm3010, %v2983
        %3017 = vst.msk [vmem:[#allocation2 + $0x30] sm:$0xff] %vm3010, %v2984
        %3018 = vst.msk [vmem:[#allocation2 + $0x38] sm:$0xff] %vm3010, %v2985
        %3019 = vst.msk [vmem:[#allocation2 + $0x40] sm:$0xff] %vm3010, %v2986
        %3020 = vst.msk [vmem:[#allocation2 + $0x48] sm:$0xff] %vm3010, %v2987
        %3021 = vst.msk [vmem:[#allocation2 + $0x50] sm:$0xff] %vm3010, %v2988
        %3022 = vst.msk [vmem:[#allocation2 + $0x58] sm:$0xff] %vm3010, %v2989
        %3023 = vst.msk [vmem:[#allocation2 + $0x60] sm:$0xff] %vm3010, %v2990
        %3024 = vst.msk [vmem:[#allocation2 + $0x68] sm:$0xff] %vm3010, %v2991
        %3025 = vst.msk [vmem:[#allocation2 + $0x70] sm:$0xff] %vm3010, %v2992
        %3026 = vst.msk [vmem:[#allocation2 + $0x78] sm:$0xff] %vm3010, %v2993
        %3027 = vst.msk [vmem:[#allocation2 + $0x80] sm:$0xff] %vm3010, %v2994
        %3028 = vst.msk [vmem:[#allocation2 + $0x88] sm:$0xff] %vm3010, %v2995
        %3029 = vst.msk [vmem:[#allocation2 + $0x90] sm:$0xff] %vm3010, %v2996
        %3030 = vst.msk [vmem:[#allocation2 + $0x98] sm:$0xff] %vm3010, %v2997
        %3031 = vst.msk [vmem:[#allocation2 + $0xa0] sm:$0xff] %vm3010, %v2998
        %3032 = vst.msk [vmem:[#allocation2 + $0xa8] sm:$0xff] %vm3010, %v2999
        %3033 = vst.msk [vmem:[#allocation2 + $0xb0] sm:$0xff] %vm3010, %v3000
        %3034 = vst.msk [vmem:[#allocation2 + $0xb8] sm:$0xff] %vm3010, %v3001
        %3035 = vst.msk [vmem:[#allocation2 + $0xc0] sm:$0xff] %vm3010, %v3002
        %3036 = vst.msk [vmem:[#allocation2 + $0xc8] sm:$0xff] %vm3010, %v3003
        %3037 = vst.msk [vmem:[#allocation2 + $0xd0] sm:$0xff] %vm3010, %v3004
        %3038 = vst.msk [vmem:[#allocation2 + $0xd8] sm:$0xff] %vm3010, %v3005
        %3039 = vst.msk [vmem:[#allocation2 + $0xe0] sm:$0xff] %vm3010, %v3006
        %3040 = vst.msk [vmem:[#allocation2 + $0xe8] sm:$0xff] %vm3010, %v3007
        %3041 = vst.msk [vmem:[#allocation2 + $0xf0] sm:$0xff] %vm3010, %v3008
        %3042 = vst.msk [vmem:[#allocation2 + $0xf8] sm:$0xff] %vm3010, %v3009
        %s3043 = scalar_lea.vmem %s222, 24
        %v3044 = vld [vmem:[%s3043 + $0x1] sm:$0xff]
        %v3045 = vld [vmem:[%s3043 + $0x9] sm:$0xff]
        %v3046 = vld [vmem:[%s3043 + $0x19] sm:$0xff]
        %v3047 = vld [vmem:[%s3043 + $0x21] sm:$0xff]
        %v3048 = vld [vmem:[%s3043 + $0x31] sm:$0xff]
        %v3049 = vld [vmem:[%s3043 + $0x39] sm:$0xff]
        %v3050 = vld [vmem:[%s3043 + $0x49] sm:$0xff]
        %v3051 = vld [vmem:[%s3043 + $0x51] sm:$0xff]
        %v3052 = vld [vmem:[%s3043 + $0x61] sm:$0xff]
        %v3053 = vld [vmem:[%s3043 + $0x69] sm:$0xff]
        %v3054 = vld [vmem:[%s3043 + $0x79] sm:$0xff]
        %v3055 = vld [vmem:[%s3043 + $0x81] sm:$0xff]
        %v3056 = vld [vmem:[%s3043 + $0x91] sm:$0xff]
        %v3057 = vld [vmem:[%s3043 + $0x99] sm:$0xff]
        %v3058 = vld [vmem:[%s3043 + $0xa9] sm:$0xff]
        %v3059 = vld [vmem:[%s3043 + $0xb1] sm:$0xff]
        %v3060 = vld [vmem:[%s3043 + $0xc1] sm:$0xff]
        %v3061 = vld [vmem:[%s3043 + $0xc9] sm:$0xff]
        %v3062 = vld [vmem:[%s3043 + $0xd9] sm:$0xff]
        %v3063 = vld [vmem:[%s3043 + $0xe1] sm:$0xff]
        %v3064 = vld [vmem:[%s3043 + $0xf1] sm:$0xff]
        %v3065 = vld [vmem:[%s3043 + $0xf9] sm:$0xff]
        %v3066 = vld [vmem:[%s3043 + $0x109] sm:$0xff]
        %v3067 = vld [vmem:[%s3043 + $0x111] sm:$0xff]
        %v3068 = vld [vmem:[%s3043 + $0x121] sm:$0xff]
        %v3069 = vld [vmem:[%s3043 + $0x129] sm:$0xff]
        %v3070 = vld [vmem:[%s3043 + $0x139] sm:$0xff]
        %v3071 = vld [vmem:[%s3043 + $0x141] sm:$0xff]
        %v3072 = vld [vmem:[%s3043 + $0x151] sm:$0xff]
        %v3073 = vld [vmem:[%s3043 + $0x159] sm:$0xff]
        %v3074 = vld [vmem:[%s3043 + $0x169] sm:$0xff]
        %v3075 = vld [vmem:[%s3043 + $0x171] sm:$0xff]
        %s3076 = scalar_lea.vmem %s2, 256
        %v3077 = vld [vmem:[%s3076] sm:$0xff]
        %v3078 = vld [vmem:[%s3076 + $0x8] sm:$0xff]
        %v3079 = vld [vmem:[%s3076 + $0x10] sm:$0xff]
        %v3080 = vld [vmem:[%s3076 + $0x18] sm:$0xff]
        %v3081 = vld [vmem:[%s3043 + $0x3] sm:$0xff]
        %v3082 = vld [vmem:[%s3043 + $0xb] sm:$0xff]
        %v3083 = vld [vmem:[%s3043 + $0x1b] sm:$0xff]
        %v3084 = vld [vmem:[%s3043 + $0x23] sm:$0xff]
        %v3085 = vld [vmem:[%s3043 + $0x33] sm:$0xff]
        %v3086 = vld [vmem:[%s3043 + $0x3b] sm:$0xff]
        %v3087 = vld [vmem:[%s3043 + $0x4b] sm:$0xff]
        %v3088 = vld [vmem:[%s3043 + $0x53] sm:$0xff]
        %v3089 = vld [vmem:[%s3043 + $0x63] sm:$0xff]
        %v3090 = vld [vmem:[%s3043 + $0x6b] sm:$0xff]
        %v3091 = vld [vmem:[%s3043 + $0x7b] sm:$0xff]
        %v3092 = vld [vmem:[%s3043 + $0x83] sm:$0xff]
        %v3093 = vld [vmem:[%s3043 + $0x93] sm:$0xff]
        %v3094 = vld [vmem:[%s3043 + $0x9b] sm:$0xff]
        %v3095 = vld [vmem:[%s3043 + $0xab] sm:$0xff]
        %v3096 = vld [vmem:[%s3043 + $0xb3] sm:$0xff]
        %v3097 = vld [vmem:[%s3043 + $0xc3] sm:$0xff]
        %v3098 = vld [vmem:[%s3043 + $0xcb] sm:$0xff]
        %v3099 = vld [vmem:[%s3043 + $0xdb] sm:$0xff]
        %v3100 = vld [vmem:[%s3043 + $0xe3] sm:$0xff]
        %v3101 = vld [vmem:[%s3043 + $0xf3] sm:$0xff]
        %v3102 = vld [vmem:[%s3043 + $0xfb] sm:$0xff]
        %v3103 = vld [vmem:[%s3043 + $0x10b] sm:$0xff]
        %v3104 = vld [vmem:[%s3043 + $0x113] sm:$0xff]
        %v3105 = vld [vmem:[%s3043 + $0x123] sm:$0xff]
        %v3106 = vld [vmem:[%s3043 + $0x12b] sm:$0xff]
        %v3107 = vld [vmem:[%s3043 + $0x13b] sm:$0xff]
        %v3108 = vld [vmem:[%s3043 + $0x143] sm:$0xff]
        %v3109 = vld [vmem:[%s3043 + $0x153] sm:$0xff]
        %v3110 = vld [vmem:[%s3043 + $0x15b] sm:$0xff]
        %v3111 = vld [vmem:[%s3043 + $0x16b] sm:$0xff]
        %v3112 = vld [vmem:[%s3043 + $0x173] sm:$0xff]
        %s3113 = scalar_lea.vmem %s2, 288
        %v3114 = vld [vmem:[%s3113] sm:$0xff]
        %v3115 = vld [vmem:[%s3113 + $0x8] sm:$0xff]
        %v3116 = vld [vmem:[%s3113 + $0x10] sm:$0xff]
        %v3117 = vld [vmem:[%s3113 + $0x18] sm:$0xff]
        %3118 = vmatprep.subr.mxu0 0.0
        %3119 = vmatpush1.xpose.msra.mxu0 %v3114
        %3120 = vmatprep.subr.mxu0 0.0
        %3121 = vmatpush1.xpose.msra.mxu0 %v3115
        %3122 = vmatprep.subr.mxu0 0.0
        %3123 = vmatpush1.xpose.msra.mxu0 %v3116
        %3124 = vmatprep.subr.mxu0 0.0
        %3125 = vmatpush1.xpose.msra.mxu0 %v3117
        %3126 = vmatprep.subr.mxu0 0.0
        %3127 = vmatpush1.xpose.msra.mxu0 0.0
        %3128 = vmatprep.subr.mxu0 0.0
        %3129 = vmatpush1.xpose.msra.mxu0 0.0
        %3130 = vmatprep.subr.mxu0 0.0
        %3131 = vmatpush1.xpose.msra.mxu0 0.0
        %3132 = vmatprep.subr.mxu0 0.0
        %3133 = vmatpush1.xpose.msra.mxu0 0.0
        %3134 = vmatprep.subr.mxu0 0.0
        %3135 = vmatpush1.xpose.msra.mxu0 0.0
        %3136 = vmatprep.subr.mxu0 0.0
        %3137 = vmatpush1.xpose.msra.mxu0 0.0
        %3138 = vmatprep.subr.mxu0 0.0
        %3139 = vmatpush1.xpose.msra.mxu0 0.0
        %3140 = vmatprep.subr.mxu0 0.0
        %3141 = vmatpush1.xpose.msra.mxu0 0.0
        %3142 = vmatprep.subr.mxu0 0.0
        %3143 = vmatpush1.xpose.msra.mxu0 0.0
        %3144 = vmatprep.subr.mxu0 0.0
        %3145 = vmatpush1.xpose.msra.mxu0 0.0
        %3146 = vmatprep.subr.mxu0 0.0
        %3147 = vmatpush1.xpose.msra.mxu0 0.0
        %3148 = vmatprep.subr.mxu0 0.0
        %3149 = vmatpush1.xpose.msra.mxu0 0.0
        %3150 = vmatprep.subr.mxu0 0.0
        %3151 = vmatpush1.xpose.msra.mxu0 0.0
        %3152 = vmatprep.subr.mxu0 0.0
        %3153 = vmatpush1.xpose.msra.mxu0 0.0
        %3154 = vmatprep.subr.mxu0 0.0
        %3155 = vmatpush1.xpose.msra.mxu0 0.0
        %3156 = vmatprep.subr.mxu0 0.0
        %3157 = vmatpush1.xpose.msra.mxu0 0.0
        %3158 = vmatprep.subr.mxu0 0.0
        %3159 = vmatpush1.xpose.msra.mxu0 0.0
        %3160 = vmatprep.subr.mxu0 0.0
        %3161 = vmatpush1.xpose.msra.mxu0 0.0
        %3162 = vmatprep.subr.mxu0 0.0
        %3163 = vmatpush1.xpose.msra.mxu0 0.0
        %3164 = vmatprep.subr.mxu0 0.0
        %3165 = vmatpush1.xpose.msra.mxu0 0.0
        %3166 = vmatprep.subr.mxu0 0.0
        %3167 = vmatpush1.xpose.msra.mxu0 0.0
        %3168 = vmatprep.subr.mxu0 0.0
        %3169 = vmatpush1.xpose.msra.mxu0 0.0
        %3170 = vmatprep.subr.mxu0 0.0
        %3171 = vmatpush1.xpose.msra.mxu0 0.0
        %3172 = vmatprep.subr.mxu0 0.0
        %3173 = vmatpush1.xpose.msra.mxu0 0.0
        %3174 = vmatprep.subr.mxu0 0.0
        %3175 = vmatpush1.xpose.msra.mxu0 0.0
        %3176 = vmatprep.subr.mxu0 0.0
        %3177 = vmatpush1.xpose.msra.mxu0 0.0
        %3178 = vmatprep.subr.mxu0 0.0
        %3179 = vmatpush1.xpose.msra.mxu0 0.0
        %3180 = vmatprep.subr.mxu0 0.0
        %3181 = vmatpush1.xpose.msra.mxu0 0.0
        %3182 = vmatprep.mubr.f32.mxu0 0.0
        %3183 = vmatmul.mubr.f32.gmra.mrb[0].mxu0 %v3081
        %v3184 = vpop.f32.mrb[0].mxu0
        %v3185 = vadd.f32 0.0, %v3184
        %v3186 = vpop.f32.mrb[0].mxu0
        %3187 = vmatprep.mubr.f32.mxu0 0.0
        %3188 = vmatmul.mubr.f32.gmra.mrb[0].mxu0 %v3082
        %v3189 = vpop.f32.mrb[0].mxu0
        %v3190 = vadd.f32 0.0, %v3189
        %v3191 = vpop.f32.mrb[0].mxu0
        %3192 = vmatprep.mubr.f32.mxu0 0.0
        %3193 = vmatmul.mubr.f32.gmra.mrb[0].mxu0 %v3083
        %v3194 = vpop.f32.mrb[0].mxu0
        %v3195 = vadd.f32 0.0, %v3194
        %v3196 = vpop.f32.mrb[0].mxu0
        %3197 = vmatprep.mubr.f32.mxu0 0.0
        %3198 = vmatmul.mubr.f32.gmra.mrb[0].mxu0 %v3084
        %v3199 = vpop.f32.mrb[0].mxu0
        %v3200 = vadd.f32 0.0, %v3199
        %v3201 = vpop.f32.mrb[0].mxu0
        %3202 = vmatprep.mubr.f32.mxu0 0.0
        %3203 = vmatmul.mubr.f32.gmra.mrb[0].mxu0 %v3085
        %v3204 = vpop.f32.mrb[0].mxu0
        %v3205 = vadd.f32 0.0, %v3204
        %v3206 = vpop.f32.mrb[0].mxu0
        %3207 = vmatprep.mubr.f32.mxu0 0.0
        %3208 = vmatmul.mubr.f32.gmra.mrb[0].mxu0 %v3086
        %v3209 = vpop.f32.mrb[0].mxu0
        %v3210 = vadd.f32 0.0, %v3209
        %v3211 = vpop.f32.mrb[0].mxu0
        %3212 = vmatprep.mubr.f32.mxu0 0.0
        %3213 = vmatmul.mubr.f32.gmra.mrb[0].mxu0 %v3087
        %v3214 = vpop.f32.mrb[0].mxu0
        %v3215 = vadd.f32 0.0, %v3214
        %v3216 = vpop.f32.mrb[0].mxu0
        %3217 = vmatprep.mubr.f32.mxu0 0.0
        %3218 = vmatmul.mubr.f32.gmra.mrb[0].mxu0 %v3088
        %v3219 = vpop.f32.mrb[0].mxu0
        %v3220 = vadd.f32 0.0, %v3219
        %v3221 = vpop.f32.mrb[0].mxu0
        %3222 = vmatprep.mubr.f32.mxu0 0.0
        %3223 = vmatmul.mubr.f32.gmra.mrb[0].mxu0 %v3089
        %v3224 = vpop.f32.mrb[0].mxu0
        %v3225 = vadd.f32 0.0, %v3224
        %v3226 = vpop.f32.mrb[0].mxu0
        %3227 = vmatprep.mubr.f32.mxu0 0.0
        %3228 = vmatmul.mubr.f32.gmra.mrb[0].mxu0 %v3090
        %v3229 = vpop.f32.mrb[0].mxu0
        %v3230 = vadd.f32 0.0, %v3229
        %v3231 = vpop.f32.mrb[0].mxu0
        %3232 = vmatprep.mubr.f32.mxu0 0.0
        %3233 = vmatmul.mubr.f32.gmra.mrb[0].mxu0 %v3091
        %v3234 = vpop.f32.mrb[0].mxu0
        %v3235 = vadd.f32 0.0, %v3234
        %v3236 = vpop.f32.mrb[0].mxu0
        %3237 = vmatprep.mubr.f32.mxu0 0.0
        %3238 = vmatmul.mubr.f32.gmra.mrb[0].mxu0 %v3092
        %v3239 = vpop.f32.mrb[0].mxu0
        %v3240 = vadd.f32 0.0, %v3239
        %v3241 = vpop.f32.mrb[0].mxu0
        %3242 = vmatprep.mubr.f32.mxu0 0.0
        %3243 = vmatmul.mubr.f32.gmra.mrb[0].mxu0 %v3093
        %v3244 = vpop.f32.mrb[0].mxu0
        %v3245 = vadd.f32 0.0, %v3244
        %v3246 = vpop.f32.mrb[0].mxu0
        %3247 = vmatprep.mubr.f32.mxu0 0.0
        %3248 = vmatmul.mubr.f32.gmra.mrb[0].mxu0 %v3094
        %v3249 = vpop.f32.mrb[0].mxu0
        %v3250 = vadd.f32 0.0, %v3249
        %v3251 = vpop.f32.mrb[0].mxu0
        %3252 = vmatprep.mubr.f32.mxu0 0.0
        %3253 = vmatmul.mubr.f32.gmra.mrb[0].mxu0 %v3095
        %v3254 = vpop.f32.mrb[0].mxu0
        %v3255 = vadd.f32 0.0, %v3254
        %v3256 = vpop.f32.mrb[0].mxu0
        %3257 = vmatprep.mubr.f32.mxu0 0.0
        %3258 = vmatmul.mubr.f32.gmra.mrb[0].mxu0 %v3096
        %v3259 = vpop.f32.mrb[0].mxu0
        %v3260 = vadd.f32 0.0, %v3259
        %v3261 = vpop.f32.mrb[0].mxu0
        %3262 = vmatprep.mubr.f32.mxu0 0.0
        %3263 = vmatmul.mubr.f32.gmra.mrb[0].mxu0 %v3097
        %v3264 = vpop.f32.mrb[0].mxu0
        %v3265 = vadd.f32 0.0, %v3264
        %v3266 = vpop.f32.mrb[0].mxu0
        %3267 = vmatprep.mubr.f32.mxu0 0.0
        %3268 = vmatmul.mubr.f32.gmra.mrb[0].mxu0 %v3098
        %v3269 = vpop.f32.mrb[0].mxu0
        %v3270 = vadd.f32 0.0, %v3269
        %v3271 = vpop.f32.mrb[0].mxu0
        %3272 = vmatprep.mubr.f32.mxu0 0.0
        %3273 = vmatmul.mubr.f32.gmra.mrb[0].mxu0 %v3099
        %v3274 = vpop.f32.mrb[0].mxu0
        %v3275 = vadd.f32 0.0, %v3274
        %v3276 = vpop.f32.mrb[0].mxu0
        %3277 = vmatprep.mubr.f32.mxu0 0.0
        %3278 = vmatmul.mubr.f32.gmra.mrb[0].mxu0 %v3100
        %v3279 = vpop.f32.mrb[0].mxu0
        %v3280 = vadd.f32 0.0, %v3279
        %v3281 = vpop.f32.mrb[0].mxu0
        %3282 = vmatprep.mubr.f32.mxu0 0.0
        %3283 = vmatmul.mubr.f32.gmra.mrb[0].mxu0 %v3101
        %v3284 = vpop.f32.mrb[0].mxu0
        %v3285 = vadd.f32 0.0, %v3284
        %v3286 = vpop.f32.mrb[0].mxu0
        %3287 = vmatprep.mubr.f32.mxu0 0.0
        %3288 = vmatmul.mubr.f32.gmra.mrb[0].mxu0 %v3102
        %v3289 = vpop.f32.mrb[0].mxu0
        %v3290 = vadd.f32 0.0, %v3289
        %v3291 = vpop.f32.mrb[0].mxu0
        %3292 = vmatprep.mubr.f32.mxu0 0.0
        %3293 = vmatmul.mubr.f32.gmra.mrb[0].mxu0 %v3103
        %v3294 = vpop.f32.mrb[0].mxu0
        %v3295 = vadd.f32 0.0, %v3294
        %v3296 = vpop.f32.mrb[0].mxu0
        %3297 = vmatprep.mubr.f32.mxu0 0.0
        %3298 = vmatmul.mubr.f32.gmra.mrb[0].mxu0 %v3104
        %v3299 = vpop.f32.mrb[0].mxu0
        %v3300 = vadd.f32 0.0, %v3299
        %v3301 = vpop.f32.mrb[0].mxu0
        %3302 = vmatprep.mubr.f32.mxu0 0.0
        %3303 = vmatmul.mubr.f32.gmra.mrb[0].mxu0 %v3105
        %v3304 = vpop.f32.mrb[0].mxu0
        %v3305 = vadd.f32 0.0, %v3304
        %v3306 = vpop.f32.mrb[0].mxu0
        %3307 = vmatprep.mubr.f32.mxu0 0.0
        %3308 = vmatmul.mubr.f32.gmra.mrb[0].mxu0 %v3106
        %v3309 = vpop.f32.mrb[0].mxu0
        %v3310 = vadd.f32 0.0, %v3309
        %v3311 = vpop.f32.mrb[0].mxu0
        %3312 = vmatprep.mubr.f32.mxu0 0.0
        %3313 = vmatmul.mubr.f32.gmra.mrb[0].mxu0 %v3107
        %v3314 = vpop.f32.mrb[0].mxu0
        %v3315 = vadd.f32 0.0, %v3314
        %v3316 = vpop.f32.mrb[0].mxu0
        %3317 = vmatprep.mubr.f32.mxu0 0.0
        %3318 = vmatmul.mubr.f32.gmra.mrb[0].mxu0 %v3108
        %v3319 = vpop.f32.mrb[0].mxu0
        %v3320 = vadd.f32 0.0, %v3319
        %v3321 = vpop.f32.mrb[0].mxu0
        %3322 = vmatprep.mubr.f32.mxu0 0.0
        %3323 = vmatmul.mubr.f32.gmra.mrb[0].mxu0 %v3109
        %v3324 = vpop.f32.mrb[0].mxu0
        %v3325 = vadd.f32 0.0, %v3324
        %v3326 = vpop.f32.mrb[0].mxu0
        %3327 = vmatprep.mubr.f32.mxu0 0.0
        %3328 = vmatmul.mubr.f32.gmra.mrb[0].mxu0 %v3110
        %v3329 = vpop.f32.mrb[0].mxu0
        %v3330 = vadd.f32 0.0, %v3329
        %v3331 = vpop.f32.mrb[0].mxu0
        %3332 = vmatprep.mubr.f32.mxu0 0.0
        %3333 = vmatmul.mubr.f32.gmra.mrb[0].mxu0 %v3111
        %v3334 = vpop.f32.mrb[0].mxu0
        %v3335 = vadd.f32 0.0, %v3334
        %v3336 = vpop.f32.mrb[0].mxu0
        %3337 = vmatprep.mubr.f32.mxu0 0.0
        %3338 = vmatmul.mubr.f32.gmra.mrb[0].mxu0 %v3112
        %v3339 = vpop.f32.mrb[0].mxu0
        %v3340 = vadd.f32 0.0, %v3339
        %v3341 = vpop.f32.mrb[0].mxu0
        %3342 = vdwg.mxu0
        %3343 = vmatprep.subr.mxu0 0.0
        %3344 = vmatpush1.xpose.msra.mxu0 %v3077
        %3345 = vmatprep.subr.mxu0 0.0
        %3346 = vmatpush1.xpose.msra.mxu0 %v3078
        %3347 = vmatprep.subr.mxu0 0.0
        %3348 = vmatpush1.xpose.msra.mxu0 %v3079
        %3349 = vmatprep.subr.mxu0 0.0
        %3350 = vmatpush1.xpose.msra.mxu0 %v3080
        %3351 = vmatprep.subr.mxu0 0.0
        %3352 = vmatpush1.xpose.msra.mxu0 0.0
        %3353 = vmatprep.subr.mxu0 0.0
        %3354 = vmatpush1.xpose.msra.mxu0 0.0
        %3355 = vmatprep.subr.mxu0 0.0
        %3356 = vmatpush1.xpose.msra.mxu0 0.0
        %3357 = vmatprep.subr.mxu0 0.0
        %3358 = vmatpush1.xpose.msra.mxu0 0.0
        %3359 = vmatprep.subr.mxu0 0.0
        %3360 = vmatpush1.xpose.msra.mxu0 0.0
        %3361 = vmatprep.subr.mxu0 0.0
        %3362 = vmatpush1.xpose.msra.mxu0 0.0
        %3363 = vmatprep.subr.mxu0 0.0
        %3364 = vmatpush1.xpose.msra.mxu0 0.0
        %3365 = vmatprep.subr.mxu0 0.0
        %3366 = vmatpush1.xpose.msra.mxu0 0.0
        %3367 = vmatprep.subr.mxu0 0.0
        %3368 = vmatpush1.xpose.msra.mxu0 0.0
        %3369 = vmatprep.subr.mxu0 0.0
        %3370 = vmatpush1.xpose.msra.mxu0 0.0
        %3371 = vmatprep.subr.mxu0 0.0
        %3372 = vmatpush1.xpose.msra.mxu0 0.0
        %3373 = vmatprep.subr.mxu0 0.0
        %3374 = vmatpush1.xpose.msra.mxu0 0.0
        %3375 = vmatprep.subr.mxu0 0.0
        %3376 = vmatpush1.xpose.msra.mxu0 0.0
        %3377 = vmatprep.subr.mxu0 0.0
        %3378 = vmatpush1.xpose.msra.mxu0 0.0
        %3379 = vmatprep.subr.mxu0 0.0
        %3380 = vmatpush1.xpose.msra.mxu0 0.0
        %3381 = vmatprep.subr.mxu0 0.0
        %3382 = vmatpush1.xpose.msra.mxu0 0.0
        %3383 = vmatprep.subr.mxu0 0.0
        %3384 = vmatpush1.xpose.msra.mxu0 0.0
        %3385 = vmatprep.subr.mxu0 0.0
        %3386 = vmatpush1.xpose.msra.mxu0 0.0
        %3387 = vmatprep.subr.mxu0 0.0
        %3388 = vmatpush1.xpose.msra.mxu0 0.0
        %3389 = vmatprep.subr.mxu0 0.0
        %3390 = vmatpush1.xpose.msra.mxu0 0.0
        %3391 = vmatprep.subr.mxu0 0.0
        %3392 = vmatpush1.xpose.msra.mxu0 0.0
        %3393 = vmatprep.subr.mxu0 0.0
        %3394 = vmatpush1.xpose.msra.mxu0 0.0
        %3395 = vmatprep.subr.mxu0 0.0
        %3396 = vmatpush1.xpose.msra.mxu0 0.0
        %3397 = vmatprep.subr.mxu0 0.0
        %3398 = vmatpush1.xpose.msra.mxu0 0.0
        %3399 = vmatprep.subr.mxu0 0.0
        %3400 = vmatpush1.xpose.msra.mxu0 0.0
        %3401 = vmatprep.subr.mxu0 0.0
        %3402 = vmatpush1.xpose.msra.mxu0 0.0
        %3403 = vmatprep.subr.mxu0 0.0
        %3404 = vmatpush1.xpose.msra.mxu0 0.0
        %3405 = vmatprep.subr.mxu0 0.0
        %3406 = vmatpush1.xpose.msra.mxu0 0.0
        %3407 = vmatprep.mubr.f32.mxu0 0.0
        %3408 = vmatmul.mubr.f32.gmra.mrb[0].mxu0 %v3044
        %v3409 = vpop.f32.mrb[0].mxu0
        %v3410 = vadd.f32 %v3185, %v3409
        %v3411 = vpop.f32.mrb[0].mxu0
        %3412 = vmatprep.mubr.f32.mxu0 0.0
        %3413 = vmatmul.mubr.f32.gmra.mrb[0].mxu0 %v3045
        %v3414 = vpop.f32.mrb[0].mxu0
        %v3415 = vadd.f32 %v3190, %v3414
        %v3416 = vpop.f32.mrb[0].mxu0
        %3417 = vmatprep.mubr.f32.mxu0 0.0
        %3418 = vmatmul.mubr.f32.gmra.mrb[0].mxu0 %v3046
        %v3419 = vpop.f32.mrb[0].mxu0
        %v3420 = vadd.f32 %v3195, %v3419
        %v3421 = vpop.f32.mrb[0].mxu0
        %3422 = vmatprep.mubr.f32.mxu0 0.0
        %3423 = vmatmul.mubr.f32.gmra.mrb[0].mxu0 %v3047
        %v3424 = vpop.f32.mrb[0].mxu0
        %v3425 = vadd.f32 %v3200, %v3424
        %v3426 = vpop.f32.mrb[0].mxu0
        %3427 = vmatprep.mubr.f32.mxu0 0.0
        %3428 = vmatmul.mubr.f32.gmra.mrb[0].mxu0 %v3048
        %v3429 = vpop.f32.mrb[0].mxu0
        %v3430 = vadd.f32 %v3205, %v3429
        %v3431 = vpop.f32.mrb[0].mxu0
        %3432 = vmatprep.mubr.f32.mxu0 0.0
        %3433 = vmatmul.mubr.f32.gmra.mrb[0].mxu0 %v3049
        %v3434 = vpop.f32.mrb[0].mxu0
        %v3435 = vadd.f32 %v3210, %v3434
        %v3436 = vpop.f32.mrb[0].mxu0
        %3437 = vmatprep.mubr.f32.mxu0 0.0
        %3438 = vmatmul.mubr.f32.gmra.mrb[0].mxu0 %v3050
        %v3439 = vpop.f32.mrb[0].mxu0
        %v3440 = vadd.f32 %v3215, %v3439
        %v3441 = vpop.f32.mrb[0].mxu0
        %3442 = vmatprep.mubr.f32.mxu0 0.0
        %3443 = vmatmul.mubr.f32.gmra.mrb[0].mxu0 %v3051
        %v3444 = vpop.f32.mrb[0].mxu0
        %v3445 = vadd.f32 %v3220, %v3444
        %v3446 = vpop.f32.mrb[0].mxu0
        %3447 = vmatprep.mubr.f32.mxu0 0.0
        %3448 = vmatmul.mubr.f32.gmra.mrb[0].mxu0 %v3052
        %v3449 = vpop.f32.mrb[0].mxu0
        %v3450 = vadd.f32 %v3225, %v3449
        %v3451 = vpop.f32.mrb[0].mxu0
        %3452 = vmatprep.mubr.f32.mxu0 0.0
        %3453 = vmatmul.mubr.f32.gmra.mrb[0].mxu0 %v3053
        %v3454 = vpop.f32.mrb[0].mxu0
        %v3455 = vadd.f32 %v3230, %v3454
        %v3456 = vpop.f32.mrb[0].mxu0
        %3457 = vmatprep.mubr.f32.mxu0 0.0
        %3458 = vmatmul.mubr.f32.gmra.mrb[0].mxu0 %v3054
        %v3459 = vpop.f32.mrb[0].mxu0
        %v3460 = vadd.f32 %v3235, %v3459
        %v3461 = vpop.f32.mrb[0].mxu0
        %3462 = vmatprep.mubr.f32.mxu0 0.0
        %3463 = vmatmul.mubr.f32.gmra.mrb[0].mxu0 %v3055
        %v3464 = vpop.f32.mrb[0].mxu0
        %v3465 = vadd.f32 %v3240, %v3464
        %v3466 = vpop.f32.mrb[0].mxu0
        %3467 = vmatprep.mubr.f32.mxu0 0.0
        %3468 = vmatmul.mubr.f32.gmra.mrb[0].mxu0 %v3056
        %v3469 = vpop.f32.mrb[0].mxu0
        %v3470 = vadd.f32 %v3245, %v3469
        %v3471 = vpop.f32.mrb[0].mxu0
        %3472 = vmatprep.mubr.f32.mxu0 0.0
        %3473 = vmatmul.mubr.f32.gmra.mrb[0].mxu0 %v3057
        %v3474 = vpop.f32.mrb[0].mxu0
        %v3475 = vadd.f32 %v3250, %v3474
        %v3476 = vpop.f32.mrb[0].mxu0
        %3477 = vmatprep.mubr.f32.mxu0 0.0
        %3478 = vmatmul.mubr.f32.gmra.mrb[0].mxu0 %v3058
        %v3479 = vpop.f32.mrb[0].mxu0
        %v3480 = vadd.f32 %v3255, %v3479
        %v3481 = vpop.f32.mrb[0].mxu0
        %3482 = vmatprep.mubr.f32.mxu0 0.0
        %3483 = vmatmul.mubr.f32.gmra.mrb[0].mxu0 %v3059
        %v3484 = vpop.f32.mrb[0].mxu0
        %v3485 = vadd.f32 %v3260, %v3484
        %v3486 = vpop.f32.mrb[0].mxu0
        %3487 = vmatprep.mubr.f32.mxu0 0.0
        %3488 = vmatmul.mubr.f32.gmra.mrb[0].mxu0 %v3060
        %v3489 = vpop.f32.mrb[0].mxu0
        %v3490 = vadd.f32 %v3265, %v3489
        %v3491 = vpop.f32.mrb[0].mxu0
        %3492 = vmatprep.mubr.f32.mxu0 0.0
        %3493 = vmatmul.mubr.f32.gmra.mrb[0].mxu0 %v3061
        %v3494 = vpop.f32.mrb[0].mxu0
        %v3495 = vadd.f32 %v3270, %v3494
        %v3496 = vpop.f32.mrb[0].mxu0
        %3497 = vmatprep.mubr.f32.mxu0 0.0
        %3498 = vmatmul.mubr.f32.gmra.mrb[0].mxu0 %v3062
        %v3499 = vpop.f32.mrb[0].mxu0
        %v3500 = vadd.f32 %v3275, %v3499
        %v3501 = vpop.f32.mrb[0].mxu0
        %3502 = vmatprep.mubr.f32.mxu0 0.0
        %3503 = vmatmul.mubr.f32.gmra.mrb[0].mxu0 %v3063
        %v3504 = vpop.f32.mrb[0].mxu0
        %v3505 = vadd.f32 %v3280, %v3504
        %v3506 = vpop.f32.mrb[0].mxu0
        %3507 = vmatprep.mubr.f32.mxu0 0.0
        %3508 = vmatmul.mubr.f32.gmra.mrb[0].mxu0 %v3064
        %v3509 = vpop.f32.mrb[0].mxu0
        %v3510 = vadd.f32 %v3285, %v3509
        %v3511 = vpop.f32.mrb[0].mxu0
        %3512 = vmatprep.mubr.f32.mxu0 0.0
        %3513 = vmatmul.mubr.f32.gmra.mrb[0].mxu0 %v3065
        %v3514 = vpop.f32.mrb[0].mxu0
        %v3515 = vadd.f32 %v3290, %v3514
        %v3516 = vpop.f32.mrb[0].mxu0
        %3517 = vmatprep.mubr.f32.mxu0 0.0
        %3518 = vmatmul.mubr.f32.gmra.mrb[0].mxu0 %v3066
        %v3519 = vpop.f32.mrb[0].mxu0
        %v3520 = vadd.f32 %v3295, %v3519
        %v3521 = vpop.f32.mrb[0].mxu0
        %3522 = vmatprep.mubr.f32.mxu0 0.0
        %3523 = vmatmul.mubr.f32.gmra.mrb[0].mxu0 %v3067
        %v3524 = vpop.f32.mrb[0].mxu0
        %v3525 = vadd.f32 %v3300, %v3524
        %v3526 = vpop.f32.mrb[0].mxu0
        %3527 = vmatprep.mubr.f32.mxu0 0.0
        %3528 = vmatmul.mubr.f32.gmra.mrb[0].mxu0 %v3068
        %v3529 = vpop.f32.mrb[0].mxu0
        %v3530 = vadd.f32 %v3305, %v3529
        %v3531 = vpop.f32.mrb[0].mxu0
        %3532 = vmatprep.mubr.f32.mxu0 0.0
        %3533 = vmatmul.mubr.f32.gmra.mrb[0].mxu0 %v3069
        %v3534 = vpop.f32.mrb[0].mxu0
        %v3535 = vadd.f32 %v3310, %v3534
        %v3536 = vpop.f32.mrb[0].mxu0
        %3537 = vmatprep.mubr.f32.mxu0 0.0
        %3538 = vmatmul.mubr.f32.gmra.mrb[0].mxu0 %v3070
        %v3539 = vpop.f32.mrb[0].mxu0
        %v3540 = vadd.f32 %v3315, %v3539
        %v3541 = vpop.f32.mrb[0].mxu0
        %3542 = vmatprep.mubr.f32.mxu0 0.0
        %3543 = vmatmul.mubr.f32.gmra.mrb[0].mxu0 %v3071
        %v3544 = vpop.f32.mrb[0].mxu0
        %v3545 = vadd.f32 %v3320, %v3544
        %v3546 = vpop.f32.mrb[0].mxu0
        %3547 = vmatprep.mubr.f32.mxu0 0.0
        %3548 = vmatmul.mubr.f32.gmra.mrb[0].mxu0 %v3072
        %v3549 = vpop.f32.mrb[0].mxu0
        %v3550 = vadd.f32 %v3325, %v3549
        %v3551 = vpop.f32.mrb[0].mxu0
        %3552 = vmatprep.mubr.f32.mxu0 0.0
        %3553 = vmatmul.mubr.f32.gmra.mrb[0].mxu0 %v3073
        %v3554 = vpop.f32.mrb[0].mxu0
        %v3555 = vadd.f32 %v3330, %v3554
        %v3556 = vpop.f32.mrb[0].mxu0
        %3557 = vmatprep.mubr.f32.mxu0 0.0
        %3558 = vmatmul.mubr.f32.gmra.mrb[0].mxu0 %v3074
        %v3559 = vpop.f32.mrb[0].mxu0
        %v3560 = vadd.f32 %v3335, %v3559
        %v3561 = vpop.f32.mrb[0].mxu0
        %3562 = vmatprep.mubr.f32.mxu0 0.0
        %3563 = vmatmul.mubr.f32.gmra.mrb[0].mxu0 %v3075
        %v3564 = vpop.f32.mrb[0].mxu0
        %v3565 = vadd.f32 %v3340, %v3564
        %v3566 = vpop.f32.mrb[0].mxu0
        %3567 = vdwg.mxu0
        %v3568 = vld [vmem:[%s3043 + $0x5] sm:$0xff]
        %v3569 = vld [vmem:[%s3043 + $0xd] sm:$0xff]
        %v3570 = vld [vmem:[%s3043 + $0x1d] sm:$0xff]
        %v3571 = vld [vmem:[%s3043 + $0x25] sm:$0xff]
        %v3572 = vld [vmem:[%s3043 + $0x35] sm:$0xff]
        %v3573 = vld [vmem:[%s3043 + $0x3d] sm:$0xff]
        %v3574 = vld [vmem:[%s3043 + $0x4d] sm:$0xff]
        %v3575 = vld [vmem:[%s3043 + $0x55] sm:$0xff]
        %v3576 = vld [vmem:[%s3043 + $0x65] sm:$0xff]
        %v3577 = vld [vmem:[%s3043 + $0x6d] sm:$0xff]
        %v3578 = vld [vmem:[%s3043 + $0x7d] sm:$0xff]
        %v3579 = vld [vmem:[%s3043 + $0x85] sm:$0xff]
        %v3580 = vld [vmem:[%s3043 + $0x95] sm:$0xff]
        %v3581 = vld [vmem:[%s3043 + $0x9d] sm:$0xff]
        %v3582 = vld [vmem:[%s3043 + $0xad] sm:$0xff]
        %v3583 = vld [vmem:[%s3043 + $0xb5] sm:$0xff]
        %v3584 = vld [vmem:[%s3043 + $0xc5] sm:$0xff]
        %v3585 = vld [vmem:[%s3043 + $0xcd] sm:$0xff]
        %v3586 = vld [vmem:[%s3043 + $0xdd] sm:$0xff]
        %v3587 = vld [vmem:[%s3043 + $0xe5] sm:$0xff]
        %v3588 = vld [vmem:[%s3043 + $0xf5] sm:$0xff]
        %v3589 = vld [vmem:[%s3043 + $0xfd] sm:$0xff]
        %v3590 = vld [vmem:[%s3043 + $0x10d] sm:$0xff]
        %v3591 = vld [vmem:[%s3043 + $0x115] sm:$0xff]
        %v3592 = vld [vmem:[%s3043 + $0x125] sm:$0xff]
        %v3593 = vld [vmem:[%s3043 + $0x12d] sm:$0xff]
        %v3594 = vld [vmem:[%s3043 + $0x13d] sm:$0xff]
        %v3595 = vld [vmem:[%s3043 + $0x145] sm:$0xff]
        %v3596 = vld [vmem:[%s3043 + $0x155] sm:$0xff]
        %v3597 = vld [vmem:[%s3043 + $0x15d] sm:$0xff]
        %v3598 = vld [vmem:[%s3043 + $0x16d] sm:$0xff]
        %v3599 = vld [vmem:[%s3043 + $0x175] sm:$0xff]
        %s3600 = scalar_lea.vmem %s2, 320
        %v3601 = vld [vmem:[%s3600] sm:$0xff]
        %v3602 = vld [vmem:[%s3600 + $0x8] sm:$0xff]
        %v3603 = vld [vmem:[%s3600 + $0x10] sm:$0xff]
        %v3604 = vld [vmem:[%s3600 + $0x18] sm:$0xff]
        %3605 = vmatprep.subr.mxu0 0.0
        %3606 = vmatpush1.xpose.msra.mxu0 %v3601
        %3607 = vmatprep.subr.mxu0 0.0
        %3608 = vmatpush1.xpose.msra.mxu0 %v3602
        %3609 = vmatprep.subr.mxu0 0.0
        %3610 = vmatpush1.xpose.msra.mxu0 %v3603
        %3611 = vmatprep.subr.mxu0 0.0
        %3612 = vmatpush1.xpose.msra.mxu0 %v3604
        %3613 = vmatprep.subr.mxu0 0.0
        %3614 = vmatpush1.xpose.msra.mxu0 0.0
        %3615 = vmatprep.subr.mxu0 0.0
        %3616 = vmatpush1.xpose.msra.mxu0 0.0
        %3617 = vmatprep.subr.mxu0 0.0
        %3618 = vmatpush1.xpose.msra.mxu0 0.0
        %3619 = vmatprep.subr.mxu0 0.0
        %3620 = vmatpush1.xpose.msra.mxu0 0.0
        %3621 = vmatprep.subr.mxu0 0.0
        %3622 = vmatpush1.xpose.msra.mxu0 0.0
        %3623 = vmatprep.subr.mxu0 0.0
        %3624 = vmatpush1.xpose.msra.mxu0 0.0
        %3625 = vmatprep.subr.mxu0 0.0
        %3626 = vmatpush1.xpose.msra.mxu0 0.0
        %3627 = vmatprep.subr.mxu0 0.0
        %3628 = vmatpush1.xpose.msra.mxu0 0.0
        %3629 = vmatprep.subr.mxu0 0.0
        %3630 = vmatpush1.xpose.msra.mxu0 0.0
        %3631 = vmatprep.subr.mxu0 0.0
        %3632 = vmatpush1.xpose.msra.mxu0 0.0
        %3633 = vmatprep.subr.mxu0 0.0
        %3634 = vmatpush1.xpose.msra.mxu0 0.0
        %3635 = vmatprep.subr.mxu0 0.0
        %3636 = vmatpush1.xpose.msra.mxu0 0.0
        %3637 = vmatprep.subr.mxu0 0.0
        %3638 = vmatpush1.xpose.msra.mxu0 0.0
        %3639 = vmatprep.subr.mxu0 0.0
        %3640 = vmatpush1.xpose.msra.mxu0 0.0
        %3641 = vmatprep.subr.mxu0 0.0
        %3642 = vmatpush1.xpose.msra.mxu0 0.0
        %3643 = vmatprep.subr.mxu0 0.0
        %3644 = vmatpush1.xpose.msra.mxu0 0.0
        %3645 = vmatprep.subr.mxu0 0.0
        %3646 = vmatpush1.xpose.msra.mxu0 0.0
        %3647 = vmatprep.subr.mxu0 0.0
        %3648 = vmatpush1.xpose.msra.mxu0 0.0
        %3649 = vmatprep.subr.mxu0 0.0
        %3650 = vmatpush1.xpose.msra.mxu0 0.0
        %3651 = vmatprep.subr.mxu0 0.0
        %3652 = vmatpush1.xpose.msra.mxu0 0.0
        %3653 = vmatprep.subr.mxu0 0.0
        %3654 = vmatpush1.xpose.msra.mxu0 0.0
        %3655 = vmatprep.subr.mxu0 0.0
        %3656 = vmatpush1.xpose.msra.mxu0 0.0
        %3657 = vmatprep.subr.mxu0 0.0
        %3658 = vmatpush1.xpose.msra.mxu0 0.0
        %3659 = vmatprep.subr.mxu0 0.0
        %3660 = vmatpush1.xpose.msra.mxu0 0.0
        %3661 = vmatprep.subr.mxu0 0.0
        %3662 = vmatpush1.xpose.msra.mxu0 0.0
        %3663 = vmatprep.subr.mxu0 0.0
        %3664 = vmatpush1.xpose.msra.mxu0 0.0
        %3665 = vmatprep.subr.mxu0 0.0
        %3666 = vmatpush1.xpose.msra.mxu0 0.0
        %3667 = vmatprep.subr.mxu0 0.0
        %3668 = vmatpush1.xpose.msra.mxu0 0.0
        %3669 = vmatprep.mubr.f32.mxu0 0.0
        %3670 = vmatmul.mubr.f32.gmra.mrb[0].mxu0 %v3568
        %v3671 = vpop.f32.mrb[0].mxu0
        %v3672 = vadd.f32 0.0, %v3671
        %v3673 = vpop.f32.mrb[0].mxu0
        %3674 = vmatprep.mubr.f32.mxu0 0.0
        %3675 = vmatmul.mubr.f32.gmra.mrb[0].mxu0 %v3569
        %v3676 = vpop.f32.mrb[0].mxu0
        %v3677 = vadd.f32 0.0, %v3676
        %v3678 = vpop.f32.mrb[0].mxu0
        %3679 = vmatprep.mubr.f32.mxu0 0.0
        %3680 = vmatmul.mubr.f32.gmra.mrb[0].mxu0 %v3570
        %v3681 = vpop.f32.mrb[0].mxu0
        %v3682 = vadd.f32 0.0, %v3681
        %v3683 = vpop.f32.mrb[0].mxu0
        %3684 = vmatprep.mubr.f32.mxu0 0.0
        %3685 = vmatmul.mubr.f32.gmra.mrb[0].mxu0 %v3571
        %v3686 = vpop.f32.mrb[0].mxu0
        %v3687 = vadd.f32 0.0, %v3686
        %v3688 = vpop.f32.mrb[0].mxu0
        %3689 = vmatprep.mubr.f32.mxu0 0.0
        %3690 = vmatmul.mubr.f32.gmra.mrb[0].mxu0 %v3572
        %v3691 = vpop.f32.mrb[0].mxu0
        %v3692 = vadd.f32 0.0, %v3691
        %v3693 = vpop.f32.mrb[0].mxu0
        %3694 = vmatprep.mubr.f32.mxu0 0.0
        %3695 = vmatmul.mubr.f32.gmra.mrb[0].mxu0 %v3573
        %v3696 = vpop.f32.mrb[0].mxu0
        %v3697 = vadd.f32 0.0, %v3696
        %v3698 = vpop.f32.mrb[0].mxu0
        %3699 = vmatprep.mubr.f32.mxu0 0.0
        %3700 = vmatmul.mubr.f32.gmra.mrb[0].mxu0 %v3574
        %v3701 = vpop.f32.mrb[0].mxu0
        %v3702 = vadd.f32 0.0, %v3701
        %v3703 = vpop.f32.mrb[0].mxu0
        %3704 = vmatprep.mubr.f32.mxu0 0.0
        %3705 = vmatmul.mubr.f32.gmra.mrb[0].mxu0 %v3575
        %v3706 = vpop.f32.mrb[0].mxu0
        %v3707 = vadd.f32 0.0, %v3706
        %v3708 = vpop.f32.mrb[0].mxu0
        %3709 = vmatprep.mubr.f32.mxu0 0.0
        %3710 = vmatmul.mubr.f32.gmra.mrb[0].mxu0 %v3576
        %v3711 = vpop.f32.mrb[0].mxu0
        %v3712 = vadd.f32 0.0, %v3711
        %v3713 = vpop.f32.mrb[0].mxu0
        %3714 = vmatprep.mubr.f32.mxu0 0.0
        %3715 = vmatmul.mubr.f32.gmra.mrb[0].mxu0 %v3577
        %v3716 = vpop.f32.mrb[0].mxu0
        %v3717 = vadd.f32 0.0, %v3716
        %v3718 = vpop.f32.mrb[0].mxu0
        %3719 = vmatprep.mubr.f32.mxu0 0.0
        %3720 = vmatmul.mubr.f32.gmra.mrb[0].mxu0 %v3578
        %v3721 = vpop.f32.mrb[0].mxu0
        %v3722 = vadd.f32 0.0, %v3721
        %v3723 = vpop.f32.mrb[0].mxu0
        %3724 = vmatprep.mubr.f32.mxu0 0.0
        %3725 = vmatmul.mubr.f32.gmra.mrb[0].mxu0 %v3579
        %v3726 = vpop.f32.mrb[0].mxu0
        %v3727 = vadd.f32 0.0, %v3726
        %v3728 = vpop.f32.mrb[0].mxu0
        %3729 = vmatprep.mubr.f32.mxu0 0.0
        %3730 = vmatmul.mubr.f32.gmra.mrb[0].mxu0 %v3580
        %v3731 = vpop.f32.mrb[0].mxu0
        %v3732 = vadd.f32 0.0, %v3731
        %v3733 = vpop.f32.mrb[0].mxu0
        %3734 = vmatprep.mubr.f32.mxu0 0.0
        %3735 = vmatmul.mubr.f32.gmra.mrb[0].mxu0 %v3581
        %v3736 = vpop.f32.mrb[0].mxu0
        %v3737 = vadd.f32 0.0, %v3736
        %v3738 = vpop.f32.mrb[0].mxu0
        %3739 = vmatprep.mubr.f32.mxu0 0.0
        %3740 = vmatmul.mubr.f32.gmra.mrb[0].mxu0 %v3582
        %v3741 = vpop.f32.mrb[0].mxu0
        %v3742 = vadd.f32 0.0, %v3741
        %v3743 = vpop.f32.mrb[0].mxu0
        %3744 = vmatprep.mubr.f32.mxu0 0.0
        %3745 = vmatmul.mubr.f32.gmra.mrb[0].mxu0 %v3583
        %v3746 = vpop.f32.mrb[0].mxu0
        %v3747 = vadd.f32 0.0, %v3746
        %v3748 = vpop.f32.mrb[0].mxu0
        %3749 = vmatprep.mubr.f32.mxu0 0.0
        %3750 = vmatmul.mubr.f32.gmra.mrb[0].mxu0 %v3584
        %v3751 = vpop.f32.mrb[0].mxu0
        %v3752 = vadd.f32 0.0, %v3751
        %v3753 = vpop.f32.mrb[0].mxu0
        %3754 = vmatprep.mubr.f32.mxu0 0.0
        %3755 = vmatmul.mubr.f32.gmra.mrb[0].mxu0 %v3585
        %v3756 = vpop.f32.mrb[0].mxu0
        %v3757 = vadd.f32 0.0, %v3756
        %v3758 = vpop.f32.mrb[0].mxu0
        %3759 = vmatprep.mubr.f32.mxu0 0.0
        %3760 = vmatmul.mubr.f32.gmra.mrb[0].mxu0 %v3586
        %v3761 = vpop.f32.mrb[0].mxu0
        %v3762 = vadd.f32 0.0, %v3761
        %v3763 = vpop.f32.mrb[0].mxu0
        %3764 = vmatprep.mubr.f32.mxu0 0.0
        %3765 = vmatmul.mubr.f32.gmra.mrb[0].mxu0 %v3587
        %v3766 = vpop.f32.mrb[0].mxu0
        %v3767 = vadd.f32 0.0, %v3766
        %v3768 = vpop.f32.mrb[0].mxu0
        %3769 = vmatprep.mubr.f32.mxu0 0.0
        %3770 = vmatmul.mubr.f32.gmra.mrb[0].mxu0 %v3588
        %v3771 = vpop.f32.mrb[0].mxu0
        %v3772 = vadd.f32 0.0, %v3771
        %v3773 = vpop.f32.mrb[0].mxu0
        %3774 = vmatprep.mubr.f32.mxu0 0.0
        %3775 = vmatmul.mubr.f32.gmra.mrb[0].mxu0 %v3589
        %v3776 = vpop.f32.mrb[0].mxu0
        %v3777 = vadd.f32 0.0, %v3776
        %v3778 = vpop.f32.mrb[0].mxu0
        %3779 = vmatprep.mubr.f32.mxu0 0.0
        %3780 = vmatmul.mubr.f32.gmra.mrb[0].mxu0 %v3590
        %v3781 = vpop.f32.mrb[0].mxu0
        %v3782 = vadd.f32 0.0, %v3781
        %v3783 = vpop.f32.mrb[0].mxu0
        %3784 = vmatprep.mubr.f32.mxu0 0.0
        %3785 = vmatmul.mubr.f32.gmra.mrb[0].mxu0 %v3591
        %v3786 = vpop.f32.mrb[0].mxu0
        %v3787 = vadd.f32 0.0, %v3786
        %v3788 = vpop.f32.mrb[0].mxu0
        %3789 = vmatprep.mubr.f32.mxu0 0.0
        %3790 = vmatmul.mubr.f32.gmra.mrb[0].mxu0 %v3592
        %v3791 = vpop.f32.mrb[0].mxu0
        %v3792 = vadd.f32 0.0, %v3791
        %v3793 = vpop.f32.mrb[0].mxu0
        %3794 = vmatprep.mubr.f32.mxu0 0.0
        %3795 = vmatmul.mubr.f32.gmra.mrb[0].mxu0 %v3593
        %v3796 = vpop.f32.mrb[0].mxu0
        %v3797 = vadd.f32 0.0, %v3796
        %v3798 = vpop.f32.mrb[0].mxu0
        %3799 = vmatprep.mubr.f32.mxu0 0.0
        %3800 = vmatmul.mubr.f32.gmra.mrb[0].mxu0 %v3594
        %v3801 = vpop.f32.mrb[0].mxu0
        %v3802 = vadd.f32 0.0, %v3801
        %v3803 = vpop.f32.mrb[0].mxu0
        %3804 = vmatprep.mubr.f32.mxu0 0.0
        %3805 = vmatmul.mubr.f32.gmra.mrb[0].mxu0 %v3595
        %v3806 = vpop.f32.mrb[0].mxu0
        %v3807 = vadd.f32 0.0, %v3806
        %v3808 = vpop.f32.mrb[0].mxu0
        %3809 = vmatprep.mubr.f32.mxu0 0.0
        %3810 = vmatmul.mubr.f32.gmra.mrb[0].mxu0 %v3596
        %v3811 = vpop.f32.mrb[0].mxu0
        %v3812 = vadd.f32 0.0, %v3811
        %v3813 = vpop.f32.mrb[0].mxu0
        %3814 = vmatprep.mubr.f32.mxu0 0.0
        %3815 = vmatmul.mubr.f32.gmra.mrb[0].mxu0 %v3597
        %v3816 = vpop.f32.mrb[0].mxu0
        %v3817 = vadd.f32 0.0, %v3816
        %v3818 = vpop.f32.mrb[0].mxu0
        %3819 = vmatprep.mubr.f32.mxu0 0.0
        %3820 = vmatmul.mubr.f32.gmra.mrb[0].mxu0 %v3598
        %v3821 = vpop.f32.mrb[0].mxu0
        %v3822 = vadd.f32 0.0, %v3821
        %v3823 = vpop.f32.mrb[0].mxu0
        %3824 = vmatprep.mubr.f32.mxu0 0.0
        %3825 = vmatmul.mubr.f32.gmra.mrb[0].mxu0 %v3599
        %v3826 = vpop.f32.mrb[0].mxu0
        %v3827 = vadd.f32 0.0, %v3826
        %v3828 = vpop.f32.mrb[0].mxu0
        %3829 = vdwg.mxu0
        %v3830 = vadd.f32 %v3410, %v3672
        %v3831 = vadd.f32 %v3415, %v3677
        %v3832 = vadd.f32 %v3420, %v3682
        %v3833 = vadd.f32 %v3425, %v3687
        %v3834 = vadd.f32 %v3430, %v3692
        %v3835 = vadd.f32 %v3435, %v3697
        %v3836 = vadd.f32 %v3440, %v3702
        %v3837 = vadd.f32 %v3445, %v3707
        %v3838 = vadd.f32 %v3450, %v3712
        %v3839 = vadd.f32 %v3455, %v3717
        %v3840 = vadd.f32 %v3460, %v3722
        %v3841 = vadd.f32 %v3465, %v3727
        %v3842 = vadd.f32 %v3470, %v3732
        %v3843 = vadd.f32 %v3475, %v3737
        %v3844 = vadd.f32 %v3480, %v3742
        %v3845 = vadd.f32 %v3485, %v3747
        %v3846 = vadd.f32 %v3490, %v3752
        %v3847 = vadd.f32 %v3495, %v3757
        %v3848 = vadd.f32 %v3500, %v3762
        %v3849 = vadd.f32 %v3505, %v3767
        %v3850 = vadd.f32 %v3510, %v3772
        %v3851 = vadd.f32 %v3515, %v3777
        %v3852 = vadd.f32 %v3520, %v3782
        %v3853 = vadd.f32 %v3525, %v3787
        %v3854 = vadd.f32 %v3530, %v3792
        %v3855 = vadd.f32 %v3535, %v3797
        %v3856 = vadd.f32 %v3540, %v3802
        %v3857 = vadd.f32 %v3545, %v3807
        %v3858 = vadd.f32 %v3550, %v3812
        %v3859 = vadd.f32 %v3555, %v3817
        %v3860 = vadd.f32 %v3560, %v3822
        %v3861 = vadd.f32 %v3565, %v3827
        %v3862 = vld [vmem:[%s223 + $0x1] sm:$0xff]
        %v3863 = vld [vmem:[%s223 + $0x9] sm:$0xff]
        %v3864 = vld [vmem:[%s223 + $0x19] sm:$0xff]
        %v3865 = vld [vmem:[%s223 + $0x21] sm:$0xff]
        %v3866 = vld [vmem:[%s223 + $0x31] sm:$0xff]
        %v3867 = vld [vmem:[%s223 + $0x39] sm:$0xff]
        %v3868 = vld [vmem:[%s223 + $0x49] sm:$0xff]
        %v3869 = vld [vmem:[%s223 + $0x51] sm:$0xff]
        %v3870 = vld [vmem:[%s223 + $0x61] sm:$0xff]
        %v3871 = vld [vmem:[%s223 + $0x69] sm:$0xff]
        %v3872 = vld [vmem:[%s223 + $0x79] sm:$0xff]
        %v3873 = vld [vmem:[%s223 + $0x81] sm:$0xff]
        %v3874 = vld [vmem:[%s223 + $0x91] sm:$0xff]
        %v3875 = vld [vmem:[%s223 + $0x99] sm:$0xff]
        %v3876 = vld [vmem:[%s223 + $0xa9] sm:$0xff]
        %v3877 = vld [vmem:[%s223 + $0xb1] sm:$0xff]
        %v3878 = vld [vmem:[%s223 + $0xc1] sm:$0xff]
        %v3879 = vld [vmem:[%s223 + $0xc9] sm:$0xff]
        %v3880 = vld [vmem:[%s223 + $0xd9] sm:$0xff]
        %v3881 = vld [vmem:[%s223 + $0xe1] sm:$0xff]
        %v3882 = vld [vmem:[%s223 + $0xf1] sm:$0xff]
        %v3883 = vld [vmem:[%s223 + $0xf9] sm:$0xff]
        %v3884 = vld [vmem:[%s223 + $0x109] sm:$0xff]
        %v3885 = vld [vmem:[%s223 + $0x111] sm:$0xff]
        %v3886 = vld [vmem:[%s223 + $0x121] sm:$0xff]
        %v3887 = vld [vmem:[%s223 + $0x129] sm:$0xff]
        %v3888 = vld [vmem:[%s223 + $0x139] sm:$0xff]
        %v3889 = vld [vmem:[%s223 + $0x141] sm:$0xff]
        %v3890 = vld [vmem:[%s223 + $0x151] sm:$0xff]
        %v3891 = vld [vmem:[%s223 + $0x159] sm:$0xff]
        %v3892 = vld [vmem:[%s223 + $0x169] sm:$0xff]
        %v3893 = vld [vmem:[%s223 + $0x171] sm:$0xff]
        %s3894 = scalar_lea.vmem %s2, 352
        %v3895 = vld [vmem:[%s3894] sm:$0xff]
        %v3896 = vld [vmem:[%s3894 + $0x8] sm:$0xff]
        %v3897 = vld [vmem:[%s3894 + $0x10] sm:$0xff]
        %v3898 = vld [vmem:[%s3894 + $0x18] sm:$0xff]
        %3899 = vmatprep.subr.mxu0 0.0
        %3900 = vmatpush1.xpose.msra.mxu0 %v3895
        %3901 = vmatprep.subr.mxu0 0.0
        %3902 = vmatpush1.xpose.msra.mxu0 %v3896
        %3903 = vmatprep.subr.mxu0 0.0
        %3904 = vmatpush1.xpose.msra.mxu0 %v3897
        %3905 = vmatprep.subr.mxu0 0.0
        %3906 = vmatpush1.xpose.msra.mxu0 %v3898
        %3907 = vmatprep.subr.mxu0 0.0
        %3908 = vmatpush1.xpose.msra.mxu0 0.0
        %3909 = vmatprep.subr.mxu0 0.0
        %3910 = vmatpush1.xpose.msra.mxu0 0.0
        %3911 = vmatprep.subr.mxu0 0.0
        %3912 = vmatpush1.xpose.msra.mxu0 0.0
        %3913 = vmatprep.subr.mxu0 0.0
        %3914 = vmatpush1.xpose.msra.mxu0 0.0
        %3915 = vmatprep.subr.mxu0 0.0
        %3916 = vmatpush1.xpose.msra.mxu0 0.0
        %3917 = vmatprep.subr.mxu0 0.0
        %3918 = vmatpush1.xpose.msra.mxu0 0.0
        %3919 = vmatprep.subr.mxu0 0.0
        %3920 = vmatpush1.xpose.msra.mxu0 0.0
        %3921 = vmatprep.subr.mxu0 0.0
        %3922 = vmatpush1.xpose.msra.mxu0 0.0
        %3923 = vmatprep.subr.mxu0 0.0
        %3924 = vmatpush1.xpose.msra.mxu0 0.0
        %3925 = vmatprep.subr.mxu0 0.0
        %3926 = vmatpush1.xpose.msra.mxu0 0.0
        %3927 = vmatprep.subr.mxu0 0.0
        %3928 = vmatpush1.xpose.msra.mxu0 0.0
        %3929 = vmatprep.subr.mxu0 0.0
        %3930 = vmatpush1.xpose.msra.mxu0 0.0
        %3931 = vmatprep.subr.mxu0 0.0
        %3932 = vmatpush1.xpose.msra.mxu0 0.0
        %3933 = vmatprep.subr.mxu0 0.0
        %3934 = vmatpush1.xpose.msra.mxu0 0.0
        %3935 = vmatprep.subr.mxu0 0.0
        %3936 = vmatpush1.xpose.msra.mxu0 0.0
        %3937 = vmatprep.subr.mxu0 0.0
        %3938 = vmatpush1.xpose.msra.mxu0 0.0
        %3939 = vmatprep.subr.mxu0 0.0
        %3940 = vmatpush1.xpose.msra.mxu0 0.0
        %3941 = vmatprep.subr.mxu0 0.0
        %3942 = vmatpush1.xpose.msra.mxu0 0.0
        %3943 = vmatprep.subr.mxu0 0.0
        %3944 = vmatpush1.xpose.msra.mxu0 0.0
        %3945 = vmatprep.subr.mxu0 0.0
        %3946 = vmatpush1.xpose.msra.mxu0 0.0
        %3947 = vmatprep.subr.mxu0 0.0
        %3948 = vmatpush1.xpose.msra.mxu0 0.0
        %3949 = vmatprep.subr.mxu0 0.0
        %3950 = vmatpush1.xpose.msra.mxu0 0.0
        %3951 = vmatprep.subr.mxu0 0.0
        %3952 = vmatpush1.xpose.msra.mxu0 0.0
        %3953 = vmatprep.subr.mxu0 0.0
        %3954 = vmatpush1.xpose.msra.mxu0 0.0
        %3955 = vmatprep.subr.mxu0 0.0
        %3956 = vmatpush1.xpose.msra.mxu0 0.0
        %3957 = vmatprep.subr.mxu0 0.0
        %3958 = vmatpush1.xpose.msra.mxu0 0.0
        %3959 = vmatprep.subr.mxu0 0.0
        %3960 = vmatpush1.xpose.msra.mxu0 0.0
        %3961 = vmatprep.subr.mxu0 0.0
        %3962 = vmatpush1.xpose.msra.mxu0 0.0
        %3963 = vmatprep.mubr.f32.mxu0 0.0
        %3964 = vmatmul.mubr.f32.gmra.mrb[0].mxu0 %v3862
        %v3965 = vpop.f32.mrb[0].mxu0
        %v3966 = vadd.f32 0.0, %v3965
        %v3967 = vpop.f32.mrb[0].mxu0
        %3968 = vmatprep.mubr.f32.mxu0 0.0
        %3969 = vmatmul.mubr.f32.gmra.mrb[0].mxu0 %v3863
        %v3970 = vpop.f32.mrb[0].mxu0
        %v3971 = vadd.f32 0.0, %v3970
        %v3972 = vpop.f32.mrb[0].mxu0
        %3973 = vmatprep.mubr.f32.mxu0 0.0
        %3974 = vmatmul.mubr.f32.gmra.mrb[0].mxu0 %v3864
        %v3975 = vpop.f32.mrb[0].mxu0
        %v3976 = vadd.f32 0.0, %v3975
        %v3977 = vpop.f32.mrb[0].mxu0
        %3978 = vmatprep.mubr.f32.mxu0 0.0
        %3979 = vmatmul.mubr.f32.gmra.mrb[0].mxu0 %v3865
        %v3980 = vpop.f32.mrb[0].mxu0
        %v3981 = vadd.f32 0.0, %v3980
        %v3982 = vpop.f32.mrb[0].mxu0
        %3983 = vmatprep.mubr.f32.mxu0 0.0
        %3984 = vmatmul.mubr.f32.gmra.mrb[0].mxu0 %v3866
        %v3985 = vpop.f32.mrb[0].mxu0
        %v3986 = vadd.f32 0.0, %v3985
        %v3987 = vpop.f32.mrb[0].mxu0
        %3988 = vmatprep.mubr.f32.mxu0 0.0
        %3989 = vmatmul.mubr.f32.gmra.mrb[0].mxu0 %v3867
        %v3990 = vpop.f32.mrb[0].mxu0
        %v3991 = vadd.f32 0.0, %v3990
        %v3992 = vpop.f32.mrb[0].mxu0
        %3993 = vmatprep.mubr.f32.mxu0 0.0
        %3994 = vmatmul.mubr.f32.gmra.mrb[0].mxu0 %v3868
        %v3995 = vpop.f32.mrb[0].mxu0
        %v3996 = vadd.f32 0.0, %v3995
        %v3997 = vpop.f32.mrb[0].mxu0
        %3998 = vmatprep.mubr.f32.mxu0 0.0
        %3999 = vmatmul.mubr.f32.gmra.mrb[0].mxu0 %v3869
        %v4000 = vpop.f32.mrb[0].mxu0
        %v4001 = vadd.f32 0.0, %v4000
        %v4002 = vpop.f32.mrb[0].mxu0
        %4003 = vmatprep.mubr.f32.mxu0 0.0
        %4004 = vmatmul.mubr.f32.gmra.mrb[0].mxu0 %v3870
        %v4005 = vpop.f32.mrb[0].mxu0
        %v4006 = vadd.f32 0.0, %v4005
        %v4007 = vpop.f32.mrb[0].mxu0
        %4008 = vmatprep.mubr.f32.mxu0 0.0
        %4009 = vmatmul.mubr.f32.gmra.mrb[0].mxu0 %v3871
        %v4010 = vpop.f32.mrb[0].mxu0
        %v4011 = vadd.f32 0.0, %v4010
        %v4012 = vpop.f32.mrb[0].mxu0
        %4013 = vmatprep.mubr.f32.mxu0 0.0
        %4014 = vmatmul.mubr.f32.gmra.mrb[0].mxu0 %v3872
        %v4015 = vpop.f32.mrb[0].mxu0
        %v4016 = vadd.f32 0.0, %v4015
        %v4017 = vpop.f32.mrb[0].mxu0
        %4018 = vmatprep.mubr.f32.mxu0 0.0
        %4019 = vmatmul.mubr.f32.gmra.mrb[0].mxu0 %v3873
        %v4020 = vpop.f32.mrb[0].mxu0
        %v4021 = vadd.f32 0.0, %v4020
        %v4022 = vpop.f32.mrb[0].mxu0
        %4023 = vmatprep.mubr.f32.mxu0 0.0
        %4024 = vmatmul.mubr.f32.gmra.mrb[0].mxu0 %v3874
        %v4025 = vpop.f32.mrb[0].mxu0
        %v4026 = vadd.f32 0.0, %v4025
        %v4027 = vpop.f32.mrb[0].mxu0
        %4028 = vmatprep.mubr.f32.mxu0 0.0
        %4029 = vmatmul.mubr.f32.gmra.mrb[0].mxu0 %v3875
        %v4030 = vpop.f32.mrb[0].mxu0
        %v4031 = vadd.f32 0.0, %v4030
        %v4032 = vpop.f32.mrb[0].mxu0
        %4033 = vmatprep.mubr.f32.mxu0 0.0
        %4034 = vmatmul.mubr.f32.gmra.mrb[0].mxu0 %v3876
        %v4035 = vpop.f32.mrb[0].mxu0
        %v4036 = vadd.f32 0.0, %v4035
        %v4037 = vpop.f32.mrb[0].mxu0
        %4038 = vmatprep.mubr.f32.mxu0 0.0
        %4039 = vmatmul.mubr.f32.gmra.mrb[0].mxu0 %v3877
        %v4040 = vpop.f32.mrb[0].mxu0
        %v4041 = vadd.f32 0.0, %v4040
        %v4042 = vpop.f32.mrb[0].mxu0
        %4043 = vmatprep.mubr.f32.mxu0 0.0
        %4044 = vmatmul.mubr.f32.gmra.mrb[0].mxu0 %v3878
        %v4045 = vpop.f32.mrb[0].mxu0
        %v4046 = vadd.f32 0.0, %v4045
        %v4047 = vpop.f32.mrb[0].mxu0
        %4048 = vmatprep.mubr.f32.mxu0 0.0
        %4049 = vmatmul.mubr.f32.gmra.mrb[0].mxu0 %v3879
        %v4050 = vpop.f32.mrb[0].mxu0
        %v4051 = vadd.f32 0.0, %v4050
        %v4052 = vpop.f32.mrb[0].mxu0
        %4053 = vmatprep.mubr.f32.mxu0 0.0
        %4054 = vmatmul.mubr.f32.gmra.mrb[0].mxu0 %v3880
        %v4055 = vpop.f32.mrb[0].mxu0
        %v4056 = vadd.f32 0.0, %v4055
        %v4057 = vpop.f32.mrb[0].mxu0
        %4058 = vmatprep.mubr.f32.mxu0 0.0
        %4059 = vmatmul.mubr.f32.gmra.mrb[0].mxu0 %v3881
        %v4060 = vpop.f32.mrb[0].mxu0
        %v4061 = vadd.f32 0.0, %v4060
        %v4062 = vpop.f32.mrb[0].mxu0
        %4063 = vmatprep.mubr.f32.mxu0 0.0
        %4064 = vmatmul.mubr.f32.gmra.mrb[0].mxu0 %v3882
        %v4065 = vpop.f32.mrb[0].mxu0
        %v4066 = vadd.f32 0.0, %v4065
        %v4067 = vpop.f32.mrb[0].mxu0
        %4068 = vmatprep.mubr.f32.mxu0 0.0
        %4069 = vmatmul.mubr.f32.gmra.mrb[0].mxu0 %v3883
        %v4070 = vpop.f32.mrb[0].mxu0
        %v4071 = vadd.f32 0.0, %v4070
        %v4072 = vpop.f32.mrb[0].mxu0
        %4073 = vmatprep.mubr.f32.mxu0 0.0
        %4074 = vmatmul.mubr.f32.gmra.mrb[0].mxu0 %v3884
        %v4075 = vpop.f32.mrb[0].mxu0
        %v4076 = vadd.f32 0.0, %v4075
        %v4077 = vpop.f32.mrb[0].mxu0
        %4078 = vmatprep.mubr.f32.mxu0 0.0
        %4079 = vmatmul.mubr.f32.gmra.mrb[0].mxu0 %v3885
        %v4080 = vpop.f32.mrb[0].mxu0
        %v4081 = vadd.f32 0.0, %v4080
        %v4082 = vpop.f32.mrb[0].mxu0
        %4083 = vmatprep.mubr.f32.mxu0 0.0
        %4084 = vmatmul.mubr.f32.gmra.mrb[0].mxu0 %v3886
        %v4085 = vpop.f32.mrb[0].mxu0
        %v4086 = vadd.f32 0.0, %v4085
        %v4087 = vpop.f32.mrb[0].mxu0
        %4088 = vmatprep.mubr.f32.mxu0 0.0
        %4089 = vmatmul.mubr.f32.gmra.mrb[0].mxu0 %v3887
        %v4090 = vpop.f32.mrb[0].mxu0
        %v4091 = vadd.f32 0.0, %v4090
        %v4092 = vpop.f32.mrb[0].mxu0
        %4093 = vmatprep.mubr.f32.mxu0 0.0
        %4094 = vmatmul.mubr.f32.gmra.mrb[0].mxu0 %v3888
        %v4095 = vpop.f32.mrb[0].mxu0
        %v4096 = vadd.f32 0.0, %v4095
        %v4097 = vpop.f32.mrb[0].mxu0
        %4098 = vmatprep.mubr.f32.mxu0 0.0
        %4099 = vmatmul.mubr.f32.gmra.mrb[0].mxu0 %v3889
        %v4100 = vpop.f32.mrb[0].mxu0
        %v4101 = vadd.f32 0.0, %v4100
        %v4102 = vpop.f32.mrb[0].mxu0
        %4103 = vmatprep.mubr.f32.mxu0 0.0
        %4104 = vmatmul.mubr.f32.gmra.mrb[0].mxu0 %v3890
        %v4105 = vpop.f32.mrb[0].mxu0
        %v4106 = vadd.f32 0.0, %v4105
        %v4107 = vpop.f32.mrb[0].mxu0
        %4108 = vmatprep.mubr.f32.mxu0 0.0
        %4109 = vmatmul.mubr.f32.gmra.mrb[0].mxu0 %v3891
        %v4110 = vpop.f32.mrb[0].mxu0
        %v4111 = vadd.f32 0.0, %v4110
        %v4112 = vpop.f32.mrb[0].mxu0
        %4113 = vmatprep.mubr.f32.mxu0 0.0
        %4114 = vmatmul.mubr.f32.gmra.mrb[0].mxu0 %v3892
        %v4115 = vpop.f32.mrb[0].mxu0
        %v4116 = vadd.f32 0.0, %v4115
        %v4117 = vpop.f32.mrb[0].mxu0
        %4118 = vmatprep.mubr.f32.mxu0 0.0
        %4119 = vmatmul.mubr.f32.gmra.mrb[0].mxu0 %v3893
        %v4120 = vpop.f32.mrb[0].mxu0
        %v4121 = vadd.f32 0.0, %v4120
        %v4122 = vpop.f32.mrb[0].mxu0
        %4123 = vdwg.mxu0
        %v4124 = vadd.f32 %v3830, %v3966
        %v4125 = vadd.f32 %v3831, %v3971
        %v4126 = vadd.f32 %v3832, %v3976
        %v4127 = vadd.f32 %v3833, %v3981
        %v4128 = vadd.f32 %v3834, %v3986
        %v4129 = vadd.f32 %v3835, %v3991
        %v4130 = vadd.f32 %v3836, %v3996
        %v4131 = vadd.f32 %v3837, %v4001
        %v4132 = vadd.f32 %v3838, %v4006
        %v4133 = vadd.f32 %v3839, %v4011
        %v4134 = vadd.f32 %v3840, %v4016
        %v4135 = vadd.f32 %v3841, %v4021
        %v4136 = vadd.f32 %v3842, %v4026
        %v4137 = vadd.f32 %v3843, %v4031
        %v4138 = vadd.f32 %v3844, %v4036
        %v4139 = vadd.f32 %v3845, %v4041
        %v4140 = vadd.f32 %v3846, %v4046
        %v4141 = vadd.f32 %v3847, %v4051
        %v4142 = vadd.f32 %v3848, %v4056
        %v4143 = vadd.f32 %v3849, %v4061
        %v4144 = vadd.f32 %v3850, %v4066
        %v4145 = vadd.f32 %v3851, %v4071
        %v4146 = vadd.f32 %v3852, %v4076
        %v4147 = vadd.f32 %v3853, %v4081
        %v4148 = vadd.f32 %v3854, %v4086
        %v4149 = vadd.f32 %v3855, %v4091
        %v4150 = vadd.f32 %v3856, %v4096
        %v4151 = vadd.f32 %v3857, %v4101
        %v4152 = vadd.f32 %v3858, %v4106
        %v4153 = vadd.f32 %v3859, %v4111
        %v4154 = vadd.f32 %v3860, %v4116
        %v4155 = vadd.f32 %v3861, %v4121
        %v4156 = vld [vmem:[%s223 + $0x5] sm:$0xff]
        %v4157 = vld [vmem:[%s223 + $0xd] sm:$0xff]
        %v4158 = vld [vmem:[%s223 + $0x1d] sm:$0xff]
        %v4159 = vld [vmem:[%s223 + $0x25] sm:$0xff]
        %v4160 = vld [vmem:[%s223 + $0x35] sm:$0xff]
        %v4161 = vld [vmem:[%s223 + $0x3d] sm:$0xff]
        %v4162 = vld [vmem:[%s223 + $0x4d] sm:$0xff]
        %v4163 = vld [vmem:[%s223 + $0x55] sm:$0xff]
        %v4164 = vld [vmem:[%s223 + $0x65] sm:$0xff]
        %v4165 = vld [vmem:[%s223 + $0x6d] sm:$0xff]
        %v4166 = vld [vmem:[%s223 + $0x7d] sm:$0xff]
        %v4167 = vld [vmem:[%s223 + $0x85] sm:$0xff]
        %v4168 = vld [vmem:[%s223 + $0x95] sm:$0xff]
        %v4169 = vld [vmem:[%s223 + $0x9d] sm:$0xff]
        %v4170 = vld [vmem:[%s223 + $0xad] sm:$0xff]
        %v4171 = vld [vmem:[%s223 + $0xb5] sm:$0xff]
        %v4172 = vld [vmem:[%s223 + $0xc5] sm:$0xff]
        %v4173 = vld [vmem:[%s223 + $0xcd] sm:$0xff]
        %v4174 = vld [vmem:[%s223 + $0xdd] sm:$0xff]
        %v4175 = vld [vmem:[%s223 + $0xe5] sm:$0xff]
        %v4176 = vld [vmem:[%s223 + $0xf5] sm:$0xff]
        %v4177 = vld [vmem:[%s223 + $0xfd] sm:$0xff]
        %v4178 = vld [vmem:[%s223 + $0x10d] sm:$0xff]
        %v4179 = vld [vmem:[%s223 + $0x115] sm:$0xff]
        %v4180 = vld [vmem:[%s223 + $0x125] sm:$0xff]
        %v4181 = vld [vmem:[%s223 + $0x12d] sm:$0xff]
        %v4182 = vld [vmem:[%s223 + $0x13d] sm:$0xff]
        %v4183 = vld [vmem:[%s223 + $0x145] sm:$0xff]
        %v4184 = vld [vmem:[%s223 + $0x155] sm:$0xff]
        %v4185 = vld [vmem:[%s223 + $0x15d] sm:$0xff]
        %v4186 = vld [vmem:[%s223 + $0x16d] sm:$0xff]
        %v4187 = vld [vmem:[%s223 + $0x175] sm:$0xff]
        %s4188 = scalar_lea.vmem %s2, 384
        %v4189 = vld [vmem:[%s4188] sm:$0xff]
        %v4190 = vld [vmem:[%s4188 + $0x8] sm:$0xff]
        %v4191 = vld [vmem:[%s4188 + $0x10] sm:$0xff]
        %v4192 = vld [vmem:[%s4188 + $0x18] sm:$0xff]
        %4193 = vmatprep.subr.mxu0 0.0
        %4194 = vmatpush1.xpose.msra.mxu0 %v4189
        %4195 = vmatprep.subr.mxu0 0.0
        %4196 = vmatpush1.xpose.msra.mxu0 %v4190
        %4197 = vmatprep.subr.mxu0 0.0
        %4198 = vmatpush1.xpose.msra.mxu0 %v4191
        %4199 = vmatprep.subr.mxu0 0.0
        %4200 = vmatpush1.xpose.msra.mxu0 %v4192
        %4201 = vmatprep.subr.mxu0 0.0
        %4202 = vmatpush1.xpose.msra.mxu0 0.0
        %4203 = vmatprep.subr.mxu0 0.0
        %4204 = vmatpush1.xpose.msra.mxu0 0.0
        %4205 = vmatprep.subr.mxu0 0.0
        %4206 = vmatpush1.xpose.msra.mxu0 0.0
        %4207 = vmatprep.subr.mxu0 0.0
        %4208 = vmatpush1.xpose.msra.mxu0 0.0
        %4209 = vmatprep.subr.mxu0 0.0
        %4210 = vmatpush1.xpose.msra.mxu0 0.0
        %4211 = vmatprep.subr.mxu0 0.0
        %4212 = vmatpush1.xpose.msra.mxu0 0.0
        %4213 = vmatprep.subr.mxu0 0.0
        %4214 = vmatpush1.xpose.msra.mxu0 0.0
        %4215 = vmatprep.subr.mxu0 0.0
        %4216 = vmatpush1.xpose.msra.mxu0 0.0
        %4217 = vmatprep.subr.mxu0 0.0
        %4218 = vmatpush1.xpose.msra.mxu0 0.0
        %4219 = vmatprep.subr.mxu0 0.0
        %4220 = vmatpush1.xpose.msra.mxu0 0.0
        %4221 = vmatprep.subr.mxu0 0.0
        %4222 = vmatpush1.xpose.msra.mxu0 0.0
        %4223 = vmatprep.subr.mxu0 0.0
        %4224 = vmatpush1.xpose.msra.mxu0 0.0
        %4225 = vmatprep.subr.mxu0 0.0
        %4226 = vmatpush1.xpose.msra.mxu0 0.0
        %4227 = vmatprep.subr.mxu0 0.0
        %4228 = vmatpush1.xpose.msra.mxu0 0.0
        %4229 = vmatprep.subr.mxu0 0.0
        %4230 = vmatpush1.xpose.msra.mxu0 0.0
        %4231 = vmatprep.subr.mxu0 0.0
        %4232 = vmatpush1.xpose.msra.mxu0 0.0
        %4233 = vmatprep.subr.mxu0 0.0
        %4234 = vmatpush1.xpose.msra.mxu0 0.0
        %4235 = vmatprep.subr.mxu0 0.0
        %4236 = vmatpush1.xpose.msra.mxu0 0.0
        %4237 = vmatprep.subr.mxu0 0.0
        %4238 = vmatpush1.xpose.msra.mxu0 0.0
        %4239 = vmatprep.subr.mxu0 0.0
        %4240 = vmatpush1.xpose.msra.mxu0 0.0
        %4241 = vmatprep.subr.mxu0 0.0
        %4242 = vmatpush1.xpose.msra.mxu0 0.0
        %4243 = vmatprep.subr.mxu0 0.0
        %4244 = vmatpush1.xpose.msra.mxu0 0.0
        %4245 = vmatprep.subr.mxu0 0.0
        %4246 = vmatpush1.xpose.msra.mxu0 0.0
        %4247 = vmatprep.subr.mxu0 0.0
        %4248 = vmatpush1.xpose.msra.mxu0 0.0
        %4249 = vmatprep.subr.mxu0 0.0
        %4250 = vmatpush1.xpose.msra.mxu0 0.0
        %4251 = vmatprep.subr.mxu0 0.0
        %4252 = vmatpush1.xpose.msra.mxu0 0.0
        %4253 = vmatprep.subr.mxu0 0.0
        %4254 = vmatpush1.xpose.msra.mxu0 0.0
        %4255 = vmatprep.subr.mxu0 0.0
        %4256 = vmatpush1.xpose.msra.mxu0 0.0
        %4257 = vmatprep.mubr.f32.mxu0 0.0
        %4258 = vmatmul.mubr.f32.gmra.mrb[0].mxu0 %v4156
        %v4259 = vpop.f32.mrb[0].mxu0
        %v4260 = vadd.f32 0.0, %v4259
        %v4261 = vpop.f32.mrb[0].mxu0
        %4262 = vmatprep.mubr.f32.mxu0 0.0
        %4263 = vmatmul.mubr.f32.gmra.mrb[0].mxu0 %v4157
        %v4264 = vpop.f32.mrb[0].mxu0
        %v4265 = vadd.f32 0.0, %v4264
        %v4266 = vpop.f32.mrb[0].mxu0
        %4267 = vmatprep.mubr.f32.mxu0 0.0
        %4268 = vmatmul.mubr.f32.gmra.mrb[0].mxu0 %v4158
        %v4269 = vpop.f32.mrb[0].mxu0
        %v4270 = vadd.f32 0.0, %v4269
        %v4271 = vpop.f32.mrb[0].mxu0
        %4272 = vmatprep.mubr.f32.mxu0 0.0
        %4273 = vmatmul.mubr.f32.gmra.mrb[0].mxu0 %v4159
        %v4274 = vpop.f32.mrb[0].mxu0
        %v4275 = vadd.f32 0.0, %v4274
        %v4276 = vpop.f32.mrb[0].mxu0
        %4277 = vmatprep.mubr.f32.mxu0 0.0
        %4278 = vmatmul.mubr.f32.gmra.mrb[0].mxu0 %v4160
        %v4279 = vpop.f32.mrb[0].mxu0
        %v4280 = vadd.f32 0.0, %v4279
        %v4281 = vpop.f32.mrb[0].mxu0
        %4282 = vmatprep.mubr.f32.mxu0 0.0
        %4283 = vmatmul.mubr.f32.gmra.mrb[0].mxu0 %v4161
        %v4284 = vpop.f32.mrb[0].mxu0
        %v4285 = vadd.f32 0.0, %v4284
        %v4286 = vpop.f32.mrb[0].mxu0
        %4287 = vmatprep.mubr.f32.mxu0 0.0
        %4288 = vmatmul.mubr.f32.gmra.mrb[0].mxu0 %v4162
        %v4289 = vpop.f32.mrb[0].mxu0
        %v4290 = vadd.f32 0.0, %v4289
        %v4291 = vpop.f32.mrb[0].mxu0
        %4292 = vmatprep.mubr.f32.mxu0 0.0
        %4293 = vmatmul.mubr.f32.gmra.mrb[0].mxu0 %v4163
        %v4294 = vpop.f32.mrb[0].mxu0
        %v4295 = vadd.f32 0.0, %v4294
        %v4296 = vpop.f32.mrb[0].mxu0
        %4297 = vmatprep.mubr.f32.mxu0 0.0
        %4298 = vmatmul.mubr.f32.gmra.mrb[0].mxu0 %v4164
        %v4299 = vpop.f32.mrb[0].mxu0
        %v4300 = vadd.f32 0.0, %v4299
        %v4301 = vpop.f32.mrb[0].mxu0
        %4302 = vmatprep.mubr.f32.mxu0 0.0
        %4303 = vmatmul.mubr.f32.gmra.mrb[0].mxu0 %v4165
        %v4304 = vpop.f32.mrb[0].mxu0
        %v4305 = vadd.f32 0.0, %v4304
        %v4306 = vpop.f32.mrb[0].mxu0
        %4307 = vmatprep.mubr.f32.mxu0 0.0
        %4308 = vmatmul.mubr.f32.gmra.mrb[0].mxu0 %v4166
        %v4309 = vpop.f32.mrb[0].mxu0
        %v4310 = vadd.f32 0.0, %v4309
        %v4311 = vpop.f32.mrb[0].mxu0
        %4312 = vmatprep.mubr.f32.mxu0 0.0
        %4313 = vmatmul.mubr.f32.gmra.mrb[0].mxu0 %v4167
        %v4314 = vpop.f32.mrb[0].mxu0
        %v4315 = vadd.f32 0.0, %v4314
        %v4316 = vpop.f32.mrb[0].mxu0
        %4317 = vmatprep.mubr.f32.mxu0 0.0
        %4318 = vmatmul.mubr.f32.gmra.mrb[0].mxu0 %v4168
        %v4319 = vpop.f32.mrb[0].mxu0
        %v4320 = vadd.f32 0.0, %v4319
        %v4321 = vpop.f32.mrb[0].mxu0
        %4322 = vmatprep.mubr.f32.mxu0 0.0
        %4323 = vmatmul.mubr.f32.gmra.mrb[0].mxu0 %v4169
        %v4324 = vpop.f32.mrb[0].mxu0
        %v4325 = vadd.f32 0.0, %v4324
        %v4326 = vpop.f32.mrb[0].mxu0
        %4327 = vmatprep.mubr.f32.mxu0 0.0
        %4328 = vmatmul.mubr.f32.gmra.mrb[0].mxu0 %v4170
        %v4329 = vpop.f32.mrb[0].mxu0
        %v4330 = vadd.f32 0.0, %v4329
        %v4331 = vpop.f32.mrb[0].mxu0
        %4332 = vmatprep.mubr.f32.mxu0 0.0
        %4333 = vmatmul.mubr.f32.gmra.mrb[0].mxu0 %v4171
        %v4334 = vpop.f32.mrb[0].mxu0
        %v4335 = vadd.f32 0.0, %v4334
        %v4336 = vpop.f32.mrb[0].mxu0
        %4337 = vmatprep.mubr.f32.mxu0 0.0
        %4338 = vmatmul.mubr.f32.gmra.mrb[0].mxu0 %v4172
        %v4339 = vpop.f32.mrb[0].mxu0
        %v4340 = vadd.f32 0.0, %v4339
        %v4341 = vpop.f32.mrb[0].mxu0
        %4342 = vmatprep.mubr.f32.mxu0 0.0
        %4343 = vmatmul.mubr.f32.gmra.mrb[0].mxu0 %v4173
        %v4344 = vpop.f32.mrb[0].mxu0
        %v4345 = vadd.f32 0.0, %v4344
        %v4346 = vpop.f32.mrb[0].mxu0
        %4347 = vmatprep.mubr.f32.mxu0 0.0
        %4348 = vmatmul.mubr.f32.gmra.mrb[0].mxu0 %v4174
        %v4349 = vpop.f32.mrb[0].mxu0
        %v4350 = vadd.f32 0.0, %v4349
        %v4351 = vpop.f32.mrb[0].mxu0
        %4352 = vmatprep.mubr.f32.mxu0 0.0
        %4353 = vmatmul.mubr.f32.gmra.mrb[0].mxu0 %v4175
        %v4354 = vpop.f32.mrb[0].mxu0
        %v4355 = vadd.f32 0.0, %v4354
        %v4356 = vpop.f32.mrb[0].mxu0
        %4357 = vmatprep.mubr.f32.mxu0 0.0
        %4358 = vmatmul.mubr.f32.gmra.mrb[0].mxu0 %v4176
        %v4359 = vpop.f32.mrb[0].mxu0
        %v4360 = vadd.f32 0.0, %v4359
        %v4361 = vpop.f32.mrb[0].mxu0
        %4362 = vmatprep.mubr.f32.mxu0 0.0
        %4363 = vmatmul.mubr.f32.gmra.mrb[0].mxu0 %v4177
        %v4364 = vpop.f32.mrb[0].mxu0
        %v4365 = vadd.f32 0.0, %v4364
        %v4366 = vpop.f32.mrb[0].mxu0
        %4367 = vmatprep.mubr.f32.mxu0 0.0
        %4368 = vmatmul.mubr.f32.gmra.mrb[0].mxu0 %v4178
        %v4369 = vpop.f32.mrb[0].mxu0
        %v4370 = vadd.f32 0.0, %v4369
        %v4371 = vpop.f32.mrb[0].mxu0
        %4372 = vmatprep.mubr.f32.mxu0 0.0
        %4373 = vmatmul.mubr.f32.gmra.mrb[0].mxu0 %v4179
        %v4374 = vpop.f32.mrb[0].mxu0
        %v4375 = vadd.f32 0.0, %v4374
        %v4376 = vpop.f32.mrb[0].mxu0
        %4377 = vmatprep.mubr.f32.mxu0 0.0
        %4378 = vmatmul.mubr.f32.gmra.mrb[0].mxu0 %v4180
        %v4379 = vpop.f32.mrb[0].mxu0
        %v4380 = vadd.f32 0.0, %v4379
        %v4381 = vpop.f32.mrb[0].mxu0
        %4382 = vmatprep.mubr.f32.mxu0 0.0
        %4383 = vmatmul.mubr.f32.gmra.mrb[0].mxu0 %v4181
        %v4384 = vpop.f32.mrb[0].mxu0
        %v4385 = vadd.f32 0.0, %v4384
        %v4386 = vpop.f32.mrb[0].mxu0
        %4387 = vmatprep.mubr.f32.mxu0 0.0
        %4388 = vmatmul.mubr.f32.gmra.mrb[0].mxu0 %v4182
        %v4389 = vpop.f32.mrb[0].mxu0
        %v4390 = vadd.f32 0.0, %v4389
        %v4391 = vpop.f32.mrb[0].mxu0
        %4392 = vmatprep.mubr.f32.mxu0 0.0
        %4393 = vmatmul.mubr.f32.gmra.mrb[0].mxu0 %v4183
        %v4394 = vpop.f32.mrb[0].mxu0
        %v4395 = vadd.f32 0.0, %v4394
        %v4396 = vpop.f32.mrb[0].mxu0
        %4397 = vmatprep.mubr.f32.mxu0 0.0
        %4398 = vmatmul.mubr.f32.gmra.mrb[0].mxu0 %v4184
        %v4399 = vpop.f32.mrb[0].mxu0
        %v4400 = vadd.f32 0.0, %v4399
        %v4401 = vpop.f32.mrb[0].mxu0
        %4402 = vmatprep.mubr.f32.mxu0 0.0
        %4403 = vmatmul.mubr.f32.gmra.mrb[0].mxu0 %v4185
        %v4404 = vpop.f32.mrb[0].mxu0
        %v4405 = vadd.f32 0.0, %v4404
        %v4406 = vpop.f32.mrb[0].mxu0
        %4407 = vmatprep.mubr.f32.mxu0 0.0
        %4408 = vmatmul.mubr.f32.gmra.mrb[0].mxu0 %v4186
        %v4409 = vpop.f32.mrb[0].mxu0
        %v4410 = vadd.f32 0.0, %v4409
        %v4411 = vpop.f32.mrb[0].mxu0
        %4412 = vmatprep.mubr.f32.mxu0 0.0
        %4413 = vmatmul.mubr.f32.gmra.mrb[0].mxu0 %v4187
        %v4414 = vpop.f32.mrb[0].mxu0
        %v4415 = vadd.f32 0.0, %v4414
        %v4416 = vpop.f32.mrb[0].mxu0
        %4417 = vdwg.mxu0
        %v4418 = vadd.f32 %v4124, %v4260
        %v4419 = vadd.f32 %v4125, %v4265
        %v4420 = vadd.f32 %v4126, %v4270
        %v4421 = vadd.f32 %v4127, %v4275
        %v4422 = vadd.f32 %v4128, %v4280
        %v4423 = vadd.f32 %v4129, %v4285
        %v4424 = vadd.f32 %v4130, %v4290
        %v4425 = vadd.f32 %v4131, %v4295
        %v4426 = vadd.f32 %v4132, %v4300
        %v4427 = vadd.f32 %v4133, %v4305
        %v4428 = vadd.f32 %v4134, %v4310
        %v4429 = vadd.f32 %v4135, %v4315
        %v4430 = vadd.f32 %v4136, %v4320
        %v4431 = vadd.f32 %v4137, %v4325
        %v4432 = vadd.f32 %v4138, %v4330
        %v4433 = vadd.f32 %v4139, %v4335
        %v4434 = vadd.f32 %v4140, %v4340
        %v4435 = vadd.f32 %v4141, %v4345
        %v4436 = vadd.f32 %v4142, %v4350
        %v4437 = vadd.f32 %v4143, %v4355
        %v4438 = vadd.f32 %v4144, %v4360
        %v4439 = vadd.f32 %v4145, %v4365
        %v4440 = vadd.f32 %v4146, %v4370
        %v4441 = vadd.f32 %v4147, %v4375
        %v4442 = vadd.f32 %v4148, %v4380
        %v4443 = vadd.f32 %v4149, %v4385
        %v4444 = vadd.f32 %v4150, %v4390
        %v4445 = vadd.f32 %v4151, %v4395
        %v4446 = vadd.f32 %v4152, %v4400
        %v4447 = vadd.f32 %v4153, %v4405
        %v4448 = vadd.f32 %v4154, %v4410
        %v4449 = vadd.f32 %v4155, %v4415
        %s4450 = scalar_lea.vmem %s222, 120
        %v4451 = vld [vmem:[%s4450 + $0x1] sm:$0xff]
        %v4452 = vld [vmem:[%s4450 + $0x9] sm:$0xff]
        %v4453 = vld [vmem:[%s4450 + $0x19] sm:$0xff]
        %v4454 = vld [vmem:[%s4450 + $0x21] sm:$0xff]
        %v4455 = vld [vmem:[%s4450 + $0x31] sm:$0xff]
        %v4456 = vld [vmem:[%s4450 + $0x39] sm:$0xff]
        %v4457 = vld [vmem:[%s4450 + $0x49] sm:$0xff]
        %v4458 = vld [vmem:[%s4450 + $0x51] sm:$0xff]
        %v4459 = vld [vmem:[%s4450 + $0x61] sm:$0xff]
        %v4460 = vld [vmem:[%s4450 + $0x69] sm:$0xff]
        %v4461 = vld [vmem:[%s4450 + $0x79] sm:$0xff]
        %v4462 = vld [vmem:[%s4450 + $0x81] sm:$0xff]
        %v4463 = vld [vmem:[%s4450 + $0x91] sm:$0xff]
        %v4464 = vld [vmem:[%s4450 + $0x99] sm:$0xff]
        %v4465 = vld [vmem:[%s4450 + $0xa9] sm:$0xff]
        %v4466 = vld [vmem:[%s4450 + $0xb1] sm:$0xff]
        %v4467 = vld [vmem:[%s4450 + $0xc1] sm:$0xff]
        %v4468 = vld [vmem:[%s4450 + $0xc9] sm:$0xff]
        %v4469 = vld [vmem:[%s4450 + $0xd9] sm:$0xff]
        %v4470 = vld [vmem:[%s4450 + $0xe1] sm:$0xff]
        %v4471 = vld [vmem:[%s4450 + $0xf1] sm:$0xff]
        %v4472 = vld [vmem:[%s4450 + $0xf9] sm:$0xff]
        %v4473 = vld [vmem:[%s4450 + $0x109] sm:$0xff]
        %v4474 = vld [vmem:[%s4450 + $0x111] sm:$0xff]
        %v4475 = vld [vmem:[%s4450 + $0x121] sm:$0xff]
        %v4476 = vld [vmem:[%s4450 + $0x129] sm:$0xff]
        %v4477 = vld [vmem:[%s4450 + $0x139] sm:$0xff]
        %v4478 = vld [vmem:[%s4450 + $0x141] sm:$0xff]
        %v4479 = vld [vmem:[%s4450 + $0x151] sm:$0xff]
        %v4480 = vld [vmem:[%s4450 + $0x159] sm:$0xff]
        %v4481 = vld [vmem:[%s4450 + $0x169] sm:$0xff]
        %v4482 = vld [vmem:[%s4450 + $0x171] sm:$0xff]
        %s4483 = scalar_lea.vmem %s2, 416
        %v4484 = vld [vmem:[%s4483] sm:$0xff]
        %v4485 = vld [vmem:[%s4483 + $0x8] sm:$0xff]
        %v4486 = vld [vmem:[%s4483 + $0x10] sm:$0xff]
        %v4487 = vld [vmem:[%s4483 + $0x18] sm:$0xff]
        %4488 = vmatprep.subr.mxu0 0.0
        %4489 = vmatpush1.xpose.msra.mxu0 %v4484
        %4490 = vmatprep.subr.mxu0 0.0
        %4491 = vmatpush1.xpose.msra.mxu0 %v4485
        %4492 = vmatprep.subr.mxu0 0.0
        %4493 = vmatpush1.xpose.msra.mxu0 %v4486
        %4494 = vmatprep.subr.mxu0 0.0
        %4495 = vmatpush1.xpose.msra.mxu0 %v4487
        %4496 = vmatprep.subr.mxu0 0.0
        %4497 = vmatpush1.xpose.msra.mxu0 0.0
        %4498 = vmatprep.subr.mxu0 0.0
        %4499 = vmatpush1.xpose.msra.mxu0 0.0
        %4500 = vmatprep.subr.mxu0 0.0
        %4501 = vmatpush1.xpose.msra.mxu0 0.0
        %4502 = vmatprep.subr.mxu0 0.0
        %4503 = vmatpush1.xpose.msra.mxu0 0.0
        %4504 = vmatprep.subr.mxu0 0.0
        %4505 = vmatpush1.xpose.msra.mxu0 0.0
        %4506 = vmatprep.subr.mxu0 0.0
        %4507 = vmatpush1.xpose.msra.mxu0 0.0
        %4508 = vmatprep.subr.mxu0 0.0
        %4509 = vmatpush1.xpose.msra.mxu0 0.0
        %4510 = vmatprep.subr.mxu0 0.0
        %4511 = vmatpush1.xpose.msra.mxu0 0.0
        %4512 = vmatprep.subr.mxu0 0.0
        %4513 = vmatpush1.xpose.msra.mxu0 0.0
        %4514 = vmatprep.subr.mxu0 0.0
        %4515 = vmatpush1.xpose.msra.mxu0 0.0
        %4516 = vmatprep.subr.mxu0 0.0
        %4517 = vmatpush1.xpose.msra.mxu0 0.0
        %4518 = vmatprep.subr.mxu0 0.0
        %4519 = vmatpush1.xpose.msra.mxu0 0.0
        %4520 = vmatprep.subr.mxu0 0.0
        %4521 = vmatpush1.xpose.msra.mxu0 0.0
        %4522 = vmatprep.subr.mxu0 0.0
        %4523 = vmatpush1.xpose.msra.mxu0 0.0
        %4524 = vmatprep.subr.mxu0 0.0
        %4525 = vmatpush1.xpose.msra.mxu0 0.0
        %4526 = vmatprep.subr.mxu0 0.0
        %4527 = vmatpush1.xpose.msra.mxu0 0.0
        %4528 = vmatprep.subr.mxu0 0.0
        %4529 = vmatpush1.xpose.msra.mxu0 0.0
        %4530 = vmatprep.subr.mxu0 0.0
        %4531 = vmatpush1.xpose.msra.mxu0 0.0
        %4532 = vmatprep.subr.mxu0 0.0
        %4533 = vmatpush1.xpose.msra.mxu0 0.0
        %4534 = vmatprep.subr.mxu0 0.0
        %4535 = vmatpush1.xpose.msra.mxu0 0.0
        %4536 = vmatprep.subr.mxu0 0.0
        %4537 = vmatpush1.xpose.msra.mxu0 0.0
        %4538 = vmatprep.subr.mxu0 0.0
        %4539 = vmatpush1.xpose.msra.mxu0 0.0
        %4540 = vmatprep.subr.mxu0 0.0
        %4541 = vmatpush1.xpose.msra.mxu0 0.0
        %4542 = vmatprep.subr.mxu0 0.0
        %4543 = vmatpush1.xpose.msra.mxu0 0.0
        %4544 = vmatprep.subr.mxu0 0.0
        %4545 = vmatpush1.xpose.msra.mxu0 0.0
        %4546 = vmatprep.subr.mxu0 0.0
        %4547 = vmatpush1.xpose.msra.mxu0 0.0
        %4548 = vmatprep.subr.mxu0 0.0
        %4549 = vmatpush1.xpose.msra.mxu0 0.0
        %4550 = vmatprep.subr.mxu0 0.0
        %4551 = vmatpush1.xpose.msra.mxu0 0.0
        %4552 = vmatprep.mubr.f32.mxu0 0.0
        %4553 = vmatmul.mubr.f32.gmra.mrb[0].mxu0 %v4451
        %v4554 = vpop.f32.mrb[0].mxu0
        %v4555 = vadd.f32 0.0, %v4554
        %v4556 = vpop.f32.mrb[0].mxu0
        %4557 = vmatprep.mubr.f32.mxu0 0.0
        %4558 = vmatmul.mubr.f32.gmra.mrb[0].mxu0 %v4452
        %v4559 = vpop.f32.mrb[0].mxu0
        %v4560 = vadd.f32 0.0, %v4559
        %v4561 = vpop.f32.mrb[0].mxu0
        %4562 = vmatprep.mubr.f32.mxu0 0.0
        %4563 = vmatmul.mubr.f32.gmra.mrb[0].mxu0 %v4453
        %v4564 = vpop.f32.mrb[0].mxu0
        %v4565 = vadd.f32 0.0, %v4564
        %v4566 = vpop.f32.mrb[0].mxu0
        %4567 = vmatprep.mubr.f32.mxu0 0.0
        %4568 = vmatmul.mubr.f32.gmra.mrb[0].mxu0 %v4454
        %v4569 = vpop.f32.mrb[0].mxu0
        %v4570 = vadd.f32 0.0, %v4569
        %v4571 = vpop.f32.mrb[0].mxu0
        %4572 = vmatprep.mubr.f32.mxu0 0.0
        %4573 = vmatmul.mubr.f32.gmra.mrb[0].mxu0 %v4455
        %v4574 = vpop.f32.mrb[0].mxu0
        %v4575 = vadd.f32 0.0, %v4574
        %v4576 = vpop.f32.mrb[0].mxu0
        %4577 = vmatprep.mubr.f32.mxu0 0.0
        %4578 = vmatmul.mubr.f32.gmra.mrb[0].mxu0 %v4456
        %v4579 = vpop.f32.mrb[0].mxu0
        %v4580 = vadd.f32 0.0, %v4579
        %v4581 = vpop.f32.mrb[0].mxu0
        %4582 = vmatprep.mubr.f32.mxu0 0.0
        %4583 = vmatmul.mubr.f32.gmra.mrb[0].mxu0 %v4457
        %v4584 = vpop.f32.mrb[0].mxu0
        %v4585 = vadd.f32 0.0, %v4584
        %v4586 = vpop.f32.mrb[0].mxu0
        %4587 = vmatprep.mubr.f32.mxu0 0.0
        %4588 = vmatmul.mubr.f32.gmra.mrb[0].mxu0 %v4458
        %v4589 = vpop.f32.mrb[0].mxu0
        %v4590 = vadd.f32 0.0, %v4589
        %v4591 = vpop.f32.mrb[0].mxu0
        %4592 = vmatprep.mubr.f32.mxu0 0.0
        %4593 = vmatmul.mubr.f32.gmra.mrb[0].mxu0 %v4459
        %v4594 = vpop.f32.mrb[0].mxu0
        %v4595 = vadd.f32 0.0, %v4594
        %v4596 = vpop.f32.mrb[0].mxu0
        %4597 = vmatprep.mubr.f32.mxu0 0.0
        %4598 = vmatmul.mubr.f32.gmra.mrb[0].mxu0 %v4460
        %v4599 = vpop.f32.mrb[0].mxu0
        %v4600 = vadd.f32 0.0, %v4599
        %v4601 = vpop.f32.mrb[0].mxu0
        %4602 = vmatprep.mubr.f32.mxu0 0.0
        %4603 = vmatmul.mubr.f32.gmra.mrb[0].mxu0 %v4461
        %v4604 = vpop.f32.mrb[0].mxu0
        %v4605 = vadd.f32 0.0, %v4604
        %v4606 = vpop.f32.mrb[0].mxu0
        %4607 = vmatprep.mubr.f32.mxu0 0.0
        %4608 = vmatmul.mubr.f32.gmra.mrb[0].mxu0 %v4462
        %v4609 = vpop.f32.mrb[0].mxu0
        %v4610 = vadd.f32 0.0, %v4609
        %v4611 = vpop.f32.mrb[0].mxu0
        %4612 = vmatprep.mubr.f32.mxu0 0.0
        %4613 = vmatmul.mubr.f32.gmra.mrb[0].mxu0 %v4463
        %v4614 = vpop.f32.mrb[0].mxu0
        %v4615 = vadd.f32 0.0, %v4614
        %v4616 = vpop.f32.mrb[0].mxu0
        %4617 = vmatprep.mubr.f32.mxu0 0.0
        %4618 = vmatmul.mubr.f32.gmra.mrb[0].mxu0 %v4464
        %v4619 = vpop.f32.mrb[0].mxu0
        %v4620 = vadd.f32 0.0, %v4619
        %v4621 = vpop.f32.mrb[0].mxu0
        %4622 = vmatprep.mubr.f32.mxu0 0.0
        %4623 = vmatmul.mubr.f32.gmra.mrb[0].mxu0 %v4465
        %v4624 = vpop.f32.mrb[0].mxu0
        %v4625 = vadd.f32 0.0, %v4624
        %v4626 = vpop.f32.mrb[0].mxu0
        %4627 = vmatprep.mubr.f32.mxu0 0.0
        %4628 = vmatmul.mubr.f32.gmra.mrb[0].mxu0 %v4466
        %v4629 = vpop.f32.mrb[0].mxu0
        %v4630 = vadd.f32 0.0, %v4629
        %v4631 = vpop.f32.mrb[0].mxu0
        %4632 = vmatprep.mubr.f32.mxu0 0.0
        %4633 = vmatmul.mubr.f32.gmra.mrb[0].mxu0 %v4467
        %v4634 = vpop.f32.mrb[0].mxu0
        %v4635 = vadd.f32 0.0, %v4634
        %v4636 = vpop.f32.mrb[0].mxu0
        %4637 = vmatprep.mubr.f32.mxu0 0.0
        %4638 = vmatmul.mubr.f32.gmra.mrb[0].mxu0 %v4468
        %v4639 = vpop.f32.mrb[0].mxu0
        %v4640 = vadd.f32 0.0, %v4639
        %v4641 = vpop.f32.mrb[0].mxu0
        %4642 = vmatprep.mubr.f32.mxu0 0.0
        %4643 = vmatmul.mubr.f32.gmra.mrb[0].mxu0 %v4469
        %v4644 = vpop.f32.mrb[0].mxu0
        %v4645 = vadd.f32 0.0, %v4644
        %v4646 = vpop.f32.mrb[0].mxu0
        %4647 = vmatprep.mubr.f32.mxu0 0.0
        %4648 = vmatmul.mubr.f32.gmra.mrb[0].mxu0 %v4470
        %v4649 = vpop.f32.mrb[0].mxu0
        %v4650 = vadd.f32 0.0, %v4649
        %v4651 = vpop.f32.mrb[0].mxu0
        %4652 = vmatprep.mubr.f32.mxu0 0.0
        %4653 = vmatmul.mubr.f32.gmra.mrb[0].mxu0 %v4471
        %v4654 = vpop.f32.mrb[0].mxu0
        %v4655 = vadd.f32 0.0, %v4654
        %v4656 = vpop.f32.mrb[0].mxu0
        %4657 = vmatprep.mubr.f32.mxu0 0.0
        %4658 = vmatmul.mubr.f32.gmra.mrb[0].mxu0 %v4472
        %v4659 = vpop.f32.mrb[0].mxu0
        %v4660 = vadd.f32 0.0, %v4659
        %v4661 = vpop.f32.mrb[0].mxu0
        %4662 = vmatprep.mubr.f32.mxu0 0.0
        %4663 = vmatmul.mubr.f32.gmra.mrb[0].mxu0 %v4473
        %v4664 = vpop.f32.mrb[0].mxu0
        %v4665 = vadd.f32 0.0, %v4664
        %v4666 = vpop.f32.mrb[0].mxu0
        %4667 = vmatprep.mubr.f32.mxu0 0.0
        %4668 = vmatmul.mubr.f32.gmra.mrb[0].mxu0 %v4474
        %v4669 = vpop.f32.mrb[0].mxu0
        %v4670 = vadd.f32 0.0, %v4669
        %v4671 = vpop.f32.mrb[0].mxu0
        %4672 = vmatprep.mubr.f32.mxu0 0.0
        %4673 = vmatmul.mubr.f32.gmra.mrb[0].mxu0 %v4475
        %v4674 = vpop.f32.mrb[0].mxu0
        %v4675 = vadd.f32 0.0, %v4674
        %v4676 = vpop.f32.mrb[0].mxu0
        %4677 = vmatprep.mubr.f32.mxu0 0.0
        %4678 = vmatmul.mubr.f32.gmra.mrb[0].mxu0 %v4476
        %v4679 = vpop.f32.mrb[0].mxu0
        %v4680 = vadd.f32 0.0, %v4679
        %v4681 = vpop.f32.mrb[0].mxu0
        %4682 = vmatprep.mubr.f32.mxu0 0.0
        %4683 = vmatmul.mubr.f32.gmra.mrb[0].mxu0 %v4477
        %v4684 = vpop.f32.mrb[0].mxu0
        %v4685 = vadd.f32 0.0, %v4684
        %v4686 = vpop.f32.mrb[0].mxu0
        %4687 = vmatprep.mubr.f32.mxu0 0.0
        %4688 = vmatmul.mubr.f32.gmra.mrb[0].mxu0 %v4478
        %v4689 = vpop.f32.mrb[0].mxu0
        %v4690 = vadd.f32 0.0, %v4689
        %v4691 = vpop.f32.mrb[0].mxu0
        %4692 = vmatprep.mubr.f32.mxu0 0.0
        %4693 = vmatmul.mubr.f32.gmra.mrb[0].mxu0 %v4479
        %v4694 = vpop.f32.mrb[0].mxu0
        %v4695 = vadd.f32 0.0, %v4694
        %v4696 = vpop.f32.mrb[0].mxu0
        %4697 = vmatprep.mubr.f32.mxu0 0.0
        %4698 = vmatmul.mubr.f32.gmra.mrb[0].mxu0 %v4480
        %v4699 = vpop.f32.mrb[0].mxu0
        %v4700 = vadd.f32 0.0, %v4699
        %v4701 = vpop.f32.mrb[0].mxu0
        %4702 = vmatprep.mubr.f32.mxu0 0.0
        %4703 = vmatmul.mubr.f32.gmra.mrb[0].mxu0 %v4481
        %v4704 = vpop.f32.mrb[0].mxu0
        %v4705 = vadd.f32 0.0, %v4704
        %v4706 = vpop.f32.mrb[0].mxu0
        %4707 = vmatprep.mubr.f32.mxu0 0.0
        %4708 = vmatmul.mubr.f32.gmra.mrb[0].mxu0 %v4482
        %v4709 = vpop.f32.mrb[0].mxu0
        %v4710 = vadd.f32 0.0, %v4709
        %v4711 = vpop.f32.mrb[0].mxu0
        %4712 = vdwg.mxu0
        %v4713 = vadd.f32 %v4418, %v4555
        %v4714 = vadd.f32 %v4419, %v4560
        %v4715 = vadd.f32 %v4420, %v4565
        %v4716 = vadd.f32 %v4421, %v4570
        %v4717 = vadd.f32 %v4422, %v4575
        %v4718 = vadd.f32 %v4423, %v4580
        %v4719 = vadd.f32 %v4424, %v4585
        %v4720 = vadd.f32 %v4425, %v4590
        %v4721 = vadd.f32 %v4426, %v4595
        %v4722 = vadd.f32 %v4427, %v4600
        %v4723 = vadd.f32 %v4428, %v4605
        %v4724 = vadd.f32 %v4429, %v4610
        %v4725 = vadd.f32 %v4430, %v4615
        %v4726 = vadd.f32 %v4431, %v4620
        %v4727 = vadd.f32 %v4432, %v4625
        %v4728 = vadd.f32 %v4433, %v4630
        %v4729 = vadd.f32 %v4434, %v4635
        %v4730 = vadd.f32 %v4435, %v4640
        %v4731 = vadd.f32 %v4436, %v4645
        %v4732 = vadd.f32 %v4437, %v4650
        %v4733 = vadd.f32 %v4438, %v4655
        %v4734 = vadd.f32 %v4439, %v4660
        %v4735 = vadd.f32 %v4440, %v4665
        %v4736 = vadd.f32 %v4441, %v4670
        %v4737 = vadd.f32 %v4442, %v4675
        %v4738 = vadd.f32 %v4443, %v4680
        %v4739 = vadd.f32 %v4444, %v4685
        %v4740 = vadd.f32 %v4445, %v4690
        %v4741 = vadd.f32 %v4446, %v4695
        %v4742 = vadd.f32 %v4447, %v4700
        %v4743 = vadd.f32 %v4448, %v4705
        %v4744 = vadd.f32 %v4449, %v4710
        %v4745 = vld [vmem:[%s4450 + $0x3] sm:$0xff]
        %v4746 = vld [vmem:[%s4450 + $0xb] sm:$0xff]
        %v4747 = vld [vmem:[%s4450 + $0x1b] sm:$0xff]
        %v4748 = vld [vmem:[%s4450 + $0x23] sm:$0xff]
        %v4749 = vld [vmem:[%s4450 + $0x33] sm:$0xff]
        %v4750 = vld [vmem:[%s4450 + $0x3b] sm:$0xff]
        %v4751 = vld [vmem:[%s4450 + $0x4b] sm:$0xff]
        %v4752 = vld [vmem:[%s4450 + $0x53] sm:$0xff]
        %v4753 = vld [vmem:[%s4450 + $0x63] sm:$0xff]
        %v4754 = vld [vmem:[%s4450 + $0x6b] sm:$0xff]
        %v4755 = vld [vmem:[%s4450 + $0x7b] sm:$0xff]
        %v4756 = vld [vmem:[%s4450 + $0x83] sm:$0xff]
        %v4757 = vld [vmem:[%s4450 + $0x93] sm:$0xff]
        %v4758 = vld [vmem:[%s4450 + $0x9b] sm:$0xff]
        %v4759 = vld [vmem:[%s4450 + $0xab] sm:$0xff]
        %v4760 = vld [vmem:[%s4450 + $0xb3] sm:$0xff]
        %v4761 = vld [vmem:[%s4450 + $0xc3] sm:$0xff]
        %v4762 = vld [vmem:[%s4450 + $0xcb] sm:$0xff]
        %v4763 = vld [vmem:[%s4450 + $0xdb] sm:$0xff]
        %v4764 = vld [vmem:[%s4450 + $0xe3] sm:$0xff]
        %v4765 = vld [vmem:[%s4450 + $0xf3] sm:$0xff]
        %v4766 = vld [vmem:[%s4450 + $0xfb] sm:$0xff]
        %v4767 = vld [vmem:[%s4450 + $0x10b] sm:$0xff]
        %v4768 = vld [vmem:[%s4450 + $0x113] sm:$0xff]
        %v4769 = vld [vmem:[%s4450 + $0x123] sm:$0xff]
        %v4770 = vld [vmem:[%s4450 + $0x12b] sm:$0xff]
        %v4771 = vld [vmem:[%s4450 + $0x13b] sm:$0xff]
        %v4772 = vld [vmem:[%s4450 + $0x143] sm:$0xff]
        %v4773 = vld [vmem:[%s4450 + $0x153] sm:$0xff]
        %v4774 = vld [vmem:[%s4450 + $0x15b] sm:$0xff]
        %v4775 = vld [vmem:[%s4450 + $0x16b] sm:$0xff]
        %v4776 = vld [vmem:[%s4450 + $0x173] sm:$0xff]
        %s4777 = scalar_lea.vmem %s2, 448
        %v4778 = vld [vmem:[%s4777] sm:$0xff]
        %v4779 = vld [vmem:[%s4777 + $0x8] sm:$0xff]
        %v4780 = vld [vmem:[%s4777 + $0x10] sm:$0xff]
        %v4781 = vld [vmem:[%s4777 + $0x18] sm:$0xff]
        %4782 = vmatprep.subr.mxu0 0.0
        %4783 = vmatpush1.xpose.msra.mxu0 %v4778
        %4784 = vmatprep.subr.mxu0 0.0
        %4785 = vmatpush1.xpose.msra.mxu0 %v4779
        %4786 = vmatprep.subr.mxu0 0.0
        %4787 = vmatpush1.xpose.msra.mxu0 %v4780
        %4788 = vmatprep.subr.mxu0 0.0
        %4789 = vmatpush1.xpose.msra.mxu0 %v4781
        %4790 = vmatprep.subr.mxu0 0.0
        %4791 = vmatpush1.xpose.msra.mxu0 0.0
        %4792 = vmatprep.subr.mxu0 0.0
        %4793 = vmatpush1.xpose.msra.mxu0 0.0
        %4794 = vmatprep.subr.mxu0 0.0
        %4795 = vmatpush1.xpose.msra.mxu0 0.0
        %4796 = vmatprep.subr.mxu0 0.0
        %4797 = vmatpush1.xpose.msra.mxu0 0.0
        %4798 = vmatprep.subr.mxu0 0.0
        %4799 = vmatpush1.xpose.msra.mxu0 0.0
        %4800 = vmatprep.subr.mxu0 0.0
        %4801 = vmatpush1.xpose.msra.mxu0 0.0
        %4802 = vmatprep.subr.mxu0 0.0
        %4803 = vmatpush1.xpose.msra.mxu0 0.0
        %4804 = vmatprep.subr.mxu0 0.0
        %4805 = vmatpush1.xpose.msra.mxu0 0.0
        %4806 = vmatprep.subr.mxu0 0.0
        %4807 = vmatpush1.xpose.msra.mxu0 0.0
        %4808 = vmatprep.subr.mxu0 0.0
        %4809 = vmatpush1.xpose.msra.mxu0 0.0
        %4810 = vmatprep.subr.mxu0 0.0
        %4811 = vmatpush1.xpose.msra.mxu0 0.0
        %4812 = vmatprep.subr.mxu0 0.0
        %4813 = vmatpush1.xpose.msra.mxu0 0.0
        %4814 = vmatprep.subr.mxu0 0.0
        %4815 = vmatpush1.xpose.msra.mxu0 0.0
        %4816 = vmatprep.subr.mxu0 0.0
        %4817 = vmatpush1.xpose.msra.mxu0 0.0
        %4818 = vmatprep.subr.mxu0 0.0
        %4819 = vmatpush1.xpose.msra.mxu0 0.0
        %4820 = vmatprep.subr.mxu0 0.0
        %4821 = vmatpush1.xpose.msra.mxu0 0.0
        %4822 = vmatprep.subr.mxu0 0.0
        %4823 = vmatpush1.xpose.msra.mxu0 0.0
        %4824 = vmatprep.subr.mxu0 0.0
        %4825 = vmatpush1.xpose.msra.mxu0 0.0
        %4826 = vmatprep.subr.mxu0 0.0
        %4827 = vmatpush1.xpose.msra.mxu0 0.0
        %4828 = vmatprep.subr.mxu0 0.0
        %4829 = vmatpush1.xpose.msra.mxu0 0.0
        %4830 = vmatprep.subr.mxu0 0.0
        %4831 = vmatpush1.xpose.msra.mxu0 0.0
        %4832 = vmatprep.subr.mxu0 0.0
        %4833 = vmatpush1.xpose.msra.mxu0 0.0
        %4834 = vmatprep.subr.mxu0 0.0
        %4835 = vmatpush1.xpose.msra.mxu0 0.0
        %4836 = vmatprep.subr.mxu0 0.0
        %4837 = vmatpush1.xpose.msra.mxu0 0.0
        %4838 = vmatprep.subr.mxu0 0.0
        %4839 = vmatpush1.xpose.msra.mxu0 0.0
        %4840 = vmatprep.subr.mxu0 0.0
        %4841 = vmatpush1.xpose.msra.mxu0 0.0
        %4842 = vmatprep.subr.mxu0 0.0
        %4843 = vmatpush1.xpose.msra.mxu0 0.0
        %4844 = vmatprep.subr.mxu0 0.0
        %4845 = vmatpush1.xpose.msra.mxu0 0.0
        %4846 = vmatprep.mubr.f32.mxu0 0.0
        %4847 = vmatmul.mubr.f32.gmra.mrb[0].mxu0 %v4745
        %v4848 = vpop.f32.mrb[0].mxu0
        %v4849 = vadd.f32 0.0, %v4848
        %v4850 = vpop.f32.mrb[0].mxu0
        %4851 = vmatprep.mubr.f32.mxu0 0.0
        %4852 = vmatmul.mubr.f32.gmra.mrb[0].mxu0 %v4746
        %v4853 = vpop.f32.mrb[0].mxu0
        %v4854 = vadd.f32 0.0, %v4853
        %v4855 = vpop.f32.mrb[0].mxu0
        %4856 = vmatprep.mubr.f32.mxu0 0.0
        %4857 = vmatmul.mubr.f32.gmra.mrb[0].mxu0 %v4747
        %v4858 = vpop.f32.mrb[0].mxu0
        %v4859 = vadd.f32 0.0, %v4858
        %v4860 = vpop.f32.mrb[0].mxu0
        %4861 = vmatprep.mubr.f32.mxu0 0.0
        %4862 = vmatmul.mubr.f32.gmra.mrb[0].mxu0 %v4748
        %v4863 = vpop.f32.mrb[0].mxu0
        %v4864 = vadd.f32 0.0, %v4863
        %v4865 = vpop.f32.mrb[0].mxu0
        %4866 = vmatprep.mubr.f32.mxu0 0.0
        %4867 = vmatmul.mubr.f32.gmra.mrb[0].mxu0 %v4749
        %v4868 = vpop.f32.mrb[0].mxu0
        %v4869 = vadd.f32 0.0, %v4868
        %v4870 = vpop.f32.mrb[0].mxu0
        %4871 = vmatprep.mubr.f32.mxu0 0.0
        %4872 = vmatmul.mubr.f32.gmra.mrb[0].mxu0 %v4750
        %v4873 = vpop.f32.mrb[0].mxu0
        %v4874 = vadd.f32 0.0, %v4873
        %v4875 = vpop.f32.mrb[0].mxu0
        %4876 = vmatprep.mubr.f32.mxu0 0.0
        %4877 = vmatmul.mubr.f32.gmra.mrb[0].mxu0 %v4751
        %v4878 = vpop.f32.mrb[0].mxu0
        %v4879 = vadd.f32 0.0, %v4878
        %v4880 = vpop.f32.mrb[0].mxu0
        %4881 = vmatprep.mubr.f32.mxu0 0.0
        %4882 = vmatmul.mubr.f32.gmra.mrb[0].mxu0 %v4752
        %v4883 = vpop.f32.mrb[0].mxu0
        %v4884 = vadd.f32 0.0, %v4883
        %v4885 = vpop.f32.mrb[0].mxu0
        %4886 = vmatprep.mubr.f32.mxu0 0.0
        %4887 = vmatmul.mubr.f32.gmra.mrb[0].mxu0 %v4753
        %v4888 = vpop.f32.mrb[0].mxu0
        %v4889 = vadd.f32 0.0, %v4888
        %v4890 = vpop.f32.mrb[0].mxu0
        %4891 = vmatprep.mubr.f32.mxu0 0.0
        %4892 = vmatmul.mubr.f32.gmra.mrb[0].mxu0 %v4754
        %v4893 = vpop.f32.mrb[0].mxu0
        %v4894 = vadd.f32 0.0, %v4893
        %v4895 = vpop.f32.mrb[0].mxu0
        %4896 = vmatprep.mubr.f32.mxu0 0.0
        %4897 = vmatmul.mubr.f32.gmra.mrb[0].mxu0 %v4755
        %v4898 = vpop.f32.mrb[0].mxu0
        %v4899 = vadd.f32 0.0, %v4898
        %v4900 = vpop.f32.mrb[0].mxu0
        %4901 = vmatprep.mubr.f32.mxu0 0.0
        %4902 = vmatmul.mubr.f32.gmra.mrb[0].mxu0 %v4756
        %v4903 = vpop.f32.mrb[0].mxu0
        %v4904 = vadd.f32 0.0, %v4903
        %v4905 = vpop.f32.mrb[0].mxu0
        %4906 = vmatprep.mubr.f32.mxu0 0.0
        %4907 = vmatmul.mubr.f32.gmra.mrb[0].mxu0 %v4757
        %v4908 = vpop.f32.mrb[0].mxu0
        %v4909 = vadd.f32 0.0, %v4908
        %v4910 = vpop.f32.mrb[0].mxu0
        %4911 = vmatprep.mubr.f32.mxu0 0.0
        %4912 = vmatmul.mubr.f32.gmra.mrb[0].mxu0 %v4758
        %v4913 = vpop.f32.mrb[0].mxu0
        %v4914 = vadd.f32 0.0, %v4913
        %v4915 = vpop.f32.mrb[0].mxu0
        %4916 = vmatprep.mubr.f32.mxu0 0.0
        %4917 = vmatmul.mubr.f32.gmra.mrb[0].mxu0 %v4759
        %v4918 = vpop.f32.mrb[0].mxu0
        %v4919 = vadd.f32 0.0, %v4918
        %v4920 = vpop.f32.mrb[0].mxu0
        %4921 = vmatprep.mubr.f32.mxu0 0.0
        %4922 = vmatmul.mubr.f32.gmra.mrb[0].mxu0 %v4760
        %v4923 = vpop.f32.mrb[0].mxu0
        %v4924 = vadd.f32 0.0, %v4923
        %v4925 = vpop.f32.mrb[0].mxu0
        %4926 = vmatprep.mubr.f32.mxu0 0.0
        %4927 = vmatmul.mubr.f32.gmra.mrb[0].mxu0 %v4761
        %v4928 = vpop.f32.mrb[0].mxu0
        %v4929 = vadd.f32 0.0, %v4928
        %v4930 = vpop.f32.mrb[0].mxu0
        %4931 = vmatprep.mubr.f32.mxu0 0.0
        %4932 = vmatmul.mubr.f32.gmra.mrb[0].mxu0 %v4762
        %v4933 = vpop.f32.mrb[0].mxu0
        %v4934 = vadd.f32 0.0, %v4933
        %v4935 = vpop.f32.mrb[0].mxu0
        %4936 = vmatprep.mubr.f32.mxu0 0.0
        %4937 = vmatmul.mubr.f32.gmra.mrb[0].mxu0 %v4763
        %v4938 = vpop.f32.mrb[0].mxu0
        %v4939 = vadd.f32 0.0, %v4938
        %v4940 = vpop.f32.mrb[0].mxu0
        %4941 = vmatprep.mubr.f32.mxu0 0.0
        %4942 = vmatmul.mubr.f32.gmra.mrb[0].mxu0 %v4764
        %v4943 = vpop.f32.mrb[0].mxu0
        %v4944 = vadd.f32 0.0, %v4943
        %v4945 = vpop.f32.mrb[0].mxu0
        %4946 = vmatprep.mubr.f32.mxu0 0.0
        %4947 = vmatmul.mubr.f32.gmra.mrb[0].mxu0 %v4765
        %v4948 = vpop.f32.mrb[0].mxu0
        %v4949 = vadd.f32 0.0, %v4948
        %v4950 = vpop.f32.mrb[0].mxu0
        %4951 = vmatprep.mubr.f32.mxu0 0.0
        %4952 = vmatmul.mubr.f32.gmra.mrb[0].mxu0 %v4766
        %v4953 = vpop.f32.mrb[0].mxu0
        %v4954 = vadd.f32 0.0, %v4953
        %v4955 = vpop.f32.mrb[0].mxu0
        %4956 = vmatprep.mubr.f32.mxu0 0.0
        %4957 = vmatmul.mubr.f32.gmra.mrb[0].mxu0 %v4767
        %v4958 = vpop.f32.mrb[0].mxu0
        %v4959 = vadd.f32 0.0, %v4958
        %v4960 = vpop.f32.mrb[0].mxu0
        %4961 = vmatprep.mubr.f32.mxu0 0.0
        %4962 = vmatmul.mubr.f32.gmra.mrb[0].mxu0 %v4768
        %v4963 = vpop.f32.mrb[0].mxu0
        %v4964 = vadd.f32 0.0, %v4963
        %v4965 = vpop.f32.mrb[0].mxu0
        %4966 = vmatprep.mubr.f32.mxu0 0.0
        %4967 = vmatmul.mubr.f32.gmra.mrb[0].mxu0 %v4769
        %v4968 = vpop.f32.mrb[0].mxu0
        %v4969 = vadd.f32 0.0, %v4968
        %v4970 = vpop.f32.mrb[0].mxu0
        %4971 = vmatprep.mubr.f32.mxu0 0.0
        %4972 = vmatmul.mubr.f32.gmra.mrb[0].mxu0 %v4770
        %v4973 = vpop.f32.mrb[0].mxu0
        %v4974 = vadd.f32 0.0, %v4973
        %v4975 = vpop.f32.mrb[0].mxu0
        %4976 = vmatprep.mubr.f32.mxu0 0.0
        %4977 = vmatmul.mubr.f32.gmra.mrb[0].mxu0 %v4771
        %v4978 = vpop.f32.mrb[0].mxu0
        %v4979 = vadd.f32 0.0, %v4978
        %v4980 = vpop.f32.mrb[0].mxu0
        %4981 = vmatprep.mubr.f32.mxu0 0.0
        %4982 = vmatmul.mubr.f32.gmra.mrb[0].mxu0 %v4772
        %v4983 = vpop.f32.mrb[0].mxu0
        %v4984 = vadd.f32 0.0, %v4983
        %v4985 = vpop.f32.mrb[0].mxu0
        %4986 = vmatprep.mubr.f32.mxu0 0.0
        %4987 = vmatmul.mubr.f32.gmra.mrb[0].mxu0 %v4773
        %v4988 = vpop.f32.mrb[0].mxu0
        %v4989 = vadd.f32 0.0, %v4988
        %v4990 = vpop.f32.mrb[0].mxu0
        %4991 = vmatprep.mubr.f32.mxu0 0.0
        %4992 = vmatmul.mubr.f32.gmra.mrb[0].mxu0 %v4774
        %v4993 = vpop.f32.mrb[0].mxu0
        %v4994 = vadd.f32 0.0, %v4993
        %v4995 = vpop.f32.mrb[0].mxu0
        %4996 = vmatprep.mubr.f32.mxu0 0.0
        %4997 = vmatmul.mubr.f32.gmra.mrb[0].mxu0 %v4775
        %v4998 = vpop.f32.mrb[0].mxu0
        %v4999 = vadd.f32 0.0, %v4998
        %v5000 = vpop.f32.mrb[0].mxu0
        %5001 = vmatprep.mubr.f32.mxu0 0.0
        %5002 = vmatmul.mubr.f32.gmra.mrb[0].mxu0 %v4776
        %v5003 = vpop.f32.mrb[0].mxu0
        %v5004 = vadd.f32 0.0, %v5003
        %v5005 = vpop.f32.mrb[0].mxu0
        %5006 = vdwg.mxu0
        %v5007 = vadd.f32 %v4713, %v4849
        %v5008 = vadd.f32 %v4714, %v4854
        %v5009 = vadd.f32 %v4715, %v4859
        %v5010 = vadd.f32 %v4716, %v4864
        %v5011 = vadd.f32 %v4717, %v4869
        %v5012 = vadd.f32 %v4718, %v4874
        %v5013 = vadd.f32 %v4719, %v4879
        %v5014 = vadd.f32 %v4720, %v4884
        %v5015 = vadd.f32 %v4721, %v4889
        %v5016 = vadd.f32 %v4722, %v4894
        %v5017 = vadd.f32 %v4723, %v4899
        %v5018 = vadd.f32 %v4724, %v4904
        %v5019 = vadd.f32 %v4725, %v4909
        %v5020 = vadd.f32 %v4726, %v4914
        %v5021 = vadd.f32 %v4727, %v4919
        %v5022 = vadd.f32 %v4728, %v4924
        %v5023 = vadd.f32 %v4729, %v4929
        %v5024 = vadd.f32 %v4730, %v4934
        %v5025 = vadd.f32 %v4731, %v4939
        %v5026 = vadd.f32 %v4732, %v4944
        %v5027 = vadd.f32 %v4733, %v4949
        %v5028 = vadd.f32 %v4734, %v4954
        %v5029 = vadd.f32 %v4735, %v4959
        %v5030 = vadd.f32 %v4736, %v4964
        %v5031 = vadd.f32 %v4737, %v4969
        %v5032 = vadd.f32 %v4738, %v4974
        %v5033 = vadd.f32 %v4739, %v4979
        %v5034 = vadd.f32 %v4740, %v4984
        %v5035 = vadd.f32 %v4741, %v4989
        %v5036 = vadd.f32 %v4742, %v4994
        %v5037 = vadd.f32 %v4743, %v4999
        %v5038 = vadd.f32 %v4744, %v5004
        %v5039 = vld [vmem:[%s4450 + $0x5] sm:$0xff]
        %v5040 = vld [vmem:[%s4450 + $0xd] sm:$0xff]
        %v5041 = vld [vmem:[%s4450 + $0x1d] sm:$0xff]
        %v5042 = vld [vmem:[%s4450 + $0x25] sm:$0xff]
        %v5043 = vld [vmem:[%s4450 + $0x35] sm:$0xff]
        %v5044 = vld [vmem:[%s4450 + $0x3d] sm:$0xff]
        %v5045 = vld [vmem:[%s4450 + $0x4d] sm:$0xff]
        %v5046 = vld [vmem:[%s4450 + $0x55] sm:$0xff]
        %v5047 = vld [vmem:[%s4450 + $0x65] sm:$0xff]
        %v5048 = vld [vmem:[%s4450 + $0x6d] sm:$0xff]
        %v5049 = vld [vmem:[%s4450 + $0x7d] sm:$0xff]
        %v5050 = vld [vmem:[%s4450 + $0x85] sm:$0xff]
        %v5051 = vld [vmem:[%s4450 + $0x95] sm:$0xff]
        %v5052 = vld [vmem:[%s4450 + $0x9d] sm:$0xff]
        %v5053 = vld [vmem:[%s4450 + $0xad] sm:$0xff]
        %v5054 = vld [vmem:[%s4450 + $0xb5] sm:$0xff]
        %v5055 = vld [vmem:[%s4450 + $0xc5] sm:$0xff]
        %v5056 = vld [vmem:[%s4450 + $0xcd] sm:$0xff]
        %v5057 = vld [vmem:[%s4450 + $0xdd] sm:$0xff]
        %v5058 = vld [vmem:[%s4450 + $0xe5] sm:$0xff]
        %v5059 = vld [vmem:[%s4450 + $0xf5] sm:$0xff]
        %v5060 = vld [vmem:[%s4450 + $0xfd] sm:$0xff]
        %v5061 = vld [vmem:[%s4450 + $0x10d] sm:$0xff]
        %v5062 = vld [vmem:[%s4450 + $0x115] sm:$0xff]
        %v5063 = vld [vmem:[%s4450 + $0x125] sm:$0xff]
        %v5064 = vld [vmem:[%s4450 + $0x12d] sm:$0xff]
        %v5065 = vld [vmem:[%s4450 + $0x13d] sm:$0xff]
        %v5066 = vld [vmem:[%s4450 + $0x145] sm:$0xff]
        %v5067 = vld [vmem:[%s4450 + $0x155] sm:$0xff]
        %v5068 = vld [vmem:[%s4450 + $0x15d] sm:$0xff]
        %v5069 = vld [vmem:[%s4450 + $0x16d] sm:$0xff]
        %v5070 = vld [vmem:[%s4450 + $0x175] sm:$0xff]
        %s5071 = scalar_lea.vmem %s2, 480
        %v5072 = vld [vmem:[%s5071] sm:$0xff]
        %v5073 = vld [vmem:[%s5071 + $0x8] sm:$0xff]
        %v5074 = vld [vmem:[%s5071 + $0x10] sm:$0xff]
        %v5075 = vld [vmem:[%s5071 + $0x18] sm:$0xff]
        %5076 = vmatprep.subr.mxu0 0.0
        %5077 = vmatpush1.xpose.msra.mxu0 %v5072
        %5078 = vmatprep.subr.mxu0 0.0
        %5079 = vmatpush1.xpose.msra.mxu0 %v5073
        %5080 = vmatprep.subr.mxu0 0.0
        %5081 = vmatpush1.xpose.msra.mxu0 %v5074
        %5082 = vmatprep.subr.mxu0 0.0
        %5083 = vmatpush1.xpose.msra.mxu0 %v5075
        %5084 = vmatprep.subr.mxu0 0.0
        %5085 = vmatpush1.xpose.msra.mxu0 0.0
        %5086 = vmatprep.subr.mxu0 0.0
        %5087 = vmatpush1.xpose.msra.mxu0 0.0
        %5088 = vmatprep.subr.mxu0 0.0
        %5089 = vmatpush1.xpose.msra.mxu0 0.0
        %5090 = vmatprep.subr.mxu0 0.0
        %5091 = vmatpush1.xpose.msra.mxu0 0.0
        %5092 = vmatprep.subr.mxu0 0.0
        %5093 = vmatpush1.xpose.msra.mxu0 0.0
        %5094 = vmatprep.subr.mxu0 0.0
        %5095 = vmatpush1.xpose.msra.mxu0 0.0
        %5096 = vmatprep.subr.mxu0 0.0
        %5097 = vmatpush1.xpose.msra.mxu0 0.0
        %5098 = vmatprep.subr.mxu0 0.0
        %5099 = vmatpush1.xpose.msra.mxu0 0.0
        %5100 = vmatprep.subr.mxu0 0.0
        %5101 = vmatpush1.xpose.msra.mxu0 0.0
        %5102 = vmatprep.subr.mxu0 0.0
        %5103 = vmatpush1.xpose.msra.mxu0 0.0
        %5104 = vmatprep.subr.mxu0 0.0
        %5105 = vmatpush1.xpose.msra.mxu0 0.0
        %5106 = vmatprep.subr.mxu0 0.0
        %5107 = vmatpush1.xpose.msra.mxu0 0.0
        %5108 = vmatprep.subr.mxu0 0.0
        %5109 = vmatpush1.xpose.msra.mxu0 0.0
        %5110 = vmatprep.subr.mxu0 0.0
        %5111 = vmatpush1.xpose.msra.mxu0 0.0
        %5112 = vmatprep.subr.mxu0 0.0
        %5113 = vmatpush1.xpose.msra.mxu0 0.0
        %5114 = vmatprep.subr.mxu0 0.0
        %5115 = vmatpush1.xpose.msra.mxu0 0.0
        %5116 = vmatprep.subr.mxu0 0.0
        %5117 = vmatpush1.xpose.msra.mxu0 0.0
        %5118 = vmatprep.subr.mxu0 0.0
        %5119 = vmatpush1.xpose.msra.mxu0 0.0
        %5120 = vmatprep.subr.mxu0 0.0
        %5121 = vmatpush1.xpose.msra.mxu0 0.0
        %5122 = vmatprep.subr.mxu0 0.0
        %5123 = vmatpush1.xpose.msra.mxu0 0.0
        %5124 = vmatprep.subr.mxu0 0.0
        %5125 = vmatpush1.xpose.msra.mxu0 0.0
        %5126 = vmatprep.subr.mxu0 0.0
        %5127 = vmatpush1.xpose.msra.mxu0 0.0
        %5128 = vmatprep.subr.mxu0 0.0
        %5129 = vmatpush1.xpose.msra.mxu0 0.0
        %5130 = vmatprep.subr.mxu0 0.0
        %5131 = vmatpush1.xpose.msra.mxu0 0.0
        %5132 = vmatprep.subr.mxu0 0.0
        %5133 = vmatpush1.xpose.msra.mxu0 0.0
        %5134 = vmatprep.subr.mxu0 0.0
        %5135 = vmatpush1.xpose.msra.mxu0 0.0
        %5136 = vmatprep.subr.mxu0 0.0
        %5137 = vmatpush1.xpose.msra.mxu0 0.0
        %5138 = vmatprep.subr.mxu0 0.0
        %5139 = vmatpush1.xpose.msra.mxu0 0.0
        %5140 = vmatprep.mubr.f32.mxu0 0.0
        %5141 = vmatmul.mubr.f32.gmra.mrb[0].mxu0 %v5039
        %v5142 = vpop.f32.mrb[0].mxu0
        %v5143 = vadd.f32 0.0, %v5142
        %v5144 = vpop.f32.mrb[0].mxu0
        %5145 = vmatprep.mubr.f32.mxu0 0.0
        %5146 = vmatmul.mubr.f32.gmra.mrb[0].mxu0 %v5040
        %v5147 = vpop.f32.mrb[0].mxu0
        %v5148 = vadd.f32 0.0, %v5147
        %v5149 = vpop.f32.mrb[0].mxu0
        %5150 = vmatprep.mubr.f32.mxu0 0.0
        %5151 = vmatmul.mubr.f32.gmra.mrb[0].mxu0 %v5041
        %v5152 = vpop.f32.mrb[0].mxu0
        %v5153 = vadd.f32 0.0, %v5152
        %v5154 = vpop.f32.mrb[0].mxu0
        %5155 = vmatprep.mubr.f32.mxu0 0.0
        %5156 = vmatmul.mubr.f32.gmra.mrb[0].mxu0 %v5042
        %v5157 = vpop.f32.mrb[0].mxu0
        %v5158 = vadd.f32 0.0, %v5157
        %v5159 = vpop.f32.mrb[0].mxu0
        %5160 = vmatprep.mubr.f32.mxu0 0.0
        %5161 = vmatmul.mubr.f32.gmra.mrb[0].mxu0 %v5043
        %v5162 = vpop.f32.mrb[0].mxu0
        %v5163 = vadd.f32 0.0, %v5162
        %v5164 = vpop.f32.mrb[0].mxu0
        %5165 = vmatprep.mubr.f32.mxu0 0.0
        %5166 = vmatmul.mubr.f32.gmra.mrb[0].mxu0 %v5044
        %v5167 = vpop.f32.mrb[0].mxu0
        %v5168 = vadd.f32 0.0, %v5167
        %v5169 = vpop.f32.mrb[0].mxu0
        %5170 = vmatprep.mubr.f32.mxu0 0.0
        %5171 = vmatmul.mubr.f32.gmra.mrb[0].mxu0 %v5045
        %v5172 = vpop.f32.mrb[0].mxu0
        %v5173 = vadd.f32 0.0, %v5172
        %v5174 = vpop.f32.mrb[0].mxu0
        %5175 = vmatprep.mubr.f32.mxu0 0.0
        %5176 = vmatmul.mubr.f32.gmra.mrb[0].mxu0 %v5046
        %v5177 = vpop.f32.mrb[0].mxu0
        %v5178 = vadd.f32 0.0, %v5177
        %v5179 = vpop.f32.mrb[0].mxu0
        %5180 = vmatprep.mubr.f32.mxu0 0.0
        %5181 = vmatmul.mubr.f32.gmra.mrb[0].mxu0 %v5047
        %v5182 = vpop.f32.mrb[0].mxu0
        %v5183 = vadd.f32 0.0, %v5182
        %v5184 = vpop.f32.mrb[0].mxu0
        %5185 = vmatprep.mubr.f32.mxu0 0.0
        %5186 = vmatmul.mubr.f32.gmra.mrb[0].mxu0 %v5048
        %v5187 = vpop.f32.mrb[0].mxu0
        %v5188 = vadd.f32 0.0, %v5187
        %v5189 = vpop.f32.mrb[0].mxu0
        %5190 = vmatprep.mubr.f32.mxu0 0.0
        %5191 = vmatmul.mubr.f32.gmra.mrb[0].mxu0 %v5049
        %v5192 = vpop.f32.mrb[0].mxu0
        %v5193 = vadd.f32 0.0, %v5192
        %v5194 = vpop.f32.mrb[0].mxu0
        %5195 = vmatprep.mubr.f32.mxu0 0.0
        %5196 = vmatmul.mubr.f32.gmra.mrb[0].mxu0 %v5050
        %v5197 = vpop.f32.mrb[0].mxu0
        %v5198 = vadd.f32 0.0, %v5197
        %v5199 = vpop.f32.mrb[0].mxu0
        %5200 = vmatprep.mubr.f32.mxu0 0.0
        %5201 = vmatmul.mubr.f32.gmra.mrb[0].mxu0 %v5051
        %v5202 = vpop.f32.mrb[0].mxu0
        %v5203 = vadd.f32 0.0, %v5202
        %v5204 = vpop.f32.mrb[0].mxu0
        %5205 = vmatprep.mubr.f32.mxu0 0.0
        %5206 = vmatmul.mubr.f32.gmra.mrb[0].mxu0 %v5052
        %v5207 = vpop.f32.mrb[0].mxu0
        %v5208 = vadd.f32 0.0, %v5207
        %v5209 = vpop.f32.mrb[0].mxu0
        %5210 = vmatprep.mubr.f32.mxu0 0.0
        %5211 = vmatmul.mubr.f32.gmra.mrb[0].mxu0 %v5053
        %v5212 = vpop.f32.mrb[0].mxu0
        %v5213 = vadd.f32 0.0, %v5212
        %v5214 = vpop.f32.mrb[0].mxu0
        %5215 = vmatprep.mubr.f32.mxu0 0.0
        %5216 = vmatmul.mubr.f32.gmra.mrb[0].mxu0 %v5054
        %v5217 = vpop.f32.mrb[0].mxu0
        %v5218 = vadd.f32 0.0, %v5217
        %v5219 = vpop.f32.mrb[0].mxu0
        %5220 = vmatprep.mubr.f32.mxu0 0.0
        %5221 = vmatmul.mubr.f32.gmra.mrb[0].mxu0 %v5055
        %v5222 = vpop.f32.mrb[0].mxu0
        %v5223 = vadd.f32 0.0, %v5222
        %v5224 = vpop.f32.mrb[0].mxu0
        %5225 = vmatprep.mubr.f32.mxu0 0.0
        %5226 = vmatmul.mubr.f32.gmra.mrb[0].mxu0 %v5056
        %v5227 = vpop.f32.mrb[0].mxu0
        %v5228 = vadd.f32 0.0, %v5227
        %v5229 = vpop.f32.mrb[0].mxu0
        %5230 = vmatprep.mubr.f32.mxu0 0.0
        %5231 = vmatmul.mubr.f32.gmra.mrb[0].mxu0 %v5057
        %v5232 = vpop.f32.mrb[0].mxu0
        %v5233 = vadd.f32 0.0, %v5232
        %v5234 = vpop.f32.mrb[0].mxu0
        %5235 = vmatprep.mubr.f32.mxu0 0.0
        %5236 = vmatmul.mubr.f32.gmra.mrb[0].mxu0 %v5058
        %v5237 = vpop.f32.mrb[0].mxu0
        %v5238 = vadd.f32 0.0, %v5237
        %v5239 = vpop.f32.mrb[0].mxu0
        %5240 = vmatprep.mubr.f32.mxu0 0.0
        %5241 = vmatmul.mubr.f32.gmra.mrb[0].mxu0 %v5059
        %v5242 = vpop.f32.mrb[0].mxu0
        %v5243 = vadd.f32 0.0, %v5242
        %v5244 = vpop.f32.mrb[0].mxu0
        %5245 = vmatprep.mubr.f32.mxu0 0.0
        %5246 = vmatmul.mubr.f32.gmra.mrb[0].mxu0 %v5060
        %v5247 = vpop.f32.mrb[0].mxu0
        %v5248 = vadd.f32 0.0, %v5247
        %v5249 = vpop.f32.mrb[0].mxu0
        %5250 = vmatprep.mubr.f32.mxu0 0.0
        %5251 = vmatmul.mubr.f32.gmra.mrb[0].mxu0 %v5061
        %v5252 = vpop.f32.mrb[0].mxu0
        %v5253 = vadd.f32 0.0, %v5252
        %v5254 = vpop.f32.mrb[0].mxu0
        %5255 = vmatprep.mubr.f32.mxu0 0.0
        %5256 = vmatmul.mubr.f32.gmra.mrb[0].mxu0 %v5062
        %v5257 = vpop.f32.mrb[0].mxu0
        %v5258 = vadd.f32 0.0, %v5257
        %v5259 = vpop.f32.mrb[0].mxu0
        %5260 = vmatprep.mubr.f32.mxu0 0.0
        %5261 = vmatmul.mubr.f32.gmra.mrb[0].mxu0 %v5063
        %v5262 = vpop.f32.mrb[0].mxu0
        %v5263 = vadd.f32 0.0, %v5262
        %v5264 = vpop.f32.mrb[0].mxu0
        %5265 = vmatprep.mubr.f32.mxu0 0.0
        %5266 = vmatmul.mubr.f32.gmra.mrb[0].mxu0 %v5064
        %v5267 = vpop.f32.mrb[0].mxu0
        %v5268 = vadd.f32 0.0, %v5267
        %v5269 = vpop.f32.mrb[0].mxu0
        %5270 = vmatprep.mubr.f32.mxu0 0.0
        %5271 = vmatmul.mubr.f32.gmra.mrb[0].mxu0 %v5065
        %v5272 = vpop.f32.mrb[0].mxu0
        %v5273 = vadd.f32 0.0, %v5272
        %v5274 = vpop.f32.mrb[0].mxu0
        %5275 = vmatprep.mubr.f32.mxu0 0.0
        %5276 = vmatmul.mubr.f32.gmra.mrb[0].mxu0 %v5066
        %v5277 = vpop.f32.mrb[0].mxu0
        %v5278 = vadd.f32 0.0, %v5277
        %v5279 = vpop.f32.mrb[0].mxu0
        %5280 = vmatprep.mubr.f32.mxu0 0.0
        %5281 = vmatmul.mubr.f32.gmra.mrb[0].mxu0 %v5067
        %v5282 = vpop.f32.mrb[0].mxu0
        %v5283 = vadd.f32 0.0, %v5282
        %v5284 = vpop.f32.mrb[0].mxu0
        %5285 = vmatprep.mubr.f32.mxu0 0.0
        %5286 = vmatmul.mubr.f32.gmra.mrb[0].mxu0 %v5068
        %v5287 = vpop.f32.mrb[0].mxu0
        %v5288 = vadd.f32 0.0, %v5287
        %v5289 = vpop.f32.mrb[0].mxu0
        %5290 = vmatprep.mubr.f32.mxu0 0.0
        %5291 = vmatmul.mubr.f32.gmra.mrb[0].mxu0 %v5069
        %v5292 = vpop.f32.mrb[0].mxu0
        %v5293 = vadd.f32 0.0, %v5292
        %v5294 = vpop.f32.mrb[0].mxu0
        %5295 = vmatprep.mubr.f32.mxu0 0.0
        %5296 = vmatmul.mubr.f32.gmra.mrb[0].mxu0 %v5070
        %v5297 = vpop.f32.mrb[0].mxu0
        %v5298 = vadd.f32 0.0, %v5297
        %v5299 = vpop.f32.mrb[0].mxu0
        %5300 = vdwg.mxu0
        %v5301 = vadd.f32 %v5007, %v5143
        %v5302 = vadd.f32 %v5008, %v5148
        %v5303 = vadd.f32 %v5009, %v5153
        %v5304 = vadd.f32 %v5010, %v5158
        %v5305 = vadd.f32 %v5011, %v5163
        %v5306 = vadd.f32 %v5012, %v5168
        %v5307 = vadd.f32 %v5013, %v5173
        %v5308 = vadd.f32 %v5014, %v5178
        %v5309 = vadd.f32 %v5015, %v5183
        %v5310 = vadd.f32 %v5016, %v5188
        %v5311 = vadd.f32 %v5017, %v5193
        %v5312 = vadd.f32 %v5018, %v5198
        %v5313 = vadd.f32 %v5019, %v5203
        %v5314 = vadd.f32 %v5020, %v5208
        %v5315 = vadd.f32 %v5021, %v5213
        %v5316 = vadd.f32 %v5022, %v5218
        %v5317 = vadd.f32 %v5023, %v5223
        %v5318 = vadd.f32 %v5024, %v5228
        %v5319 = vadd.f32 %v5025, %v5233
        %v5320 = vadd.f32 %v5026, %v5238
        %v5321 = vadd.f32 %v5027, %v5243
        %v5322 = vadd.f32 %v5028, %v5248
        %v5323 = vadd.f32 %v5029, %v5253
        %v5324 = vadd.f32 %v5030, %v5258
        %v5325 = vadd.f32 %v5031, %v5263
        %v5326 = vadd.f32 %v5032, %v5268
        %v5327 = vadd.f32 %v5033, %v5273
        %v5328 = vadd.f32 %v5034, %v5278
        %v5329 = vadd.f32 %v5035, %v5283
        %v5330 = vadd.f32 %v5036, %v5288
        %v5331 = vadd.f32 %v5037, %v5293
        %v5332 = vadd.f32 %v5038, %v5298
        %v5333 = vld [vmem:[#allocation2] sm:$0xff]
        %v5334 = vld [vmem:[#allocation2 + $0x8] sm:$0xff]
        %v5335 = vld [vmem:[#allocation2 + $0x10] sm:$0xff]
        %v5336 = vld [vmem:[#allocation2 + $0x18] sm:$0xff]
        %v5337 = vld [vmem:[#allocation2 + $0x20] sm:$0xff]
        %v5338 = vld [vmem:[#allocation2 + $0x28] sm:$0xff]
        %v5339 = vld [vmem:[#allocation2 + $0x30] sm:$0xff]
        %v5340 = vld [vmem:[#allocation2 + $0x38] sm:$0xff]
        %v5341 = vld [vmem:[#allocation2 + $0x40] sm:$0xff]
        %v5342 = vld [vmem:[#allocation2 + $0x48] sm:$0xff]
        %v5343 = vld [vmem:[#allocation2 + $0x50] sm:$0xff]
        %v5344 = vld [vmem:[#allocation2 + $0x58] sm:$0xff]
        %v5345 = vld [vmem:[#allocation2 + $0x60] sm:$0xff]
        %v5346 = vld [vmem:[#allocation2 + $0x68] sm:$0xff]
        %v5347 = vld [vmem:[#allocation2 + $0x70] sm:$0xff]
        %v5348 = vld [vmem:[#allocation2 + $0x78] sm:$0xff]
        %v5349 = vld [vmem:[#allocation2 + $0x80] sm:$0xff]
        %v5350 = vld [vmem:[#allocation2 + $0x88] sm:$0xff]
        %v5351 = vld [vmem:[#allocation2 + $0x90] sm:$0xff]
        %v5352 = vld [vmem:[#allocation2 + $0x98] sm:$0xff]
        %v5353 = vld [vmem:[#allocation2 + $0xa0] sm:$0xff]
        %v5354 = vld [vmem:[#allocation2 + $0xa8] sm:$0xff]
        %v5355 = vld [vmem:[#allocation2 + $0xb0] sm:$0xff]
        %v5356 = vld [vmem:[#allocation2 + $0xb8] sm:$0xff]
        %v5357 = vld [vmem:[#allocation2 + $0xc0] sm:$0xff]
        %v5358 = vld [vmem:[#allocation2 + $0xc8] sm:$0xff]
        %v5359 = vld [vmem:[#allocation2 + $0xd0] sm:$0xff]
        %v5360 = vld [vmem:[#allocation2 + $0xd8] sm:$0xff]
        %v5361 = vld [vmem:[#allocation2 + $0xe0] sm:$0xff]
        %v5362 = vld [vmem:[#allocation2 + $0xe8] sm:$0xff]
        %v5363 = vld [vmem:[#allocation2 + $0xf0] sm:$0xff]
        %v5364 = vld [vmem:[#allocation2 + $0xf8] sm:$0xff]
        %5397 = vrot.lane.b32.xlu0 %v5301, 64
        %v5398 = vpop.permute.xlu0 %5397
        %5399 = vrot.lane.b32.xlu0 %v5302, 64
        %v5400 = vpop.permute.xlu0 %5399
        %5401 = vrot.lane.b32.xlu0 %v5303, 64
        %v5402 = vpop.permute.xlu0 %5401
        %5403 = vrot.lane.b32.xlu0 %v5304, 64
        %v5404 = vpop.permute.xlu0 %5403
        %5405 = vrot.lane.b32.xlu0 %v5305, 64
        %v5406 = vpop.permute.xlu0 %5405
        %5407 = vrot.lane.b32.xlu0 %v5306, 64
        %v5408 = vpop.permute.xlu0 %5407
        %5409 = vrot.lane.b32.xlu0 %v5307, 64
        %v5410 = vpop.permute.xlu0 %5409
        %5411 = vrot.lane.b32.xlu0 %v5308, 64
        %v5412 = vpop.permute.xlu0 %5411
        %5413 = vrot.lane.b32.xlu0 %v5309, 64
        %v5414 = vpop.permute.xlu0 %5413
        %5415 = vrot.lane.b32.xlu0 %v5310, 64
        %v5416 = vpop.permute.xlu0 %5415
        %5417 = vrot.lane.b32.xlu0 %v5311, 64
        %v5418 = vpop.permute.xlu0 %5417
        %5419 = vrot.lane.b32.xlu0 %v5312, 64
        %v5420 = vpop.permute.xlu0 %5419
        %5421 = vrot.lane.b32.xlu0 %v5313, 64
        %v5422 = vpop.permute.xlu0 %5421
        %5423 = vrot.lane.b32.xlu0 %v5314, 64
        %v5424 = vpop.permute.xlu0 %5423
        %5425 = vrot.lane.b32.xlu0 %v5315, 64
        %v5426 = vpop.permute.xlu0 %5425
        %5427 = vrot.lane.b32.xlu0 %v5316, 64
        %v5428 = vpop.permute.xlu0 %5427
        %5429 = vrot.lane.b32.xlu0 %v5317, 64
        %v5430 = vpop.permute.xlu0 %5429
        %5431 = vrot.lane.b32.xlu0 %v5318, 64
        %v5432 = vpop.permute.xlu0 %5431
        %5433 = vrot.lane.b32.xlu0 %v5319, 64
        %v5434 = vpop.permute.xlu0 %5433
        %5435 = vrot.lane.b32.xlu0 %v5320, 64
        %v5436 = vpop.permute.xlu0 %5435
        %5437 = vrot.lane.b32.xlu0 %v5321, 64
        %v5438 = vpop.permute.xlu0 %5437
        %5439 = vrot.lane.b32.xlu0 %v5322, 64
        %v5440 = vpop.permute.xlu0 %5439
        %5441 = vrot.lane.b32.xlu0 %v5323, 64
        %v5442 = vpop.permute.xlu0 %5441
        %5443 = vrot.lane.b32.xlu0 %v5324, 64
        %v5444 = vpop.permute.xlu0 %5443
        %5445 = vrot.lane.b32.xlu0 %v5325, 64
        %v5446 = vpop.permute.xlu0 %5445
        %5447 = vrot.lane.b32.xlu0 %v5326, 64
        %v5448 = vpop.permute.xlu0 %5447
        %5449 = vrot.lane.b32.xlu0 %v5327, 64
        %v5450 = vpop.permute.xlu0 %5449
        %5451 = vrot.lane.b32.xlu0 %v5328, 64
        %v5452 = vpop.permute.xlu0 %5451
        %5453 = vrot.lane.b32.xlu0 %v5329, 64
        %v5454 = vpop.permute.xlu0 %5453
        %5455 = vrot.lane.b32.xlu0 %v5330, 64
        %v5456 = vpop.permute.xlu0 %5455
        %5457 = vrot.lane.b32.xlu0 %v5331, 64
        %v5458 = vpop.permute.xlu0 %5457
        %5459 = vrot.lane.b32.xlu0 %v5332, 64
        %v5460 = vpop.permute.xlu0 %5459
        %v5493 = vadd.f32 %v5333, %v5398
        %v5494 = vadd.f32 %v5334, %v5400
        %v5495 = vadd.f32 %v5335, %v5402
        %v5496 = vadd.f32 %v5336, %v5404
        %v5497 = vadd.f32 %v5337, %v5406
        %v5498 = vadd.f32 %v5338, %v5408
        %v5499 = vadd.f32 %v5339, %v5410
        %v5500 = vadd.f32 %v5340, %v5412
        %v5501 = vadd.f32 %v5341, %v5414
        %v5502 = vadd.f32 %v5342, %v5416
        %v5503 = vadd.f32 %v5343, %v5418
        %v5504 = vadd.f32 %v5344, %v5420
        %v5505 = vadd.f32 %v5345, %v5422
        %v5506 = vadd.f32 %v5346, %v5424
        %v5507 = vadd.f32 %v5347, %v5426
        %v5508 = vadd.f32 %v5348, %v5428
        %v5509 = vadd.f32 %v5349, %v5430
        %v5510 = vadd.f32 %v5350, %v5432
        %v5511 = vadd.f32 %v5351, %v5434
        %v5512 = vadd.f32 %v5352, %v5436
        %v5513 = vadd.f32 %v5353, %v5438
        %v5514 = vadd.f32 %v5354, %v5440
        %v5515 = vadd.f32 %v5355, %v5442
        %v5516 = vadd.f32 %v5356, %v5444
        %v5517 = vadd.f32 %v5357, %v5446
        %v5518 = vadd.f32 %v5358, %v5448
        %v5519 = vadd.f32 %v5359, %v5450
        %v5520 = vadd.f32 %v5360, %v5452
        %v5521 = vadd.f32 %v5361, %v5454
        %v5522 = vadd.f32 %v5362, %v5456
        %v5523 = vadd.f32 %v5363, %v5458
        %v5524 = vadd.f32 %v5364, %v5460
        %vm5525 = vcmask 785920
        %5526 = vst.msk [vmem:[#allocation2] sm:$0xff] %vm5525, %v5493
        %5527 = vst.msk [vmem:[#allocation2 + $0x8] sm:$0xff] %vm5525, %v5494
        %5528 = vst.msk [vmem:[#allocation2 + $0x10] sm:$0xff] %vm5525, %v5495
        %5529 = vst.msk [vmem:[#allocation2 + $0x18] sm:$0xff] %vm5525, %v5496
        %5530 = vst.msk [vmem:[#allocation2 + $0x20] sm:$0xff] %vm5525, %v5497
        %5531 = vst.msk [vmem:[#allocation2 + $0x28] sm:$0xff] %vm5525, %v5498
        %5532 = vst.msk [vmem:[#allocation2 + $0x30] sm:$0xff] %vm5525, %v5499
        %5533 = vst.msk [vmem:[#allocation2 + $0x38] sm:$0xff] %vm5525, %v5500
        %5534 = vst.msk [vmem:[#allocation2 + $0x40] sm:$0xff] %vm5525, %v5501
        %5535 = vst.msk [vmem:[#allocation2 + $0x48] sm:$0xff] %vm5525, %v5502
        %5536 = vst.msk [vmem:[#allocation2 + $0x50] sm:$0xff] %vm5525, %v5503
        %5537 = vst.msk [vmem:[#allocation2 + $0x58] sm:$0xff] %vm5525, %v5504
        %5538 = vst.msk [vmem:[#allocation2 + $0x60] sm:$0xff] %vm5525, %v5505
        %5539 = vst.msk [vmem:[#allocation2 + $0x68] sm:$0xff] %vm5525, %v5506
        %5540 = vst.msk [vmem:[#allocation2 + $0x70] sm:$0xff] %vm5525, %v5507
        %5541 = vst.msk [vmem:[#allocation2 + $0x78] sm:$0xff] %vm5525, %v5508
        %5542 = vst.msk [vmem:[#allocation2 + $0x80] sm:$0xff] %vm5525, %v5509
        %5543 = vst.msk [vmem:[#allocation2 + $0x88] sm:$0xff] %vm5525, %v5510
        %5544 = vst.msk [vmem:[#allocation2 + $0x90] sm:$0xff] %vm5525, %v5511
        %5545 = vst.msk [vmem:[#allocation2 + $0x98] sm:$0xff] %vm5525, %v5512
        %5546 = vst.msk [vmem:[#allocation2 + $0xa0] sm:$0xff] %vm5525, %v5513
        %5547 = vst.msk [vmem:[#allocation2 + $0xa8] sm:$0xff] %vm5525, %v5514
        %5548 = vst.msk [vmem:[#allocation2 + $0xb0] sm:$0xff] %vm5525, %v5515
        %5549 = vst.msk [vmem:[#allocation2 + $0xb8] sm:$0xff] %vm5525, %v5516
        %5550 = vst.msk [vmem:[#allocation2 + $0xc0] sm:$0xff] %vm5525, %v5517
        %5551 = vst.msk [vmem:[#allocation2 + $0xc8] sm:$0xff] %vm5525, %v5518
        %5552 = vst.msk [vmem:[#allocation2 + $0xd0] sm:$0xff] %vm5525, %v5519
        %5553 = vst.msk [vmem:[#allocation2 + $0xd8] sm:$0xff] %vm5525, %v5520
        %5554 = vst.msk [vmem:[#allocation2 + $0xe0] sm:$0xff] %vm5525, %v5521
        %5555 = vst.msk [vmem:[#allocation2 + $0xe8] sm:$0xff] %vm5525, %v5522
        %5556 = vst.msk [vmem:[#allocation2 + $0xf0] sm:$0xff] %vm5525, %v5523
        %5557 = vst.msk [vmem:[#allocation2 + $0xf8] sm:$0xff] %vm5525, %v5524
        %v5558 = vld [vmem:[%s222] sm:$0xff]
        %v5559 = vld [vmem:[%s222 + $0x8] sm:$0xff]
        %v5560 = vld [vmem:[%s222 + $0x18] sm:$0xff]
        %v5561 = vld [vmem:[%s222 + $0x20] sm:$0xff]
        %v5562 = vld [vmem:[%s222 + $0x30] sm:$0xff]
        %v5563 = vld [vmem:[%s222 + $0x38] sm:$0xff]
        %v5564 = vld [vmem:[%s222 + $0x48] sm:$0xff]
        %v5565 = vld [vmem:[%s222 + $0x50] sm:$0xff]
        %v5566 = vld [vmem:[%s222 + $0x60] sm:$0xff]
        %v5567 = vld [vmem:[%s222 + $0x68] sm:$0xff]
        %v5568 = vld [vmem:[%s222 + $0x78] sm:$0xff]
        %v5569 = vld [vmem:[%s222 + $0x80] sm:$0xff]
        %v5570 = vld [vmem:[%s222 + $0x90] sm:$0xff]
        %v5571 = vld [vmem:[%s222 + $0x98] sm:$0xff]
        %v5572 = vld [vmem:[%s222 + $0xa8] sm:$0xff]
        %v5573 = vld [vmem:[%s222 + $0xb0] sm:$0xff]
        %v5574 = vld [vmem:[%s222 + $0xc0] sm:$0xff]
        %v5575 = vld [vmem:[%s222 + $0xc8] sm:$0xff]
        %v5576 = vld [vmem:[%s222 + $0xd8] sm:$0xff]
        %v5577 = vld [vmem:[%s222 + $0xe0] sm:$0xff]
        %v5578 = vld [vmem:[%s222 + $0xf0] sm:$0xff]
        %v5579 = vld [vmem:[%s222 + $0xf8] sm:$0xff]
        %v5580 = vld [vmem:[%s222 + $0x108] sm:$0xff]
        %v5581 = vld [vmem:[%s222 + $0x110] sm:$0xff]
        %v5582 = vld [vmem:[%s222 + $0x120] sm:$0xff]
        %v5583 = vld [vmem:[%s222 + $0x128] sm:$0xff]
        %v5584 = vld [vmem:[%s222 + $0x138] sm:$0xff]
        %v5585 = vld [vmem:[%s222 + $0x140] sm:$0xff]
        %v5586 = vld [vmem:[%s222 + $0x150] sm:$0xff]
        %v5587 = vld [vmem:[%s222 + $0x158] sm:$0xff]
        %v5588 = vld [vmem:[%s222 + $0x168] sm:$0xff]
        %v5589 = vld [vmem:[%s222 + $0x170] sm:$0xff]
        %s5590 = scalar_lea.vmem %s2, 512
        %v5591 = vld [vmem:[%s5590] sm:$0xff]
        %v5592 = vld [vmem:[%s5590 + $0x8] sm:$0xff]
        %v5593 = vld [vmem:[%s5590 + $0x10] sm:$0xff]
        %v5594 = vld [vmem:[%s5590 + $0x18] sm:$0xff]
        %v5595 = vld [vmem:[%s222 + $0x3] sm:$0xff]
        %v5596 = vld [vmem:[%s222 + $0xb] sm:$0xff]
        %v5597 = vld [vmem:[%s222 + $0x1b] sm:$0xff]
        %v5598 = vld [vmem:[%s222 + $0x23] sm:$0xff]
        %v5599 = vld [vmem:[%s222 + $0x33] sm:$0xff]
        %v5600 = vld [vmem:[%s222 + $0x3b] sm:$0xff]
        %v5601 = vld [vmem:[%s222 + $0x4b] sm:$0xff]
        %v5602 = vld [vmem:[%s222 + $0x53] sm:$0xff]
        %v5603 = vld [vmem:[%s222 + $0x63] sm:$0xff]
        %v5604 = vld [vmem:[%s222 + $0x6b] sm:$0xff]
        %v5605 = vld [vmem:[%s222 + $0x7b] sm:$0xff]
        %v5606 = vld [vmem:[%s222 + $0x83] sm:$0xff]
        %v5607 = vld [vmem:[%s222 + $0x93] sm:$0xff]
        %v5608 = vld [vmem:[%s222 + $0x9b] sm:$0xff]
        %v5609 = vld [vmem:[%s222 + $0xab] sm:$0xff]
        %v5610 = vld [vmem:[%s222 + $0xb3] sm:$0xff]
        %v5611 = vld [vmem:[%s222 + $0xc3] sm:$0xff]
        %v5612 = vld [vmem:[%s222 + $0xcb] sm:$0xff]
        %v5613 = vld [vmem:[%s222 + $0xdb] sm:$0xff]
        %v5614 = vld [vmem:[%s222 + $0xe3] sm:$0xff]
        %v5615 = vld [vmem:[%s222 + $0xf3] sm:$0xff]
        %v5616 = vld [vmem:[%s222 + $0xfb] sm:$0xff]
        %v5617 = vld [vmem:[%s222 + $0x10b] sm:$0xff]
        %v5618 = vld [vmem:[%s222 + $0x113] sm:$0xff]
        %v5619 = vld [vmem:[%s222 + $0x123] sm:$0xff]
        %v5620 = vld [vmem:[%s222 + $0x12b] sm:$0xff]
        %v5621 = vld [vmem:[%s222 + $0x13b] sm:$0xff]
        %v5622 = vld [vmem:[%s222 + $0x143] sm:$0xff]
        %v5623 = vld [vmem:[%s222 + $0x153] sm:$0xff]
        %v5624 = vld [vmem:[%s222 + $0x15b] sm:$0xff]
        %v5625 = vld [vmem:[%s222 + $0x16b] sm:$0xff]
        %v5626 = vld [vmem:[%s222 + $0x173] sm:$0xff]
        %s5627 = scalar_lea.vmem %s2, 544
        %v5628 = vld [vmem:[%s5627] sm:$0xff]
        %v5629 = vld [vmem:[%s5627 + $0x8] sm:$0xff]
        %v5630 = vld [vmem:[%s5627 + $0x10] sm:$0xff]
        %v5631 = vld [vmem:[%s5627 + $0x18] sm:$0xff]
        %5632 = vmatprep.subr.mxu0 0.0
        %5633 = vmatpush1.xpose.msra.mxu0 %v5628
        %5634 = vmatprep.subr.mxu0 0.0
        %5635 = vmatpush1.xpose.msra.mxu0 %v5629
        %5636 = vmatprep.subr.mxu0 0.0
        %5637 = vmatpush1.xpose.msra.mxu0 %v5630
        %5638 = vmatprep.subr.mxu0 0.0
        %5639 = vmatpush1.xpose.msra.mxu0 %v5631
        %5640 = vmatprep.subr.mxu0 0.0
        %5641 = vmatpush1.xpose.msra.mxu0 0.0
        %5642 = vmatprep.subr.mxu0 0.0
        %5643 = vmatpush1.xpose.msra.mxu0 0.0
        %5644 = vmatprep.subr.mxu0 0.0
        %5645 = vmatpush1.xpose.msra.mxu0 0.0
        %5646 = vmatprep.subr.mxu0 0.0
        %5647 = vmatpush1.xpose.msra.mxu0 0.0
        %5648 = vmatprep.subr.mxu0 0.0
        %5649 = vmatpush1.xpose.msra.mxu0 0.0
        %5650 = vmatprep.subr.mxu0 0.0
        %5651 = vmatpush1.xpose.msra.mxu0 0.0
        %5652 = vmatprep.subr.mxu0 0.0
        %5653 = vmatpush1.xpose.msra.mxu0 0.0
        %5654 = vmatprep.subr.mxu0 0.0
        %5655 = vmatpush1.xpose.msra.mxu0 0.0
        %5656 = vmatprep.subr.mxu0 0.0
        %5657 = vmatpush1.xpose.msra.mxu0 0.0
        %5658 = vmatprep.subr.mxu0 0.0
        %5659 = vmatpush1.xpose.msra.mxu0 0.0
        %5660 = vmatprep.subr.mxu0 0.0
        %5661 = vmatpush1.xpose.msra.mxu0 0.0
        %5662 = vmatprep.subr.mxu0 0.0
        %5663 = vmatpush1.xpose.msra.mxu0 0.0
        %5664 = vmatprep.subr.mxu0 0.0
        %5665 = vmatpush1.xpose.msra.mxu0 0.0
        %5666 = vmatprep.subr.mxu0 0.0
        %5667 = vmatpush1.xpose.msra.mxu0 0.0
        %5668 = vmatprep.subr.mxu0 0.0
        %5669 = vmatpush1.xpose.msra.mxu0 0.0
        %5670 = vmatprep.subr.mxu0 0.0
        %5671 = vmatpush1.xpose.msra.mxu0 0.0
        %5672 = vmatprep.subr.mxu0 0.0
        %5673 = vmatpush1.xpose.msra.mxu0 0.0
        %5674 = vmatprep.subr.mxu0 0.0
        %5675 = vmatpush1.xpose.msra.mxu0 0.0
        %5676 = vmatprep.subr.mxu0 0.0
        %5677 = vmatpush1.xpose.msra.mxu0 0.0
        %5678 = vmatprep.subr.mxu0 0.0
        %5679 = vmatpush1.xpose.msra.mxu0 0.0
        %5680 = vmatprep.subr.mxu0 0.0
        %5681 = vmatpush1.xpose.msra.mxu0 0.0
        %5682 = vmatprep.subr.mxu0 0.0
        %5683 = vmatpush1.xpose.msra.mxu0 0.0
        %5684 = vmatprep.subr.mxu0 0.0
        %5685 = vmatpush1.xpose.msra.mxu0 0.0
        %5686 = vmatprep.subr.mxu0 0.0
        %5687 = vmatpush1.xpose.msra.mxu0 0.0
        %5688 = vmatprep.subr.mxu0 0.0
        %5689 = vmatpush1.xpose.msra.mxu0 0.0
        %5690 = vmatprep.subr.mxu0 0.0
        %5691 = vmatpush1.xpose.msra.mxu0 0.0
        %5692 = vmatprep.subr.mxu0 0.0
        %5693 = vmatpush1.xpose.msra.mxu0 0.0
        %5694 = vmatprep.subr.mxu0 0.0
        %5695 = vmatpush1.xpose.msra.mxu0 0.0
        %5696 = vmatprep.mubr.f32.mxu0 0.0
        %5697 = vmatmul.mubr.f32.gmra.mrb[0].mxu0 %v5595
        %v5698 = vpop.f32.mrb[0].mxu0
        %v5699 = vadd.f32 0.0, %v5698
        %v5700 = vpop.f32.mrb[0].mxu0
        %5701 = vmatprep.mubr.f32.mxu0 0.0
        %5702 = vmatmul.mubr.f32.gmra.mrb[0].mxu0 %v5596
        %v5703 = vpop.f32.mrb[0].mxu0
        %v5704 = vadd.f32 0.0, %v5703
        %v5705 = vpop.f32.mrb[0].mxu0
        %5706 = vmatprep.mubr.f32.mxu0 0.0
        %5707 = vmatmul.mubr.f32.gmra.mrb[0].mxu0 %v5597
        %v5708 = vpop.f32.mrb[0].mxu0
        %v5709 = vadd.f32 0.0, %v5708
        %v5710 = vpop.f32.mrb[0].mxu0
        %5711 = vmatprep.mubr.f32.mxu0 0.0
        %5712 = vmatmul.mubr.f32.gmra.mrb[0].mxu0 %v5598
        %v5713 = vpop.f32.mrb[0].mxu0
        %v5714 = vadd.f32 0.0, %v5713
        %v5715 = vpop.f32.mrb[0].mxu0
        %5716 = vmatprep.mubr.f32.mxu0 0.0
        %5717 = vmatmul.mubr.f32.gmra.mrb[0].mxu0 %v5599
        %v5718 = vpop.f32.mrb[0].mxu0
        %v5719 = vadd.f32 0.0, %v5718
        %v5720 = vpop.f32.mrb[0].mxu0
        %5721 = vmatprep.mubr.f32.mxu0 0.0
        %5722 = vmatmul.mubr.f32.gmra.mrb[0].mxu0 %v5600
        %v5723 = vpop.f32.mrb[0].mxu0
        %v5724 = vadd.f32 0.0, %v5723
        %v5725 = vpop.f32.mrb[0].mxu0
        %5726 = vmatprep.mubr.f32.mxu0 0.0
        %5727 = vmatmul.mubr.f32.gmra.mrb[0].mxu0 %v5601
        %v5728 = vpop.f32.mrb[0].mxu0
        %v5729 = vadd.f32 0.0, %v5728
        %v5730 = vpop.f32.mrb[0].mxu0
        %5731 = vmatprep.mubr.f32.mxu0 0.0
        %5732 = vmatmul.mubr.f32.gmra.mrb[0].mxu0 %v5602
        %v5733 = vpop.f32.mrb[0].mxu0
        %v5734 = vadd.f32 0.0, %v5733
        %v5735 = vpop.f32.mrb[0].mxu0
        %5736 = vmatprep.mubr.f32.mxu0 0.0
        %5737 = vmatmul.mubr.f32.gmra.mrb[0].mxu0 %v5603
        %v5738 = vpop.f32.mrb[0].mxu0
        %v5739 = vadd.f32 0.0, %v5738
        %v5740 = vpop.f32.mrb[0].mxu0
        %5741 = vmatprep.mubr.f32.mxu0 0.0
        %5742 = vmatmul.mubr.f32.gmra.mrb[0].mxu0 %v5604
        %v5743 = vpop.f32.mrb[0].mxu0
        %v5744 = vadd.f32 0.0, %v5743
        %v5745 = vpop.f32.mrb[0].mxu0
        %5746 = vmatprep.mubr.f32.mxu0 0.0
        %5747 = vmatmul.mubr.f32.gmra.mrb[0].mxu0 %v5605
        %v5748 = vpop.f32.mrb[0].mxu0
        %v5749 = vadd.f32 0.0, %v5748
        %v5750 = vpop.f32.mrb[0].mxu0
        %5751 = vmatprep.mubr.f32.mxu0 0.0
        %5752 = vmatmul.mubr.f32.gmra.mrb[0].mxu0 %v5606
        %v5753 = vpop.f32.mrb[0].mxu0
        %v5754 = vadd.f32 0.0, %v5753
        %v5755 = vpop.f32.mrb[0].mxu0
        %5756 = vmatprep.mubr.f32.mxu0 0.0
        %5757 = vmatmul.mubr.f32.gmra.mrb[0].mxu0 %v5607
        %v5758 = vpop.f32.mrb[0].mxu0
        %v5759 = vadd.f32 0.0, %v5758
        %v5760 = vpop.f32.mrb[0].mxu0
        %5761 = vmatprep.mubr.f32.mxu0 0.0
        %5762 = vmatmul.mubr.f32.gmra.mrb[0].mxu0 %v5608
        %v5763 = vpop.f32.mrb[0].mxu0
        %v5764 = vadd.f32 0.0, %v5763
        %v5765 = vpop.f32.mrb[0].mxu0
        %5766 = vmatprep.mubr.f32.mxu0 0.0
        %5767 = vmatmul.mubr.f32.gmra.mrb[0].mxu0 %v5609
        %v5768 = vpop.f32.mrb[0].mxu0
        %v5769 = vadd.f32 0.0, %v5768
        %v5770 = vpop.f32.mrb[0].mxu0
        %5771 = vmatprep.mubr.f32.mxu0 0.0
        %5772 = vmatmul.mubr.f32.gmra.mrb[0].mxu0 %v5610
        %v5773 = vpop.f32.mrb[0].mxu0
        %v5774 = vadd.f32 0.0, %v5773
        %v5775 = vpop.f32.mrb[0].mxu0
        %5776 = vmatprep.mubr.f32.mxu0 0.0
        %5777 = vmatmul.mubr.f32.gmra.mrb[0].mxu0 %v5611
        %v5778 = vpop.f32.mrb[0].mxu0
        %v5779 = vadd.f32 0.0, %v5778
        %v5780 = vpop.f32.mrb[0].mxu0
        %5781 = vmatprep.mubr.f32.mxu0 0.0
        %5782 = vmatmul.mubr.f32.gmra.mrb[0].mxu0 %v5612
        %v5783 = vpop.f32.mrb[0].mxu0
        %v5784 = vadd.f32 0.0, %v5783
        %v5785 = vpop.f32.mrb[0].mxu0
        %5786 = vmatprep.mubr.f32.mxu0 0.0
        %5787 = vmatmul.mubr.f32.gmra.mrb[0].mxu0 %v5613
        %v5788 = vpop.f32.mrb[0].mxu0
        %v5789 = vadd.f32 0.0, %v5788
        %v5790 = vpop.f32.mrb[0].mxu0
        %5791 = vmatprep.mubr.f32.mxu0 0.0
        %5792 = vmatmul.mubr.f32.gmra.mrb[0].mxu0 %v5614
        %v5793 = vpop.f32.mrb[0].mxu0
        %v5794 = vadd.f32 0.0, %v5793
        %v5795 = vpop.f32.mrb[0].mxu0
        %5796 = vmatprep.mubr.f32.mxu0 0.0
        %5797 = vmatmul.mubr.f32.gmra.mrb[0].mxu0 %v5615
        %v5798 = vpop.f32.mrb[0].mxu0
        %v5799 = vadd.f32 0.0, %v5798
        %v5800 = vpop.f32.mrb[0].mxu0
        %5801 = vmatprep.mubr.f32.mxu0 0.0
        %5802 = vmatmul.mubr.f32.gmra.mrb[0].mxu0 %v5616
        %v5803 = vpop.f32.mrb[0].mxu0
        %v5804 = vadd.f32 0.0, %v5803
        %v5805 = vpop.f32.mrb[0].mxu0
        %5806 = vmatprep.mubr.f32.mxu0 0.0
        %5807 = vmatmul.mubr.f32.gmra.mrb[0].mxu0 %v5617
        %v5808 = vpop.f32.mrb[0].mxu0
        %v5809 = vadd.f32 0.0, %v5808
        %v5810 = vpop.f32.mrb[0].mxu0
        %5811 = vmatprep.mubr.f32.mxu0 0.0
        %5812 = vmatmul.mubr.f32.gmra.mrb[0].mxu0 %v5618
        %v5813 = vpop.f32.mrb[0].mxu0
        %v5814 = vadd.f32 0.0, %v5813
        %v5815 = vpop.f32.mrb[0].mxu0
        %5816 = vmatprep.mubr.f32.mxu0 0.0
        %5817 = vmatmul.mubr.f32.gmra.mrb[0].mxu0 %v5619
        %v5818 = vpop.f32.mrb[0].mxu0
        %v5819 = vadd.f32 0.0, %v5818
        %v5820 = vpop.f32.mrb[0].mxu0
        %5821 = vmatprep.mubr.f32.mxu0 0.0
        %5822 = vmatmul.mubr.f32.gmra.mrb[0].mxu0 %v5620
        %v5823 = vpop.f32.mrb[0].mxu0
        %v5824 = vadd.f32 0.0, %v5823
        %v5825 = vpop.f32.mrb[0].mxu0
        %5826 = vmatprep.mubr.f32.mxu0 0.0
        %5827 = vmatmul.mubr.f32.gmra.mrb[0].mxu0 %v5621
        %v5828 = vpop.f32.mrb[0].mxu0
        %v5829 = vadd.f32 0.0, %v5828
        %v5830 = vpop.f32.mrb[0].mxu0
        %5831 = vmatprep.mubr.f32.mxu0 0.0
        %5832 = vmatmul.mubr.f32.gmra.mrb[0].mxu0 %v5622
        %v5833 = vpop.f32.mrb[0].mxu0
        %v5834 = vadd.f32 0.0, %v5833
        %v5835 = vpop.f32.mrb[0].mxu0
        %5836 = vmatprep.mubr.f32.mxu0 0.0
        %5837 = vmatmul.mubr.f32.gmra.mrb[0].mxu0 %v5623
        %v5838 = vpop.f32.mrb[0].mxu0
        %v5839 = vadd.f32 0.0, %v5838
        %v5840 = vpop.f32.mrb[0].mxu0
        %5841 = vmatprep.mubr.f32.mxu0 0.0
        %5842 = vmatmul.mubr.f32.gmra.mrb[0].mxu0 %v5624
        %v5843 = vpop.f32.mrb[0].mxu0
        %v5844 = vadd.f32 0.0, %v5843
        %v5845 = vpop.f32.mrb[0].mxu0
        %5846 = vmatprep.mubr.f32.mxu0 0.0
        %5847 = vmatmul.mubr.f32.gmra.mrb[0].mxu0 %v5625
        %v5848 = vpop.f32.mrb[0].mxu0
        %v5849 = vadd.f32 0.0, %v5848
        %v5850 = vpop.f32.mrb[0].mxu0
        %5851 = vmatprep.mubr.f32.mxu0 0.0
        %5852 = vmatmul.mubr.f32.gmra.mrb[0].mxu0 %v5626
        %v5853 = vpop.f32.mrb[0].mxu0
        %v5854 = vadd.f32 0.0, %v5853
        %v5855 = vpop.f32.mrb[0].mxu0
        %5856 = vdwg.mxu0
        %5857 = vmatprep.subr.mxu0 0.0
        %5858 = vmatpush1.xpose.msra.mxu0 %v5591
        %5859 = vmatprep.subr.mxu0 0.0
        %5860 = vmatpush1.xpose.msra.mxu0 %v5592
        %5861 = vmatprep.subr.mxu0 0.0
        %5862 = vmatpush1.xpose.msra.mxu0 %v5593
        %5863 = vmatprep.subr.mxu0 0.0
        %5864 = vmatpush1.xpose.msra.mxu0 %v5594
        %5865 = vmatprep.subr.mxu0 0.0
        %5866 = vmatpush1.xpose.msra.mxu0 0.0
        %5867 = vmatprep.subr.mxu0 0.0
        %5868 = vmatpush1.xpose.msra.mxu0 0.0
        %5869 = vmatprep.subr.mxu0 0.0
        %5870 = vmatpush1.xpose.msra.mxu0 0.0
        %5871 = vmatprep.subr.mxu0 0.0
        %5872 = vmatpush1.xpose.msra.mxu0 0.0
        %5873 = vmatprep.subr.mxu0 0.0
        %5874 = vmatpush1.xpose.msra.mxu0 0.0
        %5875 = vmatprep.subr.mxu0 0.0
        %5876 = vmatpush1.xpose.msra.mxu0 0.0
        %5877 = vmatprep.subr.mxu0 0.0
        %5878 = vmatpush1.xpose.msra.mxu0 0.0
        %5879 = vmatprep.subr.mxu0 0.0
        %5880 = vmatpush1.xpose.msra.mxu0 0.0
        %5881 = vmatprep.subr.mxu0 0.0
        %5882 = vmatpush1.xpose.msra.mxu0 0.0
        %5883 = vmatprep.subr.mxu0 0.0
        %5884 = vmatpush1.xpose.msra.mxu0 0.0
        %5885 = vmatprep.subr.mxu0 0.0
        %5886 = vmatpush1.xpose.msra.mxu0 0.0
        %5887 = vmatprep.subr.mxu0 0.0
        %5888 = vmatpush1.xpose.msra.mxu0 0.0
        %5889 = vmatprep.subr.mxu0 0.0
        %5890 = vmatpush1.xpose.msra.mxu0 0.0
        %5891 = vmatprep.subr.mxu0 0.0
        %5892 = vmatpush1.xpose.msra.mxu0 0.0
        %5893 = vmatprep.subr.mxu0 0.0
        %5894 = vmatpush1.xpose.msra.mxu0 0.0
        %5895 = vmatprep.subr.mxu0 0.0
        %5896 = vmatpush1.xpose.msra.mxu0 0.0
        %5897 = vmatprep.subr.mxu0 0.0
        %5898 = vmatpush1.xpose.msra.mxu0 0.0
        %5899 = vmatprep.subr.mxu0 0.0
        %5900 = vmatpush1.xpose.msra.mxu0 0.0
        %5901 = vmatprep.subr.mxu0 0.0
        %5902 = vmatpush1.xpose.msra.mxu0 0.0
        %5903 = vmatprep.subr.mxu0 0.0
        %5904 = vmatpush1.xpose.msra.mxu0 0.0
        %5905 = vmatprep.subr.mxu0 0.0
        %5906 = vmatpush1.xpose.msra.mxu0 0.0
        %5907 = vmatprep.subr.mxu0 0.0
        %5908 = vmatpush1.xpose.msra.mxu0 0.0
        %5909 = vmatprep.subr.mxu0 0.0
        %5910 = vmatpush1.xpose.msra.mxu0 0.0
        %5911 = vmatprep.subr.mxu0 0.0
        %5912 = vmatpush1.xpose.msra.mxu0 0.0
        %5913 = vmatprep.subr.mxu0 0.0
        %5914 = vmatpush1.xpose.msra.mxu0 0.0
        %5915 = vmatprep.subr.mxu0 0.0
        %5916 = vmatpush1.xpose.msra.mxu0 0.0
        %5917 = vmatprep.subr.mxu0 0.0
        %5918 = vmatpush1.xpose.msra.mxu0 0.0
        %5919 = vmatprep.subr.mxu0 0.0
        %5920 = vmatpush1.xpose.msra.mxu0 0.0
        %5921 = vmatprep.mubr.f32.mxu0 0.0
        %5922 = vmatmul.mubr.f32.gmra.mrb[0].mxu0 %v5558
        %v5923 = vpop.f32.mrb[0].mxu0
        %v5924 = vadd.f32 %v5699, %v5923
        %v5925 = vpop.f32.mrb[0].mxu0
        %5926 = vmatprep.mubr.f32.mxu0 0.0
        %5927 = vmatmul.mubr.f32.gmra.mrb[0].mxu0 %v5559
        %v5928 = vpop.f32.mrb[0].mxu0
        %v5929 = vadd.f32 %v5704, %v5928
        %v5930 = vpop.f32.mrb[0].mxu0
        %5931 = vmatprep.mubr.f32.mxu0 0.0
        %5932 = vmatmul.mubr.f32.gmra.mrb[0].mxu0 %v5560
        %v5933 = vpop.f32.mrb[0].mxu0
        %v5934 = vadd.f32 %v5709, %v5933
        %v5935 = vpop.f32.mrb[0].mxu0
        %5936 = vmatprep.mubr.f32.mxu0 0.0
        %5937 = vmatmul.mubr.f32.gmra.mrb[0].mxu0 %v5561
        %v5938 = vpop.f32.mrb[0].mxu0
        %v5939 = vadd.f32 %v5714, %v5938
        %v5940 = vpop.f32.mrb[0].mxu0
        %5941 = vmatprep.mubr.f32.mxu0 0.0
        %5942 = vmatmul.mubr.f32.gmra.mrb[0].mxu0 %v5562
        %v5943 = vpop.f32.mrb[0].mxu0
        %v5944 = vadd.f32 %v5719, %v5943
        %v5945 = vpop.f32.mrb[0].mxu0
        %5946 = vmatprep.mubr.f32.mxu0 0.0
        %5947 = vmatmul.mubr.f32.gmra.mrb[0].mxu0 %v5563
        %v5948 = vpop.f32.mrb[0].mxu0
        %v5949 = vadd.f32 %v5724, %v5948
        %v5950 = vpop.f32.mrb[0].mxu0
        %5951 = vmatprep.mubr.f32.mxu0 0.0
        %5952 = vmatmul.mubr.f32.gmra.mrb[0].mxu0 %v5564
        %v5953 = vpop.f32.mrb[0].mxu0
        %v5954 = vadd.f32 %v5729, %v5953
        %v5955 = vpop.f32.mrb[0].mxu0
        %5956 = vmatprep.mubr.f32.mxu0 0.0
        %5957 = vmatmul.mubr.f32.gmra.mrb[0].mxu0 %v5565
        %v5958 = vpop.f32.mrb[0].mxu0
        %v5959 = vadd.f32 %v5734, %v5958
        %v5960 = vpop.f32.mrb[0].mxu0
        %5961 = vmatprep.mubr.f32.mxu0 0.0
        %5962 = vmatmul.mubr.f32.gmra.mrb[0].mxu0 %v5566
        %v5963 = vpop.f32.mrb[0].mxu0
        %v5964 = vadd.f32 %v5739, %v5963
        %v5965 = vpop.f32.mrb[0].mxu0
        %5966 = vmatprep.mubr.f32.mxu0 0.0
        %5967 = vmatmul.mubr.f32.gmra.mrb[0].mxu0 %v5567
        %v5968 = vpop.f32.mrb[0].mxu0
        %v5969 = vadd.f32 %v5744, %v5968
        %v5970 = vpop.f32.mrb[0].mxu0
        %5971 = vmatprep.mubr.f32.mxu0 0.0
        %5972 = vmatmul.mubr.f32.gmra.mrb[0].mxu0 %v5568
        %v5973 = vpop.f32.mrb[0].mxu0
        %v5974 = vadd.f32 %v5749, %v5973
        %v5975 = vpop.f32.mrb[0].mxu0
        %5976 = vmatprep.mubr.f32.mxu0 0.0
        %5977 = vmatmul.mubr.f32.gmra.mrb[0].mxu0 %v5569
        %v5978 = vpop.f32.mrb[0].mxu0
        %v5979 = vadd.f32 %v5754, %v5978
        %v5980 = vpop.f32.mrb[0].mxu0
        %5981 = vmatprep.mubr.f32.mxu0 0.0
        %5982 = vmatmul.mubr.f32.gmra.mrb[0].mxu0 %v5570
        %v5983 = vpop.f32.mrb[0].mxu0
        %v5984 = vadd.f32 %v5759, %v5983
        %v5985 = vpop.f32.mrb[0].mxu0
        %5986 = vmatprep.mubr.f32.mxu0 0.0
        %5987 = vmatmul.mubr.f32.gmra.mrb[0].mxu0 %v5571
        %v5988 = vpop.f32.mrb[0].mxu0
        %v5989 = vadd.f32 %v5764, %v5988
        %v5990 = vpop.f32.mrb[0].mxu0
        %5991 = vmatprep.mubr.f32.mxu0 0.0
        %5992 = vmatmul.mubr.f32.gmra.mrb[0].mxu0 %v5572
        %v5993 = vpop.f32.mrb[0].mxu0
        %v5994 = vadd.f32 %v5769, %v5993
        %v5995 = vpop.f32.mrb[0].mxu0
        %5996 = vmatprep.mubr.f32.mxu0 0.0
        %5997 = vmatmul.mubr.f32.gmra.mrb[0].mxu0 %v5573
        %v5998 = vpop.f32.mrb[0].mxu0
        %v5999 = vadd.f32 %v5774, %v5998
        %v6000 = vpop.f32.mrb[0].mxu0
        %6001 = vmatprep.mubr.f32.mxu0 0.0
        %6002 = vmatmul.mubr.f32.gmra.mrb[0].mxu0 %v5574
        %v6003 = vpop.f32.mrb[0].mxu0
        %v6004 = vadd.f32 %v5779, %v6003
        %v6005 = vpop.f32.mrb[0].mxu0
        %6006 = vmatprep.mubr.f32.mxu0 0.0
        %6007 = vmatmul.mubr.f32.gmra.mrb[0].mxu0 %v5575
        %v6008 = vpop.f32.mrb[0].mxu0
        %v6009 = vadd.f32 %v5784, %v6008
        %v6010 = vpop.f32.mrb[0].mxu0
        %6011 = vmatprep.mubr.f32.mxu0 0.0
        %6012 = vmatmul.mubr.f32.gmra.mrb[0].mxu0 %v5576
        %v6013 = vpop.f32.mrb[0].mxu0
        %v6014 = vadd.f32 %v5789, %v6013
        %v6015 = vpop.f32.mrb[0].mxu0
        %6016 = vmatprep.mubr.f32.mxu0 0.0
        %6017 = vmatmul.mubr.f32.gmra.mrb[0].mxu0 %v5577
        %v6018 = vpop.f32.mrb[0].mxu0
        %v6019 = vadd.f32 %v5794, %v6018
        %v6020 = vpop.f32.mrb[0].mxu0
        %6021 = vmatprep.mubr.f32.mxu0 0.0
        %6022 = vmatmul.mubr.f32.gmra.mrb[0].mxu0 %v5578
        %v6023 = vpop.f32.mrb[0].mxu0
        %v6024 = vadd.f32 %v5799, %v6023
        %v6025 = vpop.f32.mrb[0].mxu0
        %6026 = vmatprep.mubr.f32.mxu0 0.0
        %6027 = vmatmul.mubr.f32.gmra.mrb[0].mxu0 %v5579
        %v6028 = vpop.f32.mrb[0].mxu0
        %v6029 = vadd.f32 %v5804, %v6028
        %v6030 = vpop.f32.mrb[0].mxu0
        %6031 = vmatprep.mubr.f32.mxu0 0.0
        %6032 = vmatmul.mubr.f32.gmra.mrb[0].mxu0 %v5580
        %v6033 = vpop.f32.mrb[0].mxu0
        %v6034 = vadd.f32 %v5809, %v6033
        %v6035 = vpop.f32.mrb[0].mxu0
        %6036 = vmatprep.mubr.f32.mxu0 0.0
        %6037 = vmatmul.mubr.f32.gmra.mrb[0].mxu0 %v5581
        %v6038 = vpop.f32.mrb[0].mxu0
        %v6039 = vadd.f32 %v5814, %v6038
        %v6040 = vpop.f32.mrb[0].mxu0
        %6041 = vmatprep.mubr.f32.mxu0 0.0
        %6042 = vmatmul.mubr.f32.gmra.mrb[0].mxu0 %v5582
        %v6043 = vpop.f32.mrb[0].mxu0
        %v6044 = vadd.f32 %v5819, %v6043
        %v6045 = vpop.f32.mrb[0].mxu0
        %6046 = vmatprep.mubr.f32.mxu0 0.0
        %6047 = vmatmul.mubr.f32.gmra.mrb[0].mxu0 %v5583
        %v6048 = vpop.f32.mrb[0].mxu0
        %v6049 = vadd.f32 %v5824, %v6048
        %v6050 = vpop.f32.mrb[0].mxu0
        %6051 = vmatprep.mubr.f32.mxu0 0.0
        %6052 = vmatmul.mubr.f32.gmra.mrb[0].mxu0 %v5584
        %v6053 = vpop.f32.mrb[0].mxu0
        %v6054 = vadd.f32 %v5829, %v6053
        %v6055 = vpop.f32.mrb[0].mxu0
        %6056 = vmatprep.mubr.f32.mxu0 0.0
        %6057 = vmatmul.mubr.f32.gmra.mrb[0].mxu0 %v5585
        %v6058 = vpop.f32.mrb[0].mxu0
        %v6059 = vadd.f32 %v5834, %v6058
        %v6060 = vpop.f32.mrb[0].mxu0
        %6061 = vmatprep.mubr.f32.mxu0 0.0
        %6062 = vmatmul.mubr.f32.gmra.mrb[0].mxu0 %v5586
        %v6063 = vpop.f32.mrb[0].mxu0
        %v6064 = vadd.f32 %v5839, %v6063
        %v6065 = vpop.f32.mrb[0].mxu0
        %6066 = vmatprep.mubr.f32.mxu0 0.0
        %6067 = vmatmul.mubr.f32.gmra.mrb[0].mxu0 %v5587
        %v6068 = vpop.f32.mrb[0].mxu0
        %v6069 = vadd.f32 %v5844, %v6068
        %v6070 = vpop.f32.mrb[0].mxu0
        %6071 = vmatprep.mubr.f32.mxu0 0.0
        %6072 = vmatmul.mubr.f32.gmra.mrb[0].mxu0 %v5588
        %v6073 = vpop.f32.mrb[0].mxu0
        %v6074 = vadd.f32 %v5849, %v6073
        %v6075 = vpop.f32.mrb[0].mxu0
        %6076 = vmatprep.mubr.f32.mxu0 0.0
        %6077 = vmatmul.mubr.f32.gmra.mrb[0].mxu0 %v5589
        %v6078 = vpop.f32.mrb[0].mxu0
        %v6079 = vadd.f32 %v5854, %v6078
        %v6080 = vpop.f32.mrb[0].mxu0
        %6081 = vdwg.mxu0
        %v6082 = vld [vmem:[%s222 + $0x6] sm:$0xff]
        %v6083 = vld [vmem:[%s222 + $0xe] sm:$0xff]
        %v6084 = vld [vmem:[%s222 + $0x1e] sm:$0xff]
        %v6085 = vld [vmem:[%s222 + $0x26] sm:$0xff]
        %v6086 = vld [vmem:[%s222 + $0x36] sm:$0xff]
        %v6087 = vld [vmem:[%s222 + $0x3e] sm:$0xff]
        %v6088 = vld [vmem:[%s222 + $0x4e] sm:$0xff]
        %v6089 = vld [vmem:[%s222 + $0x56] sm:$0xff]
        %v6090 = vld [vmem:[%s222 + $0x66] sm:$0xff]
        %v6091 = vld [vmem:[%s222 + $0x6e] sm:$0xff]
        %v6092 = vld [vmem:[%s222 + $0x7e] sm:$0xff]
        %v6093 = vld [vmem:[%s222 + $0x86] sm:$0xff]
        %v6094 = vld [vmem:[%s222 + $0x96] sm:$0xff]
        %v6095 = vld [vmem:[%s222 + $0x9e] sm:$0xff]
        %v6096 = vld [vmem:[%s222 + $0xae] sm:$0xff]
        %v6097 = vld [vmem:[%s222 + $0xb6] sm:$0xff]
        %v6098 = vld [vmem:[%s222 + $0xc6] sm:$0xff]
        %v6099 = vld [vmem:[%s222 + $0xce] sm:$0xff]
        %v6100 = vld [vmem:[%s222 + $0xde] sm:$0xff]
        %v6101 = vld [vmem:[%s222 + $0xe6] sm:$0xff]
        %v6102 = vld [vmem:[%s222 + $0xf6] sm:$0xff]
        %v6103 = vld [vmem:[%s222 + $0xfe] sm:$0xff]
        %v6104 = vld [vmem:[%s222 + $0x10e] sm:$0xff]
        %v6105 = vld [vmem:[%s222 + $0x116] sm:$0xff]
        %v6106 = vld [vmem:[%s222 + $0x126] sm:$0xff]
        %v6107 = vld [vmem:[%s222 + $0x12e] sm:$0xff]
        %v6108 = vld [vmem:[%s222 + $0x13e] sm:$0xff]
        %v6109 = vld [vmem:[%s222 + $0x146] sm:$0xff]
        %v6110 = vld [vmem:[%s222 + $0x156] sm:$0xff]
        %v6111 = vld [vmem:[%s222 + $0x15e] sm:$0xff]
        %v6112 = vld [vmem:[%s222 + $0x16e] sm:$0xff]
        %v6113 = vld [vmem:[%s222 + $0x176] sm:$0xff]
        %s6114 = scalar_lea.vmem %s2, 576
        %v6115 = vld [vmem:[%s6114] sm:$0xff]
        %v6116 = vld [vmem:[%s6114 + $0x8] sm:$0xff]
        %v6117 = vld [vmem:[%s6114 + $0x10] sm:$0xff]
        %v6118 = vld [vmem:[%s6114 + $0x18] sm:$0xff]
        %6119 = vmatprep.subr.mxu0 0.0
        %6120 = vmatpush1.xpose.msra.mxu0 %v6115
        %6121 = vmatprep.subr.mxu0 0.0
        %6122 = vmatpush1.xpose.msra.mxu0 %v6116
        %6123 = vmatprep.subr.mxu0 0.0
        %6124 = vmatpush1.xpose.msra.mxu0 %v6117
        %6125 = vmatprep.subr.mxu0 0.0
        %6126 = vmatpush1.xpose.msra.mxu0 %v6118
        %6127 = vmatprep.subr.mxu0 0.0
        %6128 = vmatpush1.xpose.msra.mxu0 0.0
        %6129 = vmatprep.subr.mxu0 0.0
        %6130 = vmatpush1.xpose.msra.mxu0 0.0
        %6131 = vmatprep.subr.mxu0 0.0
        %6132 = vmatpush1.xpose.msra.mxu0 0.0
        %6133 = vmatprep.subr.mxu0 0.0
        %6134 = vmatpush1.xpose.msra.mxu0 0.0
        %6135 = vmatprep.subr.mxu0 0.0
        %6136 = vmatpush1.xpose.msra.mxu0 0.0
        %6137 = vmatprep.subr.mxu0 0.0
        %6138 = vmatpush1.xpose.msra.mxu0 0.0
        %6139 = vmatprep.subr.mxu0 0.0
        %6140 = vmatpush1.xpose.msra.mxu0 0.0
        %6141 = vmatprep.subr.mxu0 0.0
        %6142 = vmatpush1.xpose.msra.mxu0 0.0
        %6143 = vmatprep.subr.mxu0 0.0
        %6144 = vmatpush1.xpose.msra.mxu0 0.0
        %6145 = vmatprep.subr.mxu0 0.0
        %6146 = vmatpush1.xpose.msra.mxu0 0.0
        %6147 = vmatprep.subr.mxu0 0.0
        %6148 = vmatpush1.xpose.msra.mxu0 0.0
        %6149 = vmatprep.subr.mxu0 0.0
        %6150 = vmatpush1.xpose.msra.mxu0 0.0
        %6151 = vmatprep.subr.mxu0 0.0
        %6152 = vmatpush1.xpose.msra.mxu0 0.0
        %6153 = vmatprep.subr.mxu0 0.0
        %6154 = vmatpush1.xpose.msra.mxu0 0.0
        %6155 = vmatprep.subr.mxu0 0.0
        %6156 = vmatpush1.xpose.msra.mxu0 0.0
        %6157 = vmatprep.subr.mxu0 0.0
        %6158 = vmatpush1.xpose.msra.mxu0 0.0
        %6159 = vmatprep.subr.mxu0 0.0
        %6160 = vmatpush1.xpose.msra.mxu0 0.0
        %6161 = vmatprep.subr.mxu0 0.0
        %6162 = vmatpush1.xpose.msra.mxu0 0.0
        %6163 = vmatprep.subr.mxu0 0.0
        %6164 = vmatpush1.xpose.msra.mxu0 0.0
        %6165 = vmatprep.subr.mxu0 0.0
        %6166 = vmatpush1.xpose.msra.mxu0 0.0
        %6167 = vmatprep.subr.mxu0 0.0
        %6168 = vmatpush1.xpose.msra.mxu0 0.0
        %6169 = vmatprep.subr.mxu0 0.0
        %6170 = vmatpush1.xpose.msra.mxu0 0.0
        %6171 = vmatprep.subr.mxu0 0.0
        %6172 = vmatpush1.xpose.msra.mxu0 0.0
        %6173 = vmatprep.subr.mxu0 0.0
        %6174 = vmatpush1.xpose.msra.mxu0 0.0
        %6175 = vmatprep.subr.mxu0 0.0
        %6176 = vmatpush1.xpose.msra.mxu0 0.0
        %6177 = vmatprep.subr.mxu0 0.0
        %6178 = vmatpush1.xpose.msra.mxu0 0.0
        %6179 = vmatprep.subr.mxu0 0.0
        %6180 = vmatpush1.xpose.msra.mxu0 0.0
        %6181 = vmatprep.subr.mxu0 0.0
        %6182 = vmatpush1.xpose.msra.mxu0 0.0
        %6183 = vmatprep.mubr.f32.mxu0 0.0
        %6184 = vmatmul.mubr.f32.gmra.mrb[0].mxu0 %v6082
        %v6185 = vpop.f32.mrb[0].mxu0
        %v6186 = vadd.f32 0.0, %v6185
        %v6187 = vpop.f32.mrb[0].mxu0
        %6188 = vmatprep.mubr.f32.mxu0 0.0
        %6189 = vmatmul.mubr.f32.gmra.mrb[0].mxu0 %v6083
        %v6190 = vpop.f32.mrb[0].mxu0
        %v6191 = vadd.f32 0.0, %v6190
        %v6192 = vpop.f32.mrb[0].mxu0
        %6193 = vmatprep.mubr.f32.mxu0 0.0
        %6194 = vmatmul.mubr.f32.gmra.mrb[0].mxu0 %v6084
        %v6195 = vpop.f32.mrb[0].mxu0
        %v6196 = vadd.f32 0.0, %v6195
        %v6197 = vpop.f32.mrb[0].mxu0
        %6198 = vmatprep.mubr.f32.mxu0 0.0
        %6199 = vmatmul.mubr.f32.gmra.mrb[0].mxu0 %v6085
        %v6200 = vpop.f32.mrb[0].mxu0
        %v6201 = vadd.f32 0.0, %v6200
        %v6202 = vpop.f32.mrb[0].mxu0
        %6203 = vmatprep.mubr.f32.mxu0 0.0
        %6204 = vmatmul.mubr.f32.gmra.mrb[0].mxu0 %v6086
        %v6205 = vpop.f32.mrb[0].mxu0
        %v6206 = vadd.f32 0.0, %v6205
        %v6207 = vpop.f32.mrb[0].mxu0
        %6208 = vmatprep.mubr.f32.mxu0 0.0
        %6209 = vmatmul.mubr.f32.gmra.mrb[0].mxu0 %v6087
        %v6210 = vpop.f32.mrb[0].mxu0
        %v6211 = vadd.f32 0.0, %v6210
        %v6212 = vpop.f32.mrb[0].mxu0
        %6213 = vmatprep.mubr.f32.mxu0 0.0
        %6214 = vmatmul.mubr.f32.gmra.mrb[0].mxu0 %v6088
        %v6215 = vpop.f32.mrb[0].mxu0
        %v6216 = vadd.f32 0.0, %v6215
        %v6217 = vpop.f32.mrb[0].mxu0
        %6218 = vmatprep.mubr.f32.mxu0 0.0
        %6219 = vmatmul.mubr.f32.gmra.mrb[0].mxu0 %v6089
        %v6220 = vpop.f32.mrb[0].mxu0
        %v6221 = vadd.f32 0.0, %v6220
        %v6222 = vpop.f32.mrb[0].mxu0
        %6223 = vmatprep.mubr.f32.mxu0 0.0
        %6224 = vmatmul.mubr.f32.gmra.mrb[0].mxu0 %v6090
        %v6225 = vpop.f32.mrb[0].mxu0
        %v6226 = vadd.f32 0.0, %v6225
        %v6227 = vpop.f32.mrb[0].mxu0
        %6228 = vmatprep.mubr.f32.mxu0 0.0
        %6229 = vmatmul.mubr.f32.gmra.mrb[0].mxu0 %v6091
        %v6230 = vpop.f32.mrb[0].mxu0
        %v6231 = vadd.f32 0.0, %v6230
        %v6232 = vpop.f32.mrb[0].mxu0
        %6233 = vmatprep.mubr.f32.mxu0 0.0
        %6234 = vmatmul.mubr.f32.gmra.mrb[0].mxu0 %v6092
        %v6235 = vpop.f32.mrb[0].mxu0
        %v6236 = vadd.f32 0.0, %v6235
        %v6237 = vpop.f32.mrb[0].mxu0
        %6238 = vmatprep.mubr.f32.mxu0 0.0
        %6239 = vmatmul.mubr.f32.gmra.mrb[0].mxu0 %v6093
        %v6240 = vpop.f32.mrb[0].mxu0
        %v6241 = vadd.f32 0.0, %v6240
        %v6242 = vpop.f32.mrb[0].mxu0
        %6243 = vmatprep.mubr.f32.mxu0 0.0
        %6244 = vmatmul.mubr.f32.gmra.mrb[0].mxu0 %v6094
        %v6245 = vpop.f32.mrb[0].mxu0
        %v6246 = vadd.f32 0.0, %v6245
        %v6247 = vpop.f32.mrb[0].mxu0
        %6248 = vmatprep.mubr.f32.mxu0 0.0
        %6249 = vmatmul.mubr.f32.gmra.mrb[0].mxu0 %v6095
        %v6250 = vpop.f32.mrb[0].mxu0
        %v6251 = vadd.f32 0.0, %v6250
        %v6252 = vpop.f32.mrb[0].mxu0
        %6253 = vmatprep.mubr.f32.mxu0 0.0
        %6254 = vmatmul.mubr.f32.gmra.mrb[0].mxu0 %v6096
        %v6255 = vpop.f32.mrb[0].mxu0
        %v6256 = vadd.f32 0.0, %v6255
        %v6257 = vpop.f32.mrb[0].mxu0
        %6258 = vmatprep.mubr.f32.mxu0 0.0
        %6259 = vmatmul.mubr.f32.gmra.mrb[0].mxu0 %v6097
        %v6260 = vpop.f32.mrb[0].mxu0
        %v6261 = vadd.f32 0.0, %v6260
        %v6262 = vpop.f32.mrb[0].mxu0
        %6263 = vmatprep.mubr.f32.mxu0 0.0
        %6264 = vmatmul.mubr.f32.gmra.mrb[0].mxu0 %v6098
        %v6265 = vpop.f32.mrb[0].mxu0
        %v6266 = vadd.f32 0.0, %v6265
        %v6267 = vpop.f32.mrb[0].mxu0
        %6268 = vmatprep.mubr.f32.mxu0 0.0
        %6269 = vmatmul.mubr.f32.gmra.mrb[0].mxu0 %v6099
        %v6270 = vpop.f32.mrb[0].mxu0
        %v6271 = vadd.f32 0.0, %v6270
        %v6272 = vpop.f32.mrb[0].mxu0
        %6273 = vmatprep.mubr.f32.mxu0 0.0
        %6274 = vmatmul.mubr.f32.gmra.mrb[0].mxu0 %v6100
        %v6275 = vpop.f32.mrb[0].mxu0
        %v6276 = vadd.f32 0.0, %v6275
        %v6277 = vpop.f32.mrb[0].mxu0
        %6278 = vmatprep.mubr.f32.mxu0 0.0
        %6279 = vmatmul.mubr.f32.gmra.mrb[0].mxu0 %v6101
        %v6280 = vpop.f32.mrb[0].mxu0
        %v6281 = vadd.f32 0.0, %v6280
        %v6282 = vpop.f32.mrb[0].mxu0
        %6283 = vmatprep.mubr.f32.mxu0 0.0
        %6284 = vmatmul.mubr.f32.gmra.mrb[0].mxu0 %v6102
        %v6285 = vpop.f32.mrb[0].mxu0
        %v6286 = vadd.f32 0.0, %v6285
        %v6287 = vpop.f32.mrb[0].mxu0
        %6288 = vmatprep.mubr.f32.mxu0 0.0
        %6289 = vmatmul.mubr.f32.gmra.mrb[0].mxu0 %v6103
        %v6290 = vpop.f32.mrb[0].mxu0
        %v6291 = vadd.f32 0.0, %v6290
        %v6292 = vpop.f32.mrb[0].mxu0
        %6293 = vmatprep.mubr.f32.mxu0 0.0
        %6294 = vmatmul.mubr.f32.gmra.mrb[0].mxu0 %v6104
        %v6295 = vpop.f32.mrb[0].mxu0
        %v6296 = vadd.f32 0.0, %v6295
        %v6297 = vpop.f32.mrb[0].mxu0
        %6298 = vmatprep.mubr.f32.mxu0 0.0
        %6299 = vmatmul.mubr.f32.gmra.mrb[0].mxu0 %v6105
        %v6300 = vpop.f32.mrb[0].mxu0
        %v6301 = vadd.f32 0.0, %v6300
        %v6302 = vpop.f32.mrb[0].mxu0
        %6303 = vmatprep.mubr.f32.mxu0 0.0
        %6304 = vmatmul.mubr.f32.gmra.mrb[0].mxu0 %v6106
        %v6305 = vpop.f32.mrb[0].mxu0
        %v6306 = vadd.f32 0.0, %v6305
        %v6307 = vpop.f32.mrb[0].mxu0
        %6308 = vmatprep.mubr.f32.mxu0 0.0
        %6309 = vmatmul.mubr.f32.gmra.mrb[0].mxu0 %v6107
        %v6310 = vpop.f32.mrb[0].mxu0
        %v6311 = vadd.f32 0.0, %v6310
        %v6312 = vpop.f32.mrb[0].mxu0
        %6313 = vmatprep.mubr.f32.mxu0 0.0
        %6314 = vmatmul.mubr.f32.gmra.mrb[0].mxu0 %v6108
        %v6315 = vpop.f32.mrb[0].mxu0
        %v6316 = vadd.f32 0.0, %v6315
        %v6317 = vpop.f32.mrb[0].mxu0
        %6318 = vmatprep.mubr.f32.mxu0 0.0
        %6319 = vmatmul.mubr.f32.gmra.mrb[0].mxu0 %v6109
        %v6320 = vpop.f32.mrb[0].mxu0
        %v6321 = vadd.f32 0.0, %v6320
        %v6322 = vpop.f32.mrb[0].mxu0
        %6323 = vmatprep.mubr.f32.mxu0 0.0
        %6324 = vmatmul.mubr.f32.gmra.mrb[0].mxu0 %v6110
        %v6325 = vpop.f32.mrb[0].mxu0
        %v6326 = vadd.f32 0.0, %v6325
        %v6327 = vpop.f32.mrb[0].mxu0
        %6328 = vmatprep.mubr.f32.mxu0 0.0
        %6329 = vmatmul.mubr.f32.gmra.mrb[0].mxu0 %v6111
        %v6330 = vpop.f32.mrb[0].mxu0
        %v6331 = vadd.f32 0.0, %v6330
        %v6332 = vpop.f32.mrb[0].mxu0
        %6333 = vmatprep.mubr.f32.mxu0 0.0
        %6334 = vmatmul.mubr.f32.gmra.mrb[0].mxu0 %v6112
        %v6335 = vpop.f32.mrb[0].mxu0
        %v6336 = vadd.f32 0.0, %v6335
        %v6337 = vpop.f32.mrb[0].mxu0
        %6338 = vmatprep.mubr.f32.mxu0 0.0
        %6339 = vmatmul.mubr.f32.gmra.mrb[0].mxu0 %v6113
        %v6340 = vpop.f32.mrb[0].mxu0
        %v6341 = vadd.f32 0.0, %v6340
        %v6342 = vpop.f32.mrb[0].mxu0
        %6343 = vdwg.mxu0
        %v6344 = vadd.f32 %v5924, %v6186
        %v6345 = vadd.f32 %v5929, %v6191
        %v6346 = vadd.f32 %v5934, %v6196
        %v6347 = vadd.f32 %v5939, %v6201
        %v6348 = vadd.f32 %v5944, %v6206
        %v6349 = vadd.f32 %v5949, %v6211
        %v6350 = vadd.f32 %v5954, %v6216
        %v6351 = vadd.f32 %v5959, %v6221
        %v6352 = vadd.f32 %v5964, %v6226
        %v6353 = vadd.f32 %v5969, %v6231
        %v6354 = vadd.f32 %v5974, %v6236
        %v6355 = vadd.f32 %v5979, %v6241
        %v6356 = vadd.f32 %v5984, %v6246
        %v6357 = vadd.f32 %v5989, %v6251
        %v6358 = vadd.f32 %v5994, %v6256
        %v6359 = vadd.f32 %v5999, %v6261
        %v6360 = vadd.f32 %v6004, %v6266
        %v6361 = vadd.f32 %v6009, %v6271
        %v6362 = vadd.f32 %v6014, %v6276
        %v6363 = vadd.f32 %v6019, %v6281
        %v6364 = vadd.f32 %v6024, %v6286
        %v6365 = vadd.f32 %v6029, %v6291
        %v6366 = vadd.f32 %v6034, %v6296
        %v6367 = vadd.f32 %v6039, %v6301
        %v6368 = vadd.f32 %v6044, %v6306
        %v6369 = vadd.f32 %v6049, %v6311
        %v6370 = vadd.f32 %v6054, %v6316
        %v6371 = vadd.f32 %v6059, %v6321
        %v6372 = vadd.f32 %v6064, %v6326
        %v6373 = vadd.f32 %v6069, %v6331
        %v6374 = vadd.f32 %v6074, %v6336
        %v6375 = vadd.f32 %v6079, %v6341
        %v6376 = vld [vmem:[%s223] sm:$0xff]
        %v6377 = vld [vmem:[%s223 + $0x8] sm:$0xff]
        %v6378 = vld [vmem:[%s223 + $0x18] sm:$0xff]
        %v6379 = vld [vmem:[%s223 + $0x20] sm:$0xff]
        %v6380 = vld [vmem:[%s223 + $0x30] sm:$0xff]
        %v6381 = vld [vmem:[%s223 + $0x38] sm:$0xff]
        %v6382 = vld [vmem:[%s223 + $0x48] sm:$0xff]
        %v6383 = vld [vmem:[%s223 + $0x50] sm:$0xff]
        %v6384 = vld [vmem:[%s223 + $0x60] sm:$0xff]
        %v6385 = vld [vmem:[%s223 + $0x68] sm:$0xff]
        %v6386 = vld [vmem:[%s223 + $0x78] sm:$0xff]
        %v6387 = vld [vmem:[%s223 + $0x80] sm:$0xff]
        %v6388 = vld [vmem:[%s223 + $0x90] sm:$0xff]
        %v6389 = vld [vmem:[%s223 + $0x98] sm:$0xff]
        %v6390 = vld [vmem:[%s223 + $0xa8] sm:$0xff]
        %v6391 = vld [vmem:[%s223 + $0xb0] sm:$0xff]
        %v6392 = vld [vmem:[%s223 + $0xc0] sm:$0xff]
        %v6393 = vld [vmem:[%s223 + $0xc8] sm:$0xff]
        %v6394 = vld [vmem:[%s223 + $0xd8] sm:$0xff]
        %v6395 = vld [vmem:[%s223 + $0xe0] sm:$0xff]
        %v6396 = vld [vmem:[%s223 + $0xf0] sm:$0xff]
        %v6397 = vld [vmem:[%s223 + $0xf8] sm:$0xff]
        %v6398 = vld [vmem:[%s223 + $0x108] sm:$0xff]
        %v6399 = vld [vmem:[%s223 + $0x110] sm:$0xff]
        %v6400 = vld [vmem:[%s223 + $0x120] sm:$0xff]
        %v6401 = vld [vmem:[%s223 + $0x128] sm:$0xff]
        %v6402 = vld [vmem:[%s223 + $0x138] sm:$0xff]
        %v6403 = vld [vmem:[%s223 + $0x140] sm:$0xff]
        %v6404 = vld [vmem:[%s223 + $0x150] sm:$0xff]
        %v6405 = vld [vmem:[%s223 + $0x158] sm:$0xff]
        %v6406 = vld [vmem:[%s223 + $0x168] sm:$0xff]
        %v6407 = vld [vmem:[%s223 + $0x170] sm:$0xff]
        %s6408 = scalar_lea.vmem %s2, 608
        %v6409 = vld [vmem:[%s6408] sm:$0xff]
        %v6410 = vld [vmem:[%s6408 + $0x8] sm:$0xff]
        %v6411 = vld [vmem:[%s6408 + $0x10] sm:$0xff]
        %v6412 = vld [vmem:[%s6408 + $0x18] sm:$0xff]
        %6413 = vmatprep.subr.mxu0 0.0
        %6414 = vmatpush1.xpose.msra.mxu0 %v6409
        %6415 = vmatprep.subr.mxu0 0.0
        %6416 = vmatpush1.xpose.msra.mxu0 %v6410
        %6417 = vmatprep.subr.mxu0 0.0
        %6418 = vmatpush1.xpose.msra.mxu0 %v6411
        %6419 = vmatprep.subr.mxu0 0.0
        %6420 = vmatpush1.xpose.msra.mxu0 %v6412
        %6421 = vmatprep.subr.mxu0 0.0
        %6422 = vmatpush1.xpose.msra.mxu0 0.0
        %6423 = vmatprep.subr.mxu0 0.0
        %6424 = vmatpush1.xpose.msra.mxu0 0.0
        %6425 = vmatprep.subr.mxu0 0.0
        %6426 = vmatpush1.xpose.msra.mxu0 0.0
        %6427 = vmatprep.subr.mxu0 0.0
        %6428 = vmatpush1.xpose.msra.mxu0 0.0
        %6429 = vmatprep.subr.mxu0 0.0
        %6430 = vmatpush1.xpose.msra.mxu0 0.0
        %6431 = vmatprep.subr.mxu0 0.0
        %6432 = vmatpush1.xpose.msra.mxu0 0.0
        %6433 = vmatprep.subr.mxu0 0.0
        %6434 = vmatpush1.xpose.msra.mxu0 0.0
        %6435 = vmatprep.subr.mxu0 0.0
        %6436 = vmatpush1.xpose.msra.mxu0 0.0
        %6437 = vmatprep.subr.mxu0 0.0
        %6438 = vmatpush1.xpose.msra.mxu0 0.0
        %6439 = vmatprep.subr.mxu0 0.0
        %6440 = vmatpush1.xpose.msra.mxu0 0.0
        %6441 = vmatprep.subr.mxu0 0.0
        %6442 = vmatpush1.xpose.msra.mxu0 0.0
        %6443 = vmatprep.subr.mxu0 0.0
        %6444 = vmatpush1.xpose.msra.mxu0 0.0
        %6445 = vmatprep.subr.mxu0 0.0
        %6446 = vmatpush1.xpose.msra.mxu0 0.0
        %6447 = vmatprep.subr.mxu0 0.0
        %6448 = vmatpush1.xpose.msra.mxu0 0.0
        %6449 = vmatprep.subr.mxu0 0.0
        %6450 = vmatpush1.xpose.msra.mxu0 0.0
        %6451 = vmatprep.subr.mxu0 0.0
        %6452 = vmatpush1.xpose.msra.mxu0 0.0
        %6453 = vmatprep.subr.mxu0 0.0
        %6454 = vmatpush1.xpose.msra.mxu0 0.0
        %6455 = vmatprep.subr.mxu0 0.0
        %6456 = vmatpush1.xpose.msra.mxu0 0.0
        %6457 = vmatprep.subr.mxu0 0.0
        %6458 = vmatpush1.xpose.msra.mxu0 0.0
        %6459 = vmatprep.subr.mxu0 0.0
        %6460 = vmatpush1.xpose.msra.mxu0 0.0
        %6461 = vmatprep.subr.mxu0 0.0
        %6462 = vmatpush1.xpose.msra.mxu0 0.0
        %6463 = vmatprep.subr.mxu0 0.0
        %6464 = vmatpush1.xpose.msra.mxu0 0.0
        %6465 = vmatprep.subr.mxu0 0.0
        %6466 = vmatpush1.xpose.msra.mxu0 0.0
        %6467 = vmatprep.subr.mxu0 0.0
        %6468 = vmatpush1.xpose.msra.mxu0 0.0
        %6469 = vmatprep.subr.mxu0 0.0
        %6470 = vmatpush1.xpose.msra.mxu0 0.0
        %6471 = vmatprep.subr.mxu0 0.0
        %6472 = vmatpush1.xpose.msra.mxu0 0.0
        %6473 = vmatprep.subr.mxu0 0.0
        %6474 = vmatpush1.xpose.msra.mxu0 0.0
        %6475 = vmatprep.subr.mxu0 0.0
        %6476 = vmatpush1.xpose.msra.mxu0 0.0
        %6477 = vmatprep.mubr.f32.mxu0 0.0
        %6478 = vmatmul.mubr.f32.gmra.mrb[0].mxu0 %v6376
        %v6479 = vpop.f32.mrb[0].mxu0
        %v6480 = vadd.f32 0.0, %v6479
        %v6481 = vpop.f32.mrb[0].mxu0
        %6482 = vmatprep.mubr.f32.mxu0 0.0
        %6483 = vmatmul.mubr.f32.gmra.mrb[0].mxu0 %v6377
        %v6484 = vpop.f32.mrb[0].mxu0
        %v6485 = vadd.f32 0.0, %v6484
        %v6486 = vpop.f32.mrb[0].mxu0
        %6487 = vmatprep.mubr.f32.mxu0 0.0
        %6488 = vmatmul.mubr.f32.gmra.mrb[0].mxu0 %v6378
        %v6489 = vpop.f32.mrb[0].mxu0
        %v6490 = vadd.f32 0.0, %v6489
        %v6491 = vpop.f32.mrb[0].mxu0
        %6492 = vmatprep.mubr.f32.mxu0 0.0
        %6493 = vmatmul.mubr.f32.gmra.mrb[0].mxu0 %v6379
        %v6494 = vpop.f32.mrb[0].mxu0
        %v6495 = vadd.f32 0.0, %v6494
        %v6496 = vpop.f32.mrb[0].mxu0
        %6497 = vmatprep.mubr.f32.mxu0 0.0
        %6498 = vmatmul.mubr.f32.gmra.mrb[0].mxu0 %v6380
        %v6499 = vpop.f32.mrb[0].mxu0
        %v6500 = vadd.f32 0.0, %v6499
        %v6501 = vpop.f32.mrb[0].mxu0
        %6502 = vmatprep.mubr.f32.mxu0 0.0
        %6503 = vmatmul.mubr.f32.gmra.mrb[0].mxu0 %v6381
        %v6504 = vpop.f32.mrb[0].mxu0
        %v6505 = vadd.f32 0.0, %v6504
        %v6506 = vpop.f32.mrb[0].mxu0
        %6507 = vmatprep.mubr.f32.mxu0 0.0
        %6508 = vmatmul.mubr.f32.gmra.mrb[0].mxu0 %v6382
        %v6509 = vpop.f32.mrb[0].mxu0
        %v6510 = vadd.f32 0.0, %v6509
        %v6511 = vpop.f32.mrb[0].mxu0
        %6512 = vmatprep.mubr.f32.mxu0 0.0
        %6513 = vmatmul.mubr.f32.gmra.mrb[0].mxu0 %v6383
        %v6514 = vpop.f32.mrb[0].mxu0
        %v6515 = vadd.f32 0.0, %v6514
        %v6516 = vpop.f32.mrb[0].mxu0
        %6517 = vmatprep.mubr.f32.mxu0 0.0
        %6518 = vmatmul.mubr.f32.gmra.mrb[0].mxu0 %v6384
        %v6519 = vpop.f32.mrb[0].mxu0
        %v6520 = vadd.f32 0.0, %v6519
        %v6521 = vpop.f32.mrb[0].mxu0
        %6522 = vmatprep.mubr.f32.mxu0 0.0
        %6523 = vmatmul.mubr.f32.gmra.mrb[0].mxu0 %v6385
        %v6524 = vpop.f32.mrb[0].mxu0
        %v6525 = vadd.f32 0.0, %v6524
        %v6526 = vpop.f32.mrb[0].mxu0
        %6527 = vmatprep.mubr.f32.mxu0 0.0
        %6528 = vmatmul.mubr.f32.gmra.mrb[0].mxu0 %v6386
        %v6529 = vpop.f32.mrb[0].mxu0
        %v6530 = vadd.f32 0.0, %v6529
        %v6531 = vpop.f32.mrb[0].mxu0
        %6532 = vmatprep.mubr.f32.mxu0 0.0
        %6533 = vmatmul.mubr.f32.gmra.mrb[0].mxu0 %v6387
        %v6534 = vpop.f32.mrb[0].mxu0
        %v6535 = vadd.f32 0.0, %v6534
        %v6536 = vpop.f32.mrb[0].mxu0
        %6537 = vmatprep.mubr.f32.mxu0 0.0
        %6538 = vmatmul.mubr.f32.gmra.mrb[0].mxu0 %v6388
        %v6539 = vpop.f32.mrb[0].mxu0
        %v6540 = vadd.f32 0.0, %v6539
        %v6541 = vpop.f32.mrb[0].mxu0
        %6542 = vmatprep.mubr.f32.mxu0 0.0
        %6543 = vmatmul.mubr.f32.gmra.mrb[0].mxu0 %v6389
        %v6544 = vpop.f32.mrb[0].mxu0
        %v6545 = vadd.f32 0.0, %v6544
        %v6546 = vpop.f32.mrb[0].mxu0
        %6547 = vmatprep.mubr.f32.mxu0 0.0
        %6548 = vmatmul.mubr.f32.gmra.mrb[0].mxu0 %v6390
        %v6549 = vpop.f32.mrb[0].mxu0
        %v6550 = vadd.f32 0.0, %v6549
        %v6551 = vpop.f32.mrb[0].mxu0
        %6552 = vmatprep.mubr.f32.mxu0 0.0
        %6553 = vmatmul.mubr.f32.gmra.mrb[0].mxu0 %v6391
        %v6554 = vpop.f32.mrb[0].mxu0
        %v6555 = vadd.f32 0.0, %v6554
        %v6556 = vpop.f32.mrb[0].mxu0
        %6557 = vmatprep.mubr.f32.mxu0 0.0
        %6558 = vmatmul.mubr.f32.gmra.mrb[0].mxu0 %v6392
        %v6559 = vpop.f32.mrb[0].mxu0
        %v6560 = vadd.f32 0.0, %v6559
        %v6561 = vpop.f32.mrb[0].mxu0
        %6562 = vmatprep.mubr.f32.mxu0 0.0
        %6563 = vmatmul.mubr.f32.gmra.mrb[0].mxu0 %v6393
        %v6564 = vpop.f32.mrb[0].mxu0
        %v6565 = vadd.f32 0.0, %v6564
        %v6566 = vpop.f32.mrb[0].mxu0
        %6567 = vmatprep.mubr.f32.mxu0 0.0
        %6568 = vmatmul.mubr.f32.gmra.mrb[0].mxu0 %v6394
        %v6569 = vpop.f32.mrb[0].mxu0
        %v6570 = vadd.f32 0.0, %v6569
        %v6571 = vpop.f32.mrb[0].mxu0
        %6572 = vmatprep.mubr.f32.mxu0 0.0
        %6573 = vmatmul.mubr.f32.gmra.mrb[0].mxu0 %v6395
        %v6574 = vpop.f32.mrb[0].mxu0
        %v6575 = vadd.f32 0.0, %v6574
        %v6576 = vpop.f32.mrb[0].mxu0
        %6577 = vmatprep.mubr.f32.mxu0 0.0
        %6578 = vmatmul.mubr.f32.gmra.mrb[0].mxu0 %v6396
        %v6579 = vpop.f32.mrb[0].mxu0
        %v6580 = vadd.f32 0.0, %v6579
        %v6581 = vpop.f32.mrb[0].mxu0
        %6582 = vmatprep.mubr.f32.mxu0 0.0
        %6583 = vmatmul.mubr.f32.gmra.mrb[0].mxu0 %v6397
        %v6584 = vpop.f32.mrb[0].mxu0
        %v6585 = vadd.f32 0.0, %v6584
        %v6586 = vpop.f32.mrb[0].mxu0
        %6587 = vmatprep.mubr.f32.mxu0 0.0
        %6588 = vmatmul.mubr.f32.gmra.mrb[0].mxu0 %v6398
        %v6589 = vpop.f32.mrb[0].mxu0
        %v6590 = vadd.f32 0.0, %v6589
        %v6591 = vpop.f32.mrb[0].mxu0
        %6592 = vmatprep.mubr.f32.mxu0 0.0
        %6593 = vmatmul.mubr.f32.gmra.mrb[0].mxu0 %v6399
        %v6594 = vpop.f32.mrb[0].mxu0
        %v6595 = vadd.f32 0.0, %v6594
        %v6596 = vpop.f32.mrb[0].mxu0
        %6597 = vmatprep.mubr.f32.mxu0 0.0
        %6598 = vmatmul.mubr.f32.gmra.mrb[0].mxu0 %v6400
        %v6599 = vpop.f32.mrb[0].mxu0
        %v6600 = vadd.f32 0.0, %v6599
        %v6601 = vpop.f32.mrb[0].mxu0
        %6602 = vmatprep.mubr.f32.mxu0 0.0
        %6603 = vmatmul.mubr.f32.gmra.mrb[0].mxu0 %v6401
        %v6604 = vpop.f32.mrb[0].mxu0
        %v6605 = vadd.f32 0.0, %v6604
        %v6606 = vpop.f32.mrb[0].mxu0
        %6607 = vmatprep.mubr.f32.mxu0 0.0
        %6608 = vmatmul.mubr.f32.gmra.mrb[0].mxu0 %v6402
        %v6609 = vpop.f32.mrb[0].mxu0
        %v6610 = vadd.f32 0.0, %v6609
        %v6611 = vpop.f32.mrb[0].mxu0
        %6612 = vmatprep.mubr.f32.mxu0 0.0
        %6613 = vmatmul.mubr.f32.gmra.mrb[0].mxu0 %v6403
        %v6614 = vpop.f32.mrb[0].mxu0
        %v6615 = vadd.f32 0.0, %v6614
        %v6616 = vpop.f32.mrb[0].mxu0
        %6617 = vmatprep.mubr.f32.mxu0 0.0
        %6618 = vmatmul.mubr.f32.gmra.mrb[0].mxu0 %v6404
        %v6619 = vpop.f32.mrb[0].mxu0
        %v6620 = vadd.f32 0.0, %v6619
        %v6621 = vpop.f32.mrb[0].mxu0
        %6622 = vmatprep.mubr.f32.mxu0 0.0
        %6623 = vmatmul.mubr.f32.gmra.mrb[0].mxu0 %v6405
        %v6624 = vpop.f32.mrb[0].mxu0
        %v6625 = vadd.f32 0.0, %v6624
        %v6626 = vpop.f32.mrb[0].mxu0
        %6627 = vmatprep.mubr.f32.mxu0 0.0
        %6628 = vmatmul.mubr.f32.gmra.mrb[0].mxu0 %v6406
        %v6629 = vpop.f32.mrb[0].mxu0
        %v6630 = vadd.f32 0.0, %v6629
        %v6631 = vpop.f32.mrb[0].mxu0
        %6632 = vmatprep.mubr.f32.mxu0 0.0
        %6633 = vmatmul.mubr.f32.gmra.mrb[0].mxu0 %v6407
        %v6634 = vpop.f32.mrb[0].mxu0
        %v6635 = vadd.f32 0.0, %v6634
        %v6636 = vpop.f32.mrb[0].mxu0
        %6637 = vdwg.mxu0
        %v6638 = vadd.f32 %v6344, %v6480
        %v6639 = vadd.f32 %v6345, %v6485
        %v6640 = vadd.f32 %v6346, %v6490
        %v6641 = vadd.f32 %v6347, %v6495
        %v6642 = vadd.f32 %v6348, %v6500
        %v6643 = vadd.f32 %v6349, %v6505
        %v6644 = vadd.f32 %v6350, %v6510
        %v6645 = vadd.f32 %v6351, %v6515
        %v6646 = vadd.f32 %v6352, %v6520
        %v6647 = vadd.f32 %v6353, %v6525
        %v6648 = vadd.f32 %v6354, %v6530
        %v6649 = vadd.f32 %v6355, %v6535
        %v6650 = vadd.f32 %v6356, %v6540
        %v6651 = vadd.f32 %v6357, %v6545
        %v6652 = vadd.f32 %v6358, %v6550
        %v6653 = vadd.f32 %v6359, %v6555
        %v6654 = vadd.f32 %v6360, %v6560
        %v6655 = vadd.f32 %v6361, %v6565
        %v6656 = vadd.f32 %v6362, %v6570
        %v6657 = vadd.f32 %v6363, %v6575
        %v6658 = vadd.f32 %v6364, %v6580
        %v6659 = vadd.f32 %v6365, %v6585
        %v6660 = vadd.f32 %v6366, %v6590
        %v6661 = vadd.f32 %v6367, %v6595
        %v6662 = vadd.f32 %v6368, %v6600
        %v6663 = vadd.f32 %v6369, %v6605
        %v6664 = vadd.f32 %v6370, %v6610
        %v6665 = vadd.f32 %v6371, %v6615
        %v6666 = vadd.f32 %v6372, %v6620
        %v6667 = vadd.f32 %v6373, %v6625
        %v6668 = vadd.f32 %v6374, %v6630
        %v6669 = vadd.f32 %v6375, %v6635
        %v6670 = vld [vmem:[%s223 + $0x6] sm:$0xff]
        %v6671 = vld [vmem:[%s223 + $0xe] sm:$0xff]
        %v6672 = vld [vmem:[%s223 + $0x1e] sm:$0xff]
        %v6673 = vld [vmem:[%s223 + $0x26] sm:$0xff]
        %v6674 = vld [vmem:[%s223 + $0x36] sm:$0xff]
        %v6675 = vld [vmem:[%s223 + $0x3e] sm:$0xff]
        %v6676 = vld [vmem:[%s223 + $0x4e] sm:$0xff]
        %v6677 = vld [vmem:[%s223 + $0x56] sm:$0xff]
        %v6678 = vld [vmem:[%s223 + $0x66] sm:$0xff]
        %v6679 = vld [vmem:[%s223 + $0x6e] sm:$0xff]
        %v6680 = vld [vmem:[%s223 + $0x7e] sm:$0xff]
        %v6681 = vld [vmem:[%s223 + $0x86] sm:$0xff]
        %v6682 = vld [vmem:[%s223 + $0x96] sm:$0xff]
        %v6683 = vld [vmem:[%s223 + $0x9e] sm:$0xff]
        %v6684 = vld [vmem:[%s223 + $0xae] sm:$0xff]
        %v6685 = vld [vmem:[%s223 + $0xb6] sm:$0xff]
        %v6686 = vld [vmem:[%s223 + $0xc6] sm:$0xff]
        %v6687 = vld [vmem:[%s223 + $0xce] sm:$0xff]
        %v6688 = vld [vmem:[%s223 + $0xde] sm:$0xff]
        %v6689 = vld [vmem:[%s223 + $0xe6] sm:$0xff]
        %v6690 = vld [vmem:[%s223 + $0xf6] sm:$0xff]
        %v6691 = vld [vmem:[%s223 + $0xfe] sm:$0xff]
        %v6692 = vld [vmem:[%s223 + $0x10e] sm:$0xff]
        %v6693 = vld [vmem:[%s223 + $0x116] sm:$0xff]
        %v6694 = vld [vmem:[%s223 + $0x126] sm:$0xff]
        %v6695 = vld [vmem:[%s223 + $0x12e] sm:$0xff]
        %v6696 = vld [vmem:[%s223 + $0x13e] sm:$0xff]
        %v6697 = vld [vmem:[%s223 + $0x146] sm:$0xff]
        %v6698 = vld [vmem:[%s223 + $0x156] sm:$0xff]
        %v6699 = vld [vmem:[%s223 + $0x15e] sm:$0xff]
        %v6700 = vld [vmem:[%s223 + $0x16e] sm:$0xff]
        %v6701 = vld [vmem:[%s223 + $0x176] sm:$0xff]
        %s6702 = scalar_lea.vmem %s2, 640
        %v6703 = vld [vmem:[%s6702] sm:$0xff]
        %v6704 = vld [vmem:[%s6702 + $0x8] sm:$0xff]
        %v6705 = vld [vmem:[%s6702 + $0x10] sm:$0xff]
        %v6706 = vld [vmem:[%s6702 + $0x18] sm:$0xff]
        %6707 = vmatprep.subr.mxu0 0.0
        %6708 = vmatpush1.xpose.msra.mxu0 %v6703
        %6709 = vmatprep.subr.mxu0 0.0
        %6710 = vmatpush1.xpose.msra.mxu0 %v6704
        %6711 = vmatprep.subr.mxu0 0.0
        %6712 = vmatpush1.xpose.msra.mxu0 %v6705
        %6713 = vmatprep.subr.mxu0 0.0
        %6714 = vmatpush1.xpose.msra.mxu0 %v6706
        %6715 = vmatprep.subr.mxu0 0.0
        %6716 = vmatpush1.xpose.msra.mxu0 0.0
        %6717 = vmatprep.subr.mxu0 0.0
        %6718 = vmatpush1.xpose.msra.mxu0 0.0
        %6719 = vmatprep.subr.mxu0 0.0
        %6720 = vmatpush1.xpose.msra.mxu0 0.0
        %6721 = vmatprep.subr.mxu0 0.0
        %6722 = vmatpush1.xpose.msra.mxu0 0.0
        %6723 = vmatprep.subr.mxu0 0.0
        %6724 = vmatpush1.xpose.msra.mxu0 0.0
        %6725 = vmatprep.subr.mxu0 0.0
        %6726 = vmatpush1.xpose.msra.mxu0 0.0
        %6727 = vmatprep.subr.mxu0 0.0
        %6728 = vmatpush1.xpose.msra.mxu0 0.0
        %6729 = vmatprep.subr.mxu0 0.0
        %6730 = vmatpush1.xpose.msra.mxu0 0.0
        %6731 = vmatprep.subr.mxu0 0.0
        %6732 = vmatpush1.xpose.msra.mxu0 0.0
        %6733 = vmatprep.subr.mxu0 0.0
        %6734 = vmatpush1.xpose.msra.mxu0 0.0
        %6735 = vmatprep.subr.mxu0 0.0
        %6736 = vmatpush1.xpose.msra.mxu0 0.0
        %6737 = vmatprep.subr.mxu0 0.0
        %6738 = vmatpush1.xpose.msra.mxu0 0.0
        %6739 = vmatprep.subr.mxu0 0.0
        %6740 = vmatpush1.xpose.msra.mxu0 0.0
        %6741 = vmatprep.subr.mxu0 0.0
        %6742 = vmatpush1.xpose.msra.mxu0 0.0
        %6743 = vmatprep.subr.mxu0 0.0
        %6744 = vmatpush1.xpose.msra.mxu0 0.0
        %6745 = vmatprep.subr.mxu0 0.0
        %6746 = vmatpush1.xpose.msra.mxu0 0.0
        %6747 = vmatprep.subr.mxu0 0.0
        %6748 = vmatpush1.xpose.msra.mxu0 0.0
        %6749 = vmatprep.subr.mxu0 0.0
        %6750 = vmatpush1.xpose.msra.mxu0 0.0
        %6751 = vmatprep.subr.mxu0 0.0
        %6752 = vmatpush1.xpose.msra.mxu0 0.0
        %6753 = vmatprep.subr.mxu0 0.0
        %6754 = vmatpush1.xpose.msra.mxu0 0.0
        %6755 = vmatprep.subr.mxu0 0.0
        %6756 = vmatpush1.xpose.msra.mxu0 0.0
        %6757 = vmatprep.subr.mxu0 0.0
        %6758 = vmatpush1.xpose.msra.mxu0 0.0
        %6759 = vmatprep.subr.mxu0 0.0
        %6760 = vmatpush1.xpose.msra.mxu0 0.0
        %6761 = vmatprep.subr.mxu0 0.0
        %6762 = vmatpush1.xpose.msra.mxu0 0.0
        %6763 = vmatprep.subr.mxu0 0.0
        %6764 = vmatpush1.xpose.msra.mxu0 0.0
        %6765 = vmatprep.subr.mxu0 0.0
        %6766 = vmatpush1.xpose.msra.mxu0 0.0
        %6767 = vmatprep.subr.mxu0 0.0
        %6768 = vmatpush1.xpose.msra.mxu0 0.0
        %6769 = vmatprep.subr.mxu0 0.0
        %6770 = vmatpush1.xpose.msra.mxu0 0.0
        %6771 = vmatprep.mubr.f32.mxu0 0.0
        %6772 = vmatmul.mubr.f32.gmra.mrb[0].mxu0 %v6670
        %v6773 = vpop.f32.mrb[0].mxu0
        %v6774 = vadd.f32 0.0, %v6773
        %v6775 = vpop.f32.mrb[0].mxu0
        %6776 = vmatprep.mubr.f32.mxu0 0.0
        %6777 = vmatmul.mubr.f32.gmra.mrb[0].mxu0 %v6671
        %v6778 = vpop.f32.mrb[0].mxu0
        %v6779 = vadd.f32 0.0, %v6778
        %v6780 = vpop.f32.mrb[0].mxu0
        %6781 = vmatprep.mubr.f32.mxu0 0.0
        %6782 = vmatmul.mubr.f32.gmra.mrb[0].mxu0 %v6672
        %v6783 = vpop.f32.mrb[0].mxu0
        %v6784 = vadd.f32 0.0, %v6783
        %v6785 = vpop.f32.mrb[0].mxu0
        %6786 = vmatprep.mubr.f32.mxu0 0.0
        %6787 = vmatmul.mubr.f32.gmra.mrb[0].mxu0 %v6673
        %v6788 = vpop.f32.mrb[0].mxu0
        %v6789 = vadd.f32 0.0, %v6788
        %v6790 = vpop.f32.mrb[0].mxu0
        %6791 = vmatprep.mubr.f32.mxu0 0.0
        %6792 = vmatmul.mubr.f32.gmra.mrb[0].mxu0 %v6674
        %v6793 = vpop.f32.mrb[0].mxu0
        %v6794 = vadd.f32 0.0, %v6793
        %v6795 = vpop.f32.mrb[0].mxu0
        %6796 = vmatprep.mubr.f32.mxu0 0.0
        %6797 = vmatmul.mubr.f32.gmra.mrb[0].mxu0 %v6675
        %v6798 = vpop.f32.mrb[0].mxu0
        %v6799 = vadd.f32 0.0, %v6798
        %v6800 = vpop.f32.mrb[0].mxu0
        %6801 = vmatprep.mubr.f32.mxu0 0.0
        %6802 = vmatmul.mubr.f32.gmra.mrb[0].mxu0 %v6676
        %v6803 = vpop.f32.mrb[0].mxu0
        %v6804 = vadd.f32 0.0, %v6803
        %v6805 = vpop.f32.mrb[0].mxu0
        %6806 = vmatprep.mubr.f32.mxu0 0.0
        %6807 = vmatmul.mubr.f32.gmra.mrb[0].mxu0 %v6677
        %v6808 = vpop.f32.mrb[0].mxu0
        %v6809 = vadd.f32 0.0, %v6808
        %v6810 = vpop.f32.mrb[0].mxu0
        %6811 = vmatprep.mubr.f32.mxu0 0.0
        %6812 = vmatmul.mubr.f32.gmra.mrb[0].mxu0 %v6678
        %v6813 = vpop.f32.mrb[0].mxu0
        %v6814 = vadd.f32 0.0, %v6813
        %v6815 = vpop.f32.mrb[0].mxu0
        %6816 = vmatprep.mubr.f32.mxu0 0.0
        %6817 = vmatmul.mubr.f32.gmra.mrb[0].mxu0 %v6679
        %v6818 = vpop.f32.mrb[0].mxu0
        %v6819 = vadd.f32 0.0, %v6818
        %v6820 = vpop.f32.mrb[0].mxu0
        %6821 = vmatprep.mubr.f32.mxu0 0.0
        %6822 = vmatmul.mubr.f32.gmra.mrb[0].mxu0 %v6680
        %v6823 = vpop.f32.mrb[0].mxu0
        %v6824 = vadd.f32 0.0, %v6823
        %v6825 = vpop.f32.mrb[0].mxu0
        %6826 = vmatprep.mubr.f32.mxu0 0.0
        %6827 = vmatmul.mubr.f32.gmra.mrb[0].mxu0 %v6681
        %v6828 = vpop.f32.mrb[0].mxu0
        %v6829 = vadd.f32 0.0, %v6828
        %v6830 = vpop.f32.mrb[0].mxu0
        %6831 = vmatprep.mubr.f32.mxu0 0.0
        %6832 = vmatmul.mubr.f32.gmra.mrb[0].mxu0 %v6682
        %v6833 = vpop.f32.mrb[0].mxu0
        %v6834 = vadd.f32 0.0, %v6833
        %v6835 = vpop.f32.mrb[0].mxu0
        %6836 = vmatprep.mubr.f32.mxu0 0.0
        %6837 = vmatmul.mubr.f32.gmra.mrb[0].mxu0 %v6683
        %v6838 = vpop.f32.mrb[0].mxu0
        %v6839 = vadd.f32 0.0, %v6838
        %v6840 = vpop.f32.mrb[0].mxu0
        %6841 = vmatprep.mubr.f32.mxu0 0.0
        %6842 = vmatmul.mubr.f32.gmra.mrb[0].mxu0 %v6684
        %v6843 = vpop.f32.mrb[0].mxu0
        %v6844 = vadd.f32 0.0, %v6843
        %v6845 = vpop.f32.mrb[0].mxu0
        %6846 = vmatprep.mubr.f32.mxu0 0.0
        %6847 = vmatmul.mubr.f32.gmra.mrb[0].mxu0 %v6685
        %v6848 = vpop.f32.mrb[0].mxu0
        %v6849 = vadd.f32 0.0, %v6848
        %v6850 = vpop.f32.mrb[0].mxu0
        %6851 = vmatprep.mubr.f32.mxu0 0.0
        %6852 = vmatmul.mubr.f32.gmra.mrb[0].mxu0 %v6686
        %v6853 = vpop.f32.mrb[0].mxu0
        %v6854 = vadd.f32 0.0, %v6853
        %v6855 = vpop.f32.mrb[0].mxu0
        %6856 = vmatprep.mubr.f32.mxu0 0.0
        %6857 = vmatmul.mubr.f32.gmra.mrb[0].mxu0 %v6687
        %v6858 = vpop.f32.mrb[0].mxu0
        %v6859 = vadd.f32 0.0, %v6858
        %v6860 = vpop.f32.mrb[0].mxu0
        %6861 = vmatprep.mubr.f32.mxu0 0.0
        %6862 = vmatmul.mubr.f32.gmra.mrb[0].mxu0 %v6688
        %v6863 = vpop.f32.mrb[0].mxu0
        %v6864 = vadd.f32 0.0, %v6863
        %v6865 = vpop.f32.mrb[0].mxu0
        %6866 = vmatprep.mubr.f32.mxu0 0.0
        %6867 = vmatmul.mubr.f32.gmra.mrb[0].mxu0 %v6689
        %v6868 = vpop.f32.mrb[0].mxu0
        %v6869 = vadd.f32 0.0, %v6868
        %v6870 = vpop.f32.mrb[0].mxu0
        %6871 = vmatprep.mubr.f32.mxu0 0.0
        %6872 = vmatmul.mubr.f32.gmra.mrb[0].mxu0 %v6690
        %v6873 = vpop.f32.mrb[0].mxu0
        %v6874 = vadd.f32 0.0, %v6873
        %v6875 = vpop.f32.mrb[0].mxu0
        %6876 = vmatprep.mubr.f32.mxu0 0.0
        %6877 = vmatmul.mubr.f32.gmra.mrb[0].mxu0 %v6691
        %v6878 = vpop.f32.mrb[0].mxu0
        %v6879 = vadd.f32 0.0, %v6878
        %v6880 = vpop.f32.mrb[0].mxu0
        %6881 = vmatprep.mubr.f32.mxu0 0.0
        %6882 = vmatmul.mubr.f32.gmra.mrb[0].mxu0 %v6692
        %v6883 = vpop.f32.mrb[0].mxu0
        %v6884 = vadd.f32 0.0, %v6883
        %v6885 = vpop.f32.mrb[0].mxu0
        %6886 = vmatprep.mubr.f32.mxu0 0.0
        %6887 = vmatmul.mubr.f32.gmra.mrb[0].mxu0 %v6693
        %v6888 = vpop.f32.mrb[0].mxu0
        %v6889 = vadd.f32 0.0, %v6888
        %v6890 = vpop.f32.mrb[0].mxu0
        %6891 = vmatprep.mubr.f32.mxu0 0.0
        %6892 = vmatmul.mubr.f32.gmra.mrb[0].mxu0 %v6694
        %v6893 = vpop.f32.mrb[0].mxu0
        %v6894 = vadd.f32 0.0, %v6893
        %v6895 = vpop.f32.mrb[0].mxu0
        %6896 = vmatprep.mubr.f32.mxu0 0.0
        %6897 = vmatmul.mubr.f32.gmra.mrb[0].mxu0 %v6695
        %v6898 = vpop.f32.mrb[0].mxu0
        %v6899 = vadd.f32 0.0, %v6898
        %v6900 = vpop.f32.mrb[0].mxu0
        %6901 = vmatprep.mubr.f32.mxu0 0.0
        %6902 = vmatmul.mubr.f32.gmra.mrb[0].mxu0 %v6696
        %v6903 = vpop.f32.mrb[0].mxu0
        %v6904 = vadd.f32 0.0, %v6903
        %v6905 = vpop.f32.mrb[0].mxu0
        %6906 = vmatprep.mubr.f32.mxu0 0.0
        %6907 = vmatmul.mubr.f32.gmra.mrb[0].mxu0 %v6697
        %v6908 = vpop.f32.mrb[0].mxu0
        %v6909 = vadd.f32 0.0, %v6908
        %v6910 = vpop.f32.mrb[0].mxu0
        %6911 = vmatprep.mubr.f32.mxu0 0.0
        %6912 = vmatmul.mubr.f32.gmra.mrb[0].mxu0 %v6698
        %v6913 = vpop.f32.mrb[0].mxu0
        %v6914 = vadd.f32 0.0, %v6913
        %v6915 = vpop.f32.mrb[0].mxu0
        %6916 = vmatprep.mubr.f32.mxu0 0.0
        %6917 = vmatmul.mubr.f32.gmra.mrb[0].mxu0 %v6699
        %v6918 = vpop.f32.mrb[0].mxu0
        %v6919 = vadd.f32 0.0, %v6918
        %v6920 = vpop.f32.mrb[0].mxu0
        %6921 = vmatprep.mubr.f32.mxu0 0.0
        %6922 = vmatmul.mubr.f32.gmra.mrb[0].mxu0 %v6700
        %v6923 = vpop.f32.mrb[0].mxu0
        %v6924 = vadd.f32 0.0, %v6923
        %v6925 = vpop.f32.mrb[0].mxu0
        %6926 = vmatprep.mubr.f32.mxu0 0.0
        %6927 = vmatmul.mubr.f32.gmra.mrb[0].mxu0 %v6701
        %v6928 = vpop.f32.mrb[0].mxu0
        %v6929 = vadd.f32 0.0, %v6928
        %v6930 = vpop.f32.mrb[0].mxu0
        %6931 = vdwg.mxu0
        %v6932 = vadd.f32 %v6638, %v6774
        %v6933 = vadd.f32 %v6639, %v6779
        %v6934 = vadd.f32 %v6640, %v6784
        %v6935 = vadd.f32 %v6641, %v6789
        %v6936 = vadd.f32 %v6642, %v6794
        %v6937 = vadd.f32 %v6643, %v6799
        %v6938 = vadd.f32 %v6644, %v6804
        %v6939 = vadd.f32 %v6645, %v6809
        %v6940 = vadd.f32 %v6646, %v6814
        %v6941 = vadd.f32 %v6647, %v6819
        %v6942 = vadd.f32 %v6648, %v6824
        %v6943 = vadd.f32 %v6649, %v6829
        %v6944 = vadd.f32 %v6650, %v6834
        %v6945 = vadd.f32 %v6651, %v6839
        %v6946 = vadd.f32 %v6652, %v6844
        %v6947 = vadd.f32 %v6653, %v6849
        %v6948 = vadd.f32 %v6654, %v6854
        %v6949 = vadd.f32 %v6655, %v6859
        %v6950 = vadd.f32 %v6656, %v6864
        %v6951 = vadd.f32 %v6657, %v6869
        %v6952 = vadd.f32 %v6658, %v6874
        %v6953 = vadd.f32 %v6659, %v6879
        %v6954 = vadd.f32 %v6660, %v6884
        %v6955 = vadd.f32 %v6661, %v6889
        %v6956 = vadd.f32 %v6662, %v6894
        %v6957 = vadd.f32 %v6663, %v6899
        %v6958 = vadd.f32 %v6664, %v6904
        %v6959 = vadd.f32 %v6665, %v6909
        %v6960 = vadd.f32 %v6666, %v6914
        %v6961 = vadd.f32 %v6667, %v6919
        %v6962 = vadd.f32 %v6668, %v6924
        %v6963 = vadd.f32 %v6669, %v6929
        %s6964 = scalar_lea.vmem %s222, 144
        %v6965 = vld [vmem:[%s6964] sm:$0xff]
        %v6966 = vld [vmem:[%s6964 + $0x8] sm:$0xff]
        %v6967 = vld [vmem:[%s6964 + $0x18] sm:$0xff]
        %v6968 = vld [vmem:[%s6964 + $0x20] sm:$0xff]
        %v6969 = vld [vmem:[%s6964 + $0x30] sm:$0xff]
        %v6970 = vld [vmem:[%s6964 + $0x38] sm:$0xff]
        %v6971 = vld [vmem:[%s6964 + $0x48] sm:$0xff]
        %v6972 = vld [vmem:[%s6964 + $0x50] sm:$0xff]
        %v6973 = vld [vmem:[%s6964 + $0x60] sm:$0xff]
        %v6974 = vld [vmem:[%s6964 + $0x68] sm:$0xff]
        %v6975 = vld [vmem:[%s6964 + $0x78] sm:$0xff]
        %v6976 = vld [vmem:[%s6964 + $0x80] sm:$0xff]
        %v6977 = vld [vmem:[%s6964 + $0x90] sm:$0xff]
        %v6978 = vld [vmem:[%s6964 + $0x98] sm:$0xff]
        %v6979 = vld [vmem:[%s6964 + $0xa8] sm:$0xff]
        %v6980 = vld [vmem:[%s6964 + $0xb0] sm:$0xff]
        %v6981 = vld [vmem:[%s6964 + $0xc0] sm:$0xff]
        %v6982 = vld [vmem:[%s6964 + $0xc8] sm:$0xff]
        %v6983 = vld [vmem:[%s6964 + $0xd8] sm:$0xff]
        %v6984 = vld [vmem:[%s6964 + $0xe0] sm:$0xff]
        %v6985 = vld [vmem:[%s6964 + $0xf0] sm:$0xff]
        %v6986 = vld [vmem:[%s6964 + $0xf8] sm:$0xff]
        %v6987 = vld [vmem:[%s6964 + $0x108] sm:$0xff]
        %v6988 = vld [vmem:[%s6964 + $0x110] sm:$0xff]
        %v6989 = vld [vmem:[%s6964 + $0x120] sm:$0xff]
        %v6990 = vld [vmem:[%s6964 + $0x128] sm:$0xff]
        %v6991 = vld [vmem:[%s6964 + $0x138] sm:$0xff]
        %v6992 = vld [vmem:[%s6964 + $0x140] sm:$0xff]
        %v6993 = vld [vmem:[%s6964 + $0x150] sm:$0xff]
        %v6994 = vld [vmem:[%s6964 + $0x158] sm:$0xff]
        %v6995 = vld [vmem:[%s6964 + $0x168] sm:$0xff]
        %v6996 = vld [vmem:[%s6964 + $0x170] sm:$0xff]
        %s6997 = scalar_lea.vmem %s2, 672
        %v6998 = vld [vmem:[%s6997] sm:$0xff]
        %v6999 = vld [vmem:[%s6997 + $0x8] sm:$0xff]
        %v7000 = vld [vmem:[%s6997 + $0x10] sm:$0xff]
        %v7001 = vld [vmem:[%s6997 + $0x18] sm:$0xff]
        %7002 = vmatprep.subr.mxu0 0.0
        %7003 = vmatpush1.xpose.msra.mxu0 %v6998
        %7004 = vmatprep.subr.mxu0 0.0
        %7005 = vmatpush1.xpose.msra.mxu0 %v6999
        %7006 = vmatprep.subr.mxu0 0.0
        %7007 = vmatpush1.xpose.msra.mxu0 %v7000
        %7008 = vmatprep.subr.mxu0 0.0
        %7009 = vmatpush1.xpose.msra.mxu0 %v7001
        %7010 = vmatprep.subr.mxu0 0.0
        %7011 = vmatpush1.xpose.msra.mxu0 0.0
        %7012 = vmatprep.subr.mxu0 0.0
        %7013 = vmatpush1.xpose.msra.mxu0 0.0
        %7014 = vmatprep.subr.mxu0 0.0
        %7015 = vmatpush1.xpose.msra.mxu0 0.0
        %7016 = vmatprep.subr.mxu0 0.0
        %7017 = vmatpush1.xpose.msra.mxu0 0.0
        %7018 = vmatprep.subr.mxu0 0.0
        %7019 = vmatpush1.xpose.msra.mxu0 0.0
        %7020 = vmatprep.subr.mxu0 0.0
        %7021 = vmatpush1.xpose.msra.mxu0 0.0
        %7022 = vmatprep.subr.mxu0 0.0
        %7023 = vmatpush1.xpose.msra.mxu0 0.0
        %7024 = vmatprep.subr.mxu0 0.0
        %7025 = vmatpush1.xpose.msra.mxu0 0.0
        %7026 = vmatprep.subr.mxu0 0.0
        %7027 = vmatpush1.xpose.msra.mxu0 0.0
        %7028 = vmatprep.subr.mxu0 0.0
        %7029 = vmatpush1.xpose.msra.mxu0 0.0
        %7030 = vmatprep.subr.mxu0 0.0
        %7031 = vmatpush1.xpose.msra.mxu0 0.0
        %7032 = vmatprep.subr.mxu0 0.0
        %7033 = vmatpush1.xpose.msra.mxu0 0.0
        %7034 = vmatprep.subr.mxu0 0.0
        %7035 = vmatpush1.xpose.msra.mxu0 0.0
        %7036 = vmatprep.subr.mxu0 0.0
        %7037 = vmatpush1.xpose.msra.mxu0 0.0
        %7038 = vmatprep.subr.mxu0 0.0
        %7039 = vmatpush1.xpose.msra.mxu0 0.0
        %7040 = vmatprep.subr.mxu0 0.0
        %7041 = vmatpush1.xpose.msra.mxu0 0.0
        %7042 = vmatprep.subr.mxu0 0.0
        %7043 = vmatpush1.xpose.msra.mxu0 0.0
        %7044 = vmatprep.subr.mxu0 0.0
        %7045 = vmatpush1.xpose.msra.mxu0 0.0
        %7046 = vmatprep.subr.mxu0 0.0
        %7047 = vmatpush1.xpose.msra.mxu0 0.0
        %7048 = vmatprep.subr.mxu0 0.0
        %7049 = vmatpush1.xpose.msra.mxu0 0.0
        %7050 = vmatprep.subr.mxu0 0.0
        %7051 = vmatpush1.xpose.msra.mxu0 0.0
        %7052 = vmatprep.subr.mxu0 0.0
        %7053 = vmatpush1.xpose.msra.mxu0 0.0
        %7054 = vmatprep.subr.mxu0 0.0
        %7055 = vmatpush1.xpose.msra.mxu0 0.0
        %7056 = vmatprep.subr.mxu0 0.0
        %7057 = vmatpush1.xpose.msra.mxu0 0.0
        %7058 = vmatprep.subr.mxu0 0.0
        %7059 = vmatpush1.xpose.msra.mxu0 0.0
        %7060 = vmatprep.subr.mxu0 0.0
        %7061 = vmatpush1.xpose.msra.mxu0 0.0
        %7062 = vmatprep.subr.mxu0 0.0
        %7063 = vmatpush1.xpose.msra.mxu0 0.0
        %7064 = vmatprep.subr.mxu0 0.0
        %7065 = vmatpush1.xpose.msra.mxu0 0.0
        %7066 = vmatprep.mubr.f32.mxu0 0.0
        %7067 = vmatmul.mubr.f32.gmra.mrb[0].mxu0 %v6965
        %v7068 = vpop.f32.mrb[0].mxu0
        %v7069 = vadd.f32 0.0, %v7068
        %v7070 = vpop.f32.mrb[0].mxu0
        %7071 = vmatprep.mubr.f32.mxu0 0.0
        %7072 = vmatmul.mubr.f32.gmra.mrb[0].mxu0 %v6966
        %v7073 = vpop.f32.mrb[0].mxu0
        %v7074 = vadd.f32 0.0, %v7073
        %v7075 = vpop.f32.mrb[0].mxu0
        %7076 = vmatprep.mubr.f32.mxu0 0.0
        %7077 = vmatmul.mubr.f32.gmra.mrb[0].mxu0 %v6967
        %v7078 = vpop.f32.mrb[0].mxu0
        %v7079 = vadd.f32 0.0, %v7078
        %v7080 = vpop.f32.mrb[0].mxu0
        %7081 = vmatprep.mubr.f32.mxu0 0.0
        %7082 = vmatmul.mubr.f32.gmra.mrb[0].mxu0 %v6968
        %v7083 = vpop.f32.mrb[0].mxu0
        %v7084 = vadd.f32 0.0, %v7083
        %v7085 = vpop.f32.mrb[0].mxu0
        %7086 = vmatprep.mubr.f32.mxu0 0.0
        %7087 = vmatmul.mubr.f32.gmra.mrb[0].mxu0 %v6969
        %v7088 = vpop.f32.mrb[0].mxu0
        %v7089 = vadd.f32 0.0, %v7088
        %v7090 = vpop.f32.mrb[0].mxu0
        %7091 = vmatprep.mubr.f32.mxu0 0.0
        %7092 = vmatmul.mubr.f32.gmra.mrb[0].mxu0 %v6970
        %v7093 = vpop.f32.mrb[0].mxu0
        %v7094 = vadd.f32 0.0, %v7093
        %v7095 = vpop.f32.mrb[0].mxu0
        %7096 = vmatprep.mubr.f32.mxu0 0.0
        %7097 = vmatmul.mubr.f32.gmra.mrb[0].mxu0 %v6971
        %v7098 = vpop.f32.mrb[0].mxu0
        %v7099 = vadd.f32 0.0, %v7098
        %v7100 = vpop.f32.mrb[0].mxu0
        %7101 = vmatprep.mubr.f32.mxu0 0.0
        %7102 = vmatmul.mubr.f32.gmra.mrb[0].mxu0 %v6972
        %v7103 = vpop.f32.mrb[0].mxu0
        %v7104 = vadd.f32 0.0, %v7103
        %v7105 = vpop.f32.mrb[0].mxu0
        %7106 = vmatprep.mubr.f32.mxu0 0.0
        %7107 = vmatmul.mubr.f32.gmra.mrb[0].mxu0 %v6973
        %v7108 = vpop.f32.mrb[0].mxu0
        %v7109 = vadd.f32 0.0, %v7108
        %v7110 = vpop.f32.mrb[0].mxu0
        %7111 = vmatprep.mubr.f32.mxu0 0.0
        %7112 = vmatmul.mubr.f32.gmra.mrb[0].mxu0 %v6974
        %v7113 = vpop.f32.mrb[0].mxu0
        %v7114 = vadd.f32 0.0, %v7113
        %v7115 = vpop.f32.mrb[0].mxu0
        %7116 = vmatprep.mubr.f32.mxu0 0.0
        %7117 = vmatmul.mubr.f32.gmra.mrb[0].mxu0 %v6975
        %v7118 = vpop.f32.mrb[0].mxu0
        %v7119 = vadd.f32 0.0, %v7118
        %v7120 = vpop.f32.mrb[0].mxu0
        %7121 = vmatprep.mubr.f32.mxu0 0.0
        %7122 = vmatmul.mubr.f32.gmra.mrb[0].mxu0 %v6976
        %v7123 = vpop.f32.mrb[0].mxu0
        %v7124 = vadd.f32 0.0, %v7123
        %v7125 = vpop.f32.mrb[0].mxu0
        %7126 = vmatprep.mubr.f32.mxu0 0.0
        %7127 = vmatmul.mubr.f32.gmra.mrb[0].mxu0 %v6977
        %v7128 = vpop.f32.mrb[0].mxu0
        %v7129 = vadd.f32 0.0, %v7128
        %v7130 = vpop.f32.mrb[0].mxu0
        %7131 = vmatprep.mubr.f32.mxu0 0.0
        %7132 = vmatmul.mubr.f32.gmra.mrb[0].mxu0 %v6978
        %v7133 = vpop.f32.mrb[0].mxu0
        %v7134 = vadd.f32 0.0, %v7133
        %v7135 = vpop.f32.mrb[0].mxu0
        %7136 = vmatprep.mubr.f32.mxu0 0.0
        %7137 = vmatmul.mubr.f32.gmra.mrb[0].mxu0 %v6979
        %v7138 = vpop.f32.mrb[0].mxu0
        %v7139 = vadd.f32 0.0, %v7138
        %v7140 = vpop.f32.mrb[0].mxu0
        %7141 = vmatprep.mubr.f32.mxu0 0.0
        %7142 = vmatmul.mubr.f32.gmra.mrb[0].mxu0 %v6980
        %v7143 = vpop.f32.mrb[0].mxu0
        %v7144 = vadd.f32 0.0, %v7143
        %v7145 = vpop.f32.mrb[0].mxu0
        %7146 = vmatprep.mubr.f32.mxu0 0.0
        %7147 = vmatmul.mubr.f32.gmra.mrb[0].mxu0 %v6981
        %v7148 = vpop.f32.mrb[0].mxu0
        %v7149 = vadd.f32 0.0, %v7148
        %v7150 = vpop.f32.mrb[0].mxu0
        %7151 = vmatprep.mubr.f32.mxu0 0.0
        %7152 = vmatmul.mubr.f32.gmra.mrb[0].mxu0 %v6982
        %v7153 = vpop.f32.mrb[0].mxu0
        %v7154 = vadd.f32 0.0, %v7153
        %v7155 = vpop.f32.mrb[0].mxu0
        %7156 = vmatprep.mubr.f32.mxu0 0.0
        %7157 = vmatmul.mubr.f32.gmra.mrb[0].mxu0 %v6983
        %v7158 = vpop.f32.mrb[0].mxu0
        %v7159 = vadd.f32 0.0, %v7158
        %v7160 = vpop.f32.mrb[0].mxu0
        %7161 = vmatprep.mubr.f32.mxu0 0.0
        %7162 = vmatmul.mubr.f32.gmra.mrb[0].mxu0 %v6984
        %v7163 = vpop.f32.mrb[0].mxu0
        %v7164 = vadd.f32 0.0, %v7163
        %v7165 = vpop.f32.mrb[0].mxu0
        %7166 = vmatprep.mubr.f32.mxu0 0.0
        %7167 = vmatmul.mubr.f32.gmra.mrb[0].mxu0 %v6985
        %v7168 = vpop.f32.mrb[0].mxu0
        %v7169 = vadd.f32 0.0, %v7168
        %v7170 = vpop.f32.mrb[0].mxu0
        %7171 = vmatprep.mubr.f32.mxu0 0.0
        %7172 = vmatmul.mubr.f32.gmra.mrb[0].mxu0 %v6986
        %v7173 = vpop.f32.mrb[0].mxu0
        %v7174 = vadd.f32 0.0, %v7173
        %v7175 = vpop.f32.mrb[0].mxu0
        %7176 = vmatprep.mubr.f32.mxu0 0.0
        %7177 = vmatmul.mubr.f32.gmra.mrb[0].mxu0 %v6987
        %v7178 = vpop.f32.mrb[0].mxu0
        %v7179 = vadd.f32 0.0, %v7178
        %v7180 = vpop.f32.mrb[0].mxu0
        %7181 = vmatprep.mubr.f32.mxu0 0.0
        %7182 = vmatmul.mubr.f32.gmra.mrb[0].mxu0 %v6988
        %v7183 = vpop.f32.mrb[0].mxu0
        %v7184 = vadd.f32 0.0, %v7183
        %v7185 = vpop.f32.mrb[0].mxu0
        %7186 = vmatprep.mubr.f32.mxu0 0.0
        %7187 = vmatmul.mubr.f32.gmra.mrb[0].mxu0 %v6989
        %v7188 = vpop.f32.mrb[0].mxu0
        %v7189 = vadd.f32 0.0, %v7188
        %v7190 = vpop.f32.mrb[0].mxu0
        %7191 = vmatprep.mubr.f32.mxu0 0.0
        %7192 = vmatmul.mubr.f32.gmra.mrb[0].mxu0 %v6990
        %v7193 = vpop.f32.mrb[0].mxu0
        %v7194 = vadd.f32 0.0, %v7193
        %v7195 = vpop.f32.mrb[0].mxu0
        %7196 = vmatprep.mubr.f32.mxu0 0.0
        %7197 = vmatmul.mubr.f32.gmra.mrb[0].mxu0 %v6991
        %v7198 = vpop.f32.mrb[0].mxu0
        %v7199 = vadd.f32 0.0, %v7198
        %v7200 = vpop.f32.mrb[0].mxu0
        %7201 = vmatprep.mubr.f32.mxu0 0.0
        %7202 = vmatmul.mubr.f32.gmra.mrb[0].mxu0 %v6992
        %v7203 = vpop.f32.mrb[0].mxu0
        %v7204 = vadd.f32 0.0, %v7203
        %v7205 = vpop.f32.mrb[0].mxu0
        %7206 = vmatprep.mubr.f32.mxu0 0.0
        %7207 = vmatmul.mubr.f32.gmra.mrb[0].mxu0 %v6993
        %v7208 = vpop.f32.mrb[0].mxu0
        %v7209 = vadd.f32 0.0, %v7208
        %v7210 = vpop.f32.mrb[0].mxu0
        %7211 = vmatprep.mubr.f32.mxu0 0.0
        %7212 = vmatmul.mubr.f32.gmra.mrb[0].mxu0 %v6994
        %v7213 = vpop.f32.mrb[0].mxu0
        %v7214 = vadd.f32 0.0, %v7213
        %v7215 = vpop.f32.mrb[0].mxu0
        %7216 = vmatprep.mubr.f32.mxu0 0.0
        %7217 = vmatmul.mubr.f32.gmra.mrb[0].mxu0 %v6995
        %v7218 = vpop.f32.mrb[0].mxu0
        %v7219 = vadd.f32 0.0, %v7218
        %v7220 = vpop.f32.mrb[0].mxu0
        %7221 = vmatprep.mubr.f32.mxu0 0.0
        %7222 = vmatmul.mubr.f32.gmra.mrb[0].mxu0 %v6996
        %v7223 = vpop.f32.mrb[0].mxu0
        %v7224 = vadd.f32 0.0, %v7223
        %v7225 = vpop.f32.mrb[0].mxu0
        %7226 = vdwg.mxu0
        %v7227 = vadd.f32 %v6932, %v7069
        %v7228 = vadd.f32 %v6933, %v7074
        %v7229 = vadd.f32 %v6934, %v7079
        %v7230 = vadd.f32 %v6935, %v7084
        %v7231 = vadd.f32 %v6936, %v7089
        %v7232 = vadd.f32 %v6937, %v7094
        %v7233 = vadd.f32 %v6938, %v7099
        %v7234 = vadd.f32 %v6939, %v7104
        %v7235 = vadd.f32 %v6940, %v7109
        %v7236 = vadd.f32 %v6941, %v7114
        %v7237 = vadd.f32 %v6942, %v7119
        %v7238 = vadd.f32 %v6943, %v7124
        %v7239 = vadd.f32 %v6944, %v7129
        %v7240 = vadd.f32 %v6945, %v7134
        %v7241 = vadd.f32 %v6946, %v7139
        %v7242 = vadd.f32 %v6947, %v7144
        %v7243 = vadd.f32 %v6948, %v7149
        %v7244 = vadd.f32 %v6949, %v7154
        %v7245 = vadd.f32 %v6950, %v7159
        %v7246 = vadd.f32 %v6951, %v7164
        %v7247 = vadd.f32 %v6952, %v7169
        %v7248 = vadd.f32 %v6953, %v7174
        %v7249 = vadd.f32 %v6954, %v7179
        %v7250 = vadd.f32 %v6955, %v7184
        %v7251 = vadd.f32 %v6956, %v7189
        %v7252 = vadd.f32 %v6957, %v7194
        %v7253 = vadd.f32 %v6958, %v7199
        %v7254 = vadd.f32 %v6959, %v7204
        %v7255 = vadd.f32 %v6960, %v7209
        %v7256 = vadd.f32 %v6961, %v7214
        %v7257 = vadd.f32 %v6962, %v7219
        %v7258 = vadd.f32 %v6963, %v7224
        %v7259 = vld [vmem:[%s6964 + $0x3] sm:$0xff]
        %v7260 = vld [vmem:[%s6964 + $0xb] sm:$0xff]
        %v7261 = vld [vmem:[%s6964 + $0x1b] sm:$0xff]
        %v7262 = vld [vmem:[%s6964 + $0x23] sm:$0xff]
        %v7263 = vld [vmem:[%s6964 + $0x33] sm:$0xff]
        %v7264 = vld [vmem:[%s6964 + $0x3b] sm:$0xff]
        %v7265 = vld [vmem:[%s6964 + $0x4b] sm:$0xff]
        %v7266 = vld [vmem:[%s6964 + $0x53] sm:$0xff]
        %v7267 = vld [vmem:[%s6964 + $0x63] sm:$0xff]
        %v7268 = vld [vmem:[%s6964 + $0x6b] sm:$0xff]
        %v7269 = vld [vmem:[%s6964 + $0x7b] sm:$0xff]
        %v7270 = vld [vmem:[%s6964 + $0x83] sm:$0xff]
        %v7271 = vld [vmem:[%s6964 + $0x93] sm:$0xff]
        %v7272 = vld [vmem:[%s6964 + $0x9b] sm:$0xff]
        %v7273 = vld [vmem:[%s6964 + $0xab] sm:$0xff]
        %v7274 = vld [vmem:[%s6964 + $0xb3] sm:$0xff]
        %v7275 = vld [vmem:[%s6964 + $0xc3] sm:$0xff]
        %v7276 = vld [vmem:[%s6964 + $0xcb] sm:$0xff]
        %v7277 = vld [vmem:[%s6964 + $0xdb] sm:$0xff]
        %v7278 = vld [vmem:[%s6964 + $0xe3] sm:$0xff]
        %v7279 = vld [vmem:[%s6964 + $0xf3] sm:$0xff]
        %v7280 = vld [vmem:[%s6964 + $0xfb] sm:$0xff]
        %v7281 = vld [vmem:[%s6964 + $0x10b] sm:$0xff]
        %v7282 = vld [vmem:[%s6964 + $0x113] sm:$0xff]
        %v7283 = vld [vmem:[%s6964 + $0x123] sm:$0xff]
        %v7284 = vld [vmem:[%s6964 + $0x12b] sm:$0xff]
        %v7285 = vld [vmem:[%s6964 + $0x13b] sm:$0xff]
        %v7286 = vld [vmem:[%s6964 + $0x143] sm:$0xff]
        %v7287 = vld [vmem:[%s6964 + $0x153] sm:$0xff]
        %v7288 = vld [vmem:[%s6964 + $0x15b] sm:$0xff]
        %v7289 = vld [vmem:[%s6964 + $0x16b] sm:$0xff]
        %v7290 = vld [vmem:[%s6964 + $0x173] sm:$0xff]
        %s7291 = scalar_lea.vmem %s2, 704
        %v7292 = vld [vmem:[%s7291] sm:$0xff]
        %v7293 = vld [vmem:[%s7291 + $0x8] sm:$0xff]
        %v7294 = vld [vmem:[%s7291 + $0x10] sm:$0xff]
        %v7295 = vld [vmem:[%s7291 + $0x18] sm:$0xff]
        %7296 = vmatprep.subr.mxu0 0.0
        %7297 = vmatpush1.xpose.msra.mxu0 %v7292
        %7298 = vmatprep.subr.mxu0 0.0
        %7299 = vmatpush1.xpose.msra.mxu0 %v7293
        %7300 = vmatprep.subr.mxu0 0.0
        %7301 = vmatpush1.xpose.msra.mxu0 %v7294
        %7302 = vmatprep.subr.mxu0 0.0
        %7303 = vmatpush1.xpose.msra.mxu0 %v7295
        %7304 = vmatprep.subr.mxu0 0.0
        %7305 = vmatpush1.xpose.msra.mxu0 0.0
        %7306 = vmatprep.subr.mxu0 0.0
        %7307 = vmatpush1.xpose.msra.mxu0 0.0
        %7308 = vmatprep.subr.mxu0 0.0
        %7309 = vmatpush1.xpose.msra.mxu0 0.0
        %7310 = vmatprep.subr.mxu0 0.0
        %7311 = vmatpush1.xpose.msra.mxu0 0.0
        %7312 = vmatprep.subr.mxu0 0.0
        %7313 = vmatpush1.xpose.msra.mxu0 0.0
        %7314 = vmatprep.subr.mxu0 0.0
        %7315 = vmatpush1.xpose.msra.mxu0 0.0
        %7316 = vmatprep.subr.mxu0 0.0
        %7317 = vmatpush1.xpose.msra.mxu0 0.0
        %7318 = vmatprep.subr.mxu0 0.0
        %7319 = vmatpush1.xpose.msra.mxu0 0.0
        %7320 = vmatprep.subr.mxu0 0.0
        %7321 = vmatpush1.xpose.msra.mxu0 0.0
        %7322 = vmatprep.subr.mxu0 0.0
        %7323 = vmatpush1.xpose.msra.mxu0 0.0
        %7324 = vmatprep.subr.mxu0 0.0
        %7325 = vmatpush1.xpose.msra.mxu0 0.0
        %7326 = vmatprep.subr.mxu0 0.0
        %7327 = vmatpush1.xpose.msra.mxu0 0.0
        %7328 = vmatprep.subr.mxu0 0.0
        %7329 = vmatpush1.xpose.msra.mxu0 0.0
        %7330 = vmatprep.subr.mxu0 0.0
        %7331 = vmatpush1.xpose.msra.mxu0 0.0
        %7332 = vmatprep.subr.mxu0 0.0
        %7333 = vmatpush1.xpose.msra.mxu0 0.0
        %7334 = vmatprep.subr.mxu0 0.0
        %7335 = vmatpush1.xpose.msra.mxu0 0.0
        %7336 = vmatprep.subr.mxu0 0.0
        %7337 = vmatpush1.xpose.msra.mxu0 0.0
        %7338 = vmatprep.subr.mxu0 0.0
        %7339 = vmatpush1.xpose.msra.mxu0 0.0
        %7340 = vmatprep.subr.mxu0 0.0
        %7341 = vmatpush1.xpose.msra.mxu0 0.0
        %7342 = vmatprep.subr.mxu0 0.0
        %7343 = vmatpush1.xpose.msra.mxu0 0.0
        %7344 = vmatprep.subr.mxu0 0.0
        %7345 = vmatpush1.xpose.msra.mxu0 0.0
        %7346 = vmatprep.subr.mxu0 0.0
        %7347 = vmatpush1.xpose.msra.mxu0 0.0
        %7348 = vmatprep.subr.mxu0 0.0
        %7349 = vmatpush1.xpose.msra.mxu0 0.0
        %7350 = vmatprep.subr.mxu0 0.0
        %7351 = vmatpush1.xpose.msra.mxu0 0.0
        %7352 = vmatprep.subr.mxu0 0.0
        %7353 = vmatpush1.xpose.msra.mxu0 0.0
        %7354 = vmatprep.subr.mxu0 0.0
        %7355 = vmatpush1.xpose.msra.mxu0 0.0
        %7356 = vmatprep.subr.mxu0 0.0
        %7357 = vmatpush1.xpose.msra.mxu0 0.0
        %7358 = vmatprep.subr.mxu0 0.0
        %7359 = vmatpush1.xpose.msra.mxu0 0.0
        %7360 = vmatprep.mubr.f32.mxu0 0.0
        %7361 = vmatmul.mubr.f32.gmra.mrb[0].mxu0 %v7259
        %v7362 = vpop.f32.mrb[0].mxu0
        %v7363 = vadd.f32 0.0, %v7362
        %v7364 = vpop.f32.mrb[0].mxu0
        %7365 = vmatprep.mubr.f32.mxu0 0.0
        %7366 = vmatmul.mubr.f32.gmra.mrb[0].mxu0 %v7260
        %v7367 = vpop.f32.mrb[0].mxu0
        %v7368 = vadd.f32 0.0, %v7367
        %v7369 = vpop.f32.mrb[0].mxu0
        %7370 = vmatprep.mubr.f32.mxu0 0.0
        %7371 = vmatmul.mubr.f32.gmra.mrb[0].mxu0 %v7261
        %v7372 = vpop.f32.mrb[0].mxu0
        %v7373 = vadd.f32 0.0, %v7372
        %v7374 = vpop.f32.mrb[0].mxu0
        %7375 = vmatprep.mubr.f32.mxu0 0.0
        %7376 = vmatmul.mubr.f32.gmra.mrb[0].mxu0 %v7262
        %v7377 = vpop.f32.mrb[0].mxu0
        %v7378 = vadd.f32 0.0, %v7377
        %v7379 = vpop.f32.mrb[0].mxu0
        %7380 = vmatprep.mubr.f32.mxu0 0.0
        %7381 = vmatmul.mubr.f32.gmra.mrb[0].mxu0 %v7263
        %v7382 = vpop.f32.mrb[0].mxu0
        %v7383 = vadd.f32 0.0, %v7382
        %v7384 = vpop.f32.mrb[0].mxu0
        %7385 = vmatprep.mubr.f32.mxu0 0.0
        %7386 = vmatmul.mubr.f32.gmra.mrb[0].mxu0 %v7264
        %v7387 = vpop.f32.mrb[0].mxu0
        %v7388 = vadd.f32 0.0, %v7387
        %v7389 = vpop.f32.mrb[0].mxu0
        %7390 = vmatprep.mubr.f32.mxu0 0.0
        %7391 = vmatmul.mubr.f32.gmra.mrb[0].mxu0 %v7265
        %v7392 = vpop.f32.mrb[0].mxu0
        %v7393 = vadd.f32 0.0, %v7392
        %v7394 = vpop.f32.mrb[0].mxu0
        %7395 = vmatprep.mubr.f32.mxu0 0.0
        %7396 = vmatmul.mubr.f32.gmra.mrb[0].mxu0 %v7266
        %v7397 = vpop.f32.mrb[0].mxu0
        %v7398 = vadd.f32 0.0, %v7397
        %v7399 = vpop.f32.mrb[0].mxu0
        %7400 = vmatprep.mubr.f32.mxu0 0.0
        %7401 = vmatmul.mubr.f32.gmra.mrb[0].mxu0 %v7267
        %v7402 = vpop.f32.mrb[0].mxu0
        %v7403 = vadd.f32 0.0, %v7402
        %v7404 = vpop.f32.mrb[0].mxu0
        %7405 = vmatprep.mubr.f32.mxu0 0.0
        %7406 = vmatmul.mubr.f32.gmra.mrb[0].mxu0 %v7268
        %v7407 = vpop.f32.mrb[0].mxu0
        %v7408 = vadd.f32 0.0, %v7407
        %v7409 = vpop.f32.mrb[0].mxu0
        %7410 = vmatprep.mubr.f32.mxu0 0.0
        %7411 = vmatmul.mubr.f32.gmra.mrb[0].mxu0 %v7269
        %v7412 = vpop.f32.mrb[0].mxu0
        %v7413 = vadd.f32 0.0, %v7412
        %v7414 = vpop.f32.mrb[0].mxu0
        %7415 = vmatprep.mubr.f32.mxu0 0.0
        %7416 = vmatmul.mubr.f32.gmra.mrb[0].mxu0 %v7270
        %v7417 = vpop.f32.mrb[0].mxu0
        %v7418 = vadd.f32 0.0, %v7417
        %v7419 = vpop.f32.mrb[0].mxu0
        %7420 = vmatprep.mubr.f32.mxu0 0.0
        %7421 = vmatmul.mubr.f32.gmra.mrb[0].mxu0 %v7271
        %v7422 = vpop.f32.mrb[0].mxu0
        %v7423 = vadd.f32 0.0, %v7422
        %v7424 = vpop.f32.mrb[0].mxu0
        %7425 = vmatprep.mubr.f32.mxu0 0.0
        %7426 = vmatmul.mubr.f32.gmra.mrb[0].mxu0 %v7272
        %v7427 = vpop.f32.mrb[0].mxu0
        %v7428 = vadd.f32 0.0, %v7427
        %v7429 = vpop.f32.mrb[0].mxu0
        %7430 = vmatprep.mubr.f32.mxu0 0.0
        %7431 = vmatmul.mubr.f32.gmra.mrb[0].mxu0 %v7273
        %v7432 = vpop.f32.mrb[0].mxu0
        %v7433 = vadd.f32 0.0, %v7432
        %v7434 = vpop.f32.mrb[0].mxu0
        %7435 = vmatprep.mubr.f32.mxu0 0.0
        %7436 = vmatmul.mubr.f32.gmra.mrb[0].mxu0 %v7274
        %v7437 = vpop.f32.mrb[0].mxu0
        %v7438 = vadd.f32 0.0, %v7437
        %v7439 = vpop.f32.mrb[0].mxu0
        %7440 = vmatprep.mubr.f32.mxu0 0.0
        %7441 = vmatmul.mubr.f32.gmra.mrb[0].mxu0 %v7275
        %v7442 = vpop.f32.mrb[0].mxu0
        %v7443 = vadd.f32 0.0, %v7442
        %v7444 = vpop.f32.mrb[0].mxu0
        %7445 = vmatprep.mubr.f32.mxu0 0.0
        %7446 = vmatmul.mubr.f32.gmra.mrb[0].mxu0 %v7276
        %v7447 = vpop.f32.mrb[0].mxu0
        %v7448 = vadd.f32 0.0, %v7447
        %v7449 = vpop.f32.mrb[0].mxu0
        %7450 = vmatprep.mubr.f32.mxu0 0.0
        %7451 = vmatmul.mubr.f32.gmra.mrb[0].mxu0 %v7277
        %v7452 = vpop.f32.mrb[0].mxu0
        %v7453 = vadd.f32 0.0, %v7452
        %v7454 = vpop.f32.mrb[0].mxu0
        %7455 = vmatprep.mubr.f32.mxu0 0.0
        %7456 = vmatmul.mubr.f32.gmra.mrb[0].mxu0 %v7278
        %v7457 = vpop.f32.mrb[0].mxu0
        %v7458 = vadd.f32 0.0, %v7457
        %v7459 = vpop.f32.mrb[0].mxu0
        %7460 = vmatprep.mubr.f32.mxu0 0.0
        %7461 = vmatmul.mubr.f32.gmra.mrb[0].mxu0 %v7279
        %v7462 = vpop.f32.mrb[0].mxu0
        %v7463 = vadd.f32 0.0, %v7462
        %v7464 = vpop.f32.mrb[0].mxu0
        %7465 = vmatprep.mubr.f32.mxu0 0.0
        %7466 = vmatmul.mubr.f32.gmra.mrb[0].mxu0 %v7280
        %v7467 = vpop.f32.mrb[0].mxu0
        %v7468 = vadd.f32 0.0, %v7467
        %v7469 = vpop.f32.mrb[0].mxu0
        %7470 = vmatprep.mubr.f32.mxu0 0.0
        %7471 = vmatmul.mubr.f32.gmra.mrb[0].mxu0 %v7281
        %v7472 = vpop.f32.mrb[0].mxu0
        %v7473 = vadd.f32 0.0, %v7472
        %v7474 = vpop.f32.mrb[0].mxu0
        %7475 = vmatprep.mubr.f32.mxu0 0.0
        %7476 = vmatmul.mubr.f32.gmra.mrb[0].mxu0 %v7282
        %v7477 = vpop.f32.mrb[0].mxu0
        %v7478 = vadd.f32 0.0, %v7477
        %v7479 = vpop.f32.mrb[0].mxu0
        %7480 = vmatprep.mubr.f32.mxu0 0.0
        %7481 = vmatmul.mubr.f32.gmra.mrb[0].mxu0 %v7283
        %v7482 = vpop.f32.mrb[0].mxu0
        %v7483 = vadd.f32 0.0, %v7482
        %v7484 = vpop.f32.mrb[0].mxu0
        %7485 = vmatprep.mubr.f32.mxu0 0.0
        %7486 = vmatmul.mubr.f32.gmra.mrb[0].mxu0 %v7284
        %v7487 = vpop.f32.mrb[0].mxu0
        %v7488 = vadd.f32 0.0, %v7487
        %v7489 = vpop.f32.mrb[0].mxu0
        %7490 = vmatprep.mubr.f32.mxu0 0.0
        %7491 = vmatmul.mubr.f32.gmra.mrb[0].mxu0 %v7285
        %v7492 = vpop.f32.mrb[0].mxu0
        %v7493 = vadd.f32 0.0, %v7492
        %v7494 = vpop.f32.mrb[0].mxu0
        %7495 = vmatprep.mubr.f32.mxu0 0.0
        %7496 = vmatmul.mubr.f32.gmra.mrb[0].mxu0 %v7286
        %v7497 = vpop.f32.mrb[0].mxu0
        %v7498 = vadd.f32 0.0, %v7497
        %v7499 = vpop.f32.mrb[0].mxu0
        %7500 = vmatprep.mubr.f32.mxu0 0.0
        %7501 = vmatmul.mubr.f32.gmra.mrb[0].mxu0 %v7287
        %v7502 = vpop.f32.mrb[0].mxu0
        %v7503 = vadd.f32 0.0, %v7502
        %v7504 = vpop.f32.mrb[0].mxu0
        %7505 = vmatprep.mubr.f32.mxu0 0.0
        %7506 = vmatmul.mubr.f32.gmra.mrb[0].mxu0 %v7288
        %v7507 = vpop.f32.mrb[0].mxu0
        %v7508 = vadd.f32 0.0, %v7507
        %v7509 = vpop.f32.mrb[0].mxu0
        %7510 = vmatprep.mubr.f32.mxu0 0.0
        %7511 = vmatmul.mubr.f32.gmra.mrb[0].mxu0 %v7289
        %v7512 = vpop.f32.mrb[0].mxu0
        %v7513 = vadd.f32 0.0, %v7512
        %v7514 = vpop.f32.mrb[0].mxu0
        %7515 = vmatprep.mubr.f32.mxu0 0.0
        %7516 = vmatmul.mubr.f32.gmra.mrb[0].mxu0 %v7290
        %v7517 = vpop.f32.mrb[0].mxu0
        %v7518 = vadd.f32 0.0, %v7517
        %v7519 = vpop.f32.mrb[0].mxu0
        %7520 = vdwg.mxu0
        %v7521 = vadd.f32 %v7227, %v7363
        %v7522 = vadd.f32 %v7228, %v7368
        %v7523 = vadd.f32 %v7229, %v7373
        %v7524 = vadd.f32 %v7230, %v7378
        %v7525 = vadd.f32 %v7231, %v7383
        %v7526 = vadd.f32 %v7232, %v7388
        %v7527 = vadd.f32 %v7233, %v7393
        %v7528 = vadd.f32 %v7234, %v7398
        %v7529 = vadd.f32 %v7235, %v7403
        %v7530 = vadd.f32 %v7236, %v7408
        %v7531 = vadd.f32 %v7237, %v7413
        %v7532 = vadd.f32 %v7238, %v7418
        %v7533 = vadd.f32 %v7239, %v7423
        %v7534 = vadd.f32 %v7240, %v7428
        %v7535 = vadd.f32 %v7241, %v7433
        %v7536 = vadd.f32 %v7242, %v7438
        %v7537 = vadd.f32 %v7243, %v7443
        %v7538 = vadd.f32 %v7244, %v7448
        %v7539 = vadd.f32 %v7245, %v7453
        %v7540 = vadd.f32 %v7246, %v7458
        %v7541 = vadd.f32 %v7247, %v7463
        %v7542 = vadd.f32 %v7248, %v7468
        %v7543 = vadd.f32 %v7249, %v7473
        %v7544 = vadd.f32 %v7250, %v7478
        %v7545 = vadd.f32 %v7251, %v7483
        %v7546 = vadd.f32 %v7252, %v7488
        %v7547 = vadd.f32 %v7253, %v7493
        %v7548 = vadd.f32 %v7254, %v7498
        %v7549 = vadd.f32 %v7255, %v7503
        %v7550 = vadd.f32 %v7256, %v7508
        %v7551 = vadd.f32 %v7257, %v7513
        %v7552 = vadd.f32 %v7258, %v7518
        %v7553 = vld [vmem:[%s6964 + $0x6] sm:$0xff]
        %v7554 = vld [vmem:[%s6964 + $0xe] sm:$0xff]
        %v7555 = vld [vmem:[%s6964 + $0x1e] sm:$0xff]
        %v7556 = vld [vmem:[%s6964 + $0x26] sm:$0xff]
        %v7557 = vld [vmem:[%s6964 + $0x36] sm:$0xff]
        %v7558 = vld [vmem:[%s6964 + $0x3e] sm:$0xff]
        %v7559 = vld [vmem:[%s6964 + $0x4e] sm:$0xff]
        %v7560 = vld [vmem:[%s6964 + $0x56] sm:$0xff]
        %v7561 = vld [vmem:[%s6964 + $0x66] sm:$0xff]
        %v7562 = vld [vmem:[%s6964 + $0x6e] sm:$0xff]
        %v7563 = vld [vmem:[%s6964 + $0x7e] sm:$0xff]
        %v7564 = vld [vmem:[%s6964 + $0x86] sm:$0xff]
        %v7565 = vld [vmem:[%s6964 + $0x96] sm:$0xff]
        %v7566 = vld [vmem:[%s6964 + $0x9e] sm:$0xff]
        %v7567 = vld [vmem:[%s6964 + $0xae] sm:$0xff]
        %v7568 = vld [vmem:[%s6964 + $0xb6] sm:$0xff]
        %v7569 = vld [vmem:[%s6964 + $0xc6] sm:$0xff]
        %v7570 = vld [vmem:[%s6964 + $0xce] sm:$0xff]
        %v7571 = vld [vmem:[%s6964 + $0xde] sm:$0xff]
        %v7572 = vld [vmem:[%s6964 + $0xe6] sm:$0xff]
        %v7573 = vld [vmem:[%s6964 + $0xf6] sm:$0xff]
        %v7574 = vld [vmem:[%s6964 + $0xfe] sm:$0xff]
        %v7575 = vld [vmem:[%s6964 + $0x10e] sm:$0xff]
        %v7576 = vld [vmem:[%s6964 + $0x116] sm:$0xff]
        %v7577 = vld [vmem:[%s6964 + $0x126] sm:$0xff]
        %v7578 = vld [vmem:[%s6964 + $0x12e] sm:$0xff]
        %v7579 = vld [vmem:[%s6964 + $0x13e] sm:$0xff]
        %v7580 = vld [vmem:[%s6964 + $0x146] sm:$0xff]
        %v7581 = vld [vmem:[%s6964 + $0x156] sm:$0xff]
        %v7582 = vld [vmem:[%s6964 + $0x15e] sm:$0xff]
        %v7583 = vld [vmem:[%s6964 + $0x16e] sm:$0xff]
        %v7584 = vld [vmem:[%s6964 + $0x176] sm:$0xff]
        %s7585 = scalar_lea.vmem %s2, 736
        %v7586 = vld [vmem:[%s7585] sm:$0xff]
        %v7587 = vld [vmem:[%s7585 + $0x8] sm:$0xff]
        %v7588 = vld [vmem:[%s7585 + $0x10] sm:$0xff]
        %v7589 = vld [vmem:[%s7585 + $0x18] sm:$0xff]
        %7590 = vmatprep.subr.mxu0 0.0
        %7591 = vmatpush1.xpose.msra.mxu0 %v7586
        %7592 = vmatprep.subr.mxu0 0.0
        %7593 = vmatpush1.xpose.msra.mxu0 %v7587
        %7594 = vmatprep.subr.mxu0 0.0
        %7595 = vmatpush1.xpose.msra.mxu0 %v7588
        %7596 = vmatprep.subr.mxu0 0.0
        %7597 = vmatpush1.xpose.msra.mxu0 %v7589
        %7598 = vmatprep.subr.mxu0 0.0
        %7599 = vmatpush1.xpose.msra.mxu0 0.0
        %7600 = vmatprep.subr.mxu0 0.0
        %7601 = vmatpush1.xpose.msra.mxu0 0.0
        %7602 = vmatprep.subr.mxu0 0.0
        %7603 = vmatpush1.xpose.msra.mxu0 0.0
        %7604 = vmatprep.subr.mxu0 0.0
        %7605 = vmatpush1.xpose.msra.mxu0 0.0
        %7606 = vmatprep.subr.mxu0 0.0
        %7607 = vmatpush1.xpose.msra.mxu0 0.0
        %7608 = vmatprep.subr.mxu0 0.0
        %7609 = vmatpush1.xpose.msra.mxu0 0.0
        %7610 = vmatprep.subr.mxu0 0.0
        %7611 = vmatpush1.xpose.msra.mxu0 0.0
        %7612 = vmatprep.subr.mxu0 0.0
        %7613 = vmatpush1.xpose.msra.mxu0 0.0
        %7614 = vmatprep.subr.mxu0 0.0
        %7615 = vmatpush1.xpose.msra.mxu0 0.0
        %7616 = vmatprep.subr.mxu0 0.0
        %7617 = vmatpush1.xpose.msra.mxu0 0.0
        %7618 = vmatprep.subr.mxu0 0.0
        %7619 = vmatpush1.xpose.msra.mxu0 0.0
        %7620 = vmatprep.subr.mxu0 0.0
        %7621 = vmatpush1.xpose.msra.mxu0 0.0
        %7622 = vmatprep.subr.mxu0 0.0
        %7623 = vmatpush1.xpose.msra.mxu0 0.0
        %7624 = vmatprep.subr.mxu0 0.0
        %7625 = vmatpush1.xpose.msra.mxu0 0.0
        %7626 = vmatprep.subr.mxu0 0.0
        %7627 = vmatpush1.xpose.msra.mxu0 0.0
        %7628 = vmatprep.subr.mxu0 0.0
        %7629 = vmatpush1.xpose.msra.mxu0 0.0
        %7630 = vmatprep.subr.mxu0 0.0
        %7631 = vmatpush1.xpose.msra.mxu0 0.0
        %7632 = vmatprep.subr.mxu0 0.0
        %7633 = vmatpush1.xpose.msra.mxu0 0.0
        %7634 = vmatprep.subr.mxu0 0.0
        %7635 = vmatpush1.xpose.msra.mxu0 0.0
        %7636 = vmatprep.subr.mxu0 0.0
        %7637 = vmatpush1.xpose.msra.mxu0 0.0
        %7638 = vmatprep.subr.mxu0 0.0
        %7639 = vmatpush1.xpose.msra.mxu0 0.0
        %7640 = vmatprep.subr.mxu0 0.0
        %7641 = vmatpush1.xpose.msra.mxu0 0.0
        %7642 = vmatprep.subr.mxu0 0.0
        %7643 = vmatpush1.xpose.msra.mxu0 0.0
        %7644 = vmatprep.subr.mxu0 0.0
        %7645 = vmatpush1.xpose.msra.mxu0 0.0
        %7646 = vmatprep.subr.mxu0 0.0
        %7647 = vmatpush1.xpose.msra.mxu0 0.0
        %7648 = vmatprep.subr.mxu0 0.0
        %7649 = vmatpush1.xpose.msra.mxu0 0.0
        %7650 = vmatprep.subr.mxu0 0.0
        %7651 = vmatpush1.xpose.msra.mxu0 0.0
        %7652 = vmatprep.subr.mxu0 0.0
        %7653 = vmatpush1.xpose.msra.mxu0 0.0
        %7654 = vmatprep.mubr.f32.mxu0 0.0
        %7655 = vmatmul.mubr.f32.gmra.mrb[0].mxu0 %v7553
        %v7656 = vpop.f32.mrb[0].mxu0
        %v7657 = vadd.f32 0.0, %v7656
        %v7658 = vpop.f32.mrb[0].mxu0
        %7659 = vmatprep.mubr.f32.mxu0 0.0
        %7660 = vmatmul.mubr.f32.gmra.mrb[0].mxu0 %v7554
        %v7661 = vpop.f32.mrb[0].mxu0
        %v7662 = vadd.f32 0.0, %v7661
        %v7663 = vpop.f32.mrb[0].mxu0
        %7664 = vmatprep.mubr.f32.mxu0 0.0
        %7665 = vmatmul.mubr.f32.gmra.mrb[0].mxu0 %v7555
        %v7666 = vpop.f32.mrb[0].mxu0
        %v7667 = vadd.f32 0.0, %v7666
        %v7668 = vpop.f32.mrb[0].mxu0
        %7669 = vmatprep.mubr.f32.mxu0 0.0
        %7670 = vmatmul.mubr.f32.gmra.mrb[0].mxu0 %v7556
        %v7671 = vpop.f32.mrb[0].mxu0
        %v7672 = vadd.f32 0.0, %v7671
        %v7673 = vpop.f32.mrb[0].mxu0
        %7674 = vmatprep.mubr.f32.mxu0 0.0
        %7675 = vmatmul.mubr.f32.gmra.mrb[0].mxu0 %v7557
        %v7676 = vpop.f32.mrb[0].mxu0
        %v7677 = vadd.f32 0.0, %v7676
        %v7678 = vpop.f32.mrb[0].mxu0
        %7679 = vmatprep.mubr.f32.mxu0 0.0
        %7680 = vmatmul.mubr.f32.gmra.mrb[0].mxu0 %v7558
        %v7681 = vpop.f32.mrb[0].mxu0
        %v7682 = vadd.f32 0.0, %v7681
        %v7683 = vpop.f32.mrb[0].mxu0
        %7684 = vmatprep.mubr.f32.mxu0 0.0
        %7685 = vmatmul.mubr.f32.gmra.mrb[0].mxu0 %v7559
        %v7686 = vpop.f32.mrb[0].mxu0
        %v7687 = vadd.f32 0.0, %v7686
        %v7688 = vpop.f32.mrb[0].mxu0
        %7689 = vmatprep.mubr.f32.mxu0 0.0
        %7690 = vmatmul.mubr.f32.gmra.mrb[0].mxu0 %v7560
        %v7691 = vpop.f32.mrb[0].mxu0
        %v7692 = vadd.f32 0.0, %v7691
        %v7693 = vpop.f32.mrb[0].mxu0
        %7694 = vmatprep.mubr.f32.mxu0 0.0
        %7695 = vmatmul.mubr.f32.gmra.mrb[0].mxu0 %v7561
        %v7696 = vpop.f32.mrb[0].mxu0
        %v7697 = vadd.f32 0.0, %v7696
        %v7698 = vpop.f32.mrb[0].mxu0
        %7699 = vmatprep.mubr.f32.mxu0 0.0
        %7700 = vmatmul.mubr.f32.gmra.mrb[0].mxu0 %v7562
        %v7701 = vpop.f32.mrb[0].mxu0
        %v7702 = vadd.f32 0.0, %v7701
        %v7703 = vpop.f32.mrb[0].mxu0
        %7704 = vmatprep.mubr.f32.mxu0 0.0
        %7705 = vmatmul.mubr.f32.gmra.mrb[0].mxu0 %v7563
        %v7706 = vpop.f32.mrb[0].mxu0
        %v7707 = vadd.f32 0.0, %v7706
        %v7708 = vpop.f32.mrb[0].mxu0
        %7709 = vmatprep.mubr.f32.mxu0 0.0
        %7710 = vmatmul.mubr.f32.gmra.mrb[0].mxu0 %v7564
        %v7711 = vpop.f32.mrb[0].mxu0
        %v7712 = vadd.f32 0.0, %v7711
        %v7713 = vpop.f32.mrb[0].mxu0
        %7714 = vmatprep.mubr.f32.mxu0 0.0
        %7715 = vmatmul.mubr.f32.gmra.mrb[0].mxu0 %v7565
        %v7716 = vpop.f32.mrb[0].mxu0
        %v7717 = vadd.f32 0.0, %v7716
        %v7718 = vpop.f32.mrb[0].mxu0
        %7719 = vmatprep.mubr.f32.mxu0 0.0
        %7720 = vmatmul.mubr.f32.gmra.mrb[0].mxu0 %v7566
        %v7721 = vpop.f32.mrb[0].mxu0
        %v7722 = vadd.f32 0.0, %v7721
        %v7723 = vpop.f32.mrb[0].mxu0
        %7724 = vmatprep.mubr.f32.mxu0 0.0
        %7725 = vmatmul.mubr.f32.gmra.mrb[0].mxu0 %v7567
        %v7726 = vpop.f32.mrb[0].mxu0
        %v7727 = vadd.f32 0.0, %v7726
        %v7728 = vpop.f32.mrb[0].mxu0
        %7729 = vmatprep.mubr.f32.mxu0 0.0
        %7730 = vmatmul.mubr.f32.gmra.mrb[0].mxu0 %v7568
        %v7731 = vpop.f32.mrb[0].mxu0
        %v7732 = vadd.f32 0.0, %v7731
        %v7733 = vpop.f32.mrb[0].mxu0
        %7734 = vmatprep.mubr.f32.mxu0 0.0
        %7735 = vmatmul.mubr.f32.gmra.mrb[0].mxu0 %v7569
        %v7736 = vpop.f32.mrb[0].mxu0
        %v7737 = vadd.f32 0.0, %v7736
        %v7738 = vpop.f32.mrb[0].mxu0
        %7739 = vmatprep.mubr.f32.mxu0 0.0
        %7740 = vmatmul.mubr.f32.gmra.mrb[0].mxu0 %v7570
        %v7741 = vpop.f32.mrb[0].mxu0
        %v7742 = vadd.f32 0.0, %v7741
        %v7743 = vpop.f32.mrb[0].mxu0
        %7744 = vmatprep.mubr.f32.mxu0 0.0
        %7745 = vmatmul.mubr.f32.gmra.mrb[0].mxu0 %v7571
        %v7746 = vpop.f32.mrb[0].mxu0
        %v7747 = vadd.f32 0.0, %v7746
        %v7748 = vpop.f32.mrb[0].mxu0
        %7749 = vmatprep.mubr.f32.mxu0 0.0
        %7750 = vmatmul.mubr.f32.gmra.mrb[0].mxu0 %v7572
        %v7751 = vpop.f32.mrb[0].mxu0
        %v7752 = vadd.f32 0.0, %v7751
        %v7753 = vpop.f32.mrb[0].mxu0
        %7754 = vmatprep.mubr.f32.mxu0 0.0
        %7755 = vmatmul.mubr.f32.gmra.mrb[0].mxu0 %v7573
        %v7756 = vpop.f32.mrb[0].mxu0
        %v7757 = vadd.f32 0.0, %v7756
        %v7758 = vpop.f32.mrb[0].mxu0
        %7759 = vmatprep.mubr.f32.mxu0 0.0
        %7760 = vmatmul.mubr.f32.gmra.mrb[0].mxu0 %v7574
        %v7761 = vpop.f32.mrb[0].mxu0
        %v7762 = vadd.f32 0.0, %v7761
        %v7763 = vpop.f32.mrb[0].mxu0
        %7764 = vmatprep.mubr.f32.mxu0 0.0
        %7765 = vmatmul.mubr.f32.gmra.mrb[0].mxu0 %v7575
        %v7766 = vpop.f32.mrb[0].mxu0
        %v7767 = vadd.f32 0.0, %v7766
        %v7768 = vpop.f32.mrb[0].mxu0
        %7769 = vmatprep.mubr.f32.mxu0 0.0
        %7770 = vmatmul.mubr.f32.gmra.mrb[0].mxu0 %v7576
        %v7771 = vpop.f32.mrb[0].mxu0
        %v7772 = vadd.f32 0.0, %v7771
        %v7773 = vpop.f32.mrb[0].mxu0
        %7774 = vmatprep.mubr.f32.mxu0 0.0
        %7775 = vmatmul.mubr.f32.gmra.mrb[0].mxu0 %v7577
        %v7776 = vpop.f32.mrb[0].mxu0
        %v7777 = vadd.f32 0.0, %v7776
        %v7778 = vpop.f32.mrb[0].mxu0
        %7779 = vmatprep.mubr.f32.mxu0 0.0
        %7780 = vmatmul.mubr.f32.gmra.mrb[0].mxu0 %v7578
        %v7781 = vpop.f32.mrb[0].mxu0
        %v7782 = vadd.f32 0.0, %v7781
        %v7783 = vpop.f32.mrb[0].mxu0
        %7784 = vmatprep.mubr.f32.mxu0 0.0
        %7785 = vmatmul.mubr.f32.gmra.mrb[0].mxu0 %v7579
        %v7786 = vpop.f32.mrb[0].mxu0
        %v7787 = vadd.f32 0.0, %v7786
        %v7788 = vpop.f32.mrb[0].mxu0
        %7789 = vmatprep.mubr.f32.mxu0 0.0
        %7790 = vmatmul.mubr.f32.gmra.mrb[0].mxu0 %v7580
        %v7791 = vpop.f32.mrb[0].mxu0
        %v7792 = vadd.f32 0.0, %v7791
        %v7793 = vpop.f32.mrb[0].mxu0
        %7794 = vmatprep.mubr.f32.mxu0 0.0
        %7795 = vmatmul.mubr.f32.gmra.mrb[0].mxu0 %v7581
        %v7796 = vpop.f32.mrb[0].mxu0
        %v7797 = vadd.f32 0.0, %v7796
        %v7798 = vpop.f32.mrb[0].mxu0
        %7799 = vmatprep.mubr.f32.mxu0 0.0
        %7800 = vmatmul.mubr.f32.gmra.mrb[0].mxu0 %v7582
        %v7801 = vpop.f32.mrb[0].mxu0
        %v7802 = vadd.f32 0.0, %v7801
        %v7803 = vpop.f32.mrb[0].mxu0
        %7804 = vmatprep.mubr.f32.mxu0 0.0
        %7805 = vmatmul.mubr.f32.gmra.mrb[0].mxu0 %v7583
        %v7806 = vpop.f32.mrb[0].mxu0
        %v7807 = vadd.f32 0.0, %v7806
        %v7808 = vpop.f32.mrb[0].mxu0
        %7809 = vmatprep.mubr.f32.mxu0 0.0
        %7810 = vmatmul.mubr.f32.gmra.mrb[0].mxu0 %v7584
        %v7811 = vpop.f32.mrb[0].mxu0
        %v7812 = vadd.f32 0.0, %v7811
        %v7813 = vpop.f32.mrb[0].mxu0
        %7814 = vdwg.mxu0
        %v7815 = vadd.f32 %v7521, %v7657
        %v7816 = vadd.f32 %v7522, %v7662
        %v7817 = vadd.f32 %v7523, %v7667
        %v7818 = vadd.f32 %v7524, %v7672
        %v7819 = vadd.f32 %v7525, %v7677
        %v7820 = vadd.f32 %v7526, %v7682
        %v7821 = vadd.f32 %v7527, %v7687
        %v7822 = vadd.f32 %v7528, %v7692
        %v7823 = vadd.f32 %v7529, %v7697
        %v7824 = vadd.f32 %v7530, %v7702
        %v7825 = vadd.f32 %v7531, %v7707
        %v7826 = vadd.f32 %v7532, %v7712
        %v7827 = vadd.f32 %v7533, %v7717
        %v7828 = vadd.f32 %v7534, %v7722
        %v7829 = vadd.f32 %v7535, %v7727
        %v7830 = vadd.f32 %v7536, %v7732
        %v7831 = vadd.f32 %v7537, %v7737
        %v7832 = vadd.f32 %v7538, %v7742
        %v7833 = vadd.f32 %v7539, %v7747
        %v7834 = vadd.f32 %v7540, %v7752
        %v7835 = vadd.f32 %v7541, %v7757
        %v7836 = vadd.f32 %v7542, %v7762
        %v7837 = vadd.f32 %v7543, %v7767
        %v7838 = vadd.f32 %v7544, %v7772
        %v7839 = vadd.f32 %v7545, %v7777
        %v7840 = vadd.f32 %v7546, %v7782
        %v7841 = vadd.f32 %v7547, %v7787
        %v7842 = vadd.f32 %v7548, %v7792
        %v7843 = vadd.f32 %v7549, %v7797
        %v7844 = vadd.f32 %v7550, %v7802
        %v7845 = vadd.f32 %v7551, %v7807
        %v7846 = vadd.f32 %v7552, %v7812
        %v7847 = vld [vmem:[#allocation2] sm:$0xff]
        %v7848 = vld [vmem:[#allocation2 + $0x8] sm:$0xff]
        %v7849 = vld [vmem:[#allocation2 + $0x10] sm:$0xff]
        %v7850 = vld [vmem:[#allocation2 + $0x18] sm:$0xff]
        %v7851 = vld [vmem:[#allocation2 + $0x20] sm:$0xff]
        %v7852 = vld [vmem:[#allocation2 + $0x28] sm:$0xff]
        %v7853 = vld [vmem:[#allocation2 + $0x30] sm:$0xff]
        %v7854 = vld [vmem:[#allocation2 + $0x38] sm:$0xff]
        %v7855 = vld [vmem:[#allocation2 + $0x40] sm:$0xff]
        %v7856 = vld [vmem:[#allocation2 + $0x48] sm:$0xff]
        %v7857 = vld [vmem:[#allocation2 + $0x50] sm:$0xff]
        %v7858 = vld [vmem:[#allocation2 + $0x58] sm:$0xff]
        %v7859 = vld [vmem:[#allocation2 + $0x60] sm:$0xff]
        %v7860 = vld [vmem:[#allocation2 + $0x68] sm:$0xff]
        %v7861 = vld [vmem:[#allocation2 + $0x70] sm:$0xff]
        %v7862 = vld [vmem:[#allocation2 + $0x78] sm:$0xff]
        %v7863 = vld [vmem:[#allocation2 + $0x80] sm:$0xff]
        %v7864 = vld [vmem:[#allocation2 + $0x88] sm:$0xff]
        %v7865 = vld [vmem:[#allocation2 + $0x90] sm:$0xff]
        %v7866 = vld [vmem:[#allocation2 + $0x98] sm:$0xff]
        %v7867 = vld [vmem:[#allocation2 + $0xa0] sm:$0xff]
        %v7868 = vld [vmem:[#allocation2 + $0xa8] sm:$0xff]
        %v7869 = vld [vmem:[#allocation2 + $0xb0] sm:$0xff]
        %v7870 = vld [vmem:[#allocation2 + $0xb8] sm:$0xff]
        %v7871 = vld [vmem:[#allocation2 + $0xc0] sm:$0xff]
        %v7872 = vld [vmem:[#allocation2 + $0xc8] sm:$0xff]
        %v7873 = vld [vmem:[#allocation2 + $0xd0] sm:$0xff]
        %v7874 = vld [vmem:[#allocation2 + $0xd8] sm:$0xff]
        %v7875 = vld [vmem:[#allocation2 + $0xe0] sm:$0xff]
        %v7876 = vld [vmem:[#allocation2 + $0xe8] sm:$0xff]
        %v7877 = vld [vmem:[#allocation2 + $0xf0] sm:$0xff]
        %v7878 = vld [vmem:[#allocation2 + $0xf8] sm:$0xff]
        %7911 = vrot.lane.b32.xlu0 %v7815, 96
        %v7912 = vpop.permute.xlu0 %7911
        %7913 = vrot.lane.b32.xlu0 %v7816, 96
        %v7914 = vpop.permute.xlu0 %7913
        %7915 = vrot.lane.b32.xlu0 %v7817, 96
        %v7916 = vpop.permute.xlu0 %7915
        %7917 = vrot.lane.b32.xlu0 %v7818, 96
        %v7918 = vpop.permute.xlu0 %7917
        %7919 = vrot.lane.b32.xlu0 %v7819, 96
        %v7920 = vpop.permute.xlu0 %7919
        %7921 = vrot.lane.b32.xlu0 %v7820, 96
        %v7922 = vpop.permute.xlu0 %7921
        %7923 = vrot.lane.b32.xlu0 %v7821, 96
        %v7924 = vpop.permute.xlu0 %7923
        %7925 = vrot.lane.b32.xlu0 %v7822, 96
        %v7926 = vpop.permute.xlu0 %7925
        %7927 = vrot.lane.b32.xlu0 %v7823, 96
        %v7928 = vpop.permute.xlu0 %7927
        %7929 = vrot.lane.b32.xlu0 %v7824, 96
        %v7930 = vpop.permute.xlu0 %7929
        %7931 = vrot.lane.b32.xlu0 %v7825, 96
        %v7932 = vpop.permute.xlu0 %7931
        %7933 = vrot.lane.b32.xlu0 %v7826, 96
        %v7934 = vpop.permute.xlu0 %7933
        %7935 = vrot.lane.b32.xlu0 %v7827, 96
        %v7936 = vpop.permute.xlu0 %7935
        %7937 = vrot.lane.b32.xlu0 %v7828, 96
        %v7938 = vpop.permute.xlu0 %7937
        %7939 = vrot.lane.b32.xlu0 %v7829, 96
        %v7940 = vpop.permute.xlu0 %7939
        %7941 = vrot.lane.b32.xlu0 %v7830, 96
        %v7942 = vpop.permute.xlu0 %7941
        %7943 = vrot.lane.b32.xlu0 %v7831, 96
        %v7944 = vpop.permute.xlu0 %7943
        %7945 = vrot.lane.b32.xlu0 %v7832, 96
        %v7946 = vpop.permute.xlu0 %7945
        %7947 = vrot.lane.b32.xlu0 %v7833, 96
        %v7948 = vpop.permute.xlu0 %7947
        %7949 = vrot.lane.b32.xlu0 %v7834, 96
        %v7950 = vpop.permute.xlu0 %7949
        %7951 = vrot.lane.b32.xlu0 %v7835, 96
        %v7952 = vpop.permute.xlu0 %7951
        %7953 = vrot.lane.b32.xlu0 %v7836, 96
        %v7954 = vpop.permute.xlu0 %7953
        %7955 = vrot.lane.b32.xlu0 %v7837, 96
        %v7956 = vpop.permute.xlu0 %7955
        %7957 = vrot.lane.b32.xlu0 %v7838, 96
        %v7958 = vpop.permute.xlu0 %7957
        %7959 = vrot.lane.b32.xlu0 %v7839, 96
        %v7960 = vpop.permute.xlu0 %7959
        %7961 = vrot.lane.b32.xlu0 %v7840, 96
        %v7962 = vpop.permute.xlu0 %7961
        %7963 = vrot.lane.b32.xlu0 %v7841, 96
        %v7964 = vpop.permute.xlu0 %7963
        %7965 = vrot.lane.b32.xlu0 %v7842, 96
        %v7966 = vpop.permute.xlu0 %7965
        %7967 = vrot.lane.b32.xlu0 %v7843, 96
        %v7968 = vpop.permute.xlu0 %7967
        %7969 = vrot.lane.b32.xlu0 %v7844, 96
        %v7970 = vpop.permute.xlu0 %7969
        %7971 = vrot.lane.b32.xlu0 %v7845, 96
        %v7972 = vpop.permute.xlu0 %7971
        %7973 = vrot.lane.b32.xlu0 %v7846, 96
        %v7974 = vpop.permute.xlu0 %7973
        %v8007 = vadd.f32 %v7847, %v7912
        %v8008 = vadd.f32 %v7848, %v7914
        %v8009 = vadd.f32 %v7849, %v7916
        %v8010 = vadd.f32 %v7850, %v7918
        %v8011 = vadd.f32 %v7851, %v7920
        %v8012 = vadd.f32 %v7852, %v7922
        %v8013 = vadd.f32 %v7853, %v7924
        %v8014 = vadd.f32 %v7854, %v7926
        %v8015 = vadd.f32 %v7855, %v7928
        %v8016 = vadd.f32 %v7856, %v7930
        %v8017 = vadd.f32 %v7857, %v7932
        %v8018 = vadd.f32 %v7858, %v7934
        %v8019 = vadd.f32 %v7859, %v7936
        %v8020 = vadd.f32 %v7860, %v7938
        %v8021 = vadd.f32 %v7861, %v7940
        %v8022 = vadd.f32 %v7862, %v7942
        %v8023 = vadd.f32 %v7863, %v7944
        %v8024 = vadd.f32 %v7864, %v7946
        %v8025 = vadd.f32 %v7865, %v7948
        %v8026 = vadd.f32 %v7866, %v7950
        %v8027 = vadd.f32 %v7867, %v7952
        %v8028 = vadd.f32 %v7868, %v7954
        %v8029 = vadd.f32 %v7869, %v7956
        %v8030 = vadd.f32 %v7870, %v7958
        %v8031 = vadd.f32 %v7871, %v7960
        %v8032 = vadd.f32 %v7872, %v7962
        %v8033 = vadd.f32 %v7873, %v7964
        %v8034 = vadd.f32 %v7874, %v7966
        %v8035 = vadd.f32 %v7875, %v7968
        %v8036 = vadd.f32 %v7876, %v7970
        %v8037 = vadd.f32 %v7877, %v7972
        %v8038 = vadd.f32 %v7878, %v7974
        %vm8039 = vcmask 1048320
        %8040 = vst.msk [vmem:[#allocation2] sm:$0xff] %vm8039, %v8007
        %8041 = vst.msk [vmem:[#allocation2 + $0x8] sm:$0xff] %vm8039, %v8008
        %8042 = vst.msk [vmem:[#allocation2 + $0x10] sm:$0xff] %vm8039, %v8009
        %8043 = vst.msk [vmem:[#allocation2 + $0x18] sm:$0xff] %vm8039, %v8010
        %8044 = vst.msk [vmem:[#allocation2 + $0x20] sm:$0xff] %vm8039, %v8011
        %8045 = vst.msk [vmem:[#allocation2 + $0x28] sm:$0xff] %vm8039, %v8012
        %8046 = vst.msk [vmem:[#allocation2 + $0x30] sm:$0xff] %vm8039, %v8013
        %8047 = vst.msk [vmem:[#allocation2 + $0x38] sm:$0xff] %vm8039, %v8014
        %8048 = vst.msk [vmem:[#allocation2 + $0x40] sm:$0xff] %vm8039, %v8015
        %8049 = vst.msk [vmem:[#allocation2 + $0x48] sm:$0xff] %vm8039, %v8016
        %8050 = vst.msk [vmem:[#allocation2 + $0x50] sm:$0xff] %vm8039, %v8017
        %8051 = vst.msk [vmem:[#allocation2 + $0x58] sm:$0xff] %vm8039, %v8018
        %8052 = vst.msk [vmem:[#allocation2 + $0x60] sm:$0xff] %vm8039, %v8019
        %8053 = vst.msk [vmem:[#allocation2 + $0x68] sm:$0xff] %vm8039, %v8020
        %8054 = vst.msk [vmem:[#allocation2 + $0x70] sm:$0xff] %vm8039, %v8021
        %8055 = vst.msk [vmem:[#allocation2 + $0x78] sm:$0xff] %vm8039, %v8022
        %8056 = vst.msk [vmem:[#allocation2 + $0x80] sm:$0xff] %vm8039, %v8023
        %8057 = vst.msk [vmem:[#allocation2 + $0x88] sm:$0xff] %vm8039, %v8024
        %8058 = vst.msk [vmem:[#allocation2 + $0x90] sm:$0xff] %vm8039, %v8025
        %8059 = vst.msk [vmem:[#allocation2 + $0x98] sm:$0xff] %vm8039, %v8026
        %8060 = vst.msk [vmem:[#allocation2 + $0xa0] sm:$0xff] %vm8039, %v8027
        %8061 = vst.msk [vmem:[#allocation2 + $0xa8] sm:$0xff] %vm8039, %v8028
        %8062 = vst.msk [vmem:[#allocation2 + $0xb0] sm:$0xff] %vm8039, %v8029
        %8063 = vst.msk [vmem:[#allocation2 + $0xb8] sm:$0xff] %vm8039, %v8030
        %8064 = vst.msk [vmem:[#allocation2 + $0xc0] sm:$0xff] %vm8039, %v8031
        %8065 = vst.msk [vmem:[#allocation2 + $0xc8] sm:$0xff] %vm8039, %v8032
        %8066 = vst.msk [vmem:[#allocation2 + $0xd0] sm:$0xff] %vm8039, %v8033
        %8067 = vst.msk [vmem:[#allocation2 + $0xd8] sm:$0xff] %vm8039, %v8034
        %8068 = vst.msk [vmem:[#allocation2 + $0xe0] sm:$0xff] %vm8039, %v8035
        %8069 = vst.msk [vmem:[#allocation2 + $0xe8] sm:$0xff] %vm8039, %v8036
        %8070 = vst.msk [vmem:[#allocation2 + $0xf0] sm:$0xff] %vm8039, %v8037
        %8071 = vst.msk [vmem:[#allocation2 + $0xf8] sm:$0xff] %vm8039, %v8038
        %v8072 = vld [vmem:[#allocation2] sm:$0xff]
        %v8073 = vld [vmem:[#allocation2 + $0x8] sm:$0xff]
        %v8074 = vld [vmem:[#allocation2 + $0x10] sm:$0xff]
        %v8075 = vld [vmem:[#allocation2 + $0x18] sm:$0xff]
        %v8076 = vld [vmem:[#allocation2 + $0x20] sm:$0xff]
        %v8077 = vld [vmem:[#allocation2 + $0x28] sm:$0xff]
        %v8078 = vld [vmem:[#allocation2 + $0x30] sm:$0xff]
        %v8079 = vld [vmem:[#allocation2 + $0x38] sm:$0xff]
        %v8080 = vld [vmem:[#allocation2 + $0x40] sm:$0xff]
        %v8081 = vld [vmem:[#allocation2 + $0x48] sm:$0xff]
        %v8082 = vld [vmem:[#allocation2 + $0x50] sm:$0xff]
        %v8083 = vld [vmem:[#allocation2 + $0x58] sm:$0xff]
        %v8084 = vld [vmem:[#allocation2 + $0x60] sm:$0xff]
        %v8085 = vld [vmem:[#allocation2 + $0x68] sm:$0xff]
        %v8086 = vld [vmem:[#allocation2 + $0x70] sm:$0xff]
        %v8087 = vld [vmem:[#allocation2 + $0x78] sm:$0xff]
        %v8088 = vld [vmem:[#allocation2 + $0x80] sm:$0xff]
        %v8089 = vld [vmem:[#allocation2 + $0x88] sm:$0xff]
        %v8090 = vld [vmem:[#allocation2 + $0x90] sm:$0xff]
        %v8091 = vld [vmem:[#allocation2 + $0x98] sm:$0xff]
        %v8092 = vld [vmem:[#allocation2 + $0xa0] sm:$0xff]
        %v8093 = vld [vmem:[#allocation2 + $0xa8] sm:$0xff]
        %v8094 = vld [vmem:[#allocation2 + $0xb0] sm:$0xff]
        %v8095 = vld [vmem:[#allocation2 + $0xb8] sm:$0xff]
        %v8096 = vld [vmem:[#allocation2 + $0xc0] sm:$0xff]
        %v8097 = vld [vmem:[#allocation2 + $0xc8] sm:$0xff]
        %v8098 = vld [vmem:[#allocation2 + $0xd0] sm:$0xff]
        %v8099 = vld [vmem:[#allocation2 + $0xd8] sm:$0xff]
        %v8100 = vld [vmem:[#allocation2 + $0xe0] sm:$0xff]
        %v8101 = vld [vmem:[#allocation2 + $0xe8] sm:$0xff]
        %v8102 = vld [vmem:[#allocation2 + $0xf0] sm:$0xff]
        %v8103 = vld [vmem:[#allocation2 + $0xf8] sm:$0xff]
        %v8104 = vld [vmem:[%s3] sm:$0x1]
        %v8106 = vlaneseq
        %v8107 = vshrl.u32 %v8106, 7
        %v8108 = vsub.s32 0, %v8107
        %v8109 = vrot.slane %v8104, %v8108
        %v8111 = vmul.f32 %v8072, %v8109
        %v8112 = vmul.f32 %v8073, %v8109
        %v8113 = vmul.f32 %v8074, %v8109
        %v8114 = vmul.f32 %v8075, %v8109
        %v8115 = vmul.f32 %v8076, %v8109
        %v8116 = vmul.f32 %v8077, %v8109
        %v8117 = vmul.f32 %v8078, %v8109
        %v8118 = vmul.f32 %v8079, %v8109
        %v8119 = vmul.f32 %v8080, %v8109
        %v8120 = vmul.f32 %v8081, %v8109
        %v8121 = vmul.f32 %v8082, %v8109
        %v8122 = vmul.f32 %v8083, %v8109
        %v8123 = vmul.f32 %v8084, %v8109
        %v8124 = vmul.f32 %v8085, %v8109
        %v8125 = vmul.f32 %v8086, %v8109
        %v8126 = vmul.f32 %v8087, %v8109
        %v8127 = vmul.f32 %v8088, %v8109
        %v8128 = vmul.f32 %v8089, %v8109
        %v8129 = vmul.f32 %v8090, %v8109
        %v8130 = vmul.f32 %v8091, %v8109
        %v8131 = vmul.f32 %v8092, %v8109
        %v8132 = vmul.f32 %v8093, %v8109
        %v8133 = vmul.f32 %v8094, %v8109
        %v8134 = vmul.f32 %v8095, %v8109
        %v8135 = vmul.f32 %v8096, %v8109
        %v8136 = vmul.f32 %v8097, %v8109
        %v8137 = vmul.f32 %v8098, %v8109
        %v8138 = vmul.f32 %v8099, %v8109
        %v8139 = vmul.f32 %v8100, %v8109
        %v8140 = vmul.f32 %v8101, %v8109
        %v8141 = vmul.f32 %v8102, %v8109
        %v8142 = vmul.f32 %v8103, %v8109
        %v8143 = vld [vmem:[%s4] sm:$0x1]
        %v8145 = vlaneseq
        %v8146 = vshrl.u32 %v8145, 7
        %v8147 = vsub.s32 0, %v8146
        %v8148 = vrot.slane %v8143, %v8147
        %v8150 = vadd.f32 %v8111, %v8148
        %v8151 = vadd.f32 %v8112, %v8148
        %v8152 = vadd.f32 %v8113, %v8148
        %v8153 = vadd.f32 %v8114, %v8148
        %v8154 = vadd.f32 %v8115, %v8148
        %v8155 = vadd.f32 %v8116, %v8148
        %v8156 = vadd.f32 %v8117, %v8148
        %v8157 = vadd.f32 %v8118, %v8148
        %v8158 = vadd.f32 %v8119, %v8148
        %v8159 = vadd.f32 %v8120, %v8148
        %v8160 = vadd.f32 %v8121, %v8148
        %v8161 = vadd.f32 %v8122, %v8148
        %v8162 = vadd.f32 %v8123, %v8148
        %v8163 = vadd.f32 %v8124, %v8148
        %v8164 = vadd.f32 %v8125, %v8148
        %v8165 = vadd.f32 %v8126, %v8148
        %v8166 = vadd.f32 %v8127, %v8148
        %v8167 = vadd.f32 %v8128, %v8148
        %v8168 = vadd.f32 %v8129, %v8148
        %v8169 = vadd.f32 %v8130, %v8148
        %v8170 = vadd.f32 %v8131, %v8148
        %v8171 = vadd.f32 %v8132, %v8148
        %v8172 = vadd.f32 %v8133, %v8148
        %v8173 = vadd.f32 %v8134, %v8148
        %v8174 = vadd.f32 %v8135, %v8148
        %v8175 = vadd.f32 %v8136, %v8148
        %v8176 = vadd.f32 %v8137, %v8148
        %v8177 = vadd.f32 %v8138, %v8148
        %v8178 = vadd.f32 %v8139, %v8148
        %v8179 = vadd.f32 %v8140, %v8148
        %v8180 = vadd.f32 %v8141, %v8148
        %v8181 = vadd.f32 %v8142, %v8148
        %v8182 = vmax.f32 %v8150, 0.0
        %v8183 = vmax.f32 %v8151, 0.0
        %v8184 = vmax.f32 %v8152, 0.0
        %v8185 = vmax.f32 %v8153, 0.0
        %v8186 = vmax.f32 %v8154, 0.0
        %v8187 = vmax.f32 %v8155, 0.0
        %v8188 = vmax.f32 %v8156, 0.0
        %v8189 = vmax.f32 %v8157, 0.0
        %v8190 = vmax.f32 %v8158, 0.0
        %v8191 = vmax.f32 %v8159, 0.0
        %v8192 = vmax.f32 %v8160, 0.0
        %v8193 = vmax.f32 %v8161, 0.0
        %v8194 = vmax.f32 %v8162, 0.0
        %v8195 = vmax.f32 %v8163, 0.0
        %v8196 = vmax.f32 %v8164, 0.0
        %v8197 = vmax.f32 %v8165, 0.0
        %v8198 = vmax.f32 %v8166, 0.0
        %v8199 = vmax.f32 %v8167, 0.0
        %v8200 = vmax.f32 %v8168, 0.0
        %v8201 = vmax.f32 %v8169, 0.0
        %v8202 = vmax.f32 %v8170, 0.0
        %v8203 = vmax.f32 %v8171, 0.0
        %v8204 = vmax.f32 %v8172, 0.0
        %v8205 = vmax.f32 %v8173, 0.0
        %v8206 = vmax.f32 %v8174, 0.0
        %v8207 = vmax.f32 %v8175, 0.0
        %v8208 = vmax.f32 %v8176, 0.0
        %v8209 = vmax.f32 %v8177, 0.0
        %v8210 = vmax.f32 %v8178, 0.0
        %v8211 = vmax.f32 %v8179, 0.0
        %v8212 = vmax.f32 %v8180, 0.0
        %v8213 = vmax.f32 %v8181, 0.0
        %8214 = vst [vmem:[%s217] sm:$0xff] %v8182
        %8215 = vst [vmem:[%s217 + $0x8] sm:$0xff] %v8183
        %8216 = vst [vmem:[%s217 + $0x10] sm:$0xff] %v8184
        %8217 = vst [vmem:[%s217 + $0x18] sm:$0xff] %v8185
        %8218 = vst [vmem:[%s217 + $0x20] sm:$0xff] %v8186
        %8219 = vst [vmem:[%s217 + $0x28] sm:$0xff] %v8187
        %8220 = vst [vmem:[%s217 + $0x30] sm:$0xff] %v8188
        %8221 = vst [vmem:[%s217 + $0x38] sm:$0xff] %v8189
        %8222 = vst [vmem:[%s217 + $0x40] sm:$0xff] %v8190
        %8223 = vst [vmem:[%s217 + $0x48] sm:$0xff] %v8191
        %8224 = vst [vmem:[%s217 + $0x50] sm:$0xff] %v8192
        %8225 = vst [vmem:[%s217 + $0x58] sm:$0xff] %v8193
        %8226 = vst [vmem:[%s217 + $0x60] sm:$0xff] %v8194
        %8227 = vst [vmem:[%s217 + $0x68] sm:$0xff] %v8195
        %8228 = vst [vmem:[%s217 + $0x70] sm:$0xff] %v8196
        %8229 = vst [vmem:[%s217 + $0x78] sm:$0xff] %v8197
        %8230 = vst [vmem:[%s217 + $0x80] sm:$0xff] %v8198
        %8231 = vst [vmem:[%s217 + $0x88] sm:$0xff] %v8199
        %8232 = vst [vmem:[%s217 + $0x90] sm:$0xff] %v8200
        %8233 = vst [vmem:[%s217 + $0x98] sm:$0xff] %v8201
        %8234 = vst [vmem:[%s217 + $0xa0] sm:$0xff] %v8202
        %8235 = vst [vmem:[%s217 + $0xa8] sm:$0xff] %v8203
        %8236 = vst [vmem:[%s217 + $0xb0] sm:$0xff] %v8204
        %8237 = vst [vmem:[%s217 + $0xb8] sm:$0xff] %v8205
        %8238 = vst [vmem:[%s217 + $0xc0] sm:$0xff] %v8206
        %8239 = vst [vmem:[%s217 + $0xc8] sm:$0xff] %v8207
        %8240 = vst [vmem:[%s217 + $0xd0] sm:$0xff] %v8208
        %8241 = vst [vmem:[%s217 + $0xd8] sm:$0xff] %v8209
        %8242 = vst [vmem:[%s217 + $0xe0] sm:$0xff] %v8210
        %8243 = vst [vmem:[%s217 + $0xe8] sm:$0xff] %v8211
        %8244 = vst [vmem:[%s217 + $0xf0] sm:$0xff] %v8212
        %8245 = vst [vmem:[%s217 + $0xf8] sm:$0xff] %v8213
        %s8246 = sand.u32 %s137, 1
        %s8247 = scalar_lea.sflag [#allocation4], %s8246
        %s8248 = sand.u32 %s137, 1
        %s8249 = smul.addr %s8248, 256
        %s8250 = scalar_lea.vmem [#allocation3], %s8249
        // Predicated region
        $region41: #{cpfe_forward.1} parent=39 // pred_check
          %p8251 = pneg %p147
        $region42: #{cpfe_forward.1} parent=39 // pred_check_branch
          %8253 = sbr.rel (%p8251) target = $region44
        $region43: #{cpfe_forward.1} parent=39 // pred_region
          %s8255 = ssub.s32 4096, 4096
          %8256 = vsyncadd %s8247, %s8255
          %s8257 = smul.addr %s19, 32
          %s8258 = smul.addr %s8257, 128
          %s8259 = scalar_lea.hbm %s5, %s8258
          %s8260 = sshll.u32 %s8250, 4
          %s8261 = int_to_ptr.vmem [resolvable:$true] %s8260
          %8266 = dma.vmem_to_hbm [thread:$0]  %s8261, 4096, %s8259, %s8247, 128, 128, 8
        $region44: #{cpfe_forward.1} parent=39 // pred_fallthru
          _
      $region40: #{cpfe_forward.1} parent=5 // pred_fallthru
        _
      %p8267 = scmp.le.s32.totalorder 2, %s14
      // Predicated region
      $region45: #{cpfe_forward.1} parent=5 // pred_check
        %p8268 = pneg %p8267
      $region46: #{cpfe_forward.1} parent=5 // pred_check_branch
        %8270 = sbr.rel (%p8268) target = $region48
      $region47: #{cpfe_forward.1} parent=5 // pred_region
        %s8271 = ssub.s32 %s14, 2
        // Predicated region
        $region49: #{cpfe_forward.1} parent=47 // pred_check
          %p8272 = pneg %p153
        $region50: #{cpfe_forward.1} parent=47 // pred_check_branch
          %8274 = sbr.rel (%p8272) target = $region52
        $region51: #{cpfe_forward.1} parent=47 // pred_region
          %s8275 = sand.u32 %s138, 1
          %s8276 = scalar_lea.sflag [#allocation4], %s8275
          %s8277 = sand.u32 %s138, 1
          %s8278 = smul.addr %s8277, 256
          %s8279 = scalar_lea.vmem [#allocation3], %s8278
          %8280 = dma.done %s8276, 4096
        $region52: #{cpfe_forward.1} parent=47 // pred_fallthru
          _
      $region48: #{cpfe_forward.1} parent=5 // pred_fallthru
        _
    $region6: #{cpfe_forward.1} parent=1 // loop_footer
      %s18 = sadd.s32 1, %s14
    $region7: #{cpfe_forward.1} parent=1 // loop_footer_branch
      %13 = sbr.rel target = $region3
    $region8: #{cpfe_forward.1} parent=1 // loop_exit
      _
    %8281 = vsyncpa [#allocation4], 1
    %s8282 = scalar_lea.sflag [#allocation4], 1
    %8283 = vsyncpa %s8282, 1

</llo_original>
